<compile_context>
chip_gen: v7x
topology: tpu7x:2x2x1
jax: 0.10.0
libtpu: 0.0.40
codegen_flags: <defaults>
</compile_context>

<pallas_src>
import jax
import jax.numpy as jnp
from jax import lax  # noqa: F401  (kept for fori_loop variant at larger T)
from jax.experimental import pallas as pl
from jax.experimental.pallas import tpu as pltpu  # noqa: F401


# ----------------------------------------------------------------------------
# Pallas kernel: fused forward+backward LSTM recurrence over the full sequence
# ----------------------------------------------------------------------------
def _bilstm_recurrence_kernel(gx_f_ref, gx_b_ref, whh_f_ref, whh_b_ref,
                              y_ref, h_n_ref, c_n_ref):
    """Fused bidirectional LSTM recurrence (time loop inside the kernel).

    gx_f, gx_b : (T, B, 4H) f32   precomputed x_t @ W_ih^T + (b_ih + b_hh),
                                  stored in forward time order for both dirs.
    whh_f/b    : (H, 4H)    bf16  recurrent weights (transposed).
    y          : (T, B, 2H) f32   [..., :H] = forward, [..., H:] = backward.
    h_n, c_n   : (2, B, H)  f32   final states, index 0 = fwd, 1 = bwd.
    """
    T, B, G = gx_f_ref.shape
    H = G // 4

    whh_f = whh_f_ref[...]
    whh_b = whh_b_ref[...]

    def cell(gates, c_prev):
        # PyTorch gate order [i, f, g, o]
        i_g = jax.nn.sigmoid(gates[:, 0 * H:1 * H])
        f_g = jax.nn.sigmoid(gates[:, 1 * H:2 * H])
        g_g = jnp.tanh(gates[:, 2 * H:3 * H])
        o_g = jax.nn.sigmoid(gates[:, 3 * H:4 * H])
        c_new = f_g * c_prev + i_g * g_g
        h_new = o_g * jnp.tanh(c_new)
        return h_new, c_new

    zeros = jnp.zeros((B, H), jnp.float32)
    h_f, c_f = zeros, zeros
    h_b, c_b = zeros, zeros

    # Fully unrolled time loop (T is small & static here). For large T switch
    # to lax.fori_loop(..., unroll=k) with the same body.
    for t in range(T):
        tb = T - 1 - t  # backward direction processes the sequence reversed

        gates_f = gx_f_ref[t] + jnp.dot(
            h_f.astype(jnp.bfloat16), whh_f, preferred_element_type=jnp.float32)
        gates_b = gx_b_ref[tb] + jnp.dot(
            h_b.astype(jnp.bfloat16), whh_b, preferred_element_type=jnp.float32)

        h_f, c_f = cell(gates_f, c_f)
        h_b, c_b = cell(gates_b, c_b)

        y_ref[t, :, 0:H] = h_f
        y_ref[tb, :, H:2 * H] = h_b

    h_n_ref[0] = h_f
    h_n_ref[1] = h_b
    c_n_ref[0] = c_f
    c_n_ref[1] = c_b


# ----------------------------------------------------------------------------
# Bidirectional layer + pyramid stacking (thin plain-JAX glue around kernel)
# ----------------------------------------------------------------------------
def bilstm_layer(x_btd, layer_params):
    """Bidirectional single-layer LSTM, batch_first semantics like nn.LSTM."""
    B, T, D = x_btd.shape
    fwd, bwd = layer_params["fwd"], layer_params["bwd"]
    H = fwd["whh_t"].shape[0]

    # Hoisted input projection: one big (B*T, D) @ (D, 4H) matmul per
    # direction (no sequential dependence), emitted time-major so the kernel's
    # per-step read is a cheap leading-dim index. The batch_first->time_major
    # transpose is fused into this matmul by XLA (no separate relayout of x).
    gx_f = jnp.einsum("btd,dg->tbg", x_btd, fwd["wih_t"]) + fwd["bias"]
    gx_b = jnp.einsum("btd,dg->tbg", x_btd, bwd["wih_t"]) + bwd["bias"]

    y, h_n, c_n = pl.pallas_call(
        _bilstm_recurrence_kernel,
        out_shape=(
            jax.ShapeDtypeStruct((T, B, 2 * H), jnp.float32),  # y (time-major)
            jax.ShapeDtypeStruct((2, B, H), jnp.float32),      # h_n
            jax.ShapeDtypeStruct((2, B, H), jnp.float32),      # c_n
        ),
    )(gx_f, gx_b,
      fwd["whh_t"].astype(jnp.bfloat16),
      bwd["whh_t"].astype(jnp.bfloat16))

    outputs = jnp.transpose(y, (1, 0, 2))  # (B, T, 2H), batch_first
    return outputs, (h_n, c_n)


def listener_forward(inputs, params):
    """Equivalent of Listener.forward: 3 pyramid BiLSTM layers."""
    outputs = inputs
    hiddens = None
    for layer_params in params:
        B, T, D = outputs.shape
        assert T % 2 == 0, f"sequence length {T} must be even for pyramid reshape"
        # PyramidLSTMLayer: halve time, double features (pure view)
        outputs = outputs.reshape(B, T // 2, D * 2)
        outputs, hiddens = bilstm_layer(outputs, layer_params)
    return outputs, hiddens


# ----------------------------------------------------------------------------
# Deterministic parameter initialization (same shapes as nn.LSTM)
# ----------------------------------------------------------------------------
def init_listener_params(key, input_dim, hidden_dim, num_pyramid_layers=3):
    params = []
    H = hidden_dim
    scale = 1.0 / jnp.sqrt(jnp.float32(H))           # PyTorch LSTM init range
    for layer in range(num_pyramid_layers):
        d_in = input_dim * 2 if layer == 0 else (hidden_dim * 2) * 2
        layer_p = {}
        for dir_name in ("fwd", "bwd"):
            key, k1, k2, k3, k4 = jax.random.split(key, 5)
            w_ih = jax.random.uniform(k1, (4 * H, d_in), jnp.float32, -scale, scale)
            w_hh = jax.random.uniform(k2, (4 * H, H), jnp.float32, -scale, scale)
            b_ih = jax.random.uniform(k3, (4 * H,), jnp.float32, -scale, scale)
            b_hh = jax.random.uniform(k4, (4 * H,), jnp.float32, -scale, scale)
            layer_p[dir_name] = {
                "wih_t": w_ih.T,                      # (d_in, 4H)
                "whh_t": w_hh.T,                      # (H, 4H)
                "bias": (b_ih + b_hh)[None, :],       # (1, 4H)
            }
        params.append(layer_p)
    return params


# ----------------------------------------------------------------------------
if __name__ == "__main__":
    key = jax.random.PRNGKey(0)

    batch = 2
    seq = 32           # divisible by 8 (3 pyramid halvings)
    input_dim = 16
    hidden_dim = 32
    num_layers = 3

    k_in, k_p = jax.random.split(key)
    x = jax.random.normal(k_in, (batch, seq, input_dim), jnp.float32)
    params = init_listener_params(k_p, input_dim, hidden_dim, num_layers)

    fwd_fn = jax.jit(listener_forward)
    outputs, (h_n, c_n) = fwd_fn(x, params)
    outputs = jax.block_until_ready(outputs)
    h_n = jax.block_until_ready(h_n)
    c_n = jax.block_until_ready(c_n)

    assert outputs.shape == (batch, seq // 8, 2 * hidden_dim), outputs.shape
    assert h_n.shape == (2, batch, hidden_dim), h_n.shape
    assert c_n.shape == (2, batch, hidden_dim), c_n.shape
    assert bool(jnp.all(jnp.isfinite(outputs)))
    assert bool(jnp.all(jnp.isfinite(h_n))) and bool(jnp.all(jnp.isfinite(c_n)))

    print("KERNEL_OK")
</pallas_src>

<mosaic_0001>
module attributes {stable_mosaic.version = 11 : i64} {
  func.func @_bilstm_recurrence_kernel(%arg0: memref<8x2x128xf32, #tpu.memory_space<vmem>>, %arg1: memref<8x2x128xf32, #tpu.memory_space<vmem>>, %arg2: memref<32x128xbf16, #tpu.memory_space<vmem>>, %arg3: memref<32x128xbf16, #tpu.memory_space<vmem>>, %arg4: memref<8x2x64xf32, #tpu.memory_space<vmem>>, %arg5: memref<2x2x32xf32, #tpu.memory_space<vmem>>, %arg6: memref<2x2x32xf32, #tpu.memory_space<vmem>>) attributes {dimension_semantics = [], scalar_prefetch = 0 : i64, scratch_operands = 0 : i64, tpu.core_type = #tpu.core_type<tc>} {
    %c0 = arith.constant 0 : index
    %c0_0 = arith.constant 0 : index
    %0 = vector.load %arg2[%c0, %c0_0] : memref<32x128xbf16, #tpu.memory_space<vmem>>, vector<32x128xbf16>
    %c0_1 = arith.constant 0 : index
    %c0_2 = arith.constant 0 : index
    %1 = vector.load %arg3[%c0_1, %c0_2] : memref<32x128xbf16, #tpu.memory_space<vmem>>, vector<32x128xbf16>
    %cst = arith.constant 0.000000e+00 : f32
    %2 = vector.broadcast %cst : f32 to vector<2x32xf32>
    %c0_3 = arith.constant 0 : index
    %c0_4 = arith.constant 0 : index
    %c0_5 = arith.constant 0 : index
    %3 = vector.load %arg0[%c0_3, %c0_4, %c0_5] : memref<8x2x128xf32, #tpu.memory_space<vmem>>, vector<1x2x128xf32>
    %4 = vector.shape_cast %3 : vector<1x2x128xf32> to vector<2x128xf32>
    %5 = arith.truncf %2 : vector<2x32xf32> to vector<2x32xbf16>
    %cst_6 = arith.constant dense<0.000000e+00> : vector<2x128xf32>
    %6 = tpu.matmul %5, %0, %cst_6 {dimension_numbers = #tpu.dot_dimension_numbers<[1], [0], [0], [1], [0, 0, 1, 1], [], []>} : vector<2x32xbf16>, vector<32x128xbf16>, vector<2x128xf32> -> vector<2x128xf32>
    %7 = arith.addf %4, %6 : vector<2x128xf32>
    %c7 = arith.constant 7 : index
    %c0_7 = arith.constant 0 : index
    %c0_8 = arith.constant 0 : index
    %8 = vector.load %arg1[%c7, %c0_7, %c0_8] : memref<8x2x128xf32, #tpu.memory_space<vmem>>, vector<1x2x128xf32>
    %9 = vector.shape_cast %8 : vector<1x2x128xf32> to vector<2x128xf32>
    %10 = arith.truncf %2 : vector<2x32xf32> to vector<2x32xbf16>
    %cst_9 = arith.constant dense<0.000000e+00> : vector<2x128xf32>
    %11 = tpu.matmul %10, %1, %cst_9 {dimension_numbers = #tpu.dot_dimension_numbers<[1], [0], [0], [1], [0, 0, 1, 1], [], []>} : vector<2x32xbf16>, vector<32x128xbf16>, vector<2x128xf32> -> vector<2x128xf32>
    %12 = arith.addf %9, %11 : vector<2x128xf32>
    %13 = vector.extract_strided_slice %7 {offsets = [0, 0], sizes = [2, 32], strides = [1, 1]} : vector<2x128xf32> to vector<2x32xf32>
    %14 = arith.negf %13 : vector<2x32xf32>
    %15 = math.exp %14 : vector<2x32xf32>
    %cst_10 = arith.constant 1.000000e+00 : f32
    %16 = vector.broadcast %cst_10 : f32 to vector<2x32xf32>
    %17 = arith.addf %16, %15 : vector<2x32xf32>
    %18 = arith.divf %16, %17 : vector<2x32xf32>
    %19 = vector.extract_strided_slice %7 {offsets = [0, 32], sizes = [2, 32], strides = [1, 1]} : vector<2x128xf32> to vector<2x32xf32>
    %20 = arith.negf %19 : vector<2x32xf32>
    %21 = math.exp %20 : vector<2x32xf32>
    %cst_11 = arith.constant 1.000000e+00 : f32
    %22 = vector.broadcast %cst_11 : f32 to vector<2x32xf32>
    %23 = arith.addf %22, %21 : vector<2x32xf32>
    %24 = arith.divf %22, %23 : vector<2x32xf32>
    %25 = vector.extract_strided_slice %7 {offsets = [0, 64], sizes = [2, 32], strides = [1, 1]} : vector<2x128xf32> to vector<2x32xf32>
    %26 = math.tanh %25 : vector<2x32xf32>
    %27 = vector.extract_strided_slice %7 {offsets = [0, 96], sizes = [2, 32], strides = [1, 1]} : vector<2x128xf32> to vector<2x32xf32>
    %28 = arith.negf %27 : vector<2x32xf32>
    %29 = math.exp %28 : vector<2x32xf32>
    %cst_12 = arith.constant 1.000000e+00 : f32
    %30 = vector.broadcast %cst_12 : f32 to vector<2x32xf32>
    %31 = arith.addf %30, %29 : vector<2x32xf32>
    %32 = arith.divf %30, %31 : vector<2x32xf32>
    %33 = arith.mulf %24, %2 : vector<2x32xf32>
    %34 = arith.mulf %18, %26 : vector<2x32xf32>
    %35 = arith.addf %33, %34 : vector<2x32xf32>
    %36 = math.tanh %35 : vector<2x32xf32>
    %37 = arith.mulf %32, %36 : vector<2x32xf32>
    %38 = vector.extract_strided_slice %12 {offsets = [0, 0], sizes = [2, 32], strides = [1, 1]} : vector<2x128xf32> to vector<2x32xf32>
    %39 = arith.negf %38 : vector<2x32xf32>
    %40 = math.exp %39 : vector<2x32xf32>
    %cst_13 = arith.constant 1.000000e+00 : f32
    %41 = vector.broadcast %cst_13 : f32 to vector<2x32xf32>
    %42 = arith.addf %41, %40 : vector<2x32xf32>
    %43 = arith.divf %41, %42 : vector<2x32xf32>
    %44 = vector.extract_strided_slice %12 {offsets = [0, 32], sizes = [2, 32], strides = [1, 1]} : vector<2x128xf32> to vector<2x32xf32>
    %45 = arith.negf %44 : vector<2x32xf32>
    %46 = math.exp %45 : vector<2x32xf32>
    %cst_14 = arith.constant 1.000000e+00 : f32
    %47 = vector.broadcast %cst_14 : f32 to vector<2x32xf32>
    %48 = arith.addf %47, %46 : vector<2x32xf32>
    %49 = arith.divf %47, %48 : vector<2x32xf32>
    %50 = vector.extract_strided_slice %12 {offsets = [0, 64], sizes = [2, 32], strides = [1, 1]} : vector<2x128xf32> to vector<2x32xf32>
    %51 = math.tanh %50 : vector<2x32xf32>
    %52 = vector.extract_strided_slice %12 {offsets = [0, 96], sizes = [2, 32], strides = [1, 1]} : vector<2x128xf32> to vector<2x32xf32>
    %53 = arith.negf %52 : vector<2x32xf32>
    %54 = math.exp %53 : vector<2x32xf32>
    %cst_15 = arith.constant 1.000000e+00 : f32
    %55 = vector.broadcast %cst_15 : f32 to vector<2x32xf32>
    %56 = arith.addf %55, %54 : vector<2x32xf32>
    %57 = arith.divf %55, %56 : vector<2x32xf32>
    %58 = arith.mulf %49, %2 : vector<2x32xf32>
    %59 = arith.mulf %43, %51 : vector<2x32xf32>
    %60 = arith.addf %58, %59 : vector<2x32xf32>
    %61 = math.tanh %60 : vector<2x32xf32>
    %62 = arith.mulf %57, %61 : vector<2x32xf32>
    %c0_16 = arith.constant 0 : index
    %c0_17 = arith.constant 0 : index
    %c0_18 = arith.constant 0 : index
    %63 = vector.load %arg4[%c0_16, %c0_17, %c0_18] : memref<8x2x64xf32, #tpu.memory_space<vmem>>, vector<1x2x32xf32>
    %64 = vector.shape_cast %63 : vector<1x2x32xf32> to vector<2x32xf32>
    %65 = vector.shape_cast %37 : vector<2x32xf32> to vector<1x2x32xf32>
    tpu.vector_store %arg4[%c0_16, %c0_17, %c0_18], %65 {strides = array<i32>} : memref<8x2x64xf32, #tpu.memory_space<vmem>>, vector<1x2x32xf32>,
    %c7_19 = arith.constant 7 : index
    %c0_20 = arith.constant 0 : index
    %c32 = arith.constant 32 : index
    %66 = vector.load %arg4[%c7_19, %c0_20, %c32] : memref<8x2x64xf32, #tpu.memory_space<vmem>>, vector<1x2x32xf32>
    %67 = vector.shape_cast %66 : vector<1x2x32xf32> to vector<2x32xf32>
    %68 = vector.shape_cast %62 : vector<2x32xf32> to vector<1x2x32xf32>
    tpu.vector_store %arg4[%c7_19, %c0_20, %c32], %68 {strides = array<i32>} : memref<8x2x64xf32, #tpu.memory_space<vmem>>, vector<1x2x32xf32>,
    %c1 = arith.constant 1 : index
    %c0_21 = arith.constant 0 : index
    %c0_22 = arith.constant 0 : index
    %69 = vector.load %arg0[%c1, %c0_21, %c0_22] : memref<8x2x128xf32, #tpu.memory_space<vmem>>, vector<1x2x128xf32>
    %70 = vector.shape_cast %69 : vector<1x2x128xf32> to vector<2x128xf32>
    %71 = arith.truncf %37 : vector<2x32xf32> to vector<2x32xbf16>
    %cst_23 = arith.constant dense<0.000000e+00> : vector<2x128xf32>
    %72 = tpu.matmul %71, %0, %cst_23 {dimension_numbers = #tpu.dot_dimension_numbers<[1], [0], [0], [1], [0, 0, 1, 1], [], []>} : vector<2x32xbf16>, vector<32x128xbf16>, vector<2x128xf32> -> vector<2x128xf32>
    %73 = arith.addf %70, %72 : vector<2x128xf32>
    %c6 = arith.constant 6 : index
    %c0_24 = arith.constant 0 : index
    %c0_25 = arith.constant 0 : index
    %74 = vector.load %arg1[%c6, %c0_24, %c0_25] : memref<8x2x128xf32, #tpu.memory_space<vmem>>, vector<1x2x128xf32>
    %75 = vector.shape_cast %74 : vector<1x2x128xf32> to vector<2x128xf32>
    %76 = arith.truncf %62 : vector<2x32xf32> to vector<2x32xbf16>
    %cst_26 = arith.constant dense<0.000000e+00> : vector<2x128xf32>
    %77 = tpu.matmul %76, %1, %cst_26 {dimension_numbers = #tpu.dot_dimension_numbers<[1], [0], [0], [1], [0, 0, 1, 1], [], []>} : vector<2x32xbf16>, vector<32x128xbf16>, vector<2x128xf32> -> vector<2x128xf32>
    %78 = arith.addf %75, %77 : vector<2x128xf32>
    %79 = vector.extract_strided_slice %73 {offsets = [0, 0], sizes = [2, 32], strides = [1, 1]} : vector<2x128xf32> to vector<2x32xf32>
    %80 = arith.negf %79 : vector<2x32xf32>
    %81 = math.exp %80 : vector<2x32xf32>
    %cst_27 = arith.constant 1.000000e+00 : f32
    %82 = vector.broadcast %cst_27 : f32 to vector<2x32xf32>
    %83 = arith.addf %82, %81 : vector<2x32xf32>
    %84 = arith.divf %82, %83 : vector<2x32xf32>
    %85 = vector.extract_strided_slice %73 {offsets = [0, 32], sizes = [2, 32], strides = [1, 1]} : vector<2x128xf32> to vector<2x32xf32>
    %86 = arith.negf %85 : vector<2x32xf32>
    %87 = math.exp %86 : vector<2x32xf32>
    %cst_28 = arith.constant 1.000000e+00 : f32
    %88 = vector.broadcast %cst_28 : f32 to vector<2x32xf32>
    %89 = arith.addf %88, %87 : vector<2x32xf32>
    %90 = arith.divf %88, %89 : vector<2x32xf32>
    %91 = vector.extract_strided_slice %73 {offsets = [0, 64], sizes = [2, 32], strides = [1, 1]} : vector<2x128xf32> to vector<2x32xf32>
    %92 = math.tanh %91 : vector<2x32xf32>
    %93 = vector.extract_strided_slice %73 {offsets = [0, 96], sizes = [2, 32], strides = [1, 1]} : vector<2x128xf32> to vector<2x32xf32>
    %94 = arith.negf %93 : vector<2x32xf32>
    %95 = math.exp %94 : vector<2x32xf32>
    %cst_29 = arith.constant 1.000000e+00 : f32
    %96 = vector.broadcast %cst_29 : f32 to vector<2x32xf32>
    %97 = arith.addf %96, %95 : vector<2x32xf32>
    %98 = arith.divf %96, %97 : vector<2x32xf32>
    %99 = arith.mulf %90, %35 : vector<2x32xf32>
    %100 = arith.mulf %84, %92 : vector<2x32xf32>
    %101 = arith.addf %99, %100 : vector<2x32xf32>
    %102 = math.tanh %101 : vector<2x32xf32>
    %103 = arith.mulf %98, %102 : vector<2x32xf32>
    %104 = vector.extract_strided_slice %78 {offsets = [0, 0], sizes = [2, 32], strides = [1, 1]} : vector<2x128xf32> to vector<2x32xf32>
    %105 = arith.negf %104 : vector<2x32xf32>
    %106 = math.exp %105 : vector<2x32xf32>
    %cst_30 = arith.constant 1.000000e+00 : f32
    %107 = vector.broadcast %cst_30 : f32 to vector<2x32xf32>
    %108 = arith.addf %107, %106 : vector<2x32xf32>
    %109 = arith.divf %107, %108 : vector<2x32xf32>
    %110 = vector.extract_strided_slice %78 {offsets = [0, 32], sizes = [2, 32], strides = [1, 1]} : vector<2x128xf32> to vector<2x32xf32>
    %111 = arith.negf %110 : vector<2x32xf32>
    %112 = math.exp %111 : vector<2x32xf32>
    %cst_31 = arith.constant 1.000000e+00 : f32
    %113 = vector.broadcast %cst_31 : f32 to vector<2x32xf32>
    %114 = arith.addf %113, %112 : vector<2x32xf32>
    %115 = arith.divf %113, %114 : vector<2x32xf32>
    %116 = vector.extract_strided_slice %78 {offsets = [0, 64], sizes = [2, 32], strides = [1, 1]} : vector<2x128xf32> to vector<2x32xf32>
    %117 = math.tanh %116 : vector<2x32xf32>
    %118 = vector.extract_strided_slice %78 {offsets = [0, 96], sizes = [2, 32], strides = [1, 1]} : vector<2x128xf32> to vector<2x32xf32>
    %119 = arith.negf %118 : vector<2x32xf32>
    %120 = math.exp %119 : vector<2x32xf32>
    %cst_32 = arith.constant 1.000000e+00 : f32
    %121 = vector.broadcast %cst_32 : f32 to vector<2x32xf32>
    %122 = arith.addf %121, %120 : vector<2x32xf32>
    %123 = arith.divf %121, %122 : vector<2x32xf32>
    %124 = arith.mulf %115, %60 : vector<2x32xf32>
    %125 = arith.mulf %109, %117 : vector<2x32xf32>
    %126 = arith.addf %124, %125 : vector<2x32xf32>
    %127 = math.tanh %126 : vector<2x32xf32>
    %128 = arith.mulf %123, %127 : vector<2x32xf32>
    %c1_33 = arith.constant 1 : index
    %c0_34 = arith.constant 0 : index
    %c0_35 = arith.constant 0 : index
    %129 = vector.load %arg4[%c1_33, %c0_34, %c0_35] : memref<8x2x64xf32, #tpu.memory_space<vmem>>, vector<1x2x32xf32>
    %130 = vector.shape_cast %129 : vector<1x2x32xf32> to vector<2x32xf32>
    %131 = vector.shape_cast %103 : vector<2x32xf32> to vector<1x2x32xf32>
    tpu.vector_store %arg4[%c1_33, %c0_34, %c0_35], %131 {strides = array<i32>} : memref<8x2x64xf32, #tpu.memory_space<vmem>>, vector<1x2x32xf32>,
    %c6_36 = arith.constant 6 : index
    %c0_37 = arith.constant 0 : index
    %c32_38 = arith.constant 32 : index
    %132 = vector.load %arg4[%c6_36, %c0_37, %c32_38] : memref<8x2x64xf32, #tpu.memory_space<vmem>>, vector<1x2x32xf32>
    %133 = vector.shape_cast %132 : vector<1x2x32xf32> to vector<2x32xf32>
    %134 = vector.shape_cast %128 : vector<2x32xf32> to vector<1x2x32xf32>
    tpu.vector_store %arg4[%c6_36, %c0_37, %c32_38], %134 {strides = array<i32>} : memref<8x2x64xf32, #tpu.memory_space<vmem>>, vector<1x2x32xf32>,
    %c2 = arith.constant 2 : index
    %c0_39 = arith.constant 0 : index
    %c0_40 = arith.constant 0 : index
    %135 = vector.load %arg0[%c2, %c0_39, %c0_40] : memref<8x2x128xf32, #tpu.memory_space<vmem>>, vector<1x2x128xf32>
    %136 = vector.shape_cast %135 : vector<1x2x128xf32> to vector<2x128xf32>
    %137 = arith.truncf %103 : vector<2x32xf32> to vector<2x32xbf16>
    %cst_41 = arith.constant dense<0.000000e+00> : vector<2x128xf32>
    %138 = tpu.matmul %137, %0, %cst_41 {dimension_numbers = #tpu.dot_dimension_numbers<[1], [0], [0], [1], [0, 0, 1, 1], [], []>} : vector<2x32xbf16>, vector<32x128xbf16>, vector<2x128xf32> -> vector<2x128xf32>
    %139 = arith.addf %136, %138 : vector<2x128xf32>
    %c5 = arith.constant 5 : index
    %c0_42 = arith.constant 0 : index
    %c0_43 = arith.constant 0 : index
    %140 = vector.load %arg1[%c5, %c0_42, %c0_43] : memref<8x2x128xf32, #tpu.memory_space<vmem>>, vector<1x2x128xf32>
    %141 = vector.shape_cast %140 : vector<1x2x128xf32> to vector<2x128xf32>
    %142 = arith.truncf %128 : vector<2x32xf32> to vector<2x32xbf16>
    %cst_44 = arith.constant dense<0.000000e+00> : vector<2x128xf32>
    %143 = tpu.matmul %142, %1, %cst_44 {dimension_numbers = #tpu.dot_dimension_numbers<[1], [0], [0], [1], [0, 0, 1, 1], [], []>} : vector<2x32xbf16>, vector<32x128xbf16>, vector<2x128xf32> -> vector<2x128xf32>
    %144 = arith.addf %141, %143 : vector<2x128xf32>
    %145 = vector.extract_strided_slice %139 {offsets = [0, 0], sizes = [2, 32], strides = [1, 1]} : vector<2x128xf32> to vector<2x32xf32>
    %146 = arith.negf %145 : vector<2x32xf32>
    %147 = math.exp %146 : vector<2x32xf32>
    %cst_45 = arith.constant 1.000000e+00 : f32
    %148 = vector.broadcast %cst_45 : f32 to vector<2x32xf32>
    %149 = arith.addf %148, %147 : vector<2x32xf32>
    %150 = arith.divf %148, %149 : vector<2x32xf32>
    %151 = vector.extract_strided_slice %139 {offsets = [0, 32], sizes = [2, 32], strides = [1, 1]} : vector<2x128xf32> to vector<2x32xf32>
    %152 = arith.negf %151 : vector<2x32xf32>
    %153 = math.exp %152 : vector<2x32xf32>
    %cst_46 = arith.constant 1.000000e+00 : f32
    %154 = vector.broadcast %cst_46 : f32 to vector<2x32xf32>
    %155 = arith.addf %154, %153 : vector<2x32xf32>
    %156 = arith.divf %154, %155 : vector<2x32xf32>
    %157 = vector.extract_strided_slice %139 {offsets = [0, 64], sizes = [2, 32], strides = [1, 1]} : vector<2x128xf32> to vector<2x32xf32>
    %158 = math.tanh %157 : vector<2x32xf32>
    %159 = vector.extract_strided_slice %139 {offsets = [0, 96], sizes = [2, 32], strides = [1, 1]} : vector<2x128xf32> to vector<2x32xf32>
    %160 = arith.negf %159 : vector<2x32xf32>
    %161 = math.exp %160 : vector<2x32xf32>
    %cst_47 = arith.constant 1.000000e+00 : f32
    %162 = vector.broadcast %cst_47 : f32 to vector<2x32xf32>
    %163 = arith.addf %162, %161 : vector<2x32xf32>
    %164 = arith.divf %162, %163 : vector<2x32xf32>
    %165 = arith.mulf %156, %101 : vector<2x32xf32>
    %166 = arith.mulf %150, %158 : vector<2x32xf32>
    %167 = arith.addf %165, %166 : vector<2x32xf32>
    %168 = math.tanh %167 : vector<2x32xf32>
    %169 = arith.mulf %164, %168 : vector<2x32xf32>
    %170 = vector.extract_strided_slice %144 {offsets = [0, 0], sizes = [2, 32], strides = [1, 1]} : vector<2x128xf32> to vector<2x32xf32>
    %171 = arith.negf %170 : vector<2x32xf32>
    %172 = math.exp %171 : vector<2x32xf32>
    %cst_48 = arith.constant 1.000000e+00 : f32
    %173 = vector.broadcast %cst_48 : f32 to vector<2x32xf32>
    %174 = arith.addf %173, %172 : vector<2x32xf32>
    %175 = arith.divf %173, %174 : vector<2x32xf32>
    %176 = vector.extract_strided_slice %144 {offsets = [0, 32], sizes = [2, 32], strides = [1, 1]} : vector<2x128xf32> to vector<2x32xf32>
    %177 = arith.negf %176 : vector<2x32xf32>
    %178 = math.exp %177 : vector<2x32xf32>
    %cst_49 = arith.constant 1.000000e+00 : f32
    %179 = vector.broadcast %cst_49 : f32 to vector<2x32xf32>
    %180 = arith.addf %179, %178 : vector<2x32xf32>
    %181 = arith.divf %179, %180 : vector<2x32xf32>
    %182 = vector.extract_strided_slice %144 {offsets = [0, 64], sizes = [2, 32], strides = [1, 1]} : vector<2x128xf32> to vector<2x32xf32>
    %183 = math.tanh %182 : vector<2x32xf32>
    %184 = vector.extract_strided_slice %144 {offsets = [0, 96], sizes = [2, 32], strides = [1, 1]} : vector<2x128xf32> to vector<2x32xf32>
    %185 = arith.negf %184 : vector<2x32xf32>
    %186 = math.exp %185 : vector<2x32xf32>
    %cst_50 = arith.constant 1.000000e+00 : f32
    %187 = vector.broadcast %cst_50 : f32 to vector<2x32xf32>
    %188 = arith.addf %187, %186 : vector<2x32xf32>
    %189 = arith.divf %187, %188 : vector<2x32xf32>
    %190 = arith.mulf %181, %126 : vector<2x32xf32>
    %191 = arith.mulf %175, %183 : vector<2x32xf32>
    %192 = arith.addf %190, %191 : vector<2x32xf32>
    %193 = math.tanh %192 : vector<2x32xf32>
    %194 = arith.mulf %189, %193 : vector<2x32xf32>
    %c2_51 = arith.constant 2 : index
    %c0_52 = arith.constant 0 : index
    %c0_53 = arith.constant 0 : index
    %195 = vector.load %arg4[%c2_51, %c0_52, %c0_53] : memref<8x2x64xf32, #tpu.memory_space<vmem>>, vector<1x2x32xf32>
    %196 = vector.shape_cast %195 : vector<1x2x32xf32> to vector<2x32xf32>
    %197 = vector.shape_cast %169 : vector<2x32xf32> to vector<1x2x32xf32>
    tpu.vector_store %arg4[%c2_51, %c0_52, %c0_53], %197 {strides = array<i32>} : memref<8x2x64xf32, #tpu.memory_space<vmem>>, vector<1x2x32xf32>,
    %c5_54 = arith.constant 5 : index
    %c0_55 = arith.constant 0 : index
    %c32_56 = arith.constant 32 : index
    %198 = vector.load %arg4[%c5_54, %c0_55, %c32_56] : memref<8x2x64xf32, #tpu.memory_space<vmem>>, vector<1x2x32xf32>
    %199 = vector.shape_cast %198 : vector<1x2x32xf32> to vector<2x32xf32>
    %200 = vector.shape_cast %194 : vector<2x32xf32> to vector<1x2x32xf32>
    tpu.vector_store %arg4[%c5_54, %c0_55, %c32_56], %200 {strides = array<i32>} : memref<8x2x64xf32, #tpu.memory_space<vmem>>, vector<1x2x32xf32>,
    %c3 = arith.constant 3 : index
    %c0_57 = arith.constant 0 : index
    %c0_58 = arith.constant 0 : index
    %201 = vector.load %arg0[%c3, %c0_57, %c0_58] : memref<8x2x128xf32, #tpu.memory_space<vmem>>, vector<1x2x128xf32>
    %202 = vector.shape_cast %201 : vector<1x2x128xf32> to vector<2x128xf32>
    %203 = arith.truncf %169 : vector<2x32xf32> to vector<2x32xbf16>
    %cst_59 = arith.constant dense<0.000000e+00> : vector<2x128xf32>
    %204 = tpu.matmul %203, %0, %cst_59 {dimension_numbers = #tpu.dot_dimension_numbers<[1], [0], [0], [1], [0, 0, 1, 1], [], []>} : vector<2x32xbf16>, vector<32x128xbf16>, vector<2x128xf32> -> vector<2x128xf32>
    %205 = arith.addf %202, %204 : vector<2x128xf32>
    %c4 = arith.constant 4 : index
    %c0_60 = arith.constant 0 : index
    %c0_61 = arith.constant 0 : index
    %206 = vector.load %arg1[%c4, %c0_60, %c0_61] : memref<8x2x128xf32, #tpu.memory_space<vmem>>, vector<1x2x128xf32>
    %207 = vector.shape_cast %206 : vector<1x2x128xf32> to vector<2x128xf32>
    %208 = arith.truncf %194 : vector<2x32xf32> to vector<2x32xbf16>
    %cst_62 = arith.constant dense<0.000000e+00> : vector<2x128xf32>
    %209 = tpu.matmul %208, %1, %cst_62 {dimension_numbers = #tpu.dot_dimension_numbers<[1], [0], [0], [1], [0, 0, 1, 1], [], []>} : vector<2x32xbf16>, vector<32x128xbf16>, vector<2x128xf32> -> vector<2x128xf32>
    %210 = arith.addf %207, %209 : vector<2x128xf32>
    %211 = vector.extract_strided_slice %205 {offsets = [0, 0], sizes = [2, 32], strides = [1, 1]} : vector<2x128xf32> to vector<2x32xf32>
    %212 = arith.negf %211 : vector<2x32xf32>
    %213 = math.exp %212 : vector<2x32xf32>
    %cst_63 = arith.constant 1.000000e+00 : f32
    %214 = vector.broadcast %cst_63 : f32 to vector<2x32xf32>
    %215 = arith.addf %214, %213 : vector<2x32xf32>
    %216 = arith.divf %214, %215 : vector<2x32xf32>
    %217 = vector.extract_strided_slice %205 {offsets = [0, 32], sizes = [2, 32], strides = [1, 1]} : vector<2x128xf32> to vector<2x32xf32>
    %218 = arith.negf %217 : vector<2x32xf32>
    %219 = math.exp %218 : vector<2x32xf32>
    %cst_64 = arith.constant 1.000000e+00 : f32
    %220 = vector.broadcast %cst_64 : f32 to vector<2x32xf32>
    %221 = arith.addf %220, %219 : vector<2x32xf32>
    %222 = arith.divf %220, %221 : vector<2x32xf32>
    %223 = vector.extract_strided_slice %205 {offsets = [0, 64], sizes = [2, 32], strides = [1, 1]} : vector<2x128xf32> to vector<2x32xf32>
    %224 = math.tanh %223 : vector<2x32xf32>
    %225 = vector.extract_strided_slice %205 {offsets = [0, 96], sizes = [2, 32], strides = [1, 1]} : vector<2x128xf32> to vector<2x32xf32>
    %226 = arith.negf %225 : vector<2x32xf32>
    %227 = math.exp %226 : vector<2x32xf32>
    %cst_65 = arith.constant 1.000000e+00 : f32
    %228 = vector.broadcast %cst_65 : f32 to vector<2x32xf32>
    %229 = arith.addf %228, %227 : vector<2x32xf32>
    %230 = arith.divf %228, %229 : vector<2x32xf32>
    %231 = arith.mulf %222, %167 : vector<2x32xf32>
    %232 = arith.mulf %216, %224 : vector<2x32xf32>
    %233 = arith.addf %231, %232 : vector<2x32xf32>
    %234 = math.tanh %233 : vector<2x32xf32>
    %235 = arith.mulf %230, %234 : vector<2x32xf32>
    %236 = vector.extract_strided_slice %210 {offsets = [0, 0], sizes = [2, 32], strides = [1, 1]} : vector<2x128xf32> to vector<2x32xf32>
    %237 = arith.negf %236 : vector<2x32xf32>
    %238 = math.exp %237 : vector<2x32xf32>
    %cst_66 = arith.constant 1.000000e+00 : f32
    %239 = vector.broadcast %cst_66 : f32 to vector<2x32xf32>
    %240 = arith.addf %239, %238 : vector<2x32xf32>
    %241 = arith.divf %239, %240 : vector<2x32xf32>
    %242 = vector.extract_strided_slice %210 {offsets = [0, 32], sizes = [2, 32], strides = [1, 1]} : vector<2x128xf32> to vector<2x32xf32>
    %243 = arith.negf %242 : vector<2x32xf32>
    %244 = math.exp %243 : vector<2x32xf32>
    %cst_67 = arith.constant 1.000000e+00 : f32
    %245 = vector.broadcast %cst_67 : f32 to vector<2x32xf32>
    %246 = arith.addf %245, %244 : vector<2x32xf32>
    %247 = arith.divf %245, %246 : vector<2x32xf32>
    %248 = vector.extract_strided_slice %210 {offsets = [0, 64], sizes = [2, 32], strides = [1, 1]} : vector<2x128xf32> to vector<2x32xf32>
    %249 = math.tanh %248 : vector<2x32xf32>
    %250 = vector.extract_strided_slice %210 {offsets = [0, 96], sizes = [2, 32], strides = [1, 1]} : vector<2x128xf32> to vector<2x32xf32>
    %251 = arith.negf %250 : vector<2x32xf32>
    %252 = math.exp %251 : vector<2x32xf32>
    %cst_68 = arith.constant 1.000000e+00 : f32
    %253 = vector.broadcast %cst_68 : f32 to vector<2x32xf32>
    %254 = arith.addf %253, %252 : vector<2x32xf32>
    %255 = arith.divf %253, %254 : vector<2x32xf32>
    %256 = arith.mulf %247, %192 : vector<2x32xf32>
    %257 = arith.mulf %241, %249 : vector<2x32xf32>
    %258 = arith.addf %256, %257 : vector<2x32xf32>
    %259 = math.tanh %258 : vector<2x32xf32>
    %260 = arith.mulf %255, %259 : vector<2x32xf32>
    %c3_69 = arith.constant 3 : index
    %c0_70 = arith.constant 0 : index
    %c0_71 = arith.constant 0 : index
    %261 = vector.load %arg4[%c3_69, %c0_70, %c0_71] : memref<8x2x64xf32, #tpu.memory_space<vmem>>, vector<1x2x32xf32>
    %262 = vector.shape_cast %261 : vector<1x2x32xf32> to vector<2x32xf32>
    %263 = vector.shape_cast %235 : vector<2x32xf32> to vector<1x2x32xf32>
    tpu.vector_store %arg4[%c3_69, %c0_70, %c0_71], %263 {strides = array<i32>} : memref<8x2x64xf32, #tpu.memory_space<vmem>>, vector<1x2x32xf32>,
    %c4_72 = arith.constant 4 : index
    %c0_73 = arith.constant 0 : index
    %c32_74 = arith.constant 32 : index
    %264 = vector.load %arg4[%c4_72, %c0_73, %c32_74] : memref<8x2x64xf32, #tpu.memory_space<vmem>>, vector<1x2x32xf32>
    %265 = vector.shape_cast %264 : vector<1x2x32xf32> to vector<2x32xf32>
    %266 = vector.shape_cast %260 : vector<2x32xf32> to vector<1x2x32xf32>
    tpu.vector_store %arg4[%c4_72, %c0_73, %c32_74], %266 {strides = array<i32>} : memref<8x2x64xf32, #tpu.memory_space<vmem>>, vector<1x2x32xf32>,
    %c4_75 = arith.constant 4 : index
    %c0_76 = arith.constant 0 : index
    %c0_77 = arith.constant 0 : index
    %267 = vector.load %arg0[%c4_75, %c0_76, %c0_77] : memref<8x2x128xf32, #tpu.memory_space<vmem>>, vector<1x2x128xf32>
    %268 = vector.shape_cast %267 : vector<1x2x128xf32> to vector<2x128xf32>
    %269 = arith.truncf %235 : vector<2x32xf32> to vector<2x32xbf16>
    %cst_78 = arith.constant dense<0.000000e+00> : vector<2x128xf32>
    %270 = tpu.matmul %269, %0, %cst_78 {dimension_numbers = #tpu.dot_dimension_numbers<[1], [0], [0], [1], [0, 0, 1, 1], [], []>} : vector<2x32xbf16>, vector<32x128xbf16>, vector<2x128xf32> -> vector<2x128xf32>
    %271 = arith.addf %268, %270 : vector<2x128xf32>
    %c3_79 = arith.constant 3 : index
    %c0_80 = arith.constant 0 : index
    %c0_81 = arith.constant 0 : index
    %272 = vector.load %arg1[%c3_79, %c0_80, %c0_81] : memref<8x2x128xf32, #tpu.memory_space<vmem>>, vector<1x2x128xf32>
    %273 = vector.shape_cast %272 : vector<1x2x128xf32> to vector<2x128xf32>
    %274 = arith.truncf %260 : vector<2x32xf32> to vector<2x32xbf16>
    %cst_82 = arith.constant dense<0.000000e+00> : vector<2x128xf32>
    %275 = tpu.matmul %274, %1, %cst_82 {dimension_numbers = #tpu.dot_dimension_numbers<[1], [0], [0], [1], [0, 0, 1, 1], [], []>} : vector<2x32xbf16>, vector<32x128xbf16>, vector<2x128xf32> -> vector<2x128xf32>
    %276 = arith.addf %273, %275 : vector<2x128xf32>
    %277 = vector.extract_strided_slice %271 {offsets = [0, 0], sizes = [2, 32], strides = [1, 1]} : vector<2x128xf32> to vector<2x32xf32>
    %278 = arith.negf %277 : vector<2x32xf32>
    %279 = math.exp %278 : vector<2x32xf32>
    %cst_83 = arith.constant 1.000000e+00 : f32
    %280 = vector.broadcast %cst_83 : f32 to vector<2x32xf32>
    %281 = arith.addf %280, %279 : vector<2x32xf32>
    %282 = arith.divf %280, %281 : vector<2x32xf32>
    %283 = vector.extract_strided_slice %271 {offsets = [0, 32], sizes = [2, 32], strides = [1, 1]} : vector<2x128xf32> to vector<2x32xf32>
    %284 = arith.negf %283 : vector<2x32xf32>
    %285 = math.exp %284 : vector<2x32xf32>
    %cst_84 = arith.constant 1.000000e+00 : f32
    %286 = vector.broadcast %cst_84 : f32 to vector<2x32xf32>
    %287 = arith.addf %286, %285 : vector<2x32xf32>
    %288 = arith.divf %286, %287 : vector<2x32xf32>
    %289 = vector.extract_strided_slice %271 {offsets = [0, 64], sizes = [2, 32], strides = [1, 1]} : vector<2x128xf32> to vector<2x32xf32>
    %290 = math.tanh %289 : vector<2x32xf32>
    %291 = vector.extract_strided_slice %271 {offsets = [0, 96], sizes = [2, 32], strides = [1, 1]} : vector<2x128xf32> to vector<2x32xf32>
    %292 = arith.negf %291 : vector<2x32xf32>
    %293 = math.exp %292 : vector<2x32xf32>
    %cst_85 = arith.constant 1.000000e+00 : f32
    %294 = vector.broadcast %cst_85 : f32 to vector<2x32xf32>
    %295 = arith.addf %294, %293 : vector<2x32xf32>
    %296 = arith.divf %294, %295 : vector<2x32xf32>
    %297 = arith.mulf %288, %233 : vector<2x32xf32>
    %298 = arith.mulf %282, %290 : vector<2x32xf32>
    %299 = arith.addf %297, %298 : vector<2x32xf32>
    %300 = math.tanh %299 : vector<2x32xf32>
    %301 = arith.mulf %296, %300 : vector<2x32xf32>
    %302 = vector.extract_strided_slice %276 {offsets = [0, 0], sizes = [2, 32], strides = [1, 1]} : vector<2x128xf32> to vector<2x32xf32>
    %303 = arith.negf %302 : vector<2x32xf32>
    %304 = math.exp %303 : vector<2x32xf32>
    %cst_86 = arith.constant 1.000000e+00 : f32
    %305 = vector.broadcast %cst_86 : f32 to vector<2x32xf32>
    %306 = arith.addf %305, %304 : vector<2x32xf32>
    %307 = arith.divf %305, %306 : vector<2x32xf32>
    %308 = vector.extract_strided_slice %276 {offsets = [0, 32], sizes = [2, 32], strides = [1, 1]} : vector<2x128xf32> to vector<2x32xf32>
    %309 = arith.negf %308 : vector<2x32xf32>
    %310 = math.exp %309 : vector<2x32xf32>
    %cst_87 = arith.constant 1.000000e+00 : f32
    %311 = vector.broadcast %cst_87 : f32 to vector<2x32xf32>
    %312 = arith.addf %311, %310 : vector<2x32xf32>
    %313 = arith.divf %311, %312 : vector<2x32xf32>
    %314 = vector.extract_strided_slice %276 {offsets = [0, 64], sizes = [2, 32], strides = [1, 1]} : vector<2x128xf32> to vector<2x32xf32>
    %315 = math.tanh %314 : vector<2x32xf32>
    %316 = vector.extract_strided_slice %276 {offsets = [0, 96], sizes = [2, 32], strides = [1, 1]} : vector<2x128xf32> to vector<2x32xf32>
    %317 = arith.negf %316 : vector<2x32xf32>
    %318 = math.exp %317 : vector<2x32xf32>
    %cst_88 = arith.constant 1.000000e+00 : f32
    %319 = vector.broadcast %cst_88 : f32 to vector<2x32xf32>
    %320 = arith.addf %319, %318 : vector<2x32xf32>
    %321 = arith.divf %319, %320 : vector<2x32xf32>
    %322 = arith.mulf %313, %258 : vector<2x32xf32>
    %323 = arith.mulf %307, %315 : vector<2x32xf32>
    %324 = arith.addf %322, %323 : vector<2x32xf32>
    %325 = math.tanh %324 : vector<2x32xf32>
    %326 = arith.mulf %321, %325 : vector<2x32xf32>
    %c4_89 = arith.constant 4 : index
    %c0_90 = arith.constant 0 : index
    %c0_91 = arith.constant 0 : index
    %327 = vector.load %arg4[%c4_89, %c0_90, %c0_91] : memref<8x2x64xf32, #tpu.memory_space<vmem>>, vector<1x2x32xf32>
    %328 = vector.shape_cast %327 : vector<1x2x32xf32> to vector<2x32xf32>
    %329 = vector.shape_cast %301 : vector<2x32xf32> to vector<1x2x32xf32>
    tpu.vector_store %arg4[%c4_89, %c0_90, %c0_91], %329 {strides = array<i32>} : memref<8x2x64xf32, #tpu.memory_space<vmem>>, vector<1x2x32xf32>,
    %c3_92 = arith.constant 3 : index
    %c0_93 = arith.constant 0 : index
    %c32_94 = arith.constant 32 : index
    %330 = vector.load %arg4[%c3_92, %c0_93, %c32_94] : memref<8x2x64xf32, #tpu.memory_space<vmem>>, vector<1x2x32xf32>
    %331 = vector.shape_cast %330 : vector<1x2x32xf32> to vector<2x32xf32>
    %332 = vector.shape_cast %326 : vector<2x32xf32> to vector<1x2x32xf32>
    tpu.vector_store %arg4[%c3_92, %c0_93, %c32_94], %332 {strides = array<i32>} : memref<8x2x64xf32, #tpu.memory_space<vmem>>, vector<1x2x32xf32>,
    %c5_95 = arith.constant 5 : index
    %c0_96 = arith.constant 0 : index
    %c0_97 = arith.constant 0 : index
    %333 = vector.load %arg0[%c5_95, %c0_96, %c0_97] : memref<8x2x128xf32, #tpu.memory_space<vmem>>, vector<1x2x128xf32>
    %334 = vector.shape_cast %333 : vector<1x2x128xf32> to vector<2x128xf32>
    %335 = arith.truncf %301 : vector<2x32xf32> to vector<2x32xbf16>
    %cst_98 = arith.constant dense<0.000000e+00> : vector<2x128xf32>
    %336 = tpu.matmul %335, %0, %cst_98 {dimension_numbers = #tpu.dot_dimension_numbers<[1], [0], [0], [1], [0, 0, 1, 1], [], []>} : vector<2x32xbf16>, vector<32x128xbf16>, vector<2x128xf32> -> vector<2x128xf32>
    %337 = arith.addf %334, %336 : vector<2x128xf32>
    %c2_99 = arith.constant 2 : index
    %c0_100 = arith.constant 0 : index
    %c0_101 = arith.constant 0 : index
    %338 = vector.load %arg1[%c2_99, %c0_100, %c0_101] : memref<8x2x128xf32, #tpu.memory_space<vmem>>, vector<1x2x128xf32>
    %339 = vector.shape_cast %338 : vector<1x2x128xf32> to vector<2x128xf32>
    %340 = arith.truncf %326 : vector<2x32xf32> to vector<2x32xbf16>
    %cst_102 = arith.constant dense<0.000000e+00> : vector<2x128xf32>
    %341 = tpu.matmul %340, %1, %cst_102 {dimension_numbers = #tpu.dot_dimension_numbers<[1], [0], [0], [1], [0, 0, 1, 1], [], []>} : vector<2x32xbf16>, vector<32x128xbf16>, vector<2x128xf32> -> vector<2x128xf32>
    %342 = arith.addf %339, %341 : vector<2x128xf32>
    %343 = vector.extract_strided_slice %337 {offsets = [0, 0], sizes = [2, 32], strides = [1, 1]} : vector<2x128xf32> to vector<2x32xf32>
    %344 = arith.negf %343 : vector<2x32xf32>
    %345 = math.exp %344 : vector<2x32xf32>
    %cst_103 = arith.constant 1.000000e+00 : f32
    %346 = vector.broadcast %cst_103 : f32 to vector<2x32xf32>
    %347 = arith.addf %346, %345 : vector<2x32xf32>
    %348 = arith.divf %346, %347 : vector<2x32xf32>
    %349 = vector.extract_strided_slice %337 {offsets = [0, 32], sizes = [2, 32], strides = [1, 1]} : vector<2x128xf32> to vector<2x32xf32>
    %350 = arith.negf %349 : vector<2x32xf32>
    %351 = math.exp %350 : vector<2x32xf32>
    %cst_104 = arith.constant 1.000000e+00 : f32
    %352 = vector.broadcast %cst_104 : f32 to vector<2x32xf32>
    %353 = arith.addf %352, %351 : vector<2x32xf32>
    %354 = arith.divf %352, %353 : vector<2x32xf32>
    %355 = vector.extract_strided_slice %337 {offsets = [0, 64], sizes = [2, 32], strides = [1, 1]} : vector<2x128xf32> to vector<2x32xf32>
    %356 = math.tanh %355 : vector<2x32xf32>
    %357 = vector.extract_strided_slice %337 {offsets = [0, 96], sizes = [2, 32], strides = [1, 1]} : vector<2x128xf32> to vector<2x32xf32>
    %358 = arith.negf %357 : vector<2x32xf32>
    %359 = math.exp %358 : vector<2x32xf32>
    %cst_105 = arith.constant 1.000000e+00 : f32
    %360 = vector.broadcast %cst_105 : f32 to vector<2x32xf32>
    %361 = arith.addf %360, %359 : vector<2x32xf32>
    %362 = arith.divf %360, %361 : vector<2x32xf32>
    %363 = arith.mulf %354, %299 : vector<2x32xf32>
    %364 = arith.mulf %348, %356 : vector<2x32xf32>
    %365 = arith.addf %363, %364 : vector<2x32xf32>
    %366 = math.tanh %365 : vector<2x32xf32>
    %367 = arith.mulf %362, %366 : vector<2x32xf32>
    %368 = vector.extract_strided_slice %342 {offsets = [0, 0], sizes = [2, 32], strides = [1, 1]} : vector<2x128xf32> to vector<2x32xf32>
    %369 = arith.negf %368 : vector<2x32xf32>
    %370 = math.exp %369 : vector<2x32xf32>
    %cst_106 = arith.constant 1.000000e+00 : f32
    %371 = vector.broadcast %cst_106 : f32 to vector<2x32xf32>
    %372 = arith.addf %371, %370 : vector<2x32xf32>
    %373 = arith.divf %371, %372 : vector<2x32xf32>
    %374 = vector.extract_strided_slice %342 {offsets = [0, 32], sizes = [2, 32], strides = [1, 1]} : vector<2x128xf32> to vector<2x32xf32>
    %375 = arith.negf %374 : vector<2x32xf32>
    %376 = math.exp %375 : vector<2x32xf32>
    %cst_107 = arith.constant 1.000000e+00 : f32
    %377 = vector.broadcast %cst_107 : f32 to vector<2x32xf32>
    %378 = arith.addf %377, %376 : vector<2x32xf32>
    %379 = arith.divf %377, %378 : vector<2x32xf32>
    %380 = vector.extract_strided_slice %342 {offsets = [0, 64], sizes = [2, 32], strides = [1, 1]} : vector<2x128xf32> to vector<2x32xf32>
    %381 = math.tanh %380 : vector<2x32xf32>
    %382 = vector.extract_strided_slice %342 {offsets = [0, 96], sizes = [2, 32], strides = [1, 1]} : vector<2x128xf32> to vector<2x32xf32>
    %383 = arith.negf %382 : vector<2x32xf32>
    %384 = math.exp %383 : vector<2x32xf32>
    %cst_108 = arith.constant 1.000000e+00 : f32
    %385 = vector.broadcast %cst_108 : f32 to vector<2x32xf32>
    %386 = arith.addf %385, %384 : vector<2x32xf32>
    %387 = arith.divf %385, %386 : vector<2x32xf32>
    %388 = arith.mulf %379, %324 : vector<2x32xf32>
    %389 = arith.mulf %373, %381 : vector<2x32xf32>
    %390 = arith.addf %388, %389 : vector<2x32xf32>
    %391 = math.tanh %390 : vector<2x32xf32>
    %392 = arith.mulf %387, %391 : vector<2x32xf32>
    %c5_109 = arith.constant 5 : index
    %c0_110 = arith.constant 0 : index
    %c0_111 = arith.constant 0 : index
    %393 = vector.load %arg4[%c5_109, %c0_110, %c0_111] : memref<8x2x64xf32, #tpu.memory_space<vmem>>, vector<1x2x32xf32>
    %394 = vector.shape_cast %393 : vector<1x2x32xf32> to vector<2x32xf32>
    %395 = vector.shape_cast %367 : vector<2x32xf32> to vector<1x2x32xf32>
    tpu.vector_store %arg4[%c5_109, %c0_110, %c0_111], %395 {strides = array<i32>} : memref<8x2x64xf32, #tpu.memory_space<vmem>>, vector<1x2x32xf32>,
    %c2_112 = arith.constant 2 : index
    %c0_113 = arith.constant 0 : index
    %c32_114 = arith.constant 32 : index
    %396 = vector.load %arg4[%c2_112, %c0_113, %c32_114] : memref<8x2x64xf32, #tpu.memory_space<vmem>>, vector<1x2x32xf32>
    %397 = vector.shape_cast %396 : vector<1x2x32xf32> to vector<2x32xf32>
    %398 = vector.shape_cast %392 : vector<2x32xf32> to vector<1x2x32xf32>
    tpu.vector_store %arg4[%c2_112, %c0_113, %c32_114], %398 {strides = array<i32>} : memref<8x2x64xf32, #tpu.memory_space<vmem>>, vector<1x2x32xf32>,
    %c6_115 = arith.constant 6 : index
    %c0_116 = arith.constant 0 : index
    %c0_117 = arith.constant 0 : index
    %399 = vector.load %arg0[%c6_115, %c0_116, %c0_117] : memref<8x2x128xf32, #tpu.memory_space<vmem>>, vector<1x2x128xf32>
    %400 = vector.shape_cast %399 : vector<1x2x128xf32> to vector<2x128xf32>
    %401 = arith.truncf %367 : vector<2x32xf32> to vector<2x32xbf16>
    %cst_118 = arith.constant dense<0.000000e+00> : vector<2x128xf32>
    %402 = tpu.matmul %401, %0, %cst_118 {dimension_numbers = #tpu.dot_dimension_numbers<[1], [0], [0], [1], [0, 0, 1, 1], [], []>} : vector<2x32xbf16>, vector<32x128xbf16>, vector<2x128xf32> -> vector<2x128xf32>
    %403 = arith.addf %400, %402 : vector<2x128xf32>
    %c1_119 = arith.constant 1 : index
    %c0_120 = arith.constant 0 : index
    %c0_121 = arith.constant 0 : index
    %404 = vector.load %arg1[%c1_119, %c0_120, %c0_121] : memref<8x2x128xf32, #tpu.memory_space<vmem>>, vector<1x2x128xf32>
    %405 = vector.shape_cast %404 : vector<1x2x128xf32> to vector<2x128xf32>
    %406 = arith.truncf %392 : vector<2x32xf32> to vector<2x32xbf16>
    %cst_122 = arith.constant dense<0.000000e+00> : vector<2x128xf32>
    %407 = tpu.matmul %406, %1, %cst_122 {dimension_numbers = #tpu.dot_dimension_numbers<[1], [0], [0], [1], [0, 0, 1, 1], [], []>} : vector<2x32xbf16>, vector<32x128xbf16>, vector<2x128xf32> -> vector<2x128xf32>
    %408 = arith.addf %405, %407 : vector<2x128xf32>
    %409 = vector.extract_strided_slice %403 {offsets = [0, 0], sizes = [2, 32], strides = [1, 1]} : vector<2x128xf32> to vector<2x32xf32>
    %410 = arith.negf %409 : vector<2x32xf32>
    %411 = math.exp %410 : vector<2x32xf32>
    %cst_123 = arith.constant 1.000000e+00 : f32
    %412 = vector.broadcast %cst_123 : f32 to vector<2x32xf32>
    %413 = arith.addf %412, %411 : vector<2x32xf32>
    %414 = arith.divf %412, %413 : vector<2x32xf32>
    %415 = vector.extract_strided_slice %403 {offsets = [0, 32], sizes = [2, 32], strides = [1, 1]} : vector<2x128xf32> to vector<2x32xf32>
    %416 = arith.negf %415 : vector<2x32xf32>
    %417 = math.exp %416 : vector<2x32xf32>
    %cst_124 = arith.constant 1.000000e+00 : f32
    %418 = vector.broadcast %cst_124 : f32 to vector<2x32xf32>
    %419 = arith.addf %418, %417 : vector<2x32xf32>
    %420 = arith.divf %418, %419 : vector<2x32xf32>
    %421 = vector.extract_strided_slice %403 {offsets = [0, 64], sizes = [2, 32], strides = [1, 1]} : vector<2x128xf32> to vector<2x32xf32>
    %422 = math.tanh %421 : vector<2x32xf32>
    %423 = vector.extract_strided_slice %403 {offsets = [0, 96], sizes = [2, 32], strides = [1, 1]} : vector<2x128xf32> to vector<2x32xf32>
    %424 = arith.negf %423 : vector<2x32xf32>
    %425 = math.exp %424 : vector<2x32xf32>
    %cst_125 = arith.constant 1.000000e+00 : f32
    %426 = vector.broadcast %cst_125 : f32 to vector<2x32xf32>
    %427 = arith.addf %426, %425 : vector<2x32xf32>
    %428 = arith.divf %426, %427 : vector<2x32xf32>
    %429 = arith.mulf %420, %365 : vector<2x32xf32>
    %430 = arith.mulf %414, %422 : vector<2x32xf32>
    %431 = arith.addf %429, %430 : vector<2x32xf32>
    %432 = math.tanh %431 : vector<2x32xf32>
    %433 = arith.mulf %428, %432 : vector<2x32xf32>
    %434 = vector.extract_strided_slice %408 {offsets = [0, 0], sizes = [2, 32], strides = [1, 1]} : vector<2x128xf32> to vector<2x32xf32>
    %435 = arith.negf %434 : vector<2x32xf32>
    %436 = math.exp %435 : vector<2x32xf32>
    %cst_126 = arith.constant 1.000000e+00 : f32
    %437 = vector.broadcast %cst_126 : f32 to vector<2x32xf32>
    %438 = arith.addf %437, %436 : vector<2x32xf32>
    %439 = arith.divf %437, %438 : vector<2x32xf32>
    %440 = vector.extract_strided_slice %408 {offsets = [0, 32], sizes = [2, 32], strides = [1, 1]} : vector<2x128xf32> to vector<2x32xf32>
    %441 = arith.negf %440 : vector<2x32xf32>
    %442 = math.exp %441 : vector<2x32xf32>
    %cst_127 = arith.constant 1.000000e+00 : f32
    %443 = vector.broadcast %cst_127 : f32 to vector<2x32xf32>
    %444 = arith.addf %443, %442 : vector<2x32xf32>
    %445 = arith.divf %443, %444 : vector<2x32xf32>
    %446 = vector.extract_strided_slice %408 {offsets = [0, 64], sizes = [2, 32], strides = [1, 1]} : vector<2x128xf32> to vector<2x32xf32>
    %447 = math.tanh %446 : vector<2x32xf32>
    %448 = vector.extract_strided_slice %408 {offsets = [0, 96], sizes = [2, 32], strides = [1, 1]} : vector<2x128xf32> to vector<2x32xf32>
    %449 = arith.negf %448 : vector<2x32xf32>
    %450 = math.exp %449 : vector<2x32xf32>
    %cst_128 = arith.constant 1.000000e+00 : f32
    %451 = vector.broadcast %cst_128 : f32 to vector<2x32xf32>
    %452 = arith.addf %451, %450 : vector<2x32xf32>
    %453 = arith.divf %451, %452 : vector<2x32xf32>
    %454 = arith.mulf %445, %390 : vector<2x32xf32>
    %455 = arith.mulf %439, %447 : vector<2x32xf32>
    %456 = arith.addf %454, %455 : vector<2x32xf32>
    %457 = math.tanh %456 : vector<2x32xf32>
    %458 = arith.mulf %453, %457 : vector<2x32xf32>
    %c6_129 = arith.constant 6 : index
    %c0_130 = arith.constant 0 : index
    %c0_131 = arith.constant 0 : index
    %459 = vector.load %arg4[%c6_129, %c0_130, %c0_131] : memref<8x2x64xf32, #tpu.memory_space<vmem>>, vector<1x2x32xf32>
    %460 = vector.shape_cast %459 : vector<1x2x32xf32> to vector<2x32xf32>
    %461 = vector.shape_cast %433 : vector<2x32xf32> to vector<1x2x32xf32>
    tpu.vector_store %arg4[%c6_129, %c0_130, %c0_131], %461 {strides = array<i32>} : memref<8x2x64xf32, #tpu.memory_space<vmem>>, vector<1x2x32xf32>,
    %c1_132 = arith.constant 1 : index
    %c0_133 = arith.constant 0 : index
    %c32_134 = arith.constant 32 : index
    %462 = vector.load %arg4[%c1_132, %c0_133, %c32_134] : memref<8x2x64xf32, #tpu.memory_space<vmem>>, vector<1x2x32xf32>
    %463 = vector.shape_cast %462 : vector<1x2x32xf32> to vector<2x32xf32>
    %464 = vector.shape_cast %458 : vector<2x32xf32> to vector<1x2x32xf32>
    tpu.vector_store %arg4[%c1_132, %c0_133, %c32_134], %464 {strides = array<i32>} : memref<8x2x64xf32, #tpu.memory_space<vmem>>, vector<1x2x32xf32>,
    %c7_135 = arith.constant 7 : index
    %c0_136 = arith.constant 0 : index
    %c0_137 = arith.constant 0 : index
    %465 = vector.load %arg0[%c7_135, %c0_136, %c0_137] : memref<8x2x128xf32, #tpu.memory_space<vmem>>, vector<1x2x128xf32>
    %466 = vector.shape_cast %465 : vector<1x2x128xf32> to vector<2x128xf32>
    %467 = arith.truncf %433 : vector<2x32xf32> to vector<2x32xbf16>
    %cst_138 = arith.constant dense<0.000000e+00> : vector<2x128xf32>
    %468 = tpu.matmul %467, %0, %cst_138 {dimension_numbers = #tpu.dot_dimension_numbers<[1], [0], [0], [1], [0, 0, 1, 1], [], []>} : vector<2x32xbf16>, vector<32x128xbf16>, vector<2x128xf32> -> vector<2x128xf32>
    %469 = arith.addf %466, %468 : vector<2x128xf32>
    %c0_139 = arith.constant 0 : index
    %c0_140 = arith.constant 0 : index
    %c0_141 = arith.constant 0 : index
    %470 = vector.load %arg1[%c0_139, %c0_140, %c0_141] : memref<8x2x128xf32, #tpu.memory_space<vmem>>, vector<1x2x128xf32>
    %471 = vector.shape_cast %470 : vector<1x2x128xf32> to vector<2x128xf32>
    %472 = arith.truncf %458 : vector<2x32xf32> to vector<2x32xbf16>
    %cst_142 = arith.constant dense<0.000000e+00> : vector<2x128xf32>
    %473 = tpu.matmul %472, %1, %cst_142 {dimension_numbers = #tpu.dot_dimension_numbers<[1], [0], [0], [1], [0, 0, 1, 1], [], []>} : vector<2x32xbf16>, vector<32x128xbf16>, vector<2x128xf32> -> vector<2x128xf32>
    %474 = arith.addf %471, %473 : vector<2x128xf32>
    %475 = vector.extract_strided_slice %469 {offsets = [0, 0], sizes = [2, 32], strides = [1, 1]} : vector<2x128xf32> to vector<2x32xf32>
    %476 = arith.negf %475 : vector<2x32xf32>
    %477 = math.exp %476 : vector<2x32xf32>
    %cst_143 = arith.constant 1.000000e+00 : f32
    %478 = vector.broadcast %cst_143 : f32 to vector<2x32xf32>
    %479 = arith.addf %478, %477 : vector<2x32xf32>
    %480 = arith.divf %478, %479 : vector<2x32xf32>
    %481 = vector.extract_strided_slice %469 {offsets = [0, 32], sizes = [2, 32], strides = [1, 1]} : vector<2x128xf32> to vector<2x32xf32>
    %482 = arith.negf %481 : vector<2x32xf32>
    %483 = math.exp %482 : vector<2x32xf32>
    %cst_144 = arith.constant 1.000000e+00 : f32
    %484 = vector.broadcast %cst_144 : f32 to vector<2x32xf32>
    %485 = arith.addf %484, %483 : vector<2x32xf32>
    %486 = arith.divf %484, %485 : vector<2x32xf32>
    %487 = vector.extract_strided_slice %469 {offsets = [0, 64], sizes = [2, 32], strides = [1, 1]} : vector<2x128xf32> to vector<2x32xf32>
    %488 = math.tanh %487 : vector<2x32xf32>
    %489 = vector.extract_strided_slice %469 {offsets = [0, 96], sizes = [2, 32], strides = [1, 1]} : vector<2x128xf32> to vector<2x32xf32>
    %490 = arith.negf %489 : vector<2x32xf32>
    %491 = math.exp %490 : vector<2x32xf32>
    %cst_145 = arith.constant 1.000000e+00 : f32
    %492 = vector.broadcast %cst_145 : f32 to vector<2x32xf32>
    %493 = arith.addf %492, %491 : vector<2x32xf32>
    %494 = arith.divf %492, %493 : vector<2x32xf32>
    %495 = arith.mulf %486, %431 : vector<2x32xf32>
    %496 = arith.mulf %480, %488 : vector<2x32xf32>
    %497 = arith.addf %495, %496 : vector<2x32xf32>
    %498 = math.tanh %497 : vector<2x32xf32>
    %499 = arith.mulf %494, %498 : vector<2x32xf32>
    %500 = vector.extract_strided_slice %474 {offsets = [0, 0], sizes = [2, 32], strides = [1, 1]} : vector<2x128xf32> to vector<2x32xf32>
    %501 = arith.negf %500 : vector<2x32xf32>
    %502 = math.exp %501 : vector<2x32xf32>
    %cst_146 = arith.constant 1.000000e+00 : f32
    %503 = vector.broadcast %cst_146 : f32 to vector<2x32xf32>
    %504 = arith.addf %503, %502 : vector<2x32xf32>
    %505 = arith.divf %503, %504 : vector<2x32xf32>
    %506 = vector.extract_strided_slice %474 {offsets = [0, 32], sizes = [2, 32], strides = [1, 1]} : vector<2x128xf32> to vector<2x32xf32>
    %507 = arith.negf %506 : vector<2x32xf32>
    %508 = math.exp %507 : vector<2x32xf32>
    %cst_147 = arith.constant 1.000000e+00 : f32
    %509 = vector.broadcast %cst_147 : f32 to vector<2x32xf32>
    %510 = arith.addf %509, %508 : vector<2x32xf32>
    %511 = arith.divf %509, %510 : vector<2x32xf32>
    %512 = vector.extract_strided_slice %474 {offsets = [0, 64], sizes = [2, 32], strides = [1, 1]} : vector<2x128xf32> to vector<2x32xf32>
    %513 = math.tanh %512 : vector<2x32xf32>
    %514 = vector.extract_strided_slice %474 {offsets = [0, 96], sizes = [2, 32], strides = [1, 1]} : vector<2x128xf32> to vector<2x32xf32>
    %515 = arith.negf %514 : vector<2x32xf32>
    %516 = math.exp %515 : vector<2x32xf32>
    %cst_148 = arith.constant 1.000000e+00 : f32
    %517 = vector.broadcast %cst_148 : f32 to vector<2x32xf32>
    %518 = arith.addf %517, %516 : vector<2x32xf32>
    %519 = arith.divf %517, %518 : vector<2x32xf32>
    %520 = arith.mulf %511, %456 : vector<2x32xf32>
    %521 = arith.mulf %505, %513 : vector<2x32xf32>
    %522 = arith.addf %520, %521 : vector<2x32xf32>
    %523 = math.tanh %522 : vector<2x32xf32>
    %524 = arith.mulf %519, %523 : vector<2x32xf32>
    %c7_149 = arith.constant 7 : index
    %c0_150 = arith.constant 0 : index
    %c0_151 = arith.constant 0 : index
    %525 = vector.load %arg4[%c7_149, %c0_150, %c0_151] : memref<8x2x64xf32, #tpu.memory_space<vmem>>, vector<1x2x32xf32>
    %526 = vector.shape_cast %525 : vector<1x2x32xf32> to vector<2x32xf32>
    %527 = vector.shape_cast %499 : vector<2x32xf32> to vector<1x2x32xf32>
    tpu.vector_store %arg4[%c7_149, %c0_150, %c0_151], %527 {strides = array<i32>} : memref<8x2x64xf32, #tpu.memory_space<vmem>>, vector<1x2x32xf32>,
    %c0_152 = arith.constant 0 : index
    %c0_153 = arith.constant 0 : index
    %c32_154 = arith.constant 32 : index
    %528 = vector.load %arg4[%c0_152, %c0_153, %c32_154] : memref<8x2x64xf32, #tpu.memory_space<vmem>>, vector<1x2x32xf32>
    %529 = vector.shape_cast %528 : vector<1x2x32xf32> to vector<2x32xf32>
    %530 = vector.shape_cast %524 : vector<2x32xf32> to vector<1x2x32xf32>
    tpu.vector_store %arg4[%c0_152, %c0_153, %c32_154], %530 {strides = array<i32>} : memref<8x2x64xf32, #tpu.memory_space<vmem>>, vector<1x2x32xf32>,
    %c0_155 = arith.constant 0 : index
    %c0_156 = arith.constant 0 : index
    %c0_157 = arith.constant 0 : index
    %531 = vector.load %arg5[%c0_155, %c0_156, %c0_157] : memref<2x2x32xf32, #tpu.memory_space<vmem>>, vector<1x2x32xf32>
    %532 = vector.shape_cast %531 : vector<1x2x32xf32> to vector<2x32xf32>
    %533 = vector.shape_cast %499 : vector<2x32xf32> to vector<1x2x32xf32>
    tpu.vector_store %arg5[%c0_155, %c0_156, %c0_157], %533 {strides = array<i32>} : memref<2x2x32xf32, #tpu.memory_space<vmem>>, vector<1x2x32xf32>,
    %c1_158 = arith.constant 1 : index
    %c0_159 = arith.constant 0 : index
    %c0_160 = arith.constant 0 : index
    %534 = vector.load %arg5[%c1_158, %c0_159, %c0_160] : memref<2x2x32xf32, #tpu.memory_space<vmem>>, vector<1x2x32xf32>
    %535 = vector.shape_cast %534 : vector<1x2x32xf32> to vector<2x32xf32>
    %536 = vector.shape_cast %524 : vector<2x32xf32> to vector<1x2x32xf32>
    tpu.vector_store %arg5[%c1_158, %c0_159, %c0_160], %536 {strides = array<i32>} : memref<2x2x32xf32, #tpu.memory_space<vmem>>, vector<1x2x32xf32>,
    %c0_161 = arith.constant 0 : index
    %c0_162 = arith.constant 0 : index
    %c0_163 = arith.constant 0 : index
    %537 = vector.load %arg6[%c0_161, %c0_162, %c0_163] : memref<2x2x32xf32, #tpu.memory_space<vmem>>, vector<1x2x32xf32>
    %538 = vector.shape_cast %537 : vector<1x2x32xf32> to vector<2x32xf32>
    %539 = vector.shape_cast %497 : vector<2x32xf32> to vector<1x2x32xf32>
    tpu.vector_store %arg6[%c0_161, %c0_162, %c0_163], %539 {strides = array<i32>} : memref<2x2x32xf32, #tpu.memory_space<vmem>>, vector<1x2x32xf32>,
    %c1_164 = arith.constant 1 : index
    %c0_165 = arith.constant 0 : index
    %c0_166 = arith.constant 0 : index
    %540 = vector.load %arg6[%c1_164, %c0_165, %c0_166] : memref<2x2x32xf32, #tpu.memory_space<vmem>>, vector<1x2x32xf32>
    %541 = vector.shape_cast %540 : vector<1x2x32xf32> to vector<2x32xf32>
    %542 = vector.shape_cast %522 : vector<2x32xf32> to vector<1x2x32xf32>
    tpu.vector_store %arg6[%c1_164, %c0_165, %c0_166], %542 {strides = array<i32>} : memref<2x2x32xf32, #tpu.memory_space<vmem>>, vector<1x2x32xf32>,
    return
  }
}

module attributes {stable_mosaic.version = 11 : i64} {
  func.func @_bilstm_recurrence_kernel(%arg0: memref<16x2x128xf32, #tpu.memory_space<vmem>>, %arg1: memref<16x2x128xf32, #tpu.memory_space<vmem>>, %arg2: memref<32x128xbf16, #tpu.memory_space<vmem>>, %arg3: memref<32x128xbf16, #tpu.memory_space<vmem>>, %arg4: memref<16x2x64xf32, #tpu.memory_space<vmem>>, %arg5: memref<2x2x32xf32, #tpu.memory_space<vmem>>, %arg6: memref<2x2x32xf32, #tpu.memory_space<vmem>>) attributes {dimension_semantics = [], scalar_prefetch = 0 : i64, scratch_operands = 0 : i64, tpu.core_type = #tpu.core_type<tc>} {
    %c0 = arith.constant 0 : index
    %c0_0 = arith.constant 0 : index
    %0 = vector.load %arg2[%c0, %c0_0] : memref<32x128xbf16, #tpu.memory_space<vmem>>, vector<32x128xbf16>
    %c0_1 = arith.constant 0 : index
    %c0_2 = arith.constant 0 : index
    %1 = vector.load %arg3[%c0_1, %c0_2] : memref<32x128xbf16, #tpu.memory_space<vmem>>, vector<32x128xbf16>
    %cst = arith.constant 0.000000e+00 : f32
    %2 = vector.broadcast %cst : f32 to vector<2x32xf32>
    %c0_3 = arith.constant 0 : index
    %c0_4 = arith.constant 0 : index
    %c0_5 = arith.constant 0 : index
    %3 = vector.load %arg0[%c0_3, %c0_4, %c0_5] : memref<16x2x128xf32, #tpu.memory_space<vmem>>, vector<1x2x128xf32>
    %4 = vector.shape_cast %3 : vector<1x2x128xf32> to vector<2x128xf32>
    %5 = arith.truncf %2 : vector<2x32xf32> to vector<2x32xbf16>
    %cst_6 = arith.constant dense<0.000000e+00> : vector<2x128xf32>
    %6 = tpu.matmul %5, %0, %cst_6 {dimension_numbers = #tpu.dot_dimension_numbers<[1], [0], [0], [1], [0, 0, 1, 1], [], []>} : vector<2x32xbf16>, vector<32x128xbf16>, vector<2x128xf32> -> vector<2x128xf32>
    %7 = arith.addf %4, %6 : vector<2x128xf32>
    %c15 = arith.constant 15 : index
    %c0_7 = arith.constant 0 : index
    %c0_8 = arith.constant 0 : index
    %8 = vector.load %arg1[%c15, %c0_7, %c0_8] : memref<16x2x128xf32, #tpu.memory_space<vmem>>, vector<1x2x128xf32>
    %9 = vector.shape_cast %8 : vector<1x2x128xf32> to vector<2x128xf32>
    %10 = arith.truncf %2 : vector<2x32xf32> to vector<2x32xbf16>
    %cst_9 = arith.constant dense<0.000000e+00> : vector<2x128xf32>
    %11 = tpu.matmul %10, %1, %cst_9 {dimension_numbers = #tpu.dot_dimension_numbers<[1], [0], [0], [1], [0, 0, 1, 1], [], []>} : vector<2x32xbf16>, vector<32x128xbf16>, vector<2x128xf32> -> vector<2x128xf32>
    %12 = arith.addf %9, %11 : vector<2x128xf32>
    %13 = vector.extract_strided_slice %7 {offsets = [0, 0], sizes = [2, 32], strides = [1, 1]} : vector<2x128xf32> to vector<2x32xf32>
    %14 = arith.negf %13 : vector<2x32xf32>
    %15 = math.exp %14 : vector<2x32xf32>
    %cst_10 = arith.constant 1.000000e+00 : f32
    %16 = vector.broadcast %cst_10 : f32 to vector<2x32xf32>
    %17 = arith.addf %16, %15 : vector<2x32xf32>
    %18 = arith.divf %16, %17 : vector<2x32xf32>
    %19 = vector.extract_strided_slice %7 {offsets = [0, 32], sizes = [2, 32], strides = [1, 1]} : vector<2x128xf32> to vector<2x32xf32>
    %20 = arith.negf %19 : vector<2x32xf32>
    %21 = math.exp %20 : vector<2x32xf32>
    %cst_11 = arith.constant 1.000000e+00 : f32
    %22 = vector.broadcast %cst_11 : f32 to vector<2x32xf32>
    %23 = arith.addf %22, %21 : vector<2x32xf32>
    %24 = arith.divf %22, %23 : vector<2x32xf32>
    %25 = vector.extract_strided_slice %7 {offsets = [0, 64], sizes = [2, 32], strides = [1, 1]} : vector<2x128xf32> to vector<2x32xf32>
    %26 = math.tanh %25 : vector<2x32xf32>
    %27 = vector.extract_strided_slice %7 {offsets = [0, 96], sizes = [2, 32], strides = [1, 1]} : vector<2x128xf32> to vector<2x32xf32>
    %28 = arith.negf %27 : vector<2x32xf32>
    %29 = math.exp %28 : vector<2x32xf32>
    %cst_12 = arith.constant 1.000000e+00 : f32
    %30 = vector.broadcast %cst_12 : f32 to vector<2x32xf32>
    %31 = arith.addf %30, %29 : vector<2x32xf32>
    %32 = arith.divf %30, %31 : vector<2x32xf32>
    %33 = arith.mulf %24, %2 : vector<2x32xf32>
    %34 = arith.mulf %18, %26 : vector<2x32xf32>
    %35 = arith.addf %33, %34 : vector<2x32xf32>
    %36 = math.tanh %35 : vector<2x32xf32>
    %37 = arith.mulf %32, %36 : vector<2x32xf32>
    %38 = vector.extract_strided_slice %12 {offsets = [0, 0], sizes = [2, 32], strides = [1, 1]} : vector<2x128xf32> to vector<2x32xf32>
    %39 = arith.negf %38 : vector<2x32xf32>
    %40 = math.exp %39 : vector<2x32xf32>
    %cst_13 = arith.constant 1.000000e+00 : f32
    %41 = vector.broadcast %cst_13 : f32 to vector<2x32xf32>
    %42 = arith.addf %41, %40 : vector<2x32xf32>
    %43 = arith.divf %41, %42 : vector<2x32xf32>
    %44 = vector.extract_strided_slice %12 {offsets = [0, 32], sizes = [2, 32], strides = [1, 1]} : vector<2x128xf32> to vector<2x32xf32>
    %45 = arith.negf %44 : vector<2x32xf32>
    %46 = math.exp %45 : vector<2x32xf32>
    %cst_14 = arith.constant 1.000000e+00 : f32
    %47 = vector.broadcast %cst_14 : f32 to vector<2x32xf32>
    %48 = arith.addf %47, %46 : vector<2x32xf32>
    %49 = arith.divf %47, %48 : vector<2x32xf32>
    %50 = vector.extract_strided_slice %12 {offsets = [0, 64], sizes = [2, 32], strides = [1, 1]} : vector<2x128xf32> to vector<2x32xf32>
    %51 = math.tanh %50 : vector<2x32xf32>
    %52 = vector.extract_strided_slice %12 {offsets = [0, 96], sizes = [2, 32], strides = [1, 1]} : vector<2x128xf32> to vector<2x32xf32>
    %53 = arith.negf %52 : vector<2x32xf32>
    %54 = math.exp %53 : vector<2x32xf32>
    %cst_15 = arith.constant 1.000000e+00 : f32
    %55 = vector.broadcast %cst_15 : f32 to vector<2x32xf32>
    %56 = arith.addf %55, %54 : vector<2x32xf32>
    %57 = arith.divf %55, %56 : vector<2x32xf32>
    %58 = arith.mulf %49, %2 : vector<2x32xf32>
    %59 = arith.mulf %43, %51 : vector<2x32xf32>
    %60 = arith.addf %58, %59 : vector<2x32xf32>
    %61 = math.tanh %60 : vector<2x32xf32>
    %62 = arith.mulf %57, %61 : vector<2x32xf32>
    %c0_16 = arith.constant 0 : index
    %c0_17 = arith.constant 0 : index
    %c0_18 = arith.constant 0 : index
    %63 = vector.load %arg4[%c0_16, %c0_17, %c0_18] : memref<16x2x64xf32, #tpu.memory_space<vmem>>, vector<1x2x32xf32>
    %64 = vector.shape_cast %63 : vector<1x2x32xf32> to vector<2x32xf32>
    %65 = vector.shape_cast %37 : vector<2x32xf32> to vector<1x2x32xf32>
    tpu.vector_store %arg4[%c0_16, %c0_17, %c0_18], %65 {strides = array<i32>} : memref<16x2x64xf32, #tpu.memory_space<vmem>>, vector<1x2x32xf32>,
    %c15_19 = arith.constant 15 : index
    %c0_20 = arith.constant 0 : index
    %c32 = arith.constant 32 : index
    %66 = vector.load %arg4[%c15_19, %c0_20, %c32] : memref<16x2x64xf32, #tpu.memory_space<vmem>>, vector<1x2x32xf32>
    %67 = vector.shape_cast %66 : vector<1x2x32xf32> to vector<2x32xf32>
    %68 = vector.shape_cast %62 : vector<2x32xf32> to vector<1x2x32xf32>
    tpu.vector_store %arg4[%c15_19, %c0_20, %c32], %68 {strides = array<i32>} : memref<16x2x64xf32, #tpu.memory_space<vmem>>, vector<1x2x32xf32>,
    %c1 = arith.constant 1 : index
    %c0_21 = arith.constant 0 : index
    %c0_22 = arith.constant 0 : index
    %69 = vector.load %arg0[%c1, %c0_21, %c0_22] : memref<16x2x128xf32, #tpu.memory_space<vmem>>, vector<1x2x128xf32>
    %70 = vector.shape_cast %69 : vector<1x2x128xf32> to vector<2x128xf32>
    %71 = arith.truncf %37 : vector<2x32xf32> to vector<2x32xbf16>
    %cst_23 = arith.constant dense<0.000000e+00> : vector<2x128xf32>
    %72 = tpu.matmul %71, %0, %cst_23 {dimension_numbers = #tpu.dot_dimension_numbers<[1], [0], [0], [1], [0, 0, 1, 1], [], []>} : vector<2x32xbf16>, vector<32x128xbf16>, vector<2x128xf32> -> vector<2x128xf32>
    %73 = arith.addf %70, %72 : vector<2x128xf32>
    %c14 = arith.constant 14 : index
    %c0_24 = arith.constant 0 : index
    %c0_25 = arith.constant 0 : index
    %74 = vector.load %arg1[%c14, %c0_24, %c0_25] : memref<16x2x128xf32, #tpu.memory_space<vmem>>, vector<1x2x128xf32>
    %75 = vector.shape_cast %74 : vector<1x2x128xf32> to vector<2x128xf32>
    %76 = arith.truncf %62 : vector<2x32xf32> to vector<2x32xbf16>
    %cst_26 = arith.constant dense<0.000000e+00> : vector<2x128xf32>
    %77 = tpu.matmul %76, %1, %cst_26 {dimension_numbers = #tpu.dot_dimension_numbers<[1], [0], [0], [1], [0, 0, 1, 1], [], []>} : vector<2x32xbf16>, vector<32x128xbf16>, vector<2x128xf32> -> vector<2x128xf32>
    %78 = arith.addf %75, %77 : vector<2x128xf32>
    %79 = vector.extract_strided_slice %73 {offsets = [0, 0], sizes = [2, 32], strides = [1, 1]} : vector<2x128xf32> to vector<2x32xf32>
    %80 = arith.negf %79 : vector<2x32xf32>
    %81 = math.exp %80 : vector<2x32xf32>
    %cst_27 = arith.constant 1.000000e+00 : f32
    %82 = vector.broadcast %cst_27 : f32 to vector<2x32xf32>
    %83 = arith.addf %82, %81 : vector<2x32xf32>
    %84 = arith.divf %82, %83 : vector<2x32xf32>
    %85 = vector.extract_strided_slice %73 {offsets = [0, 32], sizes = [2, 32], strides = [1, 1]} : vector<2x128xf32> to vector<2x32xf32>
    %86 = arith.negf %85 : vector<2x32xf32>
    %87 = math.exp %86 : vector<2x32xf32>
    %cst_28 = arith.constant 1.000000e+00 : f32
    %88 = vector.broadcast %cst_28 : f32 to vector<2x32xf32>
    %89 = arith.addf %88, %87 : vector<2x32xf32>
    %90 = arith.divf %88, %89 : vector<2x32xf32>
    %91 = vector.extract_strided_slice %73 {offsets = [0, 64], sizes = [2, 32], strides = [1, 1]} : vector<2x128xf32> to vector<2x32xf32>
    %92 = math.tanh %91 : vector<2x32xf32>
    %93 = vector.extract_strided_slice %73 {offsets = [0, 96], sizes = [2, 32], strides = [1, 1]} : vector<2x128xf32> to vector<2x32xf32>
    %94 = arith.negf %93 : vector<2x32xf32>
    %95 = math.exp %94 : vector<2x32xf32>
    %cst_29 = arith.constant 1.000000e+00 : f32
    %96 = vector.broadcast %cst_29 : f32 to vector<2x32xf32>
    %97 = arith.addf %96, %95 : vector<2x32xf32>
    %98 = arith.divf %96, %97 : vector<2x32xf32>
    %99 = arith.mulf %90, %35 : vector<2x32xf32>
    %100 = arith.mulf %84, %92 : vector<2x32xf32>
    %101 = arith.addf %99, %100 : vector<2x32xf32>
    %102 = math.tanh %101 : vector<2x32xf32>
    %103 = arith.mulf %98, %102 : vector<2x32xf32>
    %104 = vector.extract_strided_slice %78 {offsets = [0, 0], sizes = [2, 32], strides = [1, 1]} : vector<2x128xf32> to vector<2x32xf32>
    %105 = arith.negf %104 : vector<2x32xf32>
    %106 = math.exp %105 : vector<2x32xf32>
    %cst_30 = arith.constant 1.000000e+00 : f32
    %107 = vector.broadcast %cst_30 : f32 to vector<2x32xf32>
    %108 = arith.addf %107, %106 : vector<2x32xf32>
    %109 = arith.divf %107, %108 : vector<2x32xf32>
    %110 = vector.extract_strided_slice %78 {offsets = [0, 32], sizes = [2, 32], strides = [1, 1]} : vector<2x128xf32> to vector<2x32xf32>
    %111 = arith.negf %110 : vector<2x32xf32>
    %112 = math.exp %111 : vector<2x32xf32>
    %cst_31 = arith.constant 1.000000e+00 : f32
    %113 = vector.broadcast %cst_31 : f32 to vector<2x32xf32>
    %114 = arith.addf %113, %112 : vector<2x32xf32>
    %115 = arith.divf %113, %114 : vector<2x32xf32>
    %116 = vector.extract_strided_slice %78 {offsets = [0, 64], sizes = [2, 32], strides = [1, 1]} : vector<2x128xf32> to vector<2x32xf32>
    %117 = math.tanh %116 : vector<2x32xf32>
    %118 = vector.extract_strided_slice %78 {offsets = [0, 96], sizes = [2, 32], strides = [1, 1]} : vector<2x128xf32> to vector<2x32xf32>
    %119 = arith.negf %118 : vector<2x32xf32>
    %120 = math.exp %119 : vector<2x32xf32>
    %cst_32 = arith.constant 1.000000e+00 : f32
    %121 = vector.broadcast %cst_32 : f32 to vector<2x32xf32>
    %122 = arith.addf %121, %120 : vector<2x32xf32>
    %123 = arith.divf %121, %122 : vector<2x32xf32>
    %124 = arith.mulf %115, %60 : vector<2x32xf32>
    %125 = arith.mulf %109, %117 : vector<2x32xf32>
    %126 = arith.addf %124, %125 : vector<2x32xf32>
    %127 = math.tanh %126 : vector<2x32xf32>
    %128 = arith.mulf %123, %127 : vector<2x32xf32>
    %c1_33 = arith.constant 1 : index
    %c0_34 = arith.constant 0 : index
    %c0_35 = arith.constant 0 : index
    %129 = vector.load %arg4[%c1_33, %c0_34, %c0_35] : memref<16x2x64xf32, #tpu.memory_space<vmem>>, vector<1x2x32xf32>
    %130 = vector.shape_cast %129 : vector<1x2x32xf32> to vector<2x32xf32>
    %131 = vector.shape_cast %103 : vector<2x32xf32> to vector<1x2x32xf32>
    tpu.vector_store %arg4[%c1_33, %c0_34, %c0_35], %131 {strides = array<i32>} : memref<16x2x64xf32, #tpu.memory_space<vmem>>, vector<1x2x32xf32>,
    %c14_36 = arith.constant 14 : index
    %c0_37 = arith.constant 0 : index
    %c32_38 = arith.constant 32 : index
    %132 = vector.load %arg4[%c14_36, %c0_37, %c32_38] : memref<16x2x64xf32, #tpu.memory_space<vmem>>, vector<1x2x32xf32>
    %133 = vector.shape_cast %132 : vector<1x2x32xf32> to vector<2x32xf32>
    %134 = vector.shape_cast %128 : vector<2x32xf32> to vector<1x2x32xf32>
    tpu.vector_store %arg4[%c14_36, %c0_37, %c32_38], %134 {strides = array<i32>} : memref<16x2x64xf32, #tpu.memory_space<vmem>>, vector<1x2x32xf32>,
    %c2 = arith.constant 2 : index
    %c0_39 = arith.constant 0 : index
    %c0_40 = arith.constant 0 : index
    %135 = vector.load %arg0[%c2, %c0_39, %c0_40] : memref<16x2x128xf32, #tpu.memory_space<vmem>>, vector<1x2x128xf32>
    %136 = vector.shape_cast %135 : vector<1x2x128xf32> to vector<2x128xf32>
    %137 = arith.truncf %103 : vector<2x32xf32> to vector<2x32xbf16>
    %cst_41 = arith.constant dense<0.000000e+00> : vector<2x128xf32>
    %138 = tpu.matmul %137, %0, %cst_41 {dimension_numbers = #tpu.dot_dimension_numbers<[1], [0], [0], [1], [0, 0, 1, 1], [], []>} : vector<2x32xbf16>, vector<32x128xbf16>, vector<2x128xf32> -> vector<2x128xf32>
    %139 = arith.addf %136, %138 : vector<2x128xf32>
    %c13 = arith.constant 13 : index
    %c0_42 = arith.constant 0 : index
    %c0_43 = arith.constant 0 : index
    %140 = vector.load %arg1[%c13, %c0_42, %c0_43] : memref<16x2x128xf32, #tpu.memory_space<vmem>>, vector<1x2x128xf32>
    %141 = vector.shape_cast %140 : vector<1x2x128xf32> to vector<2x128xf32>
    %142 = arith.truncf %128 : vector<2x32xf32> to vector<2x32xbf16>
    %cst_44 = arith.constant dense<0.000000e+00> : vector<2x128xf32>
    %143 = tpu.matmul %142, %1, %cst_44 {dimension_numbers = #tpu.dot_dimension_numbers<[1], [0], [0], [1], [0, 0, 1, 1], [], []>} : vector<2x32xbf16>, vector<32x128xbf16>, vector<2x128xf32> -> vector<2x128xf32>
    %144 = arith.addf %141, %143 : vector<2x128xf32>
    %145 = vector.extract_strided_slice %139 {offsets = [0, 0], sizes = [2, 32], strides = [1, 1]} : vector<2x128xf32> to vector<2x32xf32>
    %146 = arith.negf %145 : vector<2x32xf32>
    %147 = math.exp %146 : vector<2x32xf32>
    %cst_45 = arith.constant 1.000000e+00 : f32
    %148 = vector.broadcast %cst_45 : f32 to vector<2x32xf32>
    %149 = arith.addf %148, %147 : vector<2x32xf32>
    %150 = arith.divf %148, %149 : vector<2x32xf32>
    %151 = vector.extract_strided_slice %139 {offsets = [0, 32], sizes = [2, 32], strides = [1, 1]} : vector<2x128xf32> to vector<2x32xf32>
    %152 = arith.negf %151 : vector<2x32xf32>
    %153 = math.exp %152 : vector<2x32xf32>
    %cst_46 = arith.constant 1.000000e+00 : f32
    %154 = vector.broadcast %cst_46 : f32 to vector<2x32xf32>
    %155 = arith.addf %154, %153 : vector<2x32xf32>
    %156 = arith.divf %154, %155 : vector<2x32xf32>
    %157 = vector.extract_strided_slice %139 {offsets = [0, 64], sizes = [2, 32], strides = [1, 1]} : vector<2x128xf32> to vector<2x32xf32>
    %158 = math.tanh %157 : vector<2x32xf32>
    %159 = vector.extract_strided_slice %139 {offsets = [0, 96], sizes = [2, 32], strides = [1, 1]} : vector<2x128xf32> to vector<2x32xf32>
    %160 = arith.negf %159 : vector<2x32xf32>
    %161 = math.exp %160 : vector<2x32xf32>
    %cst_47 = arith.constant 1.000000e+00 : f32
    %162 = vector.broadcast %cst_47 : f32 to vector<2x32xf32>
    %163 = arith.addf %162, %161 : vector<2x32xf32>
    %164 = arith.divf %162, %163 : vector<2x32xf32>
    %165 = arith.mulf %156, %101 : vector<2x32xf32>
    %166 = arith.mulf %150, %158 : vector<2x32xf32>
    %167 = arith.addf %165, %166 : vector<2x32xf32>
    %168 = math.tanh %167 : vector<2x32xf32>
    %169 = arith.mulf %164, %168 : vector<2x32xf32>
    %170 = vector.extract_strided_slice %144 {offsets = [0, 0], sizes = [2, 32], strides = [1, 1]} : vector<2x128xf32> to vector<2x32xf32>
    %171 = arith.negf %170 : vector<2x32xf32>
    %172 = math.exp %171 : vector<2x32xf32>
    %cst_48 = arith.constant 1.000000e+00 : f32
    %173 = vector.broadcast %cst_48 : f32 to vector<2x32xf32>
    %174 = arith.addf %173, %172 : vector<2x32xf32>
    %175 = arith.divf %173, %174 : vector<2x32xf32>
    %176 = vector.extract_strided_slice %144 {offsets = [0, 32], sizes = [2, 32], strides = [1, 1]} : vector<2x128xf32> to vector<2x32xf32>
    %177 = arith.negf %176 : vector<2x32xf32>
    %178 = math.exp %177 : vector<2x32xf32>
    %cst_49 = arith.constant 1.000000e+00 : f32
    %179 = vector.broadcast %cst_49 : f32 to vector<2x32xf32>
    %180 = arith.addf %179, %178 : vector<2x32xf32>
    %181 = arith.divf %179, %180 : vector<2x32xf32>
    %182 = vector.extract_strided_slice %144 {offsets = [0, 64], sizes = [2, 32], strides = [1, 1]} : vector<2x128xf32> to vector<2x32xf32>
    %183 = math.tanh %182 : vector<2x32xf32>
    %184 = vector.extract_strided_slice %144 {offsets = [0, 96], sizes = [2, 32], strides = [1, 1]} : vector<2x128xf32> to vector<2x32xf32>
    %185 = arith.negf %184 : vector<2x32xf32>
    %186 = math.exp %185 : vector<2x32xf32>
    %cst_50 = arith.constant 1.000000e+00 : f32
    %187 = vector.broadcast %cst_50 : f32 to vector<2x32xf32>
    %188 = arith.addf %187, %186 : vector<2x32xf32>
    %189 = arith.divf %187, %188 : vector<2x32xf32>
    %190 = arith.mulf %181, %126 : vector<2x32xf32>
    %191 = arith.mulf %175, %183 : vector<2x32xf32>
    %192 = arith.addf %190, %191 : vector<2x32xf32>
    %193 = math.tanh %192 : vector<2x32xf32>
    %194 = arith.mulf %189, %193 : vector<2x32xf32>
    %c2_51 = arith.constant 2 : index
    %c0_52 = arith.constant 0 : index
    %c0_53 = arith.constant 0 : index
    %195 = vector.load %arg4[%c2_51, %c0_52, %c0_53] : memref<16x2x64xf32, #tpu.memory_space<vmem>>, vector<1x2x32xf32>
    %196 = vector.shape_cast %195 : vector<1x2x32xf32> to vector<2x32xf32>
    %197 = vector.shape_cast %169 : vector<2x32xf32> to vector<1x2x32xf32>
    tpu.vector_store %arg4[%c2_51, %c0_52, %c0_53], %197 {strides = array<i32>} : memref<16x2x64xf32, #tpu.memory_space<vmem>>, vector<1x2x32xf32>,
    %c13_54 = arith.constant 13 : index
    %c0_55 = arith.constant 0 : index
    %c32_56 = arith.constant 32 : index
    %198 = vector.load %arg4[%c13_54, %c0_55, %c32_56] : memref<16x2x64xf32, #tpu.memory_space<vmem>>, vector<1x2x32xf32>
    %199 = vector.shape_cast %198 : vector<1x2x32xf32> to vector<2x32xf32>
    %200 = vector.shape_cast %194 : vector<2x32xf32> to vector<1x2x32xf32>
    tpu.vector_store %arg4[%c13_54, %c0_55, %c32_56], %200 {strides = array<i32>} : memref<16x2x64xf32, #tpu.memory_space<vmem>>, vector<1x2x32xf32>,
    %c3 = arith.constant 3 : index
    %c0_57 = arith.constant 0 : index
    %c0_58 = arith.constant 0 : index
    %201 = vector.load %arg0[%c3, %c0_57, %c0_58] : memref<16x2x128xf32, #tpu.memory_space<vmem>>, vector<1x2x128xf32>
    %202 = vector.shape_cast %201 : vector<1x2x128xf32> to vector<2x128xf32>
    %203 = arith.truncf %169 : vector<2x32xf32> to vector<2x32xbf16>
    %cst_59 = arith.constant dense<0.000000e+00> : vector<2x128xf32>
    %204 = tpu.matmul %203, %0, %cst_59 {dimension_numbers = #tpu.dot_dimension_numbers<[1], [0], [0], [1], [0, 0, 1, 1], [], []>} : vector<2x32xbf16>, vector<32x128xbf16>, vector<2x128xf32> -> vector<2x128xf32>
    %205 = arith.addf %202, %204 : vector<2x128xf32>
    %c12 = arith.constant 12 : index
    %c0_60 = arith.constant 0 : index
    %c0_61 = arith.constant 0 : index
    %206 = vector.load %arg1[%c12, %c0_60, %c0_61] : memref<16x2x128xf32, #tpu.memory_space<vmem>>, vector<1x2x128xf32>
    %207 = vector.shape_cast %206 : vector<1x2x128xf32> to vector<2x128xf32>
    %208 = arith.truncf %194 : vector<2x32xf32> to vector<2x32xbf16>
    %cst_62 = arith.constant dense<0.000000e+00> : vector<2x128xf32>
    %209 = tpu.matmul %208, %1, %cst_62 {dimension_numbers = #tpu.dot_dimension_numbers<[1], [0], [0], [1], [0, 0, 1, 1], [], []>} : vector<2x32xbf16>, vector<32x128xbf16>, vector<2x128xf32> -> vector<2x128xf32>
    %210 = arith.addf %207, %209 : vector<2x128xf32>
    %211 = vector.extract_strided_slice %205 {offsets = [0, 0], sizes = [2, 32], strides = [1, 1]} : vector<2x128xf32> to vector<2x32xf32>
    %212 = arith.negf %211 : vector<2x32xf32>
    %213 = math.exp %212 : vector<2x32xf32>
    %cst_63 = arith.constant 1.000000e+00 : f32
    %214 = vector.broadcast %cst_63 : f32 to vector<2x32xf32>
    %215 = arith.addf %214, %213 : vector<2x32xf32>
    %216 = arith.divf %214, %215 : vector<2x32xf32>
    %217 = vector.extract_strided_slice %205 {offsets = [0, 32], sizes = [2, 32], strides = [1, 1]} : vector<2x128xf32> to vector<2x32xf32>
    %218 = arith.negf %217 : vector<2x32xf32>
    %219 = math.exp %218 : vector<2x32xf32>
    %cst_64 = arith.constant 1.000000e+00 : f32
    %220 = vector.broadcast %cst_64 : f32 to vector<2x32xf32>
    %221 = arith.addf %220, %219 : vector<2x32xf32>
    %222 = arith.divf %220, %221 : vector<2x32xf32>
    %223 = vector.extract_strided_slice %205 {offsets = [0, 64], sizes = [2, 32], strides = [1, 1]} : vector<2x128xf32> to vector<2x32xf32>
    %224 = math.tanh %223 : vector<2x32xf32>
    %225 = vector.extract_strided_slice %205 {offsets = [0, 96], sizes = [2, 32], strides = [1, 1]} : vector<2x128xf32> to vector<2x32xf32>
    %226 = arith.negf %225 : vector<2x32xf32>
    %227 = math.exp %226 : vector<2x32xf32>
    %cst_65 = arith.constant 1.000000e+00 : f32
    %228 = vector.broadcast %cst_65 : f32 to vector<2x32xf32>
    %229 = arith.addf %228, %227 : vector<2x32xf32>
    %230 = arith.divf %228, %229 : vector<2x32xf32>
    %231 = arith.mulf %222, %167 : vector<2x32xf32>
    %232 = arith.mulf %216, %224 : vector<2x32xf32>
    %233 = arith.addf %231, %232 : vector<2x32xf32>
    %234 = math.tanh %233 : vector<2x32xf32>
    %235 = arith.mulf %230, %234 : vector<2x32xf32>
    %236 = vector.extract_strided_slice %210 {offsets = [0, 0], sizes = [2, 32], strides = [1, 1]} : vector<2x128xf32> to vector<2x32xf32>
    %237 = arith.negf %236 : vector<2x32xf32>
    %238 = math.exp %237 : vector<2x32xf32>
    %cst_66 = arith.constant 1.000000e+00 : f32
    %239 = vector.broadcast %cst_66 : f32 to vector<2x32xf32>
    %240 = arith.addf %239, %238 : vector<2x32xf32>
    %241 = arith.divf %239, %240 : vector<2x32xf32>
    %242 = vector.extract_strided_slice %210 {offsets = [0, 32], sizes = [2, 32], strides = [1, 1]} : vector<2x128xf32> to vector<2x32xf32>
    %243 = arith.negf %242 : vector<2x32xf32>
    %244 = math.exp %243 : vector<2x32xf32>
    %cst_67 = arith.constant 1.000000e+00 : f32
    %245 = vector.broadcast %cst_67 : f32 to vector<2x32xf32>
    %246 = arith.addf %245, %244 : vector<2x32xf32>
    %247 = arith.divf %245, %246 : vector<2x32xf32>
    %248 = vector.extract_strided_slice %210 {offsets = [0, 64], sizes = [2, 32], strides = [1, 1]} : vector<2x128xf32> to vector<2x32xf32>
    %249 = math.tanh %248 : vector<2x32xf32>
    %250 = vector.extract_strided_slice %210 {offsets = [0, 96], sizes = [2, 32], strides = [1, 1]} : vector<2x128xf32> to vector<2x32xf32>
    %251 = arith.negf %250 : vector<2x32xf32>
    %252 = math.exp %251 : vector<2x32xf32>
    %cst_68 = arith.constant 1.000000e+00 : f32
    %253 = vector.broadcast %cst_68 : f32 to vector<2x32xf32>
    %254 = arith.addf %253, %252 : vector<2x32xf32>
    %255 = arith.divf %253, %254 : vector<2x32xf32>
    %256 = arith.mulf %247, %192 : vector<2x32xf32>
    %257 = arith.mulf %241, %249 : vector<2x32xf32>
    %258 = arith.addf %256, %257 : vector<2x32xf32>
    %259 = math.tanh %258 : vector<2x32xf32>
    %260 = arith.mulf %255, %259 : vector<2x32xf32>
    %c3_69 = arith.constant 3 : index
    %c0_70 = arith.constant 0 : index
    %c0_71 = arith.constant 0 : index
    %261 = vector.load %arg4[%c3_69, %c0_70, %c0_71] : memref<16x2x64xf32, #tpu.memory_space<vmem>>, vector<1x2x32xf32>
    %262 = vector.shape_cast %261 : vector<1x2x32xf32> to vector<2x32xf32>
    %263 = vector.shape_cast %235 : vector<2x32xf32> to vector<1x2x32xf32>
    tpu.vector_store %arg4[%c3_69, %c0_70, %c0_71], %263 {strides = array<i32>} : memref<16x2x64xf32, #tpu.memory_space<vmem>>, vector<1x2x32xf32>,
    %c12_72 = arith.constant 12 : index
    %c0_73 = arith.constant 0 : index
    %c32_74 = arith.constant 32 : index
    %264 = vector.load %arg4[%c12_72, %c0_73, %c32_74] : memref<16x2x64xf32, #tpu.memory_space<vmem>>, vector<1x2x32xf32>
    %265 = vector.shape_cast %264 : vector<1x2x32xf32> to vector<2x32xf32>
    %266 = vector.shape_cast %260 : vector<2x32xf32> to vector<1x2x32xf32>
    tpu.vector_store %arg4[%c12_72, %c0_73, %c32_74], %266 {strides = array<i32>} : memref<16x2x64xf32, #tpu.memory_space<vmem>>, vector<1x2x32xf32>,
    %c4 = arith.constant 4 : index
    %c0_75 = arith.constant 0 : index
    %c0_76 = arith.constant 0 : index
    %267 = vector.load %arg0[%c4, %c0_75, %c0_76] : memref<16x2x128xf32, #tpu.memory_space<vmem>>, vector<1x2x128xf32>
    %268 = vector.shape_cast %267 : vector<1x2x128xf32> to vector<2x128xf32>
    %269 = arith.truncf %235 : vector<2x32xf32> to vector<2x32xbf16>
    %cst_77 = arith.constant dense<0.000000e+00> : vector<2x128xf32>
    %270 = tpu.matmul %269, %0, %cst_77 {dimension_numbers = #tpu.dot_dimension_numbers<[1], [0], [0], [1], [0, 0, 1, 1], [], []>} : vector<2x32xbf16>, vector<32x128xbf16>, vector<2x128xf32> -> vector<2x128xf32>
    %271 = arith.addf %268, %270 : vector<2x128xf32>
    %c11 = arith.constant 11 : index
    %c0_78 = arith.constant 0 : index
    %c0_79 = arith.constant 0 : index
    %272 = vector.load %arg1[%c11, %c0_78, %c0_79] : memref<16x2x128xf32, #tpu.memory_space<vmem>>, vector<1x2x128xf32>
    %273 = vector.shape_cast %272 : vector<1x2x128xf32> to vector<2x128xf32>
    %274 = arith.truncf %260 : vector<2x32xf32> to vector<2x32xbf16>
    %cst_80 = arith.constant dense<0.000000e+00> : vector<2x128xf32>
    %275 = tpu.matmul %274, %1, %cst_80 {dimension_numbers = #tpu.dot_dimension_numbers<[1], [0], [0], [1], [0, 0, 1, 1], [], []>} : vector<2x32xbf16>, vector<32x128xbf16>, vector<2x128xf32> -> vector<2x128xf32>
    %276 = arith.addf %273, %275 : vector<2x128xf32>
    %277 = vector.extract_strided_slice %271 {offsets = [0, 0], sizes = [2, 32], strides = [1, 1]} : vector<2x128xf32> to vector<2x32xf32>
    %278 = arith.negf %277 : vector<2x32xf32>
    %279 = math.exp %278 : vector<2x32xf32>
    %cst_81 = arith.constant 1.000000e+00 : f32
    %280 = vector.broadcast %cst_81 : f32 to vector<2x32xf32>
    %281 = arith.addf %280, %279 : vector<2x32xf32>
    %282 = arith.divf %280, %281 : vector<2x32xf32>
    %283 = vector.extract_strided_slice %271 {offsets = [0, 32], sizes = [2, 32], strides = [1, 1]} : vector<2x128xf32> to vector<2x32xf32>
    %284 = arith.negf %283 : vector<2x32xf32>
    %285 = math.exp %284 : vector<2x32xf32>
    %cst_82 = arith.constant 1.000000e+00 : f32
    %286 = vector.broadcast %cst_82 : f32 to vector<2x32xf32>
    %287 = arith.addf %286, %285 : vector<2x32xf32>
    %288 = arith.divf %286, %287 : vector<2x32xf32>
    %289 = vector.extract_strided_slice %271 {offsets = [0, 64], sizes = [2, 32], strides = [1, 1]} : vector<2x128xf32> to vector<2x32xf32>
    %290 = math.tanh %289 : vector<2x32xf32>
    %291 = vector.extract_strided_slice %271 {offsets = [0, 96], sizes = [2, 32], strides = [1, 1]} : vector<2x128xf32> to vector<2x32xf32>
    %292 = arith.negf %291 : vector<2x32xf32>
    %293 = math.exp %292 : vector<2x32xf32>
    %cst_83 = arith.constant 1.000000e+00 : f32
    %294 = vector.broadcast %cst_83 : f32 to vector<2x32xf32>
    %295 = arith.addf %294, %293 : vector<2x32xf32>
    %296 = arith.divf %294, %295 : vector<2x32xf32>
    %297 = arith.mulf %288, %233 : vector<2x32xf32>
    %298 = arith.mulf %282, %290 : vector<2x32xf32>
    %299 = arith.addf %297, %298 : vector<2x32xf32>
    %300 = math.tanh %299 : vector<2x32xf32>
    %301 = arith.mulf %296, %300 : vector<2x32xf32>
    %302 = vector.extract_strided_slice %276 {offsets = [0, 0], sizes = [2, 32], strides = [1, 1]} : vector<2x128xf32> to vector<2x32xf32>
    %303 = arith.negf %302 : vector<2x32xf32>
    %304 = math.exp %303 : vector<2x32xf32>
    %cst_84 = arith.constant 1.000000e+00 : f32
    %305 = vector.broadcast %cst_84 : f32 to vector<2x32xf32>
    %306 = arith.addf %305, %304 : vector<2x32xf32>
    %307 = arith.divf %305, %306 : vector<2x32xf32>
    %308 = vector.extract_strided_slice %276 {offsets = [0, 32], sizes = [2, 32], strides = [1, 1]} : vector<2x128xf32> to vector<2x32xf32>
    %309 = arith.negf %308 : vector<2x32xf32>
    %310 = math.exp %309 : vector<2x32xf32>
    %cst_85 = arith.constant 1.000000e+00 : f32
    %311 = vector.broadcast %cst_85 : f32 to vector<2x32xf32>
    %312 = arith.addf %311, %310 : vector<2x32xf32>
    %313 = arith.divf %311, %312 : vector<2x32xf32>
    %314 = vector.extract_strided_slice %276 {offsets = [0, 64], sizes = [2, 32], strides = [1, 1]} : vector<2x128xf32> to vector<2x32xf32>
    %315 = math.tanh %314 : vector<2x32xf32>
    %316 = vector.extract_strided_slice %276 {offsets = [0, 96], sizes = [2, 32], strides = [1, 1]} : vector<2x128xf32> to vector<2x32xf32>
    %317 = arith.negf %316 : vector<2x32xf32>
    %318 = math.exp %317 : vector<2x32xf32>
    %cst_86 = arith.constant 1.000000e+00 : f32
    %319 = vector.broadcast %cst_86 : f32 to vector<2x32xf32>
    %320 = arith.addf %319, %318 : vector<2x32xf32>
    %321 = arith.divf %319, %320 : vector<2x32xf32>
    %322 = arith.mulf %313, %258 : vector<2x32xf32>
    %323 = arith.mulf %307, %315 : vector<2x32xf32>
    %324 = arith.addf %322, %323 : vector<2x32xf32>
    %325 = math.tanh %324 : vector<2x32xf32>
    %326 = arith.mulf %321, %325 : vector<2x32xf32>
    %c4_87 = arith.constant 4 : index
    %c0_88 = arith.constant 0 : index
    %c0_89 = arith.constant 0 : index
    %327 = vector.load %arg4[%c4_87, %c0_88, %c0_89] : memref<16x2x64xf32, #tpu.memory_space<vmem>>, vector<1x2x32xf32>
    %328 = vector.shape_cast %327 : vector<1x2x32xf32> to vector<2x32xf32>
    %329 = vector.shape_cast %301 : vector<2x32xf32> to vector<1x2x32xf32>
    tpu.vector_store %arg4[%c4_87, %c0_88, %c0_89], %329 {strides = array<i32>} : memref<16x2x64xf32, #tpu.memory_space<vmem>>, vector<1x2x32xf32>,
    %c11_90 = arith.constant 11 : index
    %c0_91 = arith.constant 0 : index
    %c32_92 = arith.constant 32 : index
    %330 = vector.load %arg4[%c11_90, %c0_91, %c32_92] : memref<16x2x64xf32, #tpu.memory_space<vmem>>, vector<1x2x32xf32>
    %331 = vector.shape_cast %330 : vector<1x2x32xf32> to vector<2x32xf32>
    %332 = vector.shape_cast %326 : vector<2x32xf32> to vector<1x2x32xf32>
    tpu.vector_store %arg4[%c11_90, %c0_91, %c32_92], %332 {strides = array<i32>} : memref<16x2x64xf32, #tpu.memory_space<vmem>>, vector<1x2x32xf32>,
    %c5 = arith.constant 5 : index
    %c0_93 = arith.constant 0 : index
    %c0_94 = arith.constant 0 : index
    %333 = vector.load %arg0[%c5, %c0_93, %c0_94] : memref<16x2x128xf32, #tpu.memory_space<vmem>>, vector<1x2x128xf32>
    %334 = vector.shape_cast %333 : vector<1x2x128xf32> to vector<2x128xf32>
    %335 = arith.truncf %301 : vector<2x32xf32> to vector<2x32xbf16>
    %cst_95 = arith.constant dense<0.000000e+00> : vector<2x128xf32>
    %336 = tpu.matmul %335, %0, %cst_95 {dimension_numbers = #tpu.dot_dimension_numbers<[1], [0], [0], [1], [0, 0, 1, 1], [], []>} : vector<2x32xbf16>, vector<32x128xbf16>, vector<2x128xf32> -> vector<2x128xf32>
    %337 = arith.addf %334, %336 : vector<2x128xf32>
    %c10 = arith.constant 10 : index
    %c0_96 = arith.constant 0 : index
    %c0_97 = arith.constant 0 : index
    %338 = vector.load %arg1[%c10, %c0_96, %c0_97] : memref<16x2x128xf32, #tpu.memory_space<vmem>>, vector<1x2x128xf32>
    %339 = vector.shape_cast %338 : vector<1x2x128xf32> to vector<2x128xf32>
    %340 = arith.truncf %326 : vector<2x32xf32> to vector<2x32xbf16>
    %cst_98 = arith.constant dense<0.000000e+00> : vector<2x128xf32>
    %341 = tpu.matmul %340, %1, %cst_98 {dimension_numbers = #tpu.dot_dimension_numbers<[1], [0], [0], [1], [0, 0, 1, 1], [], []>} : vector<2x32xbf16>, vector<32x128xbf16>, vector<2x128xf32> -> vector<2x128xf32>
    %342 = arith.addf %339, %341 : vector<2x128xf32>
    %343 = vector.extract_strided_slice %337 {offsets = [0, 0], sizes = [2, 32], strides = [1, 1]} : vector<2x128xf32> to vector<2x32xf32>
    %344 = arith.negf %343 : vector<2x32xf32>
    %345 = math.exp %344 : vector<2x32xf32>
    %cst_99 = arith.constant 1.000000e+00 : f32
    %346 = vector.broadcast %cst_99 : f32 to vector<2x32xf32>
    %347 = arith.addf %346, %345 : vector<2x32xf32>
    %348 = arith.divf %346, %347 : vector<2x32xf32>
    %349 = vector.extract_strided_slice %337 {offsets = [0, 32], sizes = [2, 32], strides = [1, 1]} : vector<2x128xf32> to vector<2x32xf32>
    %350 = arith.negf %349 : vector<2x32xf32>
    %351 = math.exp %350 : vector<2x32xf32>
    %cst_100 = arith.constant 1.000000e+00 : f32
    %352 = vector.broadcast %cst_100 : f32 to vector<2x32xf32>
    %353 = arith.addf %352, %351 : vector<2x32xf32>
    %354 = arith.divf %352, %353 : vector<2x32xf32>
    %355 = vector.extract_strided_slice %337 {offsets = [0, 64], sizes = [2, 32], strides = [1, 1]} : vector<2x128xf32> to vector<2x32xf32>
    %356 = math.tanh %355 : vector<2x32xf32>
    %357 = vector.extract_strided_slice %337 {offsets = [0, 96], sizes = [2, 32], strides = [1, 1]} : vector<2x128xf32> to vector<2x32xf32>
    %358 = arith.negf %357 : vector<2x32xf32>
    %359 = math.exp %358 : vector<2x32xf32>
    %cst_101 = arith.constant 1.000000e+00 : f32
    %360 = vector.broadcast %cst_101 : f32 to vector<2x32xf32>
    %361 = arith.addf %360, %359 : vector<2x32xf32>
    %362 = arith.divf %360, %361 : vector<2x32xf32>
    %363 = arith.mulf %354, %299 : vector<2x32xf32>
    %364 = arith.mulf %348, %356 : vector<2x32xf32>
    %365 = arith.addf %363, %364 : vector<2x32xf32>
    %366 = math.tanh %365 : vector<2x32xf32>
    %367 = arith.mulf %362, %366 : vector<2x32xf32>
    %368 = vector.extract_strided_slice %342 {offsets = [0, 0], sizes = [2, 32], strides = [1, 1]} : vector<2x128xf32> to vector<2x32xf32>
    %369 = arith.negf %368 : vector<2x32xf32>
    %370 = math.exp %369 : vector<2x32xf32>
    %cst_102 = arith.constant 1.000000e+00 : f32
    %371 = vector.broadcast %cst_102 : f32 to vector<2x32xf32>
    %372 = arith.addf %371, %370 : vector<2x32xf32>
    %373 = arith.divf %371, %372 : vector<2x32xf32>
    %374 = vector.extract_strided_slice %342 {offsets = [0, 32], sizes = [2, 32], strides = [1, 1]} : vector<2x128xf32> to vector<2x32xf32>
    %375 = arith.negf %374 : vector<2x32xf32>
    %376 = math.exp %375 : vector<2x32xf32>
    %cst_103 = arith.constant 1.000000e+00 : f32
    %377 = vector.broadcast %cst_103 : f32 to vector<2x32xf32>
    %378 = arith.addf %377, %376 : vector<2x32xf32>
    %379 = arith.divf %377, %378 : vector<2x32xf32>
    %380 = vector.extract_strided_slice %342 {offsets = [0, 64], sizes = [2, 32], strides = [1, 1]} : vector<2x128xf32> to vector<2x32xf32>
    %381 = math.tanh %380 : vector<2x32xf32>
    %382 = vector.extract_strided_slice %342 {offsets = [0, 96], sizes = [2, 32], strides = [1, 1]} : vector<2x128xf32> to vector<2x32xf32>
    %383 = arith.negf %382 : vector<2x32xf32>
    %384 = math.exp %383 : vector<2x32xf32>
    %cst_104 = arith.constant 1.000000e+00 : f32
    %385 = vector.broadcast %cst_104 : f32 to vector<2x32xf32>
    %386 = arith.addf %385, %384 : vector<2x32xf32>
    %387 = arith.divf %385, %386 : vector<2x32xf32>
    %388 = arith.mulf %379, %324 : vector<2x32xf32>
    %389 = arith.mulf %373, %381 : vector<2x32xf32>
    %390 = arith.addf %388, %389 : vector<2x32xf32>
    %391 = math.tanh %390 : vector<2x32xf32>
    %392 = arith.mulf %387, %391 : vector<2x32xf32>
    %c5_105 = arith.constant 5 : index
    %c0_106 = arith.constant 0 : index
    %c0_107 = arith.constant 0 : index
    %393 = vector.load %arg4[%c5_105, %c0_106, %c0_107] : memref<16x2x64xf32, #tpu.memory_space<vmem>>, vector<1x2x32xf32>
    %394 = vector.shape_cast %393 : vector<1x2x32xf32> to vector<2x32xf32>
    %395 = vector.shape_cast %367 : vector<2x32xf32> to vector<1x2x32xf32>
    tpu.vector_store %arg4[%c5_105, %c0_106, %c0_107], %395 {strides = array<i32>} : memref<16x2x64xf32, #tpu.memory_space<vmem>>, vector<1x2x32xf32>,
    %c10_108 = arith.constant 10 : index
    %c0_109 = arith.constant 0 : index
    %c32_110 = arith.constant 32 : index
    %396 = vector.load %arg4[%c10_108, %c0_109, %c32_110] : memref<16x2x64xf32, #tpu.memory_space<vmem>>, vector<1x2x32xf32>
    %397 = vector.shape_cast %396 : vector<1x2x32xf32> to vector<2x32xf32>
    %398 = vector.shape_cast %392 : vector<2x32xf32> to vector<1x2x32xf32>
    tpu.vector_store %arg4[%c10_108, %c0_109, %c32_110], %398 {strides = array<i32>} : memref<16x2x64xf32, #tpu.memory_space<vmem>>, vector<1x2x32xf32>,
    %c6 = arith.constant 6 : index
    %c0_111 = arith.constant 0 : index
    %c0_112 = arith.constant 0 : index
    %399 = vector.load %arg0[%c6, %c0_111, %c0_112] : memref<16x2x128xf32, #tpu.memory_space<vmem>>, vector<1x2x128xf32>
    %400 = vector.shape_cast %399 : vector<1x2x128xf32> to vector<2x128xf32>
    %401 = arith.truncf %367 : vector<2x32xf32> to vector<2x32xbf16>
    %cst_113 = arith.constant dense<0.000000e+00> : vector<2x128xf32>
    %402 = tpu.matmul %401, %0, %cst_113 {dimension_numbers = #tpu.dot_dimension_numbers<[1], [0], [0], [1], [0, 0, 1, 1], [], []>} : vector<2x32xbf16>, vector<32x128xbf16>, vector<2x128xf32> -> vector<2x128xf32>
    %403 = arith.addf %400, %402 : vector<2x128xf32>
    %c9 = arith.constant 9 : index
    %c0_114 = arith.constant 0 : index
    %c0_115 = arith.constant 0 : index
    %404 = vector.load %arg1[%c9, %c0_114, %c0_115] : memref<16x2x128xf32, #tpu.memory_space<vmem>>, vector<1x2x128xf32>
    %405 = vector.shape_cast %404 : vector<1x2x128xf32> to vector<2x128xf32>
    %406 = arith.truncf %392 : vector<2x32xf32> to vector<2x32xbf16>
    %cst_116 = arith.constant dense<0.000000e+00> : vector<2x128xf32>
    %407 = tpu.matmul %406, %1, %cst_116 {dimension_numbers = #tpu.dot_dimension_numbers<[1], [0], [0], [1], [0, 0, 1, 1], [], []>} : vector<2x32xbf16>, vector<32x128xbf16>, vector<2x128xf32> -> vector<2x128xf32>
    %408 = arith.addf %405, %407 : vector<2x128xf32>
    %409 = vector.extract_strided_slice %403 {offsets = [0, 0], sizes = [2, 32], strides = [1, 1]} : vector<2x128xf32> to vector<2x32xf32>
    %410 = arith.negf %409 : vector<2x32xf32>
    %411 = math.exp %410 : vector<2x32xf32>
    %cst_117 = arith.constant 1.000000e+00 : f32
    %412 = vector.broadcast %cst_117 : f32 to vector<2x32xf32>
    %413 = arith.addf %412, %411 : vector<2x32xf32>
    %414 = arith.divf %412, %413 : vector<2x32xf32>
    %415 = vector.extract_strided_slice %403 {offsets = [0, 32], sizes = [2, 32], strides = [1, 1]} : vector<2x128xf32> to vector<2x32xf32>
    %416 = arith.negf %415 : vector<2x32xf32>
    %417 = math.exp %416 : vector<2x32xf32>
    %cst_118 = arith.constant 1.000000e+00 : f32
    %418 = vector.broadcast %cst_118 : f32 to vector<2x32xf32>
    %419 = arith.addf %418, %417 : vector<2x32xf32>
    %420 = arith.divf %418, %419 : vector<2x32xf32>
    %421 = vector.extract_strided_slice %403 {offsets = [0, 64], sizes = [2, 32], strides = [1, 1]} : vector<2x128xf32> to vector<2x32xf32>
    %422 = math.tanh %421 : vector<2x32xf32>
    %423 = vector.extract_strided_slice %403 {offsets = [0, 96], sizes = [2, 32], strides = [1, 1]} : vector<2x128xf32> to vector<2x32xf32>
    %424 = arith.negf %423 : vector<2x32xf32>
    %425 = math.exp %424 : vector<2x32xf32>
    %cst_119 = arith.constant 1.000000e+00 : f32
    %426 = vector.broadcast %cst_119 : f32 to vector<2x32xf32>
    %427 = arith.addf %426, %425 : vector<2x32xf32>
    %428 = arith.divf %426, %427 : vector<2x32xf32>
    %429 = arith.mulf %420, %365 : vector<2x32xf32>
    %430 = arith.mulf %414, %422 : vector<2x32xf32>
    %431 = arith.addf %429, %430 : vector<2x32xf32>
    %432 = math.tanh %431 : vector<2x32xf32>
    %433 = arith.mulf %428, %432 : vector<2x32xf32>
    %434 = vector.extract_strided_slice %408 {offsets = [0, 0], sizes = [2, 32], strides = [1, 1]} : vector<2x128xf32> to vector<2x32xf32>
    %435 = arith.negf %434 : vector<2x32xf32>
    %436 = math.exp %435 : vector<2x32xf32>
    %cst_120 = arith.constant 1.000000e+00 : f32
    %437 = vector.broadcast %cst_120 : f32 to vector<2x32xf32>
    %438 = arith.addf %437, %436 : vector<2x32xf32>
    %439 = arith.divf %437, %438 : vector<2x32xf32>
    %440 = vector.extract_strided_slice %408 {offsets = [0, 32], sizes = [2, 32], strides = [1, 1]} : vector<2x128xf32> to vector<2x32xf32>
    %441 = arith.negf %440 : vector<2x32xf32>
    %442 = math.exp %441 : vector<2x32xf32>
    %cst_121 = arith.constant 1.000000e+00 : f32
    %443 = vector.broadcast %cst_121 : f32 to vector<2x32xf32>
    %444 = arith.addf %443, %442 : vector<2x32xf32>
    %445 = arith.divf %443, %444 : vector<2x32xf32>
    %446 = vector.extract_strided_slice %408 {offsets = [0, 64], sizes = [2, 32], strides = [1, 1]} : vector<2x128xf32> to vector<2x32xf32>
    %447 = math.tanh %446 : vector<2x32xf32>
    %448 = vector.extract_strided_slice %408 {offsets = [0, 96], sizes = [2, 32], strides = [1, 1]} : vector<2x128xf32> to vector<2x32xf32>
    %449 = arith.negf %448 : vector<2x32xf32>
    %450 = math.exp %449 : vector<2x32xf32>
    %cst_122 = arith.constant 1.000000e+00 : f32
    %451 = vector.broadcast %cst_122 : f32 to vector<2x32xf32>
    %452 = arith.addf %451, %450 : vector<2x32xf32>
    %453 = arith.divf %451, %452 : vector<2x32xf32>
    %454 = arith.mulf %445, %390 : vector<2x32xf32>
    %455 = arith.mulf %439, %447 : vector<2x32xf32>
    %456 = arith.addf %454, %455 : vector<2x32xf32>
    %457 = math.tanh %456 : vector<2x32xf32>
    %458 = arith.mulf %453, %457 : vector<2x32xf32>
    %c6_123 = arith.constant 6 : index
    %c0_124 = arith.constant 0 : index
    %c0_125 = arith.constant 0 : index
    %459 = vector.load %arg4[%c6_123, %c0_124, %c0_125] : memref<16x2x64xf32, #tpu.memory_space<vmem>>, vector<1x2x32xf32>
    %460 = vector.shape_cast %459 : vector<1x2x32xf32> to vector<2x32xf32>
    %461 = vector.shape_cast %433 : vector<2x32xf32> to vector<1x2x32xf32>
    tpu.vector_store %arg4[%c6_123, %c0_124, %c0_125], %461 {strides = array<i32>} : memref<16x2x64xf32, #tpu.memory_space<vmem>>, vector<1x2x32xf32>,
    %c9_126 = arith.constant 9 : index
    %c0_127 = arith.constant 0 : index
    %c32_128 = arith.constant 32 : index
    %462 = vector.load %arg4[%c9_126, %c0_127, %c32_128] : memref<16x2x64xf32, #tpu.memory_space<vmem>>, vector<1x2x32xf32>
    %463 = vector.shape_cast %462 : vector<1x2x32xf32> to vector<2x32xf32>
    %464 = vector.shape_cast %458 : vector<2x32xf32> to vector<1x2x32xf32>
    tpu.vector_store %arg4[%c9_126, %c0_127, %c32_128], %464 {strides = array<i32>} : memref<16x2x64xf32, #tpu.memory_space<vmem>>, vector<1x2x32xf32>,
    %c7 = arith.constant 7 : index
    %c0_129 = arith.constant 0 : index
    %c0_130 = arith.constant 0 : index
    %465 = vector.load %arg0[%c7, %c0_129, %c0_130] : memref<16x2x128xf32, #tpu.memory_space<vmem>>, vector<1x2x128xf32>
    %466 = vector.shape_cast %465 : vector<1x2x128xf32> to vector<2x128xf32>
    %467 = arith.truncf %433 : vector<2x32xf32> to vector<2x32xbf16>
    %cst_131 = arith.constant dense<0.000000e+00> : vector<2x128xf32>
    %468 = tpu.matmul %467, %0, %cst_131 {dimension_numbers = #tpu.dot_dimension_numbers<[1], [0], [0], [1], [0, 0, 1, 1], [], []>} : vector<2x32xbf16>, vector<32x128xbf16>, vector<2x128xf32> -> vector<2x128xf32>
    %469 = arith.addf %466, %468 : vector<2x128xf32>
    %c8 = arith.constant 8 : index
    %c0_132 = arith.constant 0 : index
    %c0_133 = arith.constant 0 : index
    %470 = vector.load %arg1[%c8, %c0_132, %c0_133] : memref<16x2x128xf32, #tpu.memory_space<vmem>>, vector<1x2x128xf32>
    %471 = vector.shape_cast %470 : vector<1x2x128xf32> to vector<2x128xf32>
    %472 = arith.truncf %458 : vector<2x32xf32> to vector<2x32xbf16>
    %cst_134 = arith.constant dense<0.000000e+00> : vector<2x128xf32>
    %473 = tpu.matmul %472, %1, %cst_134 {dimension_numbers = #tpu.dot_dimension_numbers<[1], [0], [0], [1], [0, 0, 1, 1], [], []>} : vector<2x32xbf16>, vector<32x128xbf16>, vector<2x128xf32> -> vector<2x128xf32>
    %474 = arith.addf %471, %473 : vector<2x128xf32>
    %475 = vector.extract_strided_slice %469 {offsets = [0, 0], sizes = [2, 32], strides = [1, 1]} : vector<2x128xf32> to vector<2x32xf32>
    %476 = arith.negf %475 : vector<2x32xf32>
    %477 = math.exp %476 : vector<2x32xf32>
    %cst_135 = arith.constant 1.000000e+00 : f32
    %478 = vector.broadcast %cst_135 : f32 to vector<2x32xf32>
    %479 = arith.addf %478, %477 : vector<2x32xf32>
    %480 = arith.divf %478, %479 : vector<2x32xf32>
    %481 = vector.extract_strided_slice %469 {offsets = [0, 32], sizes = [2, 32], strides = [1, 1]} : vector<2x128xf32> to vector<2x32xf32>
    %482 = arith.negf %481 : vector<2x32xf32>
    %483 = math.exp %482 : vector<2x32xf32>
    %cst_136 = arith.constant 1.000000e+00 : f32
    %484 = vector.broadcast %cst_136 : f32 to vector<2x32xf32>
    %485 = arith.addf %484, %483 : vector<2x32xf32>
    %486 = arith.divf %484, %485 : vector<2x32xf32>
    %487 = vector.extract_strided_slice %469 {offsets = [0, 64], sizes = [2, 32], strides = [1, 1]} : vector<2x128xf32> to vector<2x32xf32>
    %488 = math.tanh %487 : vector<2x32xf32>
    %489 = vector.extract_strided_slice %469 {offsets = [0, 96], sizes = [2, 32], strides = [1, 1]} : vector<2x128xf32> to vector<2x32xf32>
    %490 = arith.negf %489 : vector<2x32xf32>
    %491 = math.exp %490 : vector<2x32xf32>
    %cst_137 = arith.constant 1.000000e+00 : f32
    %492 = vector.broadcast %cst_137 : f32 to vector<2x32xf32>
    %493 = arith.addf %492, %491 : vector<2x32xf32>
    %494 = arith.divf %492, %493 : vector<2x32xf32>
    %495 = arith.mulf %486, %431 : vector<2x32xf32>
    %496 = arith.mulf %480, %488 : vector<2x32xf32>
    %497 = arith.addf %495, %496 : vector<2x32xf32>
    %498 = math.tanh %497 : vector<2x32xf32>
    %499 = arith.mulf %494, %498 : vector<2x32xf32>
    %500 = vector.extract_strided_slice %474 {offsets = [0, 0], sizes = [2, 32], strides = [1, 1]} : vector<2x128xf32> to vector<2x32xf32>
    %501 = arith.negf %500 : vector<2x32xf32>
    %502 = math.exp %501 : vector<2x32xf32>
    %cst_138 = arith.constant 1.000000e+00 : f32
    %503 = vector.broadcast %cst_138 : f32 to vector<2x32xf32>
    %504 = arith.addf %503, %502 : vector<2x32xf32>
    %505 = arith.divf %503, %504 : vector<2x32xf32>
    %506 = vector.extract_strided_slice %474 {offsets = [0, 32], sizes = [2, 32], strides = [1, 1]} : vector<2x128xf32> to vector<2x32xf32>
    %507 = arith.negf %506 : vector<2x32xf32>
    %508 = math.exp %507 : vector<2x32xf32>
    %cst_139 = arith.constant 1.000000e+00 : f32
    %509 = vector.broadcast %cst_139 : f32 to vector<2x32xf32>
    %510 = arith.addf %509, %508 : vector<2x32xf32>
    %511 = arith.divf %509, %510 : vector<2x32xf32>
    %512 = vector.extract_strided_slice %474 {offsets = [0, 64], sizes = [2, 32], strides = [1, 1]} : vector<2x128xf32> to vector<2x32xf32>
    %513 = math.tanh %512 : vector<2x32xf32>
    %514 = vector.extract_strided_slice %474 {offsets = [0, 96], sizes = [2, 32], strides = [1, 1]} : vector<2x128xf32> to vector<2x32xf32>
    %515 = arith.negf %514 : vector<2x32xf32>
    %516 = math.exp %515 : vector<2x32xf32>
    %cst_140 = arith.constant 1.000000e+00 : f32
    %517 = vector.broadcast %cst_140 : f32 to vector<2x32xf32>
    %518 = arith.addf %517, %516 : vector<2x32xf32>
    %519 = arith.divf %517, %518 : vector<2x32xf32>
    %520 = arith.mulf %511, %456 : vector<2x32xf32>
    %521 = arith.mulf %505, %513 : vector<2x32xf32>
    %522 = arith.addf %520, %521 : vector<2x32xf32>
    %523 = math.tanh %522 : vector<2x32xf32>
    %524 = arith.mulf %519, %523 : vector<2x32xf32>
    %c7_141 = arith.constant 7 : index
    %c0_142 = arith.constant 0 : index
    %c0_143 = arith.constant 0 : index
    %525 = vector.load %arg4[%c7_141, %c0_142, %c0_143] : memref<16x2x64xf32, #tpu.memory_space<vmem>>, vector<1x2x32xf32>
    %526 = vector.shape_cast %525 : vector<1x2x32xf32> to vector<2x32xf32>
    %527 = vector.shape_cast %499 : vector<2x32xf32> to vector<1x2x32xf32>
    tpu.vector_store %arg4[%c7_141, %c0_142, %c0_143], %527 {strides = array<i32>} : memref<16x2x64xf32, #tpu.memory_space<vmem>>, vector<1x2x32xf32>,
    %c8_144 = arith.constant 8 : index
    %c0_145 = arith.constant 0 : index
    %c32_146 = arith.constant 32 : index
    %528 = vector.load %arg4[%c8_144, %c0_145, %c32_146] : memref<16x2x64xf32, #tpu.memory_space<vmem>>, vector<1x2x32xf32>
    %529 = vector.shape_cast %528 : vector<1x2x32xf32> to vector<2x32xf32>
    %530 = vector.shape_cast %524 : vector<2x32xf32> to vector<1x2x32xf32>
    tpu.vector_store %arg4[%c8_144, %c0_145, %c32_146], %530 {strides = array<i32>} : memref<16x2x64xf32, #tpu.memory_space<vmem>>, vector<1x2x32xf32>,
    %c8_147 = arith.constant 8 : index
    %c0_148 = arith.constant 0 : index
    %c0_149 = arith.constant 0 : index
    %531 = vector.load %arg0[%c8_147, %c0_148, %c0_149] : memref<16x2x128xf32, #tpu.memory_space<vmem>>, vector<1x2x128xf32>
    %532 = vector.shape_cast %531 : vector<1x2x128xf32> to vector<2x128xf32>
    %533 = arith.truncf %499 : vector<2x32xf32> to vector<2x32xbf16>
    %cst_150 = arith.constant dense<0.000000e+00> : vector<2x128xf32>
    %534 = tpu.matmul %533, %0, %cst_150 {dimension_numbers = #tpu.dot_dimension_numbers<[1], [0], [0], [1], [0, 0, 1, 1], [], []>} : vector<2x32xbf16>, vector<32x128xbf16>, vector<2x128xf32> -> vector<2x128xf32>
    %535 = arith.addf %532, %534 : vector<2x128xf32>
    %c7_151 = arith.constant 7 : index
    %c0_152 = arith.constant 0 : index
    %c0_153 = arith.constant 0 : index
    %536 = vector.load %arg1[%c7_151, %c0_152, %c0_153] : memref<16x2x128xf32, #tpu.memory_space<vmem>>, vector<1x2x128xf32>
    %537 = vector.shape_cast %536 : vector<1x2x128xf32> to vector<2x128xf32>
    %538 = arith.truncf %524 : vector<2x32xf32> to vector<2x32xbf16>
    %cst_154 = arith.constant dense<0.000000e+00> : vector<2x128xf32>
    %539 = tpu.matmul %538, %1, %cst_154 {dimension_numbers = #tpu.dot_dimension_numbers<[1], [0], [0], [1], [0, 0, 1, 1], [], []>} : vector<2x32xbf16>, vector<32x128xbf16>, vector<2x128xf32> -> vector<2x128xf32>
    %540 = arith.addf %537, %539 : vector<2x128xf32>
    %541 = vector.extract_strided_slice %535 {offsets = [0, 0], sizes = [2, 32], strides = [1, 1]} : vector<2x128xf32> to vector<2x32xf32>
    %542 = arith.negf %541 : vector<2x32xf32>
    %543 = math.exp %542 : vector<2x32xf32>
    %cst_155 = arith.constant 1.000000e+00 : f32
    %544 = vector.broadcast %cst_155 : f32 to vector<2x32xf32>
    %545 = arith.addf %544, %543 : vector<2x32xf32>
    %546 = arith.divf %544, %545 : vector<2x32xf32>
    %547 = vector.extract_strided_slice %535 {offsets = [0, 32], sizes = [2, 32], strides = [1, 1]} : vector<2x128xf32> to vector<2x32xf32>
    %548 = arith.negf %547 : vector<2x32xf32>
    %549 = math.exp %548 : vector<2x32xf32>
    %cst_156 = arith.constant 1.000000e+00 : f32
    %550 = vector.broadcast %cst_156 : f32 to vector<2x32xf32>
    %551 = arith.addf %550, %549 : vector<2x32xf32>
    %552 = arith.divf %550, %551 : vector<2x32xf32>
    %553 = vector.extract_strided_slice %535 {offsets = [0, 64], sizes = [2, 32], strides = [1, 1]} : vector<2x128xf32> to vector<2x32xf32>
    %554 = math.tanh %553 : vector<2x32xf32>
    %555 = vector.extract_strided_slice %535 {offsets = [0, 96], sizes = [2, 32], strides = [1, 1]} : vector<2x128xf32> to vector<2x32xf32>
    %556 = arith.negf %555 : vector<2x32xf32>
    %557 = math.exp %556 : vector<2x32xf32>
    %cst_157 = arith.constant 1.000000e+00 : f32
    %558 = vector.broadcast %cst_157 : f32 to vector<2x32xf32>
    %559 = arith.addf %558, %557 : vector<2x32xf32>
    %560 = arith.divf %558, %559 : vector<2x32xf32>
    %561 = arith.mulf %552, %497 : vector<2x32xf32>
    %562 = arith.mulf %546, %554 : vector<2x32xf32>
    %563 = arith.addf %561, %562 : vector<2x32xf32>
    %564 = math.tanh %563 : vector<2x32xf32>
    %565 = arith.mulf %560, %564 : vector<2x32xf32>
    %566 = vector.extract_strided_slice %540 {offsets = [0, 0], sizes = [2, 32], strides = [1, 1]} : vector<2x128xf32> to vector<2x32xf32>
    %567 = arith.negf %566 : vector<2x32xf32>
    %568 = math.exp %567 : vector<2x32xf32>
    %cst_158 = arith.constant 1.000000e+00 : f32
    %569 = vector.broadcast %cst_158 : f32 to vector<2x32xf32>
    %570 = arith.addf %569, %568 : vector<2x32xf32>
    %571 = arith.divf %569, %570 : vector<2x32xf32>
    %572 = vector.extract_strided_slice %540 {offsets = [0, 32], sizes = [2, 32], strides = [1, 1]} : vector<2x128xf32> to vector<2x32xf32>
    %573 = arith.negf %572 : vector<2x32xf32>
    %574 = math.exp %573 : vector<2x32xf32>
    %cst_159 = arith.constant 1.000000e+00 : f32
    %575 = vector.broadcast %cst_159 : f32 to vector<2x32xf32>
    %576 = arith.addf %575, %574 : vector<2x32xf32>
    %577 = arith.divf %575, %576 : vector<2x32xf32>
    %578 = vector.extract_strided_slice %540 {offsets = [0, 64], sizes = [2, 32], strides = [1, 1]} : vector<2x128xf32> to vector<2x32xf32>
    %579 = math.tanh %578 : vector<2x32xf32>
    %580 = vector.extract_strided_slice %540 {offsets = [0, 96], sizes = [2, 32], strides = [1, 1]} : vector<2x128xf32> to vector<2x32xf32>
    %581 = arith.negf %580 : vector<2x32xf32>
    %582 = math.exp %581 : vector<2x32xf32>
    %cst_160 = arith.constant 1.000000e+00 : f32
    %583 = vector.broadcast %cst_160 : f32 to vector<2x32xf32>
    %584 = arith.addf %583, %582 : vector<2x32xf32>
    %585 = arith.divf %583, %584 : vector<2x32xf32>
    %586 = arith.mulf %577, %522 : vector<2x32xf32>
    %587 = arith.mulf %571, %579 : vector<2x32xf32>
    %588 = arith.addf %586, %587 : vector<2x32xf32>
    %589 = math.tanh %588 : vector<2x32xf32>
    %590 = arith.mulf %585, %589 : vector<2x32xf32>
    %c8_161 = arith.constant 8 : index
    %c0_162 = arith.constant 0 : index
    %c0_163 = arith.constant 0 : index
    %591 = vector.load %arg4[%c8_161, %c0_162, %c0_163] : memref<16x2x64xf32, #tpu.memory_space<vmem>>, vector<1x2x32xf32>
    %592 = vector.shape_cast %591 : vector<1x2x32xf32> to vector<2x32xf32>
    %593 = vector.shape_cast %565 : vector<2x32xf32> to vector<1x2x32xf32>
    tpu.vector_store %arg4[%c8_161, %c0_162, %c0_163], %593 {strides = array<i32>} : memref<16x2x64xf32, #tpu.memory_space<vmem>>, vector<1x2x32xf32>,
    %c7_164 = arith.constant 7 : index
    %c0_165 = arith.constant 0 : index
    %c32_166 = arith.constant 32 : index
    %594 = vector.load %arg4[%c7_164, %c0_165, %c32_166] : memref<16x2x64xf32, #tpu.memory_space<vmem>>, vector<1x2x32xf32>
    %595 = vector.shape_cast %594 : vector<1x2x32xf32> to vector<2x32xf32>
    %596 = vector.shape_cast %590 : vector<2x32xf32> to vector<1x2x32xf32>
    tpu.vector_store %arg4[%c7_164, %c0_165, %c32_166], %596 {strides = array<i32>} : memref<16x2x64xf32, #tpu.memory_space<vmem>>, vector<1x2x32xf32>,
    %c9_167 = arith.constant 9 : index
    %c0_168 = arith.constant 0 : index
    %c0_169 = arith.constant 0 : index
    %597 = vector.load %arg0[%c9_167, %c0_168, %c0_169] : memref<16x2x128xf32, #tpu.memory_space<vmem>>, vector<1x2x128xf32>
    %598 = vector.shape_cast %597 : vector<1x2x128xf32> to vector<2x128xf32>
    %599 = arith.truncf %565 : vector<2x32xf32> to vector<2x32xbf16>
    %cst_170 = arith.constant dense<0.000000e+00> : vector<2x128xf32>
    %600 = tpu.matmul %599, %0, %cst_170 {dimension_numbers = #tpu.dot_dimension_numbers<[1], [0], [0], [1], [0, 0, 1, 1], [], []>} : vector<2x32xbf16>, vector<32x128xbf16>, vector<2x128xf32> -> vector<2x128xf32>
    %601 = arith.addf %598, %600 : vector<2x128xf32>
    %c6_171 = arith.constant 6 : index
    %c0_172 = arith.constant 0 : index
    %c0_173 = arith.constant 0 : index
    %602 = vector.load %arg1[%c6_171, %c0_172, %c0_173] : memref<16x2x128xf32, #tpu.memory_space<vmem>>, vector<1x2x128xf32>
    %603 = vector.shape_cast %602 : vector<1x2x128xf32> to vector<2x128xf32>
    %604 = arith.truncf %590 : vector<2x32xf32> to vector<2x32xbf16>
    %cst_174 = arith.constant dense<0.000000e+00> : vector<2x128xf32>
    %605 = tpu.matmul %604, %1, %cst_174 {dimension_numbers = #tpu.dot_dimension_numbers<[1], [0], [0], [1], [0, 0, 1, 1], [], []>} : vector<2x32xbf16>, vector<32x128xbf16>, vector<2x128xf32> -> vector<2x128xf32>
    %606 = arith.addf %603, %605 : vector<2x128xf32>
    %607 = vector.extract_strided_slice %601 {offsets = [0, 0], sizes = [2, 32], strides = [1, 1]} : vector<2x128xf32> to vector<2x32xf32>
    %608 = arith.negf %607 : vector<2x32xf32>
    %609 = math.exp %608 : vector<2x32xf32>
    %cst_175 = arith.constant 1.000000e+00 : f32
    %610 = vector.broadcast %cst_175 : f32 to vector<2x32xf32>
    %611 = arith.addf %610, %609 : vector<2x32xf32>
    %612 = arith.divf %610, %611 : vector<2x32xf32>
    %613 = vector.extract_strided_slice %601 {offsets = [0, 32], sizes = [2, 32], strides = [1, 1]} : vector<2x128xf32> to vector<2x32xf32>
    %614 = arith.negf %613 : vector<2x32xf32>
    %615 = math.exp %614 : vector<2x32xf32>
    %cst_176 = arith.constant 1.000000e+00 : f32
    %616 = vector.broadcast %cst_176 : f32 to vector<2x32xf32>
    %617 = arith.addf %616, %615 : vector<2x32xf32>
    %618 = arith.divf %616, %617 : vector<2x32xf32>
    %619 = vector.extract_strided_slice %601 {offsets = [0, 64], sizes = [2, 32], strides = [1, 1]} : vector<2x128xf32> to vector<2x32xf32>
    %620 = math.tanh %619 : vector<2x32xf32>
    %621 = vector.extract_strided_slice %601 {offsets = [0, 96], sizes = [2, 32], strides = [1, 1]} : vector<2x128xf32> to vector<2x32xf32>
    %622 = arith.negf %621 : vector<2x32xf32>
    %623 = math.exp %622 : vector<2x32xf32>
    %cst_177 = arith.constant 1.000000e+00 : f32
    %624 = vector.broadcast %cst_177 : f32 to vector<2x32xf32>
    %625 = arith.addf %624, %623 : vector<2x32xf32>
    %626 = arith.divf %624, %625 : vector<2x32xf32>
    %627 = arith.mulf %618, %563 : vector<2x32xf32>
    %628 = arith.mulf %612, %620 : vector<2x32xf32>
    %629 = arith.addf %627, %628 : vector<2x32xf32>
    %630 = math.tanh %629 : vector<2x32xf32>
    %631 = arith.mulf %626, %630 : vector<2x32xf32>
    %632 = vector.extract_strided_slice %606 {offsets = [0, 0], sizes = [2, 32], strides = [1, 1]} : vector<2x128xf32> to vector<2x32xf32>
    %633 = arith.negf %632 : vector<2x32xf32>
    %634 = math.exp %633 : vector<2x32xf32>
    %cst_178 = arith.constant 1.000000e+00 : f32
    %635 = vector.broadcast %cst_178 : f32 to vector<2x32xf32>
    %636 = arith.addf %635, %634 : vector<2x32xf32>
    %637 = arith.divf %635, %636 : vector<2x32xf32>
    %638 = vector.extract_strided_slice %606 {offsets = [0, 32], sizes = [2, 32], strides = [1, 1]} : vector<2x128xf32> to vector<2x32xf32>
    %639 = arith.negf %638 : vector<2x32xf32>
    %640 = math.exp %639 : vector<2x32xf32>
    %cst_179 = arith.constant 1.000000e+00 : f32
    %641 = vector.broadcast %cst_179 : f32 to vector<2x32xf32>
    %642 = arith.addf %641, %640 : vector<2x32xf32>
    %643 = arith.divf %641, %642 : vector<2x32xf32>
    %644 = vector.extract_strided_slice %606 {offsets = [0, 64], sizes = [2, 32], strides = [1, 1]} : vector<2x128xf32> to vector<2x32xf32>
    %645 = math.tanh %644 : vector<2x32xf32>
    %646 = vector.extract_strided_slice %606 {offsets = [0, 96], sizes = [2, 32], strides = [1, 1]} : vector<2x128xf32> to vector<2x32xf32>
    %647 = arith.negf %646 : vector<2x32xf32>
    %648 = math.exp %647 : vector<2x32xf32>
    %cst_180 = arith.constant 1.000000e+00 : f32
    %649 = vector.broadcast %cst_180 : f32 to vector<2x32xf32>
    %650 = arith.addf %649, %648 : vector<2x32xf32>
    %651 = arith.divf %649, %650 : vector<2x32xf32>
    %652 = arith.mulf %643, %588 : vector<2x32xf32>
    %653 = arith.mulf %637, %645 : vector<2x32xf32>
    %654 = arith.addf %652, %653 : vector<2x32xf32>
    %655 = math.tanh %654 : vector<2x32xf32>
    %656 = arith.mulf %651, %655 : vector<2x32xf32>
    %c9_181 = arith.constant 9 : index
    %c0_182 = arith.constant 0 : index
    %c0_183 = arith.constant 0 : index
    %657 = vector.load %arg4[%c9_181, %c0_182, %c0_183] : memref<16x2x64xf32, #tpu.memory_space<vmem>>, vector<1x2x32xf32>
    %658 = vector.shape_cast %657 : vector<1x2x32xf32> to vector<2x32xf32>
    %659 = vector.shape_cast %631 : vector<2x32xf32> to vector<1x2x32xf32>
    tpu.vector_store %arg4[%c9_181, %c0_182, %c0_183], %659 {strides = array<i32>} : memref<16x2x64xf32, #tpu.memory_space<vmem>>, vector<1x2x32xf32>,
    %c6_184 = arith.constant 6 : index
    %c0_185 = arith.constant 0 : index
    %c32_186 = arith.constant 32 : index
    %660 = vector.load %arg4[%c6_184, %c0_185, %c32_186] : memref<16x2x64xf32, #tpu.memory_space<vmem>>, vector<1x2x32xf32>
    %661 = vector.shape_cast %660 : vector<1x2x32xf32> to vector<2x32xf32>
    %662 = vector.shape_cast %656 : vector<2x32xf32> to vector<1x2x32xf32>
    tpu.vector_store %arg4[%c6_184, %c0_185, %c32_186], %662 {strides = array<i32>} : memref<16x2x64xf32, #tpu.memory_space<vmem>>, vector<1x2x32xf32>,
    %c10_187 = arith.constant 10 : index
    %c0_188 = arith.constant 0 : index
    %c0_189 = arith.constant 0 : index
    %663 = vector.load %arg0[%c10_187, %c0_188, %c0_189] : memref<16x2x128xf32, #tpu.memory_space<vmem>>, vector<1x2x128xf32>
    %664 = vector.shape_cast %663 : vector<1x2x128xf32> to vector<2x128xf32>
    %665 = arith.truncf %631 : vector<2x32xf32> to vector<2x32xbf16>
    %cst_190 = arith.constant dense<0.000000e+00> : vector<2x128xf32>
    %666 = tpu.matmul %665, %0, %cst_190 {dimension_numbers = #tpu.dot_dimension_numbers<[1], [0], [0], [1], [0, 0, 1, 1], [], []>} : vector<2x32xbf16>, vector<32x128xbf16>, vector<2x128xf32> -> vector<2x128xf32>
    %667 = arith.addf %664, %666 : vector<2x128xf32>
    %c5_191 = arith.constant 5 : index
    %c0_192 = arith.constant 0 : index
    %c0_193 = arith.constant 0 : index
    %668 = vector.load %arg1[%c5_191, %c0_192, %c0_193] : memref<16x2x128xf32, #tpu.memory_space<vmem>>, vector<1x2x128xf32>
    %669 = vector.shape_cast %668 : vector<1x2x128xf32> to vector<2x128xf32>
    %670 = arith.truncf %656 : vector<2x32xf32> to vector<2x32xbf16>
    %cst_194 = arith.constant dense<0.000000e+00> : vector<2x128xf32>
    %671 = tpu.matmul %670, %1, %cst_194 {dimension_numbers = #tpu.dot_dimension_numbers<[1], [0], [0], [1], [0, 0, 1, 1], [], []>} : vector<2x32xbf16>, vector<32x128xbf16>, vector<2x128xf32> -> vector<2x128xf32>
    %672 = arith.addf %669, %671 : vector<2x128xf32>
    %673 = vector.extract_strided_slice %667 {offsets = [0, 0], sizes = [2, 32], strides = [1, 1]} : vector<2x128xf32> to vector<2x32xf32>
    %674 = arith.negf %673 : vector<2x32xf32>
    %675 = math.exp %674 : vector<2x32xf32>
    %cst_195 = arith.constant 1.000000e+00 : f32
    %676 = vector.broadcast %cst_195 : f32 to vector<2x32xf32>
    %677 = arith.addf %676, %675 : vector<2x32xf32>
    %678 = arith.divf %676, %677 : vector<2x32xf32>
    %679 = vector.extract_strided_slice %667 {offsets = [0, 32], sizes = [2, 32], strides = [1, 1]} : vector<2x128xf32> to vector<2x32xf32>
    %680 = arith.negf %679 : vector<2x32xf32>
    %681 = math.exp %680 : vector<2x32xf32>
    %cst_196 = arith.constant 1.000000e+00 : f32
    %682 = vector.broadcast %cst_196 : f32 to vector<2x32xf32>
    %683 = arith.addf %682, %681 : vector<2x32xf32>
    %684 = arith.divf %682, %683 : vector<2x32xf32>
    %685 = vector.extract_strided_slice %667 {offsets = [0, 64], sizes = [2, 32], strides = [1, 1]} : vector<2x128xf32> to vector<2x32xf32>
    %686 = math.tanh %685 : vector<2x32xf32>
    %687 = vector.extract_strided_slice %667 {offsets = [0, 96], sizes = [2, 32], strides = [1, 1]} : vector<2x128xf32> to vector<2x32xf32>
    %688 = arith.negf %687 : vector<2x32xf32>
    %689 = math.exp %688 : vector<2x32xf32>
    %cst_197 = arith.constant 1.000000e+00 : f32
    %690 = vector.broadcast %cst_197 : f32 to vector<2x32xf32>
    %691 = arith.addf %690, %689 : vector<2x32xf32>
    %692 = arith.divf %690, %691 : vector<2x32xf32>
    %693 = arith.mulf %684, %629 : vector<2x32xf32>
    %694 = arith.mulf %678, %686 : vector<2x32xf32>
    %695 = arith.addf %693, %694 : vector<2x32xf32>
    %696 = math.tanh %695 : vector<2x32xf32>
    %697 = arith.mulf %692, %696 : vector<2x32xf32>
    %698 = vector.extract_strided_slice %672 {offsets = [0, 0], sizes = [2, 32], strides = [1, 1]} : vector<2x128xf32> to vector<2x32xf32>
    %699 = arith.negf %698 : vector<2x32xf32>
    %700 = math.exp %699 : vector<2x32xf32>
    %cst_198 = arith.constant 1.000000e+00 : f32
    %701 = vector.broadcast %cst_198 : f32 to vector<2x32xf32>
    %702 = arith.addf %701, %700 : vector<2x32xf32>
    %703 = arith.divf %701, %702 : vector<2x32xf32>
    %704 = vector.extract_strided_slice %672 {offsets = [0, 32], sizes = [2, 32], strides = [1, 1]} : vector<2x128xf32> to vector<2x32xf32>
    %705 = arith.negf %704 : vector<2x32xf32>
    %706 = math.exp %705 : vector<2x32xf32>
    %cst_199 = arith.constant 1.000000e+00 : f32
    %707 = vector.broadcast %cst_199 : f32 to vector<2x32xf32>
    %708 = arith.addf %707, %706 : vector<2x32xf32>
    %709 = arith.divf %707, %708 : vector<2x32xf32>
    %710 = vector.extract_strided_slice %672 {offsets = [0, 64], sizes = [2, 32], strides = [1, 1]} : vector<2x128xf32> to vector<2x32xf32>
    %711 = math.tanh %710 : vector<2x32xf32>
    %712 = vector.extract_strided_slice %672 {offsets = [0, 96], sizes = [2, 32], strides = [1, 1]} : vector<2x128xf32> to vector<2x32xf32>
    %713 = arith.negf %712 : vector<2x32xf32>
    %714 = math.exp %713 : vector<2x32xf32>
    %cst_200 = arith.constant 1.000000e+00 : f32
    %715 = vector.broadcast %cst_200 : f32 to vector<2x32xf32>
    %716 = arith.addf %715, %714 : vector<2x32xf32>
    %717 = arith.divf %715, %716 : vector<2x32xf32>
    %718 = arith.mulf %709, %654 : vector<2x32xf32>
    %719 = arith.mulf %703, %711 : vector<2x32xf32>
    %720 = arith.addf %718, %719 : vector<2x32xf32>
    %721 = math.tanh %720 : vector<2x32xf32>
    %722 = arith.mulf %717, %721 : vector<2x32xf32>
    %c10_201 = arith.constant 10 : index
    %c0_202 = arith.constant 0 : index
    %c0_203 = arith.constant 0 : index
    %723 = vector.load %arg4[%c10_201, %c0_202, %c0_203] : memref<16x2x64xf32, #tpu.memory_space<vmem>>, vector<1x2x32xf32>
    %724 = vector.shape_cast %723 : vector<1x2x32xf32> to vector<2x32xf32>
    %725 = vector.shape_cast %697 : vector<2x32xf32> to vector<1x2x32xf32>
    tpu.vector_store %arg4[%c10_201, %c0_202, %c0_203], %725 {strides = array<i32>} : memref<16x2x64xf32, #tpu.memory_space<vmem>>, vector<1x2x32xf32>,
    %c5_204 = arith.constant 5 : index
    %c0_205 = arith.constant 0 : index
    %c32_206 = arith.constant 32 : index
    %726 = vector.load %arg4[%c5_204, %c0_205, %c32_206] : memref<16x2x64xf32, #tpu.memory_space<vmem>>, vector<1x2x32xf32>
    %727 = vector.shape_cast %726 : vector<1x2x32xf32> to vector<2x32xf32>
    %728 = vector.shape_cast %722 : vector<2x32xf32> to vector<1x2x32xf32>
    tpu.vector_store %arg4[%c5_204, %c0_205, %c32_206], %728 {strides = array<i32>} : memref<16x2x64xf32, #tpu.memory_space<vmem>>, vector<1x2x32xf32>,
    %c11_207 = arith.constant 11 : index
    %c0_208 = arith.constant 0 : index
    %c0_209 = arith.constant 0 : index
    %729 = vector.load %arg0[%c11_207, %c0_208, %c0_209] : memref<16x2x128xf32, #tpu.memory_space<vmem>>, vector<1x2x128xf32>
    %730 = vector.shape_cast %729 : vector<1x2x128xf32> to vector<2x128xf32>
    %731 = arith.truncf %697 : vector<2x32xf32> to vector<2x32xbf16>
    %cst_210 = arith.constant dense<0.000000e+00> : vector<2x128xf32>
    %732 = tpu.matmul %731, %0, %cst_210 {dimension_numbers = #tpu.dot_dimension_numbers<[1], [0], [0], [1], [0, 0, 1, 1], [], []>} : vector<2x32xbf16>, vector<32x128xbf16>, vector<2x128xf32> -> vector<2x128xf32>
    %733 = arith.addf %730, %732 : vector<2x128xf32>
    %c4_211 = arith.constant 4 : index
    %c0_212 = arith.constant 0 : index
    %c0_213 = arith.constant 0 : index
    %734 = vector.load %arg1[%c4_211, %c0_212, %c0_213] : memref<16x2x128xf32, #tpu.memory_space<vmem>>, vector<1x2x128xf32>
    %735 = vector.shape_cast %734 : vector<1x2x128xf32> to vector<2x128xf32>
    %736 = arith.truncf %722 : vector<2x32xf32> to vector<2x32xbf16>
    %cst_214 = arith.constant dense<0.000000e+00> : vector<2x128xf32>
    %737 = tpu.matmul %736, %1, %cst_214 {dimension_numbers = #tpu.dot_dimension_numbers<[1], [0], [0], [1], [0, 0, 1, 1], [], []>} : vector<2x32xbf16>, vector<32x128xbf16>, vector<2x128xf32> -> vector<2x128xf32>
    %738 = arith.addf %735, %737 : vector<2x128xf32>
    %739 = vector.extract_strided_slice %733 {offsets = [0, 0], sizes = [2, 32], strides = [1, 1]} : vector<2x128xf32> to vector<2x32xf32>
    %740 = arith.negf %739 : vector<2x32xf32>
    %741 = math.exp %740 : vector<2x32xf32>
    %cst_215 = arith.constant 1.000000e+00 : f32
    %742 = vector.broadcast %cst_215 : f32 to vector<2x32xf32>
    %743 = arith.addf %742, %741 : vector<2x32xf32>
    %744 = arith.divf %742, %743 : vector<2x32xf32>
    %745 = vector.extract_strided_slice %733 {offsets = [0, 32], sizes = [2, 32], strides = [1, 1]} : vector<2x128xf32> to vector<2x32xf32>
    %746 = arith.negf %745 : vector<2x32xf32>
    %747 = math.exp %746 : vector<2x32xf32>
    %cst_216 = arith.constant 1.000000e+00 : f32
    %748 = vector.broadcast %cst_216 : f32 to vector<2x32xf32>
    %749 = arith.addf %748, %747 : vector<2x32xf32>
    %750 = arith.divf %748, %749 : vector<2x32xf32>
    %751 = vector.extract_strided_slice %733 {offsets = [0, 64], sizes = [2, 32], strides = [1, 1]} : vector<2x128xf32> to vector<2x32xf32>
    %752 = math.tanh %751 : vector<2x32xf32>
    %753 = vector.extract_strided_slice %733 {offsets = [0, 96], sizes = [2, 32], strides = [1, 1]} : vector<2x128xf32> to vector<2x32xf32>
    %754 = arith.negf %753 : vector<2x32xf32>
    %755 = math.exp %754 : vector<2x32xf32>
    %cst_217 = arith.constant 1.000000e+00 : f32
    %756 = vector.broadcast %cst_217 : f32 to vector<2x32xf32>
    %757 = arith.addf %756, %755 : vector<2x32xf32>
    %758 = arith.divf %756, %757 : vector<2x32xf32>
    %759 = arith.mulf %750, %695 : vector<2x32xf32>
    %760 = arith.mulf %744, %752 : vector<2x32xf32>
    %761 = arith.addf %759, %760 : vector<2x32xf32>
    %762 = math.tanh %761 : vector<2x32xf32>
    %763 = arith.mulf %758, %762 : vector<2x32xf32>
    %764 = vector.extract_strided_slice %738 {offsets = [0, 0], sizes = [2, 32], strides = [1, 1]} : vector<2x128xf32> to vector<2x32xf32>
    %765 = arith.negf %764 : vector<2x32xf32>
    %766 = math.exp %765 : vector<2x32xf32>
    %cst_218 = arith.constant 1.000000e+00 : f32
    %767 = vector.broadcast %cst_218 : f32 to vector<2x32xf32>
    %768 = arith.addf %767, %766 : vector<2x32xf32>
    %769 = arith.divf %767, %768 : vector<2x32xf32>
    %770 = vector.extract_strided_slice %738 {offsets = [0, 32], sizes = [2, 32], strides = [1, 1]} : vector<2x128xf32> to vector<2x32xf32>
    %771 = arith.negf %770 : vector<2x32xf32>
    %772 = math.exp %771 : vector<2x32xf32>
    %cst_219 = arith.constant 1.000000e+00 : f32
    %773 = vector.broadcast %cst_219 : f32 to vector<2x32xf32>
    %774 = arith.addf %773, %772 : vector<2x32xf32>
    %775 = arith.divf %773, %774 : vector<2x32xf32>
    %776 = vector.extract_strided_slice %738 {offsets = [0, 64], sizes = [2, 32], strides = [1, 1]} : vector<2x128xf32> to vector<2x32xf32>
    %777 = math.tanh %776 : vector<2x32xf32>
    %778 = vector.extract_strided_slice %738 {offsets = [0, 96], sizes = [2, 32], strides = [1, 1]} : vector<2x128xf32> to vector<2x32xf32>
    %779 = arith.negf %778 : vector<2x32xf32>
    %780 = math.exp %779 : vector<2x32xf32>
    %cst_220 = arith.constant 1.000000e+00 : f32
    %781 = vector.broadcast %cst_220 : f32 to vector<2x32xf32>
    %782 = arith.addf %781, %780 : vector<2x32xf32>
    %783 = arith.divf %781, %782 : vector<2x32xf32>
    %784 = arith.mulf %775, %720 : vector<2x32xf32>
    %785 = arith.mulf %769, %777 : vector<2x32xf32>
    %786 = arith.addf %784, %785 : vector<2x32xf32>
    %787 = math.tanh %786 : vector<2x32xf32>
    %788 = arith.mulf %783, %787 : vector<2x32xf32>
    %c11_221 = arith.constant 11 : index
    %c0_222 = arith.constant 0 : index
    %c0_223 = arith.constant 0 : index
    %789 = vector.load %arg4[%c11_221, %c0_222, %c0_223] : memref<16x2x64xf32, #tpu.memory_space<vmem>>, vector<1x2x32xf32>
    %790 = vector.shape_cast %789 : vector<1x2x32xf32> to vector<2x32xf32>
    %791 = vector.shape_cast %763 : vector<2x32xf32> to vector<1x2x32xf32>
    tpu.vector_store %arg4[%c11_221, %c0_222, %c0_223], %791 {strides = array<i32>} : memref<16x2x64xf32, #tpu.memory_space<vmem>>, vector<1x2x32xf32>,
    %c4_224 = arith.constant 4 : index
    %c0_225 = arith.constant 0 : index
    %c32_226 = arith.constant 32 : index
    %792 = vector.load %arg4[%c4_224, %c0_225, %c32_226] : memref<16x2x64xf32, #tpu.memory_space<vmem>>, vector<1x2x32xf32>
    %793 = vector.shape_cast %792 : vector<1x2x32xf32> to vector<2x32xf32>
    %794 = vector.shape_cast %788 : vector<2x32xf32> to vector<1x2x32xf32>
    tpu.vector_store %arg4[%c4_224, %c0_225, %c32_226], %794 {strides = array<i32>} : memref<16x2x64xf32, #tpu.memory_space<vmem>>, vector<1x2x32xf32>,
    %c12_227 = arith.constant 12 : index
    %c0_228 = arith.constant 0 : index
    %c0_229 = arith.constant 0 : index
    %795 = vector.load %arg0[%c12_227, %c0_228, %c0_229] : memref<16x2x128xf32, #tpu.memory_space<vmem>>, vector<1x2x128xf32>
    %796 = vector.shape_cast %795 : vector<1x2x128xf32> to vector<2x128xf32>
    %797 = arith.truncf %763 : vector<2x32xf32> to vector<2x32xbf16>
    %cst_230 = arith.constant dense<0.000000e+00> : vector<2x128xf32>
    %798 = tpu.matmul %797, %0, %cst_230 {dimension_numbers = #tpu.dot_dimension_numbers<[1], [0], [0], [1], [0, 0, 1, 1], [], []>} : vector<2x32xbf16>, vector<32x128xbf16>, vector<2x128xf32> -> vector<2x128xf32>
    %799 = arith.addf %796, %798 : vector<2x128xf32>
    %c3_231 = arith.constant 3 : index
    %c0_232 = arith.constant 0 : index
    %c0_233 = arith.constant 0 : index
    %800 = vector.load %arg1[%c3_231, %c0_232, %c0_233] : memref<16x2x128xf32, #tpu.memory_space<vmem>>, vector<1x2x128xf32>
    %801 = vector.shape_cast %800 : vector<1x2x128xf32> to vector<2x128xf32>
    %802 = arith.truncf %788 : vector<2x32xf32> to vector<2x32xbf16>
    %cst_234 = arith.constant dense<0.000000e+00> : vector<2x128xf32>
    %803 = tpu.matmul %802, %1, %cst_234 {dimension_numbers = #tpu.dot_dimension_numbers<[1], [0], [0], [1], [0, 0, 1, 1], [], []>} : vector<2x32xbf16>, vector<32x128xbf16>, vector<2x128xf32> -> vector<2x128xf32>
    %804 = arith.addf %801, %803 : vector<2x128xf32>
    %805 = vector.extract_strided_slice %799 {offsets = [0, 0], sizes = [2, 32], strides = [1, 1]} : vector<2x128xf32> to vector<2x32xf32>
    %806 = arith.negf %805 : vector<2x32xf32>
    %807 = math.exp %806 : vector<2x32xf32>
    %cst_235 = arith.constant 1.000000e+00 : f32
    %808 = vector.broadcast %cst_235 : f32 to vector<2x32xf32>
    %809 = arith.addf %808, %807 : vector<2x32xf32>
    %810 = arith.divf %808, %809 : vector<2x32xf32>
    %811 = vector.extract_strided_slice %799 {offsets = [0, 32], sizes = [2, 32], strides = [1, 1]} : vector<2x128xf32> to vector<2x32xf32>
    %812 = arith.negf %811 : vector<2x32xf32>
    %813 = math.exp %812 : vector<2x32xf32>
    %cst_236 = arith.constant 1.000000e+00 : f32
    %814 = vector.broadcast %cst_236 : f32 to vector<2x32xf32>
    %815 = arith.addf %814, %813 : vector<2x32xf32>
    %816 = arith.divf %814, %815 : vector<2x32xf32>
    %817 = vector.extract_strided_slice %799 {offsets = [0, 64], sizes = [2, 32], strides = [1, 1]} : vector<2x128xf32> to vector<2x32xf32>
    %818 = math.tanh %817 : vector<2x32xf32>
    %819 = vector.extract_strided_slice %799 {offsets = [0, 96], sizes = [2, 32], strides = [1, 1]} : vector<2x128xf32> to vector<2x32xf32>
    %820 = arith.negf %819 : vector<2x32xf32>
    %821 = math.exp %820 : vector<2x32xf32>
    %cst_237 = arith.constant 1.000000e+00 : f32
    %822 = vector.broadcast %cst_237 : f32 to vector<2x32xf32>
    %823 = arith.addf %822, %821 : vector<2x32xf32>
    %824 = arith.divf %822, %823 : vector<2x32xf32>
    %825 = arith.mulf %816, %761 : vector<2x32xf32>
    %826 = arith.mulf %810, %818 : vector<2x32xf32>
    %827 = arith.addf %825, %826 : vector<2x32xf32>
    %828 = math.tanh %827 : vector<2x32xf32>
    %829 = arith.mulf %824, %828 : vector<2x32xf32>
    %830 = vector.extract_strided_slice %804 {offsets = [0, 0], sizes = [2, 32], strides = [1, 1]} : vector<2x128xf32> to vector<2x32xf32>
    %831 = arith.negf %830 : vector<2x32xf32>
    %832 = math.exp %831 : vector<2x32xf32>
    %cst_238 = arith.constant 1.000000e+00 : f32
    %833 = vector.broadcast %cst_238 : f32 to vector<2x32xf32>
    %834 = arith.addf %833, %832 : vector<2x32xf32>
    %835 = arith.divf %833, %834 : vector<2x32xf32>
    %836 = vector.extract_strided_slice %804 {offsets = [0, 32], sizes = [2, 32], strides = [1, 1]} : vector<2x128xf32> to vector<2x32xf32>
    %837 = arith.negf %836 : vector<2x32xf32>
    %838 = math.exp %837 : vector<2x32xf32>
    %cst_239 = arith.constant 1.000000e+00 : f32
    %839 = vector.broadcast %cst_239 : f32 to vector<2x32xf32>
    %840 = arith.addf %839, %838 : vector<2x32xf32>
    %841 = arith.divf %839, %840 : vector<2x32xf32>
    %842 = vector.extract_strided_slice %804 {offsets = [0, 64], sizes = [2, 32], strides = [1, 1]} : vector<2x128xf32> to vector<2x32xf32>
    %843 = math.tanh %842 : vector<2x32xf32>
    %844 = vector.extract_strided_slice %804 {offsets = [0, 96], sizes = [2, 32], strides = [1, 1]} : vector<2x128xf32> to vector<2x32xf32>
    %845 = arith.negf %844 : vector<2x32xf32>
    %846 = math.exp %845 : vector<2x32xf32>
    %cst_240 = arith.constant 1.000000e+00 : f32
    %847 = vector.broadcast %cst_240 : f32 to vector<2x32xf32>
    %848 = arith.addf %847, %846 : vector<2x32xf32>
    %849 = arith.divf %847, %848 : vector<2x32xf32>
    %850 = arith.mulf %841, %786 : vector<2x32xf32>
    %851 = arith.mulf %835, %843 : vector<2x32xf32>
    %852 = arith.addf %850, %851 : vector<2x32xf32>
    %853 = math.tanh %852 : vector<2x32xf32>
    %854 = arith.mulf %849, %853 : vector<2x32xf32>
    %c12_241 = arith.constant 12 : index
    %c0_242 = arith.constant 0 : index
    %c0_243 = arith.constant 0 : index
    %855 = vector.load %arg4[%c12_241, %c0_242, %c0_243] : memref<16x2x64xf32, #tpu.memory_space<vmem>>, vector<1x2x32xf32>
    %856 = vector.shape_cast %855 : vector<1x2x32xf32> to vector<2x32xf32>
    %857 = vector.shape_cast %829 : vector<2x32xf32> to vector<1x2x32xf32>
    tpu.vector_store %arg4[%c12_241, %c0_242, %c0_243], %857 {strides = array<i32>} : memref<16x2x64xf32, #tpu.memory_space<vmem>>, vector<1x2x32xf32>,
    %c3_244 = arith.constant 3 : index
    %c0_245 = arith.constant 0 : index
    %c32_246 = arith.constant 32 : index
    %858 = vector.load %arg4[%c3_244, %c0_245, %c32_246] : memref<16x2x64xf32, #tpu.memory_space<vmem>>, vector<1x2x32xf32>
    %859 = vector.shape_cast %858 : vector<1x2x32xf32> to vector<2x32xf32>
    %860 = vector.shape_cast %854 : vector<2x32xf32> to vector<1x2x32xf32>
    tpu.vector_store %arg4[%c3_244, %c0_245, %c32_246], %860 {strides = array<i32>} : memref<16x2x64xf32, #tpu.memory_space<vmem>>, vector<1x2x32xf32>,
    %c13_247 = arith.constant 13 : index
    %c0_248 = arith.constant 0 : index
    %c0_249 = arith.constant 0 : index
    %861 = vector.load %arg0[%c13_247, %c0_248, %c0_249] : memref<16x2x128xf32, #tpu.memory_space<vmem>>, vector<1x2x128xf32>
    %862 = vector.shape_cast %861 : vector<1x2x128xf32> to vector<2x128xf32>
    %863 = arith.truncf %829 : vector<2x32xf32> to vector<2x32xbf16>
    %cst_250 = arith.constant dense<0.000000e+00> : vector<2x128xf32>
    %864 = tpu.matmul %863, %0, %cst_250 {dimension_numbers = #tpu.dot_dimension_numbers<[1], [0], [0], [1], [0, 0, 1, 1], [], []>} : vector<2x32xbf16>, vector<32x128xbf16>, vector<2x128xf32> -> vector<2x128xf32>
    %865 = arith.addf %862, %864 : vector<2x128xf32>
    %c2_251 = arith.constant 2 : index
    %c0_252 = arith.constant 0 : index
    %c0_253 = arith.constant 0 : index
    %866 = vector.load %arg1[%c2_251, %c0_252, %c0_253] : memref<16x2x128xf32, #tpu.memory_space<vmem>>, vector<1x2x128xf32>
    %867 = vector.shape_cast %866 : vector<1x2x128xf32> to vector<2x128xf32>
    %868 = arith.truncf %854 : vector<2x32xf32> to vector<2x32xbf16>
    %cst_254 = arith.constant dense<0.000000e+00> : vector<2x128xf32>
    %869 = tpu.matmul %868, %1, %cst_254 {dimension_numbers = #tpu.dot_dimension_numbers<[1], [0], [0], [1], [0, 0, 1, 1], [], []>} : vector<2x32xbf16>, vector<32x128xbf16>, vector<2x128xf32> -> vector<2x128xf32>
    %870 = arith.addf %867, %869 : vector<2x128xf32>
    %871 = vector.extract_strided_slice %865 {offsets = [0, 0], sizes = [2, 32], strides = [1, 1]} : vector<2x128xf32> to vector<2x32xf32>
    %872 = arith.negf %871 : vector<2x32xf32>
    %873 = math.exp %872 : vector<2x32xf32>
    %cst_255 = arith.constant 1.000000e+00 : f32
    %874 = vector.broadcast %cst_255 : f32 to vector<2x32xf32>
    %875 = arith.addf %874, %873 : vector<2x32xf32>
    %876 = arith.divf %874, %875 : vector<2x32xf32>
    %877 = vector.extract_strided_slice %865 {offsets = [0, 32], sizes = [2, 32], strides = [1, 1]} : vector<2x128xf32> to vector<2x32xf32>
    %878 = arith.negf %877 : vector<2x32xf32>
    %879 = math.exp %878 : vector<2x32xf32>
    %cst_256 = arith.constant 1.000000e+00 : f32
    %880 = vector.broadcast %cst_256 : f32 to vector<2x32xf32>
    %881 = arith.addf %880, %879 : vector<2x32xf32>
    %882 = arith.divf %880, %881 : vector<2x32xf32>
    %883 = vector.extract_strided_slice %865 {offsets = [0, 64], sizes = [2, 32], strides = [1, 1]} : vector<2x128xf32> to vector<2x32xf32>
    %884 = math.tanh %883 : vector<2x32xf32>
    %885 = vector.extract_strided_slice %865 {offsets = [0, 96], sizes = [2, 32], strides = [1, 1]} : vector<2x128xf32> to vector<2x32xf32>
    %886 = arith.negf %885 : vector<2x32xf32>
    %887 = math.exp %886 : vector<2x32xf32>
    %cst_257 = arith.constant 1.000000e+00 : f32
    %888 = vector.broadcast %cst_257 : f32 to vector<2x32xf32>
    %889 = arith.addf %888, %887 : vector<2x32xf32>
    %890 = arith.divf %888, %889 : vector<2x32xf32>
    %891 = arith.mulf %882, %827 : vector<2x32xf32>
    %892 = arith.mulf %876, %884 : vector<2x32xf32>
    %893 = arith.addf %891, %892 : vector<2x32xf32>
    %894 = math.tanh %893 : vector<2x32xf32>
    %895 = arith.mulf %890, %894 : vector<2x32xf32>
    %896 = vector.extract_strided_slice %870 {offsets = [0, 0], sizes = [2, 32], strides = [1, 1]} : vector<2x128xf32> to vector<2x32xf32>
    %897 = arith.negf %896 : vector<2x32xf32>
    %898 = math.exp %897 : vector<2x32xf32>
    %cst_258 = arith.constant 1.000000e+00 : f32
    %899 = vector.broadcast %cst_258 : f32 to vector<2x32xf32>
    %900 = arith.addf %899, %898 : vector<2x32xf32>
    %901 = arith.divf %899, %900 : vector<2x32xf32>
    %902 = vector.extract_strided_slice %870 {offsets = [0, 32], sizes = [2, 32], strides = [1, 1]} : vector<2x128xf32> to vector<2x32xf32>
    %903 = arith.negf %902 : vector<2x32xf32>
    %904 = math.exp %903 : vector<2x32xf32>
    %cst_259 = arith.constant 1.000000e+00 : f32
    %905 = vector.broadcast %cst_259 : f32 to vector<2x32xf32>
    %906 = arith.addf %905, %904 : vector<2x32xf32>
    %907 = arith.divf %905, %906 : vector<2x32xf32>
    %908 = vector.extract_strided_slice %870 {offsets = [0, 64], sizes = [2, 32], strides = [1, 1]} : vector<2x128xf32> to vector<2x32xf32>
    %909 = math.tanh %908 : vector<2x32xf32>
    %910 = vector.extract_strided_slice %870 {offsets = [0, 96], sizes = [2, 32], strides = [1, 1]} : vector<2x128xf32> to vector<2x32xf32>
    %911 = arith.negf %910 : vector<2x32xf32>
    %912 = math.exp %911 : vector<2x32xf32>
    %cst_260 = arith.constant 1.000000e+00 : f32
    %913 = vector.broadcast %cst_260 : f32 to vector<2x32xf32>
    %914 = arith.addf %913, %912 : vector<2x32xf32>
    %915 = arith.divf %913, %914 : vector<2x32xf32>
    %916 = arith.mulf %907, %852 : vector<2x32xf32>
    %917 = arith.mulf %901, %909 : vector<2x32xf32>
    %918 = arith.addf %916, %917 : vector<2x32xf32>
    %919 = math.tanh %918 : vector<2x32xf32>
    %920 = arith.mulf %915, %919 : vector<2x32xf32>
    %c13_261 = arith.constant 13 : index
    %c0_262 = arith.constant 0 : index
    %c0_263 = arith.constant 0 : index
    %921 = vector.load %arg4[%c13_261, %c0_262, %c0_263] : memref<16x2x64xf32, #tpu.memory_space<vmem>>, vector<1x2x32xf32>
    %922 = vector.shape_cast %921 : vector<1x2x32xf32> to vector<2x32xf32>
    %923 = vector.shape_cast %895 : vector<2x32xf32> to vector<1x2x32xf32>
    tpu.vector_store %arg4[%c13_261, %c0_262, %c0_263], %923 {strides = array<i32>} : memref<16x2x64xf32, #tpu.memory_space<vmem>>, vector<1x2x32xf32>,
    %c2_264 = arith.constant 2 : index
    %c0_265 = arith.constant 0 : index
    %c32_266 = arith.constant 32 : index
    %924 = vector.load %arg4[%c2_264, %c0_265, %c32_266] : memref<16x2x64xf32, #tpu.memory_space<vmem>>, vector<1x2x32xf32>
    %925 = vector.shape_cast %924 : vector<1x2x32xf32> to vector<2x32xf32>
    %926 = vector.shape_cast %920 : vector<2x32xf32> to vector<1x2x32xf32>
    tpu.vector_store %arg4[%c2_264, %c0_265, %c32_266], %926 {strides = array<i32>} : memref<16x2x64xf32, #tpu.memory_space<vmem>>, vector<1x2x32xf32>,
    %c14_267 = arith.constant 14 : index
    %c0_268 = arith.constant 0 : index
    %c0_269 = arith.constant 0 : index
    %927 = vector.load %arg0[%c14_267, %c0_268, %c0_269] : memref<16x2x128xf32, #tpu.memory_space<vmem>>, vector<1x2x128xf32>
    %928 = vector.shape_cast %927 : vector<1x2x128xf32> to vector<2x128xf32>
    %929 = arith.truncf %895 : vector<2x32xf32> to vector<2x32xbf16>
    %cst_270 = arith.constant dense<0.000000e+00> : vector<2x128xf32>
    %930 = tpu.matmul %929, %0, %cst_270 {dimension_numbers = #tpu.dot_dimension_numbers<[1], [0], [0], [1], [0, 0, 1, 1], [], []>} : vector<2x32xbf16>, vector<32x128xbf16>, vector<2x128xf32> -> vector<2x128xf32>
    %931 = arith.addf %928, %930 : vector<2x128xf32>
    %c1_271 = arith.constant 1 : index
    %c0_272 = arith.constant 0 : index
    %c0_273 = arith.constant 0 : index
    %932 = vector.load %arg1[%c1_271, %c0_272, %c0_273] : memref<16x2x128xf32, #tpu.memory_space<vmem>>, vector<1x2x128xf32>
    %933 = vector.shape_cast %932 : vector<1x2x128xf32> to vector<2x128xf32>
    %934 = arith.truncf %920 : vector<2x32xf32> to vector<2x32xbf16>
    %cst_274 = arith.constant dense<0.000000e+00> : vector<2x128xf32>
    %935 = tpu.matmul %934, %1, %cst_274 {dimension_numbers = #tpu.dot_dimension_numbers<[1], [0], [0], [1], [0, 0, 1, 1], [], []>} : vector<2x32xbf16>, vector<32x128xbf16>, vector<2x128xf32> -> vector<2x128xf32>
    %936 = arith.addf %933, %935 : vector<2x128xf32>
    %937 = vector.extract_strided_slice %931 {offsets = [0, 0], sizes = [2, 32], strides = [1, 1]} : vector<2x128xf32> to vector<2x32xf32>
    %938 = arith.negf %937 : vector<2x32xf32>
    %939 = math.exp %938 : vector<2x32xf32>
    %cst_275 = arith.constant 1.000000e+00 : f32
    %940 = vector.broadcast %cst_275 : f32 to vector<2x32xf32>
    %941 = arith.addf %940, %939 : vector<2x32xf32>
    %942 = arith.divf %940, %941 : vector<2x32xf32>
    %943 = vector.extract_strided_slice %931 {offsets = [0, 32], sizes = [2, 32], strides = [1, 1]} : vector<2x128xf32> to vector<2x32xf32>
    %944 = arith.negf %943 : vector<2x32xf32>
    %945 = math.exp %944 : vector<2x32xf32>
    %cst_276 = arith.constant 1.000000e+00 : f32
    %946 = vector.broadcast %cst_276 : f32 to vector<2x32xf32>
    %947 = arith.addf %946, %945 : vector<2x32xf32>
    %948 = arith.divf %946, %947 : vector<2x32xf32>
    %949 = vector.extract_strided_slice %931 {offsets = [0, 64], sizes = [2, 32], strides = [1, 1]} : vector<2x128xf32> to vector<2x32xf32>
    %950 = math.tanh %949 : vector<2x32xf32>
    %951 = vector.extract_strided_slice %931 {offsets = [0, 96], sizes = [2, 32], strides = [1, 1]} : vector<2x128xf32> to vector<2x32xf32>
    %952 = arith.negf %951 : vector<2x32xf32>
    %953 = math.exp %952 : vector<2x32xf32>
    %cst_277 = arith.constant 1.000000e+00 : f32
    %954 = vector.broadcast %cst_277 : f32 to vector<2x32xf32>
    %955 = arith.addf %954, %953 : vector<2x32xf32>
    %956 = arith.divf %954, %955 : vector<2x32xf32>
    %957 = arith.mulf %948, %893 : vector<2x32xf32>
    %958 = arith.mulf %942, %950 : vector<2x32xf32>
    %959 = arith.addf %957, %958 : vector<2x32xf32>
    %960 = math.tanh %959 : vector<2x32xf32>
    %961 = arith.mulf %956, %960 : vector<2x32xf32>
    %962 = vector.extract_strided_slice %936 {offsets = [0, 0], sizes = [2, 32], strides = [1, 1]} : vector<2x128xf32> to vector<2x32xf32>
    %963 = arith.negf %962 : vector<2x32xf32>
    %964 = math.exp %963 : vector<2x32xf32>
    %cst_278 = arith.constant 1.000000e+00 : f32
    %965 = vector.broadcast %cst_278 : f32 to vector<2x32xf32>
    %966 = arith.addf %965, %964 : vector<2x32xf32>
    %967 = arith.divf %965, %966 : vector<2x32xf32>
    %968 = vector.extract_strided_slice %936 {offsets = [0, 32], sizes = [2, 32], strides = [1, 1]} : vector<2x128xf32> to vector<2x32xf32>
    %969 = arith.negf %968 : vector<2x32xf32>
    %970 = math.exp %969 : vector<2x32xf32>
    %cst_279 = arith.constant 1.000000e+00 : f32
    %971 = vector.broadcast %cst_279 : f32 to vector<2x32xf32>
    %972 = arith.addf %971, %970 : vector<2x32xf32>
    %973 = arith.divf %971, %972 : vector<2x32xf32>
    %974 = vector.extract_strided_slice %936 {offsets = [0, 64], sizes = [2, 32], strides = [1, 1]} : vector<2x128xf32> to vector<2x32xf32>
    %975 = math.tanh %974 : vector<2x32xf32>
    %976 = vector.extract_strided_slice %936 {offsets = [0, 96], sizes = [2, 32], strides = [1, 1]} : vector<2x128xf32> to vector<2x32xf32>
    %977 = arith.negf %976 : vector<2x32xf32>
    %978 = math.exp %977 : vector<2x32xf32>
    %cst_280 = arith.constant 1.000000e+00 : f32
    %979 = vector.broadcast %cst_280 : f32 to vector<2x32xf32>
    %980 = arith.addf %979, %978 : vector<2x32xf32>
    %981 = arith.divf %979, %980 : vector<2x32xf32>
    %982 = arith.mulf %973, %918 : vector<2x32xf32>
    %983 = arith.mulf %967, %975 : vector<2x32xf32>
    %984 = arith.addf %982, %983 : vector<2x32xf32>
    %985 = math.tanh %984 : vector<2x32xf32>
    %986 = arith.mulf %981, %985 : vector<2x32xf32>
    %c14_281 = arith.constant 14 : index
    %c0_282 = arith.constant 0 : index
    %c0_283 = arith.constant 0 : index
    %987 = vector.load %arg4[%c14_281, %c0_282, %c0_283] : memref<16x2x64xf32, #tpu.memory_space<vmem>>, vector<1x2x32xf32>
    %988 = vector.shape_cast %987 : vector<1x2x32xf32> to vector<2x32xf32>
    %989 = vector.shape_cast %961 : vector<2x32xf32> to vector<1x2x32xf32>
    tpu.vector_store %arg4[%c14_281, %c0_282, %c0_283], %989 {strides = array<i32>} : memref<16x2x64xf32, #tpu.memory_space<vmem>>, vector<1x2x32xf32>,
    %c1_284 = arith.constant 1 : index
    %c0_285 = arith.constant 0 : index
    %c32_286 = arith.constant 32 : index
    %990 = vector.load %arg4[%c1_284, %c0_285, %c32_286] : memref<16x2x64xf32, #tpu.memory_space<vmem>>, vector<1x2x32xf32>
    %991 = vector.shape_cast %990 : vector<1x2x32xf32> to vector<2x32xf32>
    %992 = vector.shape_cast %986 : vector<2x32xf32> to vector<1x2x32xf32>
    tpu.vector_store %arg4[%c1_284, %c0_285, %c32_286], %992 {strides = array<i32>} : memref<16x2x64xf32, #tpu.memory_space<vmem>>, vector<1x2x32xf32>,
    %c15_287 = arith.constant 15 : index
    %c0_288 = arith.constant 0 : index
    %c0_289 = arith.constant 0 : index
    %993 = vector.load %arg0[%c15_287, %c0_288, %c0_289] : memref<16x2x128xf32, #tpu.memory_space<vmem>>, vector<1x2x128xf32>
    %994 = vector.shape_cast %993 : vector<1x2x128xf32> to vector<2x128xf32>
    %995 = arith.truncf %961 : vector<2x32xf32> to vector<2x32xbf16>
    %cst_290 = arith.constant dense<0.000000e+00> : vector<2x128xf32>
    %996 = tpu.matmul %995, %0, %cst_290 {dimension_numbers = #tpu.dot_dimension_numbers<[1], [0], [0], [1], [0, 0, 1, 1], [], []>} : vector<2x32xbf16>, vector<32x128xbf16>, vector<2x128xf32> -> vector<2x128xf32>
    %997 = arith.addf %994, %996 : vector<2x128xf32>
    %c0_291 = arith.constant 0 : index
    %c0_292 = arith.constant 0 : index
    %c0_293 = arith.constant 0 : index
    %998 = vector.load %arg1[%c0_291, %c0_292, %c0_293] : memref<16x2x128xf32, #tpu.memory_space<vmem>>, vector<1x2x128xf32>
    %999 = vector.shape_cast %998 : vector<1x2x128xf32> to vector<2x128xf32>
    %1000 = arith.truncf %986 : vector<2x32xf32> to vector<2x32xbf16>
    %cst_294 = arith.constant dense<0.000000e+00> : vector<2x128xf32>
    %1001 = tpu.matmul %1000, %1, %cst_294 {dimension_numbers = #tpu.dot_dimension_numbers<[1], [0], [0], [1], [0, 0, 1, 1], [], []>} : vector<2x32xbf16>, vector<32x128xbf16>, vector<2x128xf32> -> vector<2x128xf32>
    %1002 = arith.addf %999, %1001 : vector<2x128xf32>
    %1003 = vector.extract_strided_slice %997 {offsets = [0, 0], sizes = [2, 32], strides = [1, 1]} : vector<2x128xf32> to vector<2x32xf32>
    %1004 = arith.negf %1003 : vector<2x32xf32>
    %1005 = math.exp %1004 : vector<2x32xf32>
    %cst_295 = arith.constant 1.000000e+00 : f32
    %1006 = vector.broadcast %cst_295 : f32 to vector<2x32xf32>
    %1007 = arith.addf %1006, %1005 : vector<2x32xf32>
    %1008 = arith.divf %1006, %1007 : vector<2x32xf32>
    %1009 = vector.extract_strided_slice %997 {offsets = [0, 32], sizes = [2, 32], strides = [1, 1]} : vector<2x128xf32> to vector<2x32xf32>
    %1010 = arith.negf %1009 : vector<2x32xf32>
    %1011 = math.exp %1010 : vector<2x32xf32>
    %cst_296 = arith.constant 1.000000e+00 : f32
    %1012 = vector.broadcast %cst_296 : f32 to vector<2x32xf32>
    %1013 = arith.addf %1012, %1011 : vector<2x32xf32>
    %1014 = arith.divf %1012, %1013 : vector<2x32xf32>
    %1015 = vector.extract_strided_slice %997 {offsets = [0, 64], sizes = [2, 32], strides = [1, 1]} : vector<2x128xf32> to vector<2x32xf32>
    %1016 = math.tanh %1015 : vector<2x32xf32>
    %1017 = vector.extract_strided_slice %997 {offsets = [0, 96], sizes = [2, 32], strides = [1, 1]} : vector<2x128xf32> to vector<2x32xf32>
    %1018 = arith.negf %1017 : vector<2x32xf32>
    %1019 = math.exp %1018 : vector<2x32xf32>
    %cst_297 = arith.constant 1.000000e+00 : f32
    %1020 = vector.broadcast %cst_297 : f32 to vector<2x32xf32>
    %1021 = arith.addf %1020, %1019 : vector<2x32xf32>
    %1022 = arith.divf %1020, %1021 : vector<2x32xf32>
    %1023 = arith.mulf %1014, %959 : vector<2x32xf32>
    %1024 = arith.mulf %1008, %1016 : vector<2x32xf32>
    %1025 = arith.addf %1023, %1024 : vector<2x32xf32>
    %1026 = math.tanh %1025 : vector<2x32xf32>
    %1027 = arith.mulf %1022, %1026 : vector<2x32xf32>
    %1028 = vector.extract_strided_slice %1002 {offsets = [0, 0], sizes = [2, 32], strides = [1, 1]} : vector<2x128xf32> to vector<2x32xf32>
    %1029 = arith.negf %1028 : vector<2x32xf32>
    %1030 = math.exp %1029 : vector<2x32xf32>
    %cst_298 = arith.constant 1.000000e+00 : f32
    %1031 = vector.broadcast %cst_298 : f32 to vector<2x32xf32>
    %1032 = arith.addf %1031, %1030 : vector<2x32xf32>
    %1033 = arith.divf %1031, %1032 : vector<2x32xf32>
    %1034 = vector.extract_strided_slice %1002 {offsets = [0, 32], sizes = [2, 32], strides = [1, 1]} : vector<2x128xf32> to vector<2x32xf32>
    %1035 = arith.negf %1034 : vector<2x32xf32>
    %1036 = math.exp %1035 : vector<2x32xf32>
    %cst_299 = arith.constant 1.000000e+00 : f32
    %1037 = vector.broadcast %cst_299 : f32 to vector<2x32xf32>
    %1038 = arith.addf %1037, %1036 : vector<2x32xf32>
    %1039 = arith.divf %1037, %1038 : vector<2x32xf32>
    %1040 = vector.extract_strided_slice %1002 {offsets = [0, 64], sizes = [2, 32], strides = [1, 1]} : vector<2x128xf32> to vector<2x32xf32>
    %1041 = math.tanh %1040 : vector<2x32xf32>
    %1042 = vector.extract_strided_slice %1002 {offsets = [0, 96], sizes = [2, 32], strides = [1, 1]} : vector<2x128xf32> to vector<2x32xf32>
    %1043 = arith.negf %1042 : vector<2x32xf32>
    %1044 = math.exp %1043 : vector<2x32xf32>
    %cst_300 = arith.constant 1.000000e+00 : f32
    %1045 = vector.broadcast %cst_300 : f32 to vector<2x32xf32>
    %1046 = arith.addf %1045, %1044 : vector<2x32xf32>
    %1047 = arith.divf %1045, %1046 : vector<2x32xf32>
    %1048 = arith.mulf %1039, %984 : vector<2x32xf32>
    %1049 = arith.mulf %1033, %1041 : vector<2x32xf32>
    %1050 = arith.addf %1048, %1049 : vector<2x32xf32>
    %1051 = math.tanh %1050 : vector<2x32xf32>
    %1052 = arith.mulf %1047, %1051 : vector<2x32xf32>
    %c15_301 = arith.constant 15 : index
    %c0_302 = arith.constant 0 : index
    %c0_303 = arith.constant 0 : index
    %1053 = vector.load %arg4[%c15_301, %c0_302, %c0_303] : memref<16x2x64xf32, #tpu.memory_space<vmem>>, vector<1x2x32xf32>
    %1054 = vector.shape_cast %1053 : vector<1x2x32xf32> to vector<2x32xf32>
    %1055 = vector.shape_cast %1027 : vector<2x32xf32> to vector<1x2x32xf32>
    tpu.vector_store %arg4[%c15_301, %c0_302, %c0_303], %1055 {strides = array<i32>} : memref<16x2x64xf32, #tpu.memory_space<vmem>>, vector<1x2x32xf32>,
    %c0_304 = arith.constant 0 : index
    %c0_305 = arith.constant 0 : index
    %c32_306 = arith.constant 32 : index
    %1056 = vector.load %arg4[%c0_304, %c0_305, %c32_306] : memref<16x2x64xf32, #tpu.memory_space<vmem>>, vector<1x2x32xf32>
    %1057 = vector.shape_cast %1056 : vector<1x2x32xf32> to vector<2x32xf32>
    %1058 = vector.shape_cast %1052 : vector<2x32xf32> to vector<1x2x32xf32>
    tpu.vector_store %arg4[%c0_304, %c0_305, %c32_306], %1058 {strides = array<i32>} : memref<16x2x64xf32, #tpu.memory_space<vmem>>, vector<1x2x32xf32>,
    %c0_307 = arith.constant 0 : index
    %c0_308 = arith.constant 0 : index
    %c0_309 = arith.constant 0 : index
    %1059 = vector.load %arg5[%c0_307, %c0_308, %c0_309] : memref<2x2x32xf32, #tpu.memory_space<vmem>>, vector<1x2x32xf32>
    %1060 = vector.shape_cast %1059 : vector<1x2x32xf32> to vector<2x32xf32>
    %1061 = vector.shape_cast %1027 : vector<2x32xf32> to vector<1x2x32xf32>
    tpu.vector_store %arg5[%c0_307, %c0_308, %c0_309], %1061 {strides = array<i32>} : memref<2x2x32xf32, #tpu.memory_space<vmem>>, vector<1x2x32xf32>,
    %c1_310 = arith.constant 1 : index
    %c0_311 = arith.constant 0 : index
    %c0_312 = arith.constant 0 : index
    %1062 = vector.load %arg5[%c1_310, %c0_311, %c0_312] : memref<2x2x32xf32, #tpu.memory_space<vmem>>, vector<1x2x32xf32>
    %1063 = vector.shape_cast %1062 : vector<1x2x32xf32> to vector<2x32xf32>
    %1064 = vector.shape_cast %1052 : vector<2x32xf32> to vector<1x2x32xf32>
    tpu.vector_store %arg5[%c1_310, %c0_311, %c0_312], %1064 {strides = array<i32>} : memref<2x2x32xf32, #tpu.memory_space<vmem>>, vector<1x2x32xf32>,
    %c0_313 = arith.constant 0 : index
    %c0_314 = arith.constant 0 : index
    %c0_315 = arith.constant 0 : index
    %1065 = vector.load %arg6[%c0_313, %c0_314, %c0_315] : memref<2x2x32xf32, #tpu.memory_space<vmem>>, vector<1x2x32xf32>
    %1066 = vector.shape_cast %1065 : vector<1x2x32xf32> to vector<2x32xf32>
    %1067 = vector.shape_cast %1025 : vector<2x32xf32> to vector<1x2x32xf32>
    tpu.vector_store %arg6[%c0_313, %c0_314, %c0_315], %1067 {strides = array<i32>} : memref<2x2x32xf32, #tpu.memory_space<vmem>>, vector<1x2x32xf32>,
    %c1_316 = arith.constant 1 : index
    %c0_317 = arith.constant 0 : index
    %c0_318 = arith.constant 0 : index
    %1068 = vector.load %arg6[%c1_316, %c0_317, %c0_318] : memref<2x2x32xf32, #tpu.memory_space<vmem>>, vector<1x2x32xf32>
    %1069 = vector.shape_cast %1068 : vector<1x2x32xf32> to vector<2x32xf32>
    %1070 = vector.shape_cast %1050 : vector<2x32xf32> to vector<1x2x32xf32>
    tpu.vector_store %arg6[%c1_316, %c0_317, %c0_318], %1070 {strides = array<i32>} : memref<2x2x32xf32, #tpu.memory_space<vmem>>, vector<1x2x32xf32>,
    return
  }
}

module attributes {stable_mosaic.version = 11 : i64} {
  func.func @_bilstm_recurrence_kernel(%arg0: memref<4x2x128xf32, #tpu.memory_space<vmem>>, %arg1: memref<4x2x128xf32, #tpu.memory_space<vmem>>, %arg2: memref<32x128xbf16, #tpu.memory_space<vmem>>, %arg3: memref<32x128xbf16, #tpu.memory_space<vmem>>, %arg4: memref<4x2x64xf32, #tpu.memory_space<vmem>>, %arg5: memref<2x2x32xf32, #tpu.memory_space<vmem>>, %arg6: memref<2x2x32xf32, #tpu.memory_space<vmem>>) attributes {dimension_semantics = [], scalar_prefetch = 0 : i64, scratch_operands = 0 : i64, tpu.core_type = #tpu.core_type<tc>} {
    %c0 = arith.constant 0 : index
    %c0_0 = arith.constant 0 : index
    %0 = vector.load %arg2[%c0, %c0_0] : memref<32x128xbf16, #tpu.memory_space<vmem>>, vector<32x128xbf16>
    %c0_1 = arith.constant 0 : index
    %c0_2 = arith.constant 0 : index
    %1 = vector.load %arg3[%c0_1, %c0_2] : memref<32x128xbf16, #tpu.memory_space<vmem>>, vector<32x128xbf16>
    %cst = arith.constant 0.000000e+00 : f32
    %2 = vector.broadcast %cst : f32 to vector<2x32xf32>
    %c0_3 = arith.constant 0 : index
    %c0_4 = arith.constant 0 : index
    %c0_5 = arith.constant 0 : index
    %3 = vector.load %arg0[%c0_3, %c0_4, %c0_5] : memref<4x2x128xf32, #tpu.memory_space<vmem>>, vector<1x2x128xf32>
    %4 = vector.shape_cast %3 : vector<1x2x128xf32> to vector<2x128xf32>
    %5 = arith.truncf %2 : vector<2x32xf32> to vector<2x32xbf16>
    %cst_6 = arith.constant dense<0.000000e+00> : vector<2x128xf32>
    %6 = tpu.matmul %5, %0, %cst_6 {dimension_numbers = #tpu.dot_dimension_numbers<[1], [0], [0], [1], [0, 0, 1, 1], [], []>} : vector<2x32xbf16>, vector<32x128xbf16>, vector<2x128xf32> -> vector<2x128xf32>
    %7 = arith.addf %4, %6 : vector<2x128xf32>
    %c3 = arith.constant 3 : index
    %c0_7 = arith.constant 0 : index
    %c0_8 = arith.constant 0 : index
    %8 = vector.load %arg1[%c3, %c0_7, %c0_8] : memref<4x2x128xf32, #tpu.memory_space<vmem>>, vector<1x2x128xf32>
    %9 = vector.shape_cast %8 : vector<1x2x128xf32> to vector<2x128xf32>
    %10 = arith.truncf %2 : vector<2x32xf32> to vector<2x32xbf16>
    %cst_9 = arith.constant dense<0.000000e+00> : vector<2x128xf32>
    %11 = tpu.matmul %10, %1, %cst_9 {dimension_numbers = #tpu.dot_dimension_numbers<[1], [0], [0], [1], [0, 0, 1, 1], [], []>} : vector<2x32xbf16>, vector<32x128xbf16>, vector<2x128xf32> -> vector<2x128xf32>
    %12 = arith.addf %9, %11 : vector<2x128xf32>
    %13 = vector.extract_strided_slice %7 {offsets = [0, 0], sizes = [2, 32], strides = [1, 1]} : vector<2x128xf32> to vector<2x32xf32>
    %14 = arith.negf %13 : vector<2x32xf32>
    %15 = math.exp %14 : vector<2x32xf32>
    %cst_10 = arith.constant 1.000000e+00 : f32
    %16 = vector.broadcast %cst_10 : f32 to vector<2x32xf32>
    %17 = arith.addf %16, %15 : vector<2x32xf32>
    %18 = arith.divf %16, %17 : vector<2x32xf32>
    %19 = vector.extract_strided_slice %7 {offsets = [0, 32], sizes = [2, 32], strides = [1, 1]} : vector<2x128xf32> to vector<2x32xf32>
    %20 = arith.negf %19 : vector<2x32xf32>
    %21 = math.exp %20 : vector<2x32xf32>
    %cst_11 = arith.constant 1.000000e+00 : f32
    %22 = vector.broadcast %cst_11 : f32 to vector<2x32xf32>
    %23 = arith.addf %22, %21 : vector<2x32xf32>
    %24 = arith.divf %22, %23 : vector<2x32xf32>
    %25 = vector.extract_strided_slice %7 {offsets = [0, 64], sizes = [2, 32], strides = [1, 1]} : vector<2x128xf32> to vector<2x32xf32>
    %26 = math.tanh %25 : vector<2x32xf32>
    %27 = vector.extract_strided_slice %7 {offsets = [0, 96], sizes = [2, 32], strides = [1, 1]} : vector<2x128xf32> to vector<2x32xf32>
    %28 = arith.negf %27 : vector<2x32xf32>
    %29 = math.exp %28 : vector<2x32xf32>
    %cst_12 = arith.constant 1.000000e+00 : f32
    %30 = vector.broadcast %cst_12 : f32 to vector<2x32xf32>
    %31 = arith.addf %30, %29 : vector<2x32xf32>
    %32 = arith.divf %30, %31 : vector<2x32xf32>
    %33 = arith.mulf %24, %2 : vector<2x32xf32>
    %34 = arith.mulf %18, %26 : vector<2x32xf32>
    %35 = arith.addf %33, %34 : vector<2x32xf32>
    %36 = math.tanh %35 : vector<2x32xf32>
    %37 = arith.mulf %32, %36 : vector<2x32xf32>
    %38 = vector.extract_strided_slice %12 {offsets = [0, 0], sizes = [2, 32], strides = [1, 1]} : vector<2x128xf32> to vector<2x32xf32>
    %39 = arith.negf %38 : vector<2x32xf32>
    %40 = math.exp %39 : vector<2x32xf32>
    %cst_13 = arith.constant 1.000000e+00 : f32
    %41 = vector.broadcast %cst_13 : f32 to vector<2x32xf32>
    %42 = arith.addf %41, %40 : vector<2x32xf32>
    %43 = arith.divf %41, %42 : vector<2x32xf32>
    %44 = vector.extract_strided_slice %12 {offsets = [0, 32], sizes = [2, 32], strides = [1, 1]} : vector<2x128xf32> to vector<2x32xf32>
    %45 = arith.negf %44 : vector<2x32xf32>
    %46 = math.exp %45 : vector<2x32xf32>
    %cst_14 = arith.constant 1.000000e+00 : f32
    %47 = vector.broadcast %cst_14 : f32 to vector<2x32xf32>
    %48 = arith.addf %47, %46 : vector<2x32xf32>
    %49 = arith.divf %47, %48 : vector<2x32xf32>
    %50 = vector.extract_strided_slice %12 {offsets = [0, 64], sizes = [2, 32], strides = [1, 1]} : vector<2x128xf32> to vector<2x32xf32>
    %51 = math.tanh %50 : vector<2x32xf32>
    %52 = vector.extract_strided_slice %12 {offsets = [0, 96], sizes = [2, 32], strides = [1, 1]} : vector<2x128xf32> to vector<2x32xf32>
    %53 = arith.negf %52 : vector<2x32xf32>
    %54 = math.exp %53 : vector<2x32xf32>
    %cst_15 = arith.constant 1.000000e+00 : f32
    %55 = vector.broadcast %cst_15 : f32 to vector<2x32xf32>
    %56 = arith.addf %55, %54 : vector<2x32xf32>
    %57 = arith.divf %55, %56 : vector<2x32xf32>
    %58 = arith.mulf %49, %2 : vector<2x32xf32>
    %59 = arith.mulf %43, %51 : vector<2x32xf32>
    %60 = arith.addf %58, %59 : vector<2x32xf32>
    %61 = math.tanh %60 : vector<2x32xf32>
    %62 = arith.mulf %57, %61 : vector<2x32xf32>
    %c0_16 = arith.constant 0 : index
    %c0_17 = arith.constant 0 : index
    %c0_18 = arith.constant 0 : index
    %63 = vector.load %arg4[%c0_16, %c0_17, %c0_18] : memref<4x2x64xf32, #tpu.memory_space<vmem>>, vector<1x2x32xf32>
    %64 = vector.shape_cast %63 : vector<1x2x32xf32> to vector<2x32xf32>
    %65 = vector.shape_cast %37 : vector<2x32xf32> to vector<1x2x32xf32>
    tpu.vector_store %arg4[%c0_16, %c0_17, %c0_18], %65 {strides = array<i32>} : memref<4x2x64xf32, #tpu.memory_space<vmem>>, vector<1x2x32xf32>,
    %c3_19 = arith.constant 3 : index
    %c0_20 = arith.constant 0 : index
    %c32 = arith.constant 32 : index
    %66 = vector.load %arg4[%c3_19, %c0_20, %c32] : memref<4x2x64xf32, #tpu.memory_space<vmem>>, vector<1x2x32xf32>
    %67 = vector.shape_cast %66 : vector<1x2x32xf32> to vector<2x32xf32>
    %68 = vector.shape_cast %62 : vector<2x32xf32> to vector<1x2x32xf32>
    tpu.vector_store %arg4[%c3_19, %c0_20, %c32], %68 {strides = array<i32>} : memref<4x2x64xf32, #tpu.memory_space<vmem>>, vector<1x2x32xf32>,
    %c1 = arith.constant 1 : index
    %c0_21 = arith.constant 0 : index
    %c0_22 = arith.constant 0 : index
    %69 = vector.load %arg0[%c1, %c0_21, %c0_22] : memref<4x2x128xf32, #tpu.memory_space<vmem>>, vector<1x2x128xf32>
    %70 = vector.shape_cast %69 : vector<1x2x128xf32> to vector<2x128xf32>
    %71 = arith.truncf %37 : vector<2x32xf32> to vector<2x32xbf16>
    %cst_23 = arith.constant dense<0.000000e+00> : vector<2x128xf32>
    %72 = tpu.matmul %71, %0, %cst_23 {dimension_numbers = #tpu.dot_dimension_numbers<[1], [0], [0], [1], [0, 0, 1, 1], [], []>} : vector<2x32xbf16>, vector<32x128xbf16>, vector<2x128xf32> -> vector<2x128xf32>
    %73 = arith.addf %70, %72 : vector<2x128xf32>
    %c2 = arith.constant 2 : index
    %c0_24 = arith.constant 0 : index
    %c0_25 = arith.constant 0 : index
    %74 = vector.load %arg1[%c2, %c0_24, %c0_25] : memref<4x2x128xf32, #tpu.memory_space<vmem>>, vector<1x2x128xf32>
    %75 = vector.shape_cast %74 : vector<1x2x128xf32> to vector<2x128xf32>
    %76 = arith.truncf %62 : vector<2x32xf32> to vector<2x32xbf16>
    %cst_26 = arith.constant dense<0.000000e+00> : vector<2x128xf32>
    %77 = tpu.matmul %76, %1, %cst_26 {dimension_numbers = #tpu.dot_dimension_numbers<[1], [0], [0], [1], [0, 0, 1, 1], [], []>} : vector<2x32xbf16>, vector<32x128xbf16>, vector<2x128xf32> -> vector<2x128xf32>
    %78 = arith.addf %75, %77 : vector<2x128xf32>
    %79 = vector.extract_strided_slice %73 {offsets = [0, 0], sizes = [2, 32], strides = [1, 1]} : vector<2x128xf32> to vector<2x32xf32>
    %80 = arith.negf %79 : vector<2x32xf32>
    %81 = math.exp %80 : vector<2x32xf32>
    %cst_27 = arith.constant 1.000000e+00 : f32
    %82 = vector.broadcast %cst_27 : f32 to vector<2x32xf32>
    %83 = arith.addf %82, %81 : vector<2x32xf32>
    %84 = arith.divf %82, %83 : vector<2x32xf32>
    %85 = vector.extract_strided_slice %73 {offsets = [0, 32], sizes = [2, 32], strides = [1, 1]} : vector<2x128xf32> to vector<2x32xf32>
    %86 = arith.negf %85 : vector<2x32xf32>
    %87 = math.exp %86 : vector<2x32xf32>
    %cst_28 = arith.constant 1.000000e+00 : f32
    %88 = vector.broadcast %cst_28 : f32 to vector<2x32xf32>
    %89 = arith.addf %88, %87 : vector<2x32xf32>
    %90 = arith.divf %88, %89 : vector<2x32xf32>
    %91 = vector.extract_strided_slice %73 {offsets = [0, 64], sizes = [2, 32], strides = [1, 1]} : vector<2x128xf32> to vector<2x32xf32>
    %92 = math.tanh %91 : vector<2x32xf32>
    %93 = vector.extract_strided_slice %73 {offsets = [0, 96], sizes = [2, 32], strides = [1, 1]} : vector<2x128xf32> to vector<2x32xf32>
    %94 = arith.negf %93 : vector<2x32xf32>
    %95 = math.exp %94 : vector<2x32xf32>
    %cst_29 = arith.constant 1.000000e+00 : f32
    %96 = vector.broadcast %cst_29 : f32 to vector<2x32xf32>
    %97 = arith.addf %96, %95 : vector<2x32xf32>
    %98 = arith.divf %96, %97 : vector<2x32xf32>
    %99 = arith.mulf %90, %35 : vector<2x32xf32>
    %100 = arith.mulf %84, %92 : vector<2x32xf32>
    %101 = arith.addf %99, %100 : vector<2x32xf32>
    %102 = math.tanh %101 : vector<2x32xf32>
    %103 = arith.mulf %98, %102 : vector<2x32xf32>
    %104 = vector.extract_strided_slice %78 {offsets = [0, 0], sizes = [2, 32], strides = [1, 1]} : vector<2x128xf32> to vector<2x32xf32>
    %105 = arith.negf %104 : vector<2x32xf32>
    %106 = math.exp %105 : vector<2x32xf32>
    %cst_30 = arith.constant 1.000000e+00 : f32
    %107 = vector.broadcast %cst_30 : f32 to vector<2x32xf32>
    %108 = arith.addf %107, %106 : vector<2x32xf32>
    %109 = arith.divf %107, %108 : vector<2x32xf32>
    %110 = vector.extract_strided_slice %78 {offsets = [0, 32], sizes = [2, 32], strides = [1, 1]} : vector<2x128xf32> to vector<2x32xf32>
    %111 = arith.negf %110 : vector<2x32xf32>
    %112 = math.exp %111 : vector<2x32xf32>
    %cst_31 = arith.constant 1.000000e+00 : f32
    %113 = vector.broadcast %cst_31 : f32 to vector<2x32xf32>
    %114 = arith.addf %113, %112 : vector<2x32xf32>
    %115 = arith.divf %113, %114 : vector<2x32xf32>
    %116 = vector.extract_strided_slice %78 {offsets = [0, 64], sizes = [2, 32], strides = [1, 1]} : vector<2x128xf32> to vector<2x32xf32>
    %117 = math.tanh %116 : vector<2x32xf32>
    %118 = vector.extract_strided_slice %78 {offsets = [0, 96], sizes = [2, 32], strides = [1, 1]} : vector<2x128xf32> to vector<2x32xf32>
    %119 = arith.negf %118 : vector<2x32xf32>
    %120 = math.exp %119 : vector<2x32xf32>
    %cst_32 = arith.constant 1.000000e+00 : f32
    %121 = vector.broadcast %cst_32 : f32 to vector<2x32xf32>
    %122 = arith.addf %121, %120 : vector<2x32xf32>
    %123 = arith.divf %121, %122 : vector<2x32xf32>
    %124 = arith.mulf %115, %60 : vector<2x32xf32>
    %125 = arith.mulf %109, %117 : vector<2x32xf32>
    %126 = arith.addf %124, %125 : vector<2x32xf32>
    %127 = math.tanh %126 : vector<2x32xf32>
    %128 = arith.mulf %123, %127 : vector<2x32xf32>
    %c1_33 = arith.constant 1 : index
    %c0_34 = arith.constant 0 : index
    %c0_35 = arith.constant 0 : index
    %129 = vector.load %arg4[%c1_33, %c0_34, %c0_35] : memref<4x2x64xf32, #tpu.memory_space<vmem>>, vector<1x2x32xf32>
    %130 = vector.shape_cast %129 : vector<1x2x32xf32> to vector<2x32xf32>
    %131 = vector.shape_cast %103 : vector<2x32xf32> to vector<1x2x32xf32>
    tpu.vector_store %arg4[%c1_33, %c0_34, %c0_35], %131 {strides = array<i32>} : memref<4x2x64xf32, #tpu.memory_space<vmem>>, vector<1x2x32xf32>,
    %c2_36 = arith.constant 2 : index
    %c0_37 = arith.constant 0 : index
    %c32_38 = arith.constant 32 : index
    %132 = vector.load %arg4[%c2_36, %c0_37, %c32_38] : memref<4x2x64xf32, #tpu.memory_space<vmem>>, vector<1x2x32xf32>
    %133 = vector.shape_cast %132 : vector<1x2x32xf32> to vector<2x32xf32>
    %134 = vector.shape_cast %128 : vector<2x32xf32> to vector<1x2x32xf32>
    tpu.vector_store %arg4[%c2_36, %c0_37, %c32_38], %134 {strides = array<i32>} : memref<4x2x64xf32, #tpu.memory_space<vmem>>, vector<1x2x32xf32>,
    %c2_39 = arith.constant 2 : index
    %c0_40 = arith.constant 0 : index
    %c0_41 = arith.constant 0 : index
    %135 = vector.load %arg0[%c2_39, %c0_40, %c0_41] : memref<4x2x128xf32, #tpu.memory_space<vmem>>, vector<1x2x128xf32>
    %136 = vector.shape_cast %135 : vector<1x2x128xf32> to vector<2x128xf32>
    %137 = arith.truncf %103 : vector<2x32xf32> to vector<2x32xbf16>
    %cst_42 = arith.constant dense<0.000000e+00> : vector<2x128xf32>
    %138 = tpu.matmul %137, %0, %cst_42 {dimension_numbers = #tpu.dot_dimension_numbers<[1], [0], [0], [1], [0, 0, 1, 1], [], []>} : vector<2x32xbf16>, vector<32x128xbf16>, vector<2x128xf32> -> vector<2x128xf32>
    %139 = arith.addf %136, %138 : vector<2x128xf32>
    %c1_43 = arith.constant 1 : index
    %c0_44 = arith.constant 0 : index
    %c0_45 = arith.constant 0 : index
    %140 = vector.load %arg1[%c1_43, %c0_44, %c0_45] : memref<4x2x128xf32, #tpu.memory_space<vmem>>, vector<1x2x128xf32>
    %141 = vector.shape_cast %140 : vector<1x2x128xf32> to vector<2x128xf32>
    %142 = arith.truncf %128 : vector<2x32xf32> to vector<2x32xbf16>
    %cst_46 = arith.constant dense<0.000000e+00> : vector<2x128xf32>
    %143 = tpu.matmul %142, %1, %cst_46 {dimension_numbers = #tpu.dot_dimension_numbers<[1], [0], [0], [1], [0, 0, 1, 1], [], []>} : vector<2x32xbf16>, vector<32x128xbf16>, vector<2x128xf32> -> vector<2x128xf32>
    %144 = arith.addf %141, %143 : vector<2x128xf32>
    %145 = vector.extract_strided_slice %139 {offsets = [0, 0], sizes = [2, 32], strides = [1, 1]} : vector<2x128xf32> to vector<2x32xf32>
    %146 = arith.negf %145 : vector<2x32xf32>
    %147 = math.exp %146 : vector<2x32xf32>
    %cst_47 = arith.constant 1.000000e+00 : f32
    %148 = vector.broadcast %cst_47 : f32 to vector<2x32xf32>
    %149 = arith.addf %148, %147 : vector<2x32xf32>
    %150 = arith.divf %148, %149 : vector<2x32xf32>
    %151 = vector.extract_strided_slice %139 {offsets = [0, 32], sizes = [2, 32], strides = [1, 1]} : vector<2x128xf32> to vector<2x32xf32>
    %152 = arith.negf %151 : vector<2x32xf32>
    %153 = math.exp %152 : vector<2x32xf32>
    %cst_48 = arith.constant 1.000000e+00 : f32
    %154 = vector.broadcast %cst_48 : f32 to vector<2x32xf32>
    %155 = arith.addf %154, %153 : vector<2x32xf32>
    %156 = arith.divf %154, %155 : vector<2x32xf32>
    %157 = vector.extract_strided_slice %139 {offsets = [0, 64], sizes = [2, 32], strides = [1, 1]} : vector<2x128xf32> to vector<2x32xf32>
    %158 = math.tanh %157 : vector<2x32xf32>
    %159 = vector.extract_strided_slice %139 {offsets = [0, 96], sizes = [2, 32], strides = [1, 1]} : vector<2x128xf32> to vector<2x32xf32>
    %160 = arith.negf %159 : vector<2x32xf32>
    %161 = math.exp %160 : vector<2x32xf32>
    %cst_49 = arith.constant 1.000000e+00 : f32
    %162 = vector.broadcast %cst_49 : f32 to vector<2x32xf32>
    %163 = arith.addf %162, %161 : vector<2x32xf32>
    %164 = arith.divf %162, %163 : vector<2x32xf32>
    %165 = arith.mulf %156, %101 : vector<2x32xf32>
    %166 = arith.mulf %150, %158 : vector<2x32xf32>
    %167 = arith.addf %165, %166 : vector<2x32xf32>
    %168 = math.tanh %167 : vector<2x32xf32>
    %169 = arith.mulf %164, %168 : vector<2x32xf32>
    %170 = vector.extract_strided_slice %144 {offsets = [0, 0], sizes = [2, 32], strides = [1, 1]} : vector<2x128xf32> to vector<2x32xf32>
    %171 = arith.negf %170 : vector<2x32xf32>
    %172 = math.exp %171 : vector<2x32xf32>
    %cst_50 = arith.constant 1.000000e+00 : f32
    %173 = vector.broadcast %cst_50 : f32 to vector<2x32xf32>
    %174 = arith.addf %173, %172 : vector<2x32xf32>
    %175 = arith.divf %173, %174 : vector<2x32xf32>
    %176 = vector.extract_strided_slice %144 {offsets = [0, 32], sizes = [2, 32], strides = [1, 1]} : vector<2x128xf32> to vector<2x32xf32>
    %177 = arith.negf %176 : vector<2x32xf32>
    %178 = math.exp %177 : vector<2x32xf32>
    %cst_51 = arith.constant 1.000000e+00 : f32
    %179 = vector.broadcast %cst_51 : f32 to vector<2x32xf32>
    %180 = arith.addf %179, %178 : vector<2x32xf32>
    %181 = arith.divf %179, %180 : vector<2x32xf32>
    %182 = vector.extract_strided_slice %144 {offsets = [0, 64], sizes = [2, 32], strides = [1, 1]} : vector<2x128xf32> to vector<2x32xf32>
    %183 = math.tanh %182 : vector<2x32xf32>
    %184 = vector.extract_strided_slice %144 {offsets = [0, 96], sizes = [2, 32], strides = [1, 1]} : vector<2x128xf32> to vector<2x32xf32>
    %185 = arith.negf %184 : vector<2x32xf32>
    %186 = math.exp %185 : vector<2x32xf32>
    %cst_52 = arith.constant 1.000000e+00 : f32
    %187 = vector.broadcast %cst_52 : f32 to vector<2x32xf32>
    %188 = arith.addf %187, %186 : vector<2x32xf32>
    %189 = arith.divf %187, %188 : vector<2x32xf32>
    %190 = arith.mulf %181, %126 : vector<2x32xf32>
    %191 = arith.mulf %175, %183 : vector<2x32xf32>
    %192 = arith.addf %190, %191 : vector<2x32xf32>
    %193 = math.tanh %192 : vector<2x32xf32>
    %194 = arith.mulf %189, %193 : vector<2x32xf32>
    %c2_53 = arith.constant 2 : index
    %c0_54 = arith.constant 0 : index
    %c0_55 = arith.constant 0 : index
    %195 = vector.load %arg4[%c2_53, %c0_54, %c0_55] : memref<4x2x64xf32, #tpu.memory_space<vmem>>, vector<1x2x32xf32>
    %196 = vector.shape_cast %195 : vector<1x2x32xf32> to vector<2x32xf32>
    %197 = vector.shape_cast %169 : vector<2x32xf32> to vector<1x2x32xf32>
    tpu.vector_store %arg4[%c2_53, %c0_54, %c0_55], %197 {strides = array<i32>} : memref<4x2x64xf32, #tpu.memory_space<vmem>>, vector<1x2x32xf32>,
    %c1_56 = arith.constant 1 : index
    %c0_57 = arith.constant 0 : index
    %c32_58 = arith.constant 32 : index
    %198 = vector.load %arg4[%c1_56, %c0_57, %c32_58] : memref<4x2x64xf32, #tpu.memory_space<vmem>>, vector<1x2x32xf32>
    %199 = vector.shape_cast %198 : vector<1x2x32xf32> to vector<2x32xf32>
    %200 = vector.shape_cast %194 : vector<2x32xf32> to vector<1x2x32xf32>
    tpu.vector_store %arg4[%c1_56, %c0_57, %c32_58], %200 {strides = array<i32>} : memref<4x2x64xf32, #tpu.memory_space<vmem>>, vector<1x2x32xf32>,
    %c3_59 = arith.constant 3 : index
    %c0_60 = arith.constant 0 : index
    %c0_61 = arith.constant 0 : index
    %201 = vector.load %arg0[%c3_59, %c0_60, %c0_61] : memref<4x2x128xf32, #tpu.memory_space<vmem>>, vector<1x2x128xf32>
    %202 = vector.shape_cast %201 : vector<1x2x128xf32> to vector<2x128xf32>
    %203 = arith.truncf %169 : vector<2x32xf32> to vector<2x32xbf16>
    %cst_62 = arith.constant dense<0.000000e+00> : vector<2x128xf32>
    %204 = tpu.matmul %203, %0, %cst_62 {dimension_numbers = #tpu.dot_dimension_numbers<[1], [0], [0], [1], [0, 0, 1, 1], [], []>} : vector<2x32xbf16>, vector<32x128xbf16>, vector<2x128xf32> -> vector<2x128xf32>
    %205 = arith.addf %202, %204 : vector<2x128xf32>
    %c0_63 = arith.constant 0 : index
    %c0_64 = arith.constant 0 : index
    %c0_65 = arith.constant 0 : index
    %206 = vector.load %arg1[%c0_63, %c0_64, %c0_65] : memref<4x2x128xf32, #tpu.memory_space<vmem>>, vector<1x2x128xf32>
    %207 = vector.shape_cast %206 : vector<1x2x128xf32> to vector<2x128xf32>
    %208 = arith.truncf %194 : vector<2x32xf32> to vector<2x32xbf16>
    %cst_66 = arith.constant dense<0.000000e+00> : vector<2x128xf32>
    %209 = tpu.matmul %208, %1, %cst_66 {dimension_numbers = #tpu.dot_dimension_numbers<[1], [0], [0], [1], [0, 0, 1, 1], [], []>} : vector<2x32xbf16>, vector<32x128xbf16>, vector<2x128xf32> -> vector<2x128xf32>
    %210 = arith.addf %207, %209 : vector<2x128xf32>
    %211 = vector.extract_strided_slice %205 {offsets = [0, 0], sizes = [2, 32], strides = [1, 1]} : vector<2x128xf32> to vector<2x32xf32>
    %212 = arith.negf %211 : vector<2x32xf32>
    %213 = math.exp %212 : vector<2x32xf32>
    %cst_67 = arith.constant 1.000000e+00 : f32
    %214 = vector.broadcast %cst_67 : f32 to vector<2x32xf32>
    %215 = arith.addf %214, %213 : vector<2x32xf32>
    %216 = arith.divf %214, %215 : vector<2x32xf32>
    %217 = vector.extract_strided_slice %205 {offsets = [0, 32], sizes = [2, 32], strides = [1, 1]} : vector<2x128xf32> to vector<2x32xf32>
    %218 = arith.negf %217 : vector<2x32xf32>
    %219 = math.exp %218 : vector<2x32xf32>
    %cst_68 = arith.constant 1.000000e+00 : f32
    %220 = vector.broadcast %cst_68 : f32 to vector<2x32xf32>
    %221 = arith.addf %220, %219 : vector<2x32xf32>
    %222 = arith.divf %220, %221 : vector<2x32xf32>
    %223 = vector.extract_strided_slice %205 {offsets = [0, 64], sizes = [2, 32], strides = [1, 1]} : vector<2x128xf32> to vector<2x32xf32>
    %224 = math.tanh %223 : vector<2x32xf32>
    %225 = vector.extract_strided_slice %205 {offsets = [0, 96], sizes = [2, 32], strides = [1, 1]} : vector<2x128xf32> to vector<2x32xf32>
    %226 = arith.negf %225 : vector<2x32xf32>
    %227 = math.exp %226 : vector<2x32xf32>
    %cst_69 = arith.constant 1.000000e+00 : f32
    %228 = vector.broadcast %cst_69 : f32 to vector<2x32xf32>
    %229 = arith.addf %228, %227 : vector<2x32xf32>
    %230 = arith.divf %228, %229 : vector<2x32xf32>
    %231 = arith.mulf %222, %167 : vector<2x32xf32>
    %232 = arith.mulf %216, %224 : vector<2x32xf32>
    %233 = arith.addf %231, %232 : vector<2x32xf32>
    %234 = math.tanh %233 : vector<2x32xf32>
    %235 = arith.mulf %230, %234 : vector<2x32xf32>
    %236 = vector.extract_strided_slice %210 {offsets = [0, 0], sizes = [2, 32], strides = [1, 1]} : vector<2x128xf32> to vector<2x32xf32>
    %237 = arith.negf %236 : vector<2x32xf32>
    %238 = math.exp %237 : vector<2x32xf32>
    %cst_70 = arith.constant 1.000000e+00 : f32
    %239 = vector.broadcast %cst_70 : f32 to vector<2x32xf32>
    %240 = arith.addf %239, %238 : vector<2x32xf32>
    %241 = arith.divf %239, %240 : vector<2x32xf32>
    %242 = vector.extract_strided_slice %210 {offsets = [0, 32], sizes = [2, 32], strides = [1, 1]} : vector<2x128xf32> to vector<2x32xf32>
    %243 = arith.negf %242 : vector<2x32xf32>
    %244 = math.exp %243 : vector<2x32xf32>
    %cst_71 = arith.constant 1.000000e+00 : f32
    %245 = vector.broadcast %cst_71 : f32 to vector<2x32xf32>
    %246 = arith.addf %245, %244 : vector<2x32xf32>
    %247 = arith.divf %245, %246 : vector<2x32xf32>
    %248 = vector.extract_strided_slice %210 {offsets = [0, 64], sizes = [2, 32], strides = [1, 1]} : vector<2x128xf32> to vector<2x32xf32>
    %249 = math.tanh %248 : vector<2x32xf32>
    %250 = vector.extract_strided_slice %210 {offsets = [0, 96], sizes = [2, 32], strides = [1, 1]} : vector<2x128xf32> to vector<2x32xf32>
    %251 = arith.negf %250 : vector<2x32xf32>
    %252 = math.exp %251 : vector<2x32xf32>
    %cst_72 = arith.constant 1.000000e+00 : f32
    %253 = vector.broadcast %cst_72 : f32 to vector<2x32xf32>
    %254 = arith.addf %253, %252 : vector<2x32xf32>
    %255 = arith.divf %253, %254 : vector<2x32xf32>
    %256 = arith.mulf %247, %192 : vector<2x32xf32>
    %257 = arith.mulf %241, %249 : vector<2x32xf32>
    %258 = arith.addf %256, %257 : vector<2x32xf32>
    %259 = math.tanh %258 : vector<2x32xf32>
    %260 = arith.mulf %255, %259 : vector<2x32xf32>
    %c3_73 = arith.constant 3 : index
    %c0_74 = arith.constant 0 : index
    %c0_75 = arith.constant 0 : index
    %261 = vector.load %arg4[%c3_73, %c0_74, %c0_75] : memref<4x2x64xf32, #tpu.memory_space<vmem>>, vector<1x2x32xf32>
    %262 = vector.shape_cast %261 : vector<1x2x32xf32> to vector<2x32xf32>
    %263 = vector.shape_cast %235 : vector<2x32xf32> to vector<1x2x32xf32>
    tpu.vector_store %arg4[%c3_73, %c0_74, %c0_75], %263 {strides = array<i32>} : memref<4x2x64xf32, #tpu.memory_space<vmem>>, vector<1x2x32xf32>,
    %c0_76 = arith.constant 0 : index
    %c0_77 = arith.constant 0 : index
    %c32_78 = arith.constant 32 : index
    %264 = vector.load %arg4[%c0_76, %c0_77, %c32_78] : memref<4x2x64xf32, #tpu.memory_space<vmem>>, vector<1x2x32xf32>
    %265 = vector.shape_cast %264 : vector<1x2x32xf32> to vector<2x32xf32>
    %266 = vector.shape_cast %260 : vector<2x32xf32> to vector<1x2x32xf32>
    tpu.vector_store %arg4[%c0_76, %c0_77, %c32_78], %266 {strides = array<i32>} : memref<4x2x64xf32, #tpu.memory_space<vmem>>, vector<1x2x32xf32>,
    %c0_79 = arith.constant 0 : index
    %c0_80 = arith.constant 0 : index
    %c0_81 = arith.constant 0 : index
    %267 = vector.load %arg5[%c0_79, %c0_80, %c0_81] : memref<2x2x32xf32, #tpu.memory_space<vmem>>, vector<1x2x32xf32>
    %268 = vector.shape_cast %267 : vector<1x2x32xf32> to vector<2x32xf32>
    %269 = vector.shape_cast %235 : vector<2x32xf32> to vector<1x2x32xf32>
    tpu.vector_store %arg5[%c0_79, %c0_80, %c0_81], %269 {strides = array<i32>} : memref<2x2x32xf32, #tpu.memory_space<vmem>>, vector<1x2x32xf32>,
    %c1_82 = arith.constant 1 : index
    %c0_83 = arith.constant 0 : index
    %c0_84 = arith.constant 0 : index
    %270 = vector.load %arg5[%c1_82, %c0_83, %c0_84] : memref<2x2x32xf32, #tpu.memory_space<vmem>>, vector<1x2x32xf32>
    %271 = vector.shape_cast %270 : vector<1x2x32xf32> to vector<2x32xf32>
    %272 = vector.shape_cast %260 : vector<2x32xf32> to vector<1x2x32xf32>
    tpu.vector_store %arg5[%c1_82, %c0_83, %c0_84], %272 {strides = array<i32>} : memref<2x2x32xf32, #tpu.memory_space<vmem>>, vector<1x2x32xf32>,
    %c0_85 = arith.constant 0 : index
    %c0_86 = arith.constant 0 : index
    %c0_87 = arith.constant 0 : index
    %273 = vector.load %arg6[%c0_85, %c0_86, %c0_87] : memref<2x2x32xf32, #tpu.memory_space<vmem>>, vector<1x2x32xf32>
    %274 = vector.shape_cast %273 : vector<1x2x32xf32> to vector<2x32xf32>
    %275 = vector.shape_cast %233 : vector<2x32xf32> to vector<1x2x32xf32>
    tpu.vector_store %arg6[%c0_85, %c0_86, %c0_87], %275 {strides = array<i32>} : memref<2x2x32xf32, #tpu.memory_space<vmem>>, vector<1x2x32xf32>,
    %c1_88 = arith.constant 1 : index
    %c0_89 = arith.constant 0 : index
    %c0_90 = arith.constant 0 : index
    %276 = vector.load %arg6[%c1_88, %c0_89, %c0_90] : memref<2x2x32xf32, #tpu.memory_space<vmem>>, vector<1x2x32xf32>
    %277 = vector.shape_cast %276 : vector<1x2x32xf32> to vector<2x32xf32>
    %278 = vector.shape_cast %258 : vector<2x32xf32> to vector<1x2x32xf32>
    tpu.vector_store %arg6[%c1_88, %c0_89, %c0_90], %278 {strides = array<i32>} : memref<2x2x32xf32, #tpu.memory_space<vmem>>, vector<1x2x32xf32>,
    return
  }
}

</mosaic_0001>

<llo_original>
// kernel: listener_forward.5
$region0: #{listener_forward.5}
  #allocation0 [shape = 'u32[]', space=smem, size = 0x4, offset = 0x4, fixed_abs, tag = 'smem constant byte address 0x4 - core index']
  #allocation1 [shape = 'u32[144,128]{1,0:T(1,128)}', space=vmem, size = 0x12000, scoped, tag = 'internal scratch']
  %s0 = inlined_call_operand.vmem [shape: f32[4,2,128], index: 0, kind: input, shape index: {}]
  %s1 = inlined_call_operand.vmem [shape: f32[4,2,128], index: 1, kind: input, shape index: {}]
  %s2 = inlined_call_operand.vmem [shape: bf16[32,128], index: 2, kind: input, shape index: {}]
  %s3 = inlined_call_operand.vmem [shape: bf16[32,128], index: 3, kind: input, shape index: {}]
  %s4 = inlined_call_operand.vmem [shape: f32[4,2,64], index: 4, kind: output, shape index: {0}]
  %s5 = inlined_call_operand.hbm [shape: f32[2,2,32], index: 5, kind: output, shape index: {1}]
  %s6 = inlined_call_operand.hbm [shape: f32[2,2,32], index: 6, kind: output, shape index: {2}]
  %7 = xla_tuple %s4, %s5, %s6
  %s8 = sld [smem:[#allocation0]]
  $region42: #{listener_forward.5} parent=0
    _
  %s10 = ssub.s32 1, %s8
  %s11 = scalar_select 0, %s10, %s8
  $region1: #{listener_forward.5} parent=0
    #allocation2 [shape = 'u8[2048]{0}', space=vmem, size = 0x800, scoped, tag = 'output window, operand 1, single buffered']
    #allocation3 [shape = 's32[1]{0}', space=sflag, size = 0x4, scoped, tag = 'scoped memory for listener_forward.5']
    #allocation4 [shape = 'u8[2048]{0}', space=vmem, size = 0x800, scoped, tag = 'output window, operand 2, single buffered']
    #allocation5 [shape = 's32[1]{0}', space=sflag, size = 0x4, scoped, tag = 'scoped memory for listener_forward.5']
    %12 = vsyncpa [#allocation3], 0
    %13 = vsyncpa [#allocation5], 0
    // Predicated region
    $region2: #{listener_forward.5} parent=1 // pred_check
      _
    $region3: #{listener_forward.5} parent=1 // pred_check_branch
      %15 = sbr.rel (0) target = $region5
    $region4: #{listener_forward.5} parent=1 // pred_region
      _
    $region5: #{listener_forward.5} parent=1 // pred_fallthru
      _
    // Predicated region
    $region6: #{listener_forward.5} parent=1 // pred_check
      _
    $region7: #{listener_forward.5} parent=1 // pred_check_branch
      %17 = sbr.rel (0) target = $region9
    $region8: #{listener_forward.5} parent=1 // pred_region
      _
    $region9: #{listener_forward.5} parent=1 // pred_fallthru
      _
    // Predicated region
    $region10: #{listener_forward.5} parent=1 // pred_check
      _
    $region11: #{listener_forward.5} parent=1 // pred_check_branch
      %19 = sbr.rel (0) target = $region13
    $region12: #{listener_forward.5} parent=1 // pred_region
      _
    $region13: #{listener_forward.5} parent=1 // pred_fallthru
      _
    // Predicated region
    $region14: #{listener_forward.5} parent=1 // pred_check
      _
    $region15: #{listener_forward.5} parent=1 // pred_check_branch
      %21 = sbr.rel (0) target = $region17
    $region16: #{listener_forward.5} parent=1 // pred_region
      _
    $region17: #{listener_forward.5} parent=1 // pred_fallthru
      _
    %v23 = vld [vmem:[%s2] sm:$0xf]
    %v24 = vld [vmem:[%s2 + $0x4] sm:$0xf]
    %v25 = vld [vmem:[%s2 + $0x8] sm:$0xf]
    %v26 = vld [vmem:[%s2 + $0xc] sm:$0xf]
    %v27 = vld [vmem:[%s3] sm:$0xf]
    %v28 = vld [vmem:[%s3 + $0x4] sm:$0xf]
    %v29 = vld [vmem:[%s3 + $0x8] sm:$0xf]
    %v30 = vld [vmem:[%s3 + $0xc] sm:$0xf]
    %v31 = vld [vmem:[%s0] sm:$0x3]
    %v36 = vunpack.c.l.b16 %v23
    %v37 = vunpack.c.l.b16 %v24
    %v38 = vunpack.c.l.b16 %v25
    %v39 = vunpack.c.l.b16 %v26
    %v40 = vpack.c.b16 %v37, %v36
    %v41 = vpack.c.b16 %v39, %v38
    %vm44 = vcmask 261120
    %v46 = vsel %vm44, 0, 0
    %48 = vmatprep.subr.bf16.mxu0 0
    %49 = vmatpush1.bf16.msra.mxu0 %v40
    %50 = vmatprep.subr.bf16.mxu0 0
    %51 = vmatpush1.bf16.msra.mxu0 %v41
    %52 = vmatprep.subr.bf16.mxu0 0
    %53 = vmatpush1.bf16.msra.mxu0 0
    %54 = vmatprep.subr.bf16.mxu0 0
    %55 = vmatpush1.bf16.msra.mxu0 0
    %56 = vmatprep.subr.bf16.mxu0 0
    %57 = vmatpush1.bf16.msra.mxu0 0
    %58 = vmatprep.subr.bf16.mxu0 0
    %59 = vmatpush1.bf16.msra.mxu0 0
    %60 = vmatprep.subr.bf16.mxu0 0
    %61 = vmatpush1.bf16.msra.mxu0 0
    %62 = vmatprep.subr.bf16.mxu0 0
    %63 = vmatpush1.bf16.msra.mxu0 0
    %64 = vmatprep.subr.bf16.mxu0 0
    %65 = vmatpush1.bf16.msra.mxu0 0
    %66 = vmatprep.subr.bf16.mxu0 0
    %67 = vmatpush1.bf16.msra.mxu0 0
    %68 = vmatprep.subr.bf16.mxu0 0
    %69 = vmatpush1.bf16.msra.mxu0 0
    %70 = vmatprep.subr.bf16.mxu0 0
    %71 = vmatpush1.bf16.msra.mxu0 0
    %72 = vmatprep.subr.bf16.mxu0 0
    %73 = vmatpush1.bf16.msra.mxu0 0
    %74 = vmatprep.subr.bf16.mxu0 0
    %75 = vmatpush1.bf16.msra.mxu0 0
    %76 = vmatprep.subr.bf16.mxu0 0
    %77 = vmatpush1.bf16.msra.mxu0 0
    %78 = vmatprep.subr.bf16.mxu0 0
    %79 = vmatpush1.bf16.msra.mxu0 0
    %80 = vmatprep.mubr.bf16.mxu0 0
    %81 = vmatmul.mubr.bf16.gmra.mrb[0].mxu0 %v46
    %v82 = vpop.f32.mrb[0].mxu0
    %v83 = vadd.f32 0.0, %v82
    %v84 = vpop.f32.mrb[0].mxu0
    %v85 = vpop.f32.mrb[0].mxu0
    %v86 = vpop.f32.mrb[0].mxu0
    %87 = vdwg.mxu0
    %v88 = vadd.f32 %v31, %v83
    %s89 = scalar_lea.vmem %s1, 6
    %v90 = vld [vmem:[%s89] sm:$0x3]
    %v95 = vunpack.c.l.b16 %v27
    %v96 = vunpack.c.l.b16 %v28
    %v97 = vunpack.c.l.b16 %v29
    %v98 = vunpack.c.l.b16 %v30
    %v99 = vpack.c.b16 %v96, %v95
    %v100 = vpack.c.b16 %v98, %v97
    %103 = vmatprep.subr.bf16.mxu0 0
    %104 = vmatpush1.bf16.msra.mxu0 %v99
    %105 = vmatprep.subr.bf16.mxu0 0
    %106 = vmatpush1.bf16.msra.mxu0 %v100
    %107 = vmatprep.subr.bf16.mxu0 0
    %108 = vmatpush1.bf16.msra.mxu0 0
    %109 = vmatprep.subr.bf16.mxu0 0
    %110 = vmatpush1.bf16.msra.mxu0 0
    %111 = vmatprep.subr.bf16.mxu0 0
    %112 = vmatpush1.bf16.msra.mxu0 0
    %113 = vmatprep.subr.bf16.mxu0 0
    %114 = vmatpush1.bf16.msra.mxu0 0
    %115 = vmatprep.subr.bf16.mxu0 0
    %116 = vmatpush1.bf16.msra.mxu0 0
    %117 = vmatprep.subr.bf16.mxu0 0
    %118 = vmatpush1.bf16.msra.mxu0 0
    %119 = vmatprep.subr.bf16.mxu0 0
    %120 = vmatpush1.bf16.msra.mxu0 0
    %121 = vmatprep.subr.bf16.mxu0 0
    %122 = vmatpush1.bf16.msra.mxu0 0
    %123 = vmatprep.subr.bf16.mxu0 0
    %124 = vmatpush1.bf16.msra.mxu0 0
    %125 = vmatprep.subr.bf16.mxu0 0
    %126 = vmatpush1.bf16.msra.mxu0 0
    %127 = vmatprep.subr.bf16.mxu0 0
    %128 = vmatpush1.bf16.msra.mxu0 0
    %129 = vmatprep.subr.bf16.mxu0 0
    %130 = vmatpush1.bf16.msra.mxu0 0
    %131 = vmatprep.subr.bf16.mxu0 0
    %132 = vmatpush1.bf16.msra.mxu0 0
    %133 = vmatprep.subr.bf16.mxu0 0
    %134 = vmatpush1.bf16.msra.mxu0 0
    %135 = vmatprep.mubr.bf16.mxu0 0
    %136 = vmatmul.mubr.bf16.gmra.mrb[0].mxu0 %v46
    %v137 = vpop.f32.mrb[0].mxu0
    %v138 = vadd.f32 0.0, %v137
    %v139 = vpop.f32.mrb[0].mxu0
    %v140 = vpop.f32.mrb[0].mxu0
    %v141 = vpop.f32.mrb[0].mxu0
    %142 = vdwg.mxu0
    %v143 = vadd.f32 %v90, %v138
    %v144 = vxor.u32 %v88, 2147483648
    %v145 = vmul.f32 %v144, 1.442695
    %v146 = vpow.pop %v145
    %v147 = vadd.f32 %v146, 1.0
    %v148 = vrcp.pop %v147
    %v149 = vmul.f32 1.0, %v148
    %v150 = vtanh.pop %v88
    %v151 = vmul.f32 %v149, 0.0
    %153 = vrot.lane.b32.xlu0 %v150, 64
    %v154 = vpop.permute.xlu0 %153
    %v156 = vmul.f32 %v149, %v154
    %158 = vrot.lane.b32.xlu0 %v156, 32
    %v159 = vpop.permute.xlu0 %158
    %v161 = vadd.f32 %v151, %v159
    %v162 = vtanh.pop %v161
    %164 = vrot.lane.b32.xlu0 %v162, 64
    %v165 = vpop.permute.xlu0 %164
    %v167 = vmul.f32 %v149, %v165
    %v168 = vxor.u32 %v143, 2147483648
    %v169 = vmul.f32 %v168, 1.442695
    %v170 = vpow.pop %v169
    %v171 = vadd.f32 %v170, 1.0
    %v172 = vrcp.pop %v171
    %v173 = vmul.f32 1.0, %v172
    %v174 = vtanh.pop %v143
    %v175 = vmul.f32 %v173, 0.0
    %177 = vrot.lane.b32.xlu0 %v174, 64
    %v178 = vpop.permute.xlu0 %177
    %v180 = vmul.f32 %v173, %v178
    %182 = vrot.lane.b32.xlu0 %v180, 32
    %v183 = vpop.permute.xlu0 %182
    %v185 = vadd.f32 %v175, %v183
    %v186 = vtanh.pop %v185
    %188 = vrot.lane.b32.xlu0 %v186, 64
    %v189 = vpop.permute.xlu0 %188
    %v191 = vmul.f32 %v173, %v189
    %193 = vrot.lane.b32.xlu0 %v167, 32
    %v194 = vpop.permute.xlu0 %193
    %vm196 = vcmask 254976
    %197 = vst.msk [vmem:[%s4] sm:$0x3] %vm196, %v194
    %199 = vrot.lane.b32.xlu0 %v191, 64
    %v200 = vpop.permute.xlu0 %199
    %s202 = scalar_lea.vmem %s4, 6
    %vm203 = vcmask 517376
    %204 = vst.msk [vmem:[%s202] sm:$0x3] %vm203, %v200
    %s205 = scalar_lea.vmem %s0, 2
    %v206 = vld [vmem:[%s205] sm:$0x3]
    %v207 = vpack.c.bf16 %v167, %v167
    %209 = vrot.lane.b32.xlu0 %v207, 32
    %v210 = vpop.permute.xlu0 %209
    %v212 = vsel %vm44, %v210, 0
    %214 = vmatprep.subr.bf16.mxu0 0
    %215 = vmatpush1.bf16.msra.mxu0 %v40
    %216 = vmatprep.subr.bf16.mxu0 0
    %217 = vmatpush1.bf16.msra.mxu0 %v41
    %218 = vmatprep.subr.bf16.mxu0 0
    %219 = vmatpush1.bf16.msra.mxu0 0
    %220 = vmatprep.subr.bf16.mxu0 0
    %221 = vmatpush1.bf16.msra.mxu0 0
    %222 = vmatprep.subr.bf16.mxu0 0
    %223 = vmatpush1.bf16.msra.mxu0 0
    %224 = vmatprep.subr.bf16.mxu0 0
    %225 = vmatpush1.bf16.msra.mxu0 0
    %226 = vmatprep.subr.bf16.mxu0 0
    %227 = vmatpush1.bf16.msra.mxu0 0
    %228 = vmatprep.subr.bf16.mxu0 0
    %229 = vmatpush1.bf16.msra.mxu0 0
    %230 = vmatprep.subr.bf16.mxu0 0
    %231 = vmatpush1.bf16.msra.mxu0 0
    %232 = vmatprep.subr.bf16.mxu0 0
    %233 = vmatpush1.bf16.msra.mxu0 0
    %234 = vmatprep.subr.bf16.mxu0 0
    %235 = vmatpush1.bf16.msra.mxu0 0
    %236 = vmatprep.subr.bf16.mxu0 0
    %237 = vmatpush1.bf16.msra.mxu0 0
    %238 = vmatprep.subr.bf16.mxu0 0
    %239 = vmatpush1.bf16.msra.mxu0 0
    %240 = vmatprep.subr.bf16.mxu0 0
    %241 = vmatpush1.bf16.msra.mxu0 0
    %242 = vmatprep.subr.bf16.mxu0 0
    %243 = vmatpush1.bf16.msra.mxu0 0
    %244 = vmatprep.subr.bf16.mxu0 0
    %245 = vmatpush1.bf16.msra.mxu0 0
    %246 = vmatprep.mubr.bf16.mxu0 0
    %247 = vmatmul.mubr.bf16.gmra.mrb[0].mxu0 %v212
    %v248 = vpop.f32.mrb[0].mxu0
    %v249 = vadd.f32 0.0, %v248
    %v250 = vpop.f32.mrb[0].mxu0
    %v251 = vpop.f32.mrb[0].mxu0
    %v252 = vpop.f32.mrb[0].mxu0
    %253 = vdwg.mxu0
    %v254 = vadd.f32 %v206, %v249
    %s255 = scalar_lea.vmem %s1, 4
    %v256 = vld [vmem:[%s255] sm:$0x3]
    %v257 = vpack.c.bf16 %v191, %v191
    %259 = vrot.lane.b32.xlu0 %v257, 32
    %v260 = vpop.permute.xlu0 %259
    %v262 = vsel %vm44, %v260, 0
    %264 = vmatprep.subr.bf16.mxu0 0
    %265 = vmatpush1.bf16.msra.mxu0 %v99
    %266 = vmatprep.subr.bf16.mxu0 0
    %267 = vmatpush1.bf16.msra.mxu0 %v100
    %268 = vmatprep.subr.bf16.mxu0 0
    %269 = vmatpush1.bf16.msra.mxu0 0
    %270 = vmatprep.subr.bf16.mxu0 0
    %271 = vmatpush1.bf16.msra.mxu0 0
    %272 = vmatprep.subr.bf16.mxu0 0
    %273 = vmatpush1.bf16.msra.mxu0 0
    %274 = vmatprep.subr.bf16.mxu0 0
    %275 = vmatpush1.bf16.msra.mxu0 0
    %276 = vmatprep.subr.bf16.mxu0 0
    %277 = vmatpush1.bf16.msra.mxu0 0
    %278 = vmatprep.subr.bf16.mxu0 0
    %279 = vmatpush1.bf16.msra.mxu0 0
    %280 = vmatprep.subr.bf16.mxu0 0
    %281 = vmatpush1.bf16.msra.mxu0 0
    %282 = vmatprep.subr.bf16.mxu0 0
    %283 = vmatpush1.bf16.msra.mxu0 0
    %284 = vmatprep.subr.bf16.mxu0 0
    %285 = vmatpush1.bf16.msra.mxu0 0
    %286 = vmatprep.subr.bf16.mxu0 0
    %287 = vmatpush1.bf16.msra.mxu0 0
    %288 = vmatprep.subr.bf16.mxu0 0
    %289 = vmatpush1.bf16.msra.mxu0 0
    %290 = vmatprep.subr.bf16.mxu0 0
    %291 = vmatpush1.bf16.msra.mxu0 0
    %292 = vmatprep.subr.bf16.mxu0 0
    %293 = vmatpush1.bf16.msra.mxu0 0
    %294 = vmatprep.subr.bf16.mxu0 0
    %295 = vmatpush1.bf16.msra.mxu0 0
    %296 = vmatprep.mubr.bf16.mxu0 0
    %297 = vmatmul.mubr.bf16.gmra.mrb[0].mxu0 %v262
    %v298 = vpop.f32.mrb[0].mxu0
    %v299 = vadd.f32 0.0, %v298
    %v300 = vpop.f32.mrb[0].mxu0
    %v301 = vpop.f32.mrb[0].mxu0
    %v302 = vpop.f32.mrb[0].mxu0
    %303 = vdwg.mxu0
    %v304 = vadd.f32 %v256, %v299
    %v305 = vxor.u32 %v254, 2147483648
    %v306 = vmul.f32 %v305, 1.442695
    %v307 = vpow.pop %v306
    %v308 = vadd.f32 %v307, 1.0
    %v309 = vrcp.pop %v308
    %v310 = vmul.f32 1.0, %v309
    %v311 = vtanh.pop %v254
    %v312 = vmul.f32 %v310, %v161
    %314 = vrot.lane.b32.xlu0 %v311, 64
    %v315 = vpop.permute.xlu0 %314
    %v317 = vmul.f32 %v310, %v315
    %319 = vrot.lane.b32.xlu0 %v317, 32
    %v320 = vpop.permute.xlu0 %319
    %v322 = vadd.f32 %v312, %v320
    %v323 = vtanh.pop %v322
    %325 = vrot.lane.b32.xlu0 %v323, 64
    %v326 = vpop.permute.xlu0 %325
    %v328 = vmul.f32 %v310, %v326
    %v329 = vxor.u32 %v304, 2147483648
    %v330 = vmul.f32 %v329, 1.442695
    %v331 = vpow.pop %v330
    %v332 = vadd.f32 %v331, 1.0
    %v333 = vrcp.pop %v332
    %v334 = vmul.f32 1.0, %v333
    %v335 = vtanh.pop %v304
    %v336 = vmul.f32 %v334, %v185
    %338 = vrot.lane.b32.xlu0 %v335, 64
    %v339 = vpop.permute.xlu0 %338
    %v341 = vmul.f32 %v334, %v339
    %343 = vrot.lane.b32.xlu0 %v341, 32
    %v344 = vpop.permute.xlu0 %343
    %v346 = vadd.f32 %v336, %v344
    %v347 = vtanh.pop %v346
    %349 = vrot.lane.b32.xlu0 %v347, 64
    %v350 = vpop.permute.xlu0 %349
    %v352 = vmul.f32 %v334, %v350
    %354 = vrot.lane.b32.xlu0 %v328, 32
    %v355 = vpop.permute.xlu0 %354
    %s357 = scalar_lea.vmem %s4, 2
    %358 = vst.msk [vmem:[%s357] sm:$0x3] %vm196, %v355
    %360 = vrot.lane.b32.xlu0 %v352, 64
    %v361 = vpop.permute.xlu0 %360
    %s363 = scalar_lea.vmem %s4, 4
    %364 = vst.msk [vmem:[%s363] sm:$0x3] %vm203, %v361
    %s365 = scalar_lea.vmem %s0, 4
    %v366 = vld [vmem:[%s365] sm:$0x3]
    %v367 = vpack.c.bf16 %v328, %v328
    %369 = vrot.lane.b32.xlu0 %v367, 32
    %v370 = vpop.permute.xlu0 %369
    %v372 = vsel %vm44, %v370, 0
    %374 = vmatprep.subr.bf16.mxu0 0
    %375 = vmatpush1.bf16.msra.mxu0 %v40
    %376 = vmatprep.subr.bf16.mxu0 0
    %377 = vmatpush1.bf16.msra.mxu0 %v41
    %378 = vmatprep.subr.bf16.mxu0 0
    %379 = vmatpush1.bf16.msra.mxu0 0
    %380 = vmatprep.subr.bf16.mxu0 0
    %381 = vmatpush1.bf16.msra.mxu0 0
    %382 = vmatprep.subr.bf16.mxu0 0
    %383 = vmatpush1.bf16.msra.mxu0 0
    %384 = vmatprep.subr.bf16.mxu0 0
    %385 = vmatpush1.bf16.msra.mxu0 0
    %386 = vmatprep.subr.bf16.mxu0 0
    %387 = vmatpush1.bf16.msra.mxu0 0
    %388 = vmatprep.subr.bf16.mxu0 0
    %389 = vmatpush1.bf16.msra.mxu0 0
    %390 = vmatprep.subr.bf16.mxu0 0
    %391 = vmatpush1.bf16.msra.mxu0 0
    %392 = vmatprep.subr.bf16.mxu0 0
    %393 = vmatpush1.bf16.msra.mxu0 0
    %394 = vmatprep.subr.bf16.mxu0 0
    %395 = vmatpush1.bf16.msra.mxu0 0
    %396 = vmatprep.subr.bf16.mxu0 0
    %397 = vmatpush1.bf16.msra.mxu0 0
    %398 = vmatprep.subr.bf16.mxu0 0
    %399 = vmatpush1.bf16.msra.mxu0 0
    %400 = vmatprep.subr.bf16.mxu0 0
    %401 = vmatpush1.bf16.msra.mxu0 0
    %402 = vmatprep.subr.bf16.mxu0 0
    %403 = vmatpush1.bf16.msra.mxu0 0
    %404 = vmatprep.subr.bf16.mxu0 0
    %405 = vmatpush1.bf16.msra.mxu0 0
    %406 = vmatprep.mubr.bf16.mxu0 0
    %407 = vmatmul.mubr.bf16.gmra.mrb[0].mxu0 %v372
    %v408 = vpop.f32.mrb[0].mxu0
    %v409 = vadd.f32 0.0, %v408
    %v410 = vpop.f32.mrb[0].mxu0
    %v411 = vpop.f32.mrb[0].mxu0
    %v412 = vpop.f32.mrb[0].mxu0
    %413 = vdwg.mxu0
    %v414 = vadd.f32 %v366, %v409
    %s415 = scalar_lea.vmem %s1, 2
    %v416 = vld [vmem:[%s415] sm:$0x3]
    %v417 = vpack.c.bf16 %v352, %v352
    %419 = vrot.lane.b32.xlu0 %v417, 32
    %v420 = vpop.permute.xlu0 %419
    %v422 = vsel %vm44, %v420, 0
    %424 = vmatprep.subr.bf16.mxu0 0
    %425 = vmatpush1.bf16.msra.mxu0 %v99
    %426 = vmatprep.subr.bf16.mxu0 0
    %427 = vmatpush1.bf16.msra.mxu0 %v100
    %428 = vmatprep.subr.bf16.mxu0 0
    %429 = vmatpush1.bf16.msra.mxu0 0
    %430 = vmatprep.subr.bf16.mxu0 0
    %431 = vmatpush1.bf16.msra.mxu0 0
    %432 = vmatprep.subr.bf16.mxu0 0
    %433 = vmatpush1.bf16.msra.mxu0 0
    %434 = vmatprep.subr.bf16.mxu0 0
    %435 = vmatpush1.bf16.msra.mxu0 0
    %436 = vmatprep.subr.bf16.mxu0 0
    %437 = vmatpush1.bf16.msra.mxu0 0
    %438 = vmatprep.subr.bf16.mxu0 0
    %439 = vmatpush1.bf16.msra.mxu0 0
    %440 = vmatprep.subr.bf16.mxu0 0
    %441 = vmatpush1.bf16.msra.mxu0 0
    %442 = vmatprep.subr.bf16.mxu0 0
    %443 = vmatpush1.bf16.msra.mxu0 0
    %444 = vmatprep.subr.bf16.mxu0 0
    %445 = vmatpush1.bf16.msra.mxu0 0
    %446 = vmatprep.subr.bf16.mxu0 0
    %447 = vmatpush1.bf16.msra.mxu0 0
    %448 = vmatprep.subr.bf16.mxu0 0
    %449 = vmatpush1.bf16.msra.mxu0 0
    %450 = vmatprep.subr.bf16.mxu0 0
    %451 = vmatpush1.bf16.msra.mxu0 0
    %452 = vmatprep.subr.bf16.mxu0 0
    %453 = vmatpush1.bf16.msra.mxu0 0
    %454 = vmatprep.subr.bf16.mxu0 0
    %455 = vmatpush1.bf16.msra.mxu0 0
    %456 = vmatprep.mubr.bf16.mxu0 0
    %457 = vmatmul.mubr.bf16.gmra.mrb[0].mxu0 %v422
    %v458 = vpop.f32.mrb[0].mxu0
    %v459 = vadd.f32 0.0, %v458
    %v460 = vpop.f32.mrb[0].mxu0
    %v461 = vpop.f32.mrb[0].mxu0
    %v462 = vpop.f32.mrb[0].mxu0
    %463 = vdwg.mxu0
    %v464 = vadd.f32 %v416, %v459
    %v465 = vxor.u32 %v414, 2147483648
    %v466 = vmul.f32 %v465, 1.442695
    %v467 = vpow.pop %v466
    %v468 = vadd.f32 %v467, 1.0
    %v469 = vrcp.pop %v468
    %v470 = vmul.f32 1.0, %v469
    %v471 = vtanh.pop %v414
    %v472 = vmul.f32 %v470, %v322
    %474 = vrot.lane.b32.xlu0 %v471, 64
    %v475 = vpop.permute.xlu0 %474
    %v477 = vmul.f32 %v470, %v475
    %479 = vrot.lane.b32.xlu0 %v477, 32
    %v480 = vpop.permute.xlu0 %479
    %v482 = vadd.f32 %v472, %v480
    %v483 = vtanh.pop %v482
    %485 = vrot.lane.b32.xlu0 %v483, 64
    %v486 = vpop.permute.xlu0 %485
    %v488 = vmul.f32 %v470, %v486
    %v489 = vxor.u32 %v464, 2147483648
    %v490 = vmul.f32 %v489, 1.442695
    %v491 = vpow.pop %v490
    %v492 = vadd.f32 %v491, 1.0
    %v493 = vrcp.pop %v492
    %v494 = vmul.f32 1.0, %v493
    %v495 = vtanh.pop %v464
    %v496 = vmul.f32 %v494, %v346
    %498 = vrot.lane.b32.xlu0 %v495, 64
    %v499 = vpop.permute.xlu0 %498
    %v501 = vmul.f32 %v494, %v499
    %503 = vrot.lane.b32.xlu0 %v501, 32
    %v504 = vpop.permute.xlu0 %503
    %v506 = vadd.f32 %v496, %v504
    %v507 = vtanh.pop %v506
    %509 = vrot.lane.b32.xlu0 %v507, 64
    %v510 = vpop.permute.xlu0 %509
    %v512 = vmul.f32 %v494, %v510
    %514 = vrot.lane.b32.xlu0 %v488, 32
    %v515 = vpop.permute.xlu0 %514
    %517 = vst.msk [vmem:[%s363] sm:$0x3] %vm196, %v515
    %519 = vrot.lane.b32.xlu0 %v512, 64
    %v520 = vpop.permute.xlu0 %519
    %522 = vst.msk [vmem:[%s357] sm:$0x3] %vm203, %v520
    %s523 = scalar_lea.vmem %s0, 6
    %v524 = vld [vmem:[%s523] sm:$0x3]
    %v525 = vpack.c.bf16 %v488, %v488
    %527 = vrot.lane.b32.xlu0 %v525, 32
    %v528 = vpop.permute.xlu0 %527
    %v530 = vsel %vm44, %v528, 0
    %532 = vmatprep.subr.bf16.mxu0 0
    %533 = vmatpush1.bf16.msra.mxu0 %v40
    %534 = vmatprep.subr.bf16.mxu0 0
    %535 = vmatpush1.bf16.msra.mxu0 %v41
    %536 = vmatprep.subr.bf16.mxu0 0
    %537 = vmatpush1.bf16.msra.mxu0 0
    %538 = vmatprep.subr.bf16.mxu0 0
    %539 = vmatpush1.bf16.msra.mxu0 0
    %540 = vmatprep.subr.bf16.mxu0 0
    %541 = vmatpush1.bf16.msra.mxu0 0
    %542 = vmatprep.subr.bf16.mxu0 0
    %543 = vmatpush1.bf16.msra.mxu0 0
    %544 = vmatprep.subr.bf16.mxu0 0
    %545 = vmatpush1.bf16.msra.mxu0 0
    %546 = vmatprep.subr.bf16.mxu0 0
    %547 = vmatpush1.bf16.msra.mxu0 0
    %548 = vmatprep.subr.bf16.mxu0 0
    %549 = vmatpush1.bf16.msra.mxu0 0
    %550 = vmatprep.subr.bf16.mxu0 0
    %551 = vmatpush1.bf16.msra.mxu0 0
    %552 = vmatprep.subr.bf16.mxu0 0
    %553 = vmatpush1.bf16.msra.mxu0 0
    %554 = vmatprep.subr.bf16.mxu0 0
    %555 = vmatpush1.bf16.msra.mxu0 0
    %556 = vmatprep.subr.bf16.mxu0 0
    %557 = vmatpush1.bf16.msra.mxu0 0
    %558 = vmatprep.subr.bf16.mxu0 0
    %559 = vmatpush1.bf16.msra.mxu0 0
    %560 = vmatprep.subr.bf16.mxu0 0
    %561 = vmatpush1.bf16.msra.mxu0 0
    %562 = vmatprep.subr.bf16.mxu0 0
    %563 = vmatpush1.bf16.msra.mxu0 0
    %564 = vmatprep.mubr.bf16.mxu0 0
    %565 = vmatmul.mubr.bf16.gmra.mrb[0].mxu0 %v530
    %v566 = vpop.f32.mrb[0].mxu0
    %v567 = vadd.f32 0.0, %v566
    %v568 = vpop.f32.mrb[0].mxu0
    %v569 = vpop.f32.mrb[0].mxu0
    %v570 = vpop.f32.mrb[0].mxu0
    %571 = vdwg.mxu0
    %v572 = vadd.f32 %v524, %v567
    %v573 = vld [vmem:[%s1] sm:$0x3]
    %v574 = vpack.c.bf16 %v512, %v512
    %576 = vrot.lane.b32.xlu0 %v574, 32
    %v577 = vpop.permute.xlu0 %576
    %v579 = vsel %vm44, %v577, 0
    %581 = vmatprep.subr.bf16.mxu0 0
    %582 = vmatpush1.bf16.msra.mxu0 %v99
    %583 = vmatprep.subr.bf16.mxu0 0
    %584 = vmatpush1.bf16.msra.mxu0 %v100
    %585 = vmatprep.subr.bf16.mxu0 0
    %586 = vmatpush1.bf16.msra.mxu0 0
    %587 = vmatprep.subr.bf16.mxu0 0
    %588 = vmatpush1.bf16.msra.mxu0 0
    %589 = vmatprep.subr.bf16.mxu0 0
    %590 = vmatpush1.bf16.msra.mxu0 0
    %591 = vmatprep.subr.bf16.mxu0 0
    %592 = vmatpush1.bf16.msra.mxu0 0
    %593 = vmatprep.subr.bf16.mxu0 0
    %594 = vmatpush1.bf16.msra.mxu0 0
    %595 = vmatprep.subr.bf16.mxu0 0
    %596 = vmatpush1.bf16.msra.mxu0 0
    %597 = vmatprep.subr.bf16.mxu0 0
    %598 = vmatpush1.bf16.msra.mxu0 0
    %599 = vmatprep.subr.bf16.mxu0 0
    %600 = vmatpush1.bf16.msra.mxu0 0
    %601 = vmatprep.subr.bf16.mxu0 0
    %602 = vmatpush1.bf16.msra.mxu0 0
    %603 = vmatprep.subr.bf16.mxu0 0
    %604 = vmatpush1.bf16.msra.mxu0 0
    %605 = vmatprep.subr.bf16.mxu0 0
    %606 = vmatpush1.bf16.msra.mxu0 0
    %607 = vmatprep.subr.bf16.mxu0 0
    %608 = vmatpush1.bf16.msra.mxu0 0
    %609 = vmatprep.subr.bf16.mxu0 0
    %610 = vmatpush1.bf16.msra.mxu0 0
    %611 = vmatprep.subr.bf16.mxu0 0
    %612 = vmatpush1.bf16.msra.mxu0 0
    %613 = vmatprep.mubr.bf16.mxu0 0
    %614 = vmatmul.mubr.bf16.gmra.mrb[0].mxu0 %v579
    %v615 = vpop.f32.mrb[0].mxu0
    %v616 = vadd.f32 0.0, %v615
    %v617 = vpop.f32.mrb[0].mxu0
    %v618 = vpop.f32.mrb[0].mxu0
    %v619 = vpop.f32.mrb[0].mxu0
    %620 = vdwg.mxu0
    %v621 = vadd.f32 %v573, %v616
    %v622 = vxor.u32 %v572, 2147483648
    %v623 = vmul.f32 %v622, 1.442695
    %v624 = vpow.pop %v623
    %v625 = vadd.f32 %v624, 1.0
    %v626 = vrcp.pop %v625
    %v627 = vmul.f32 1.0, %v626
    %v628 = vtanh.pop %v572
    %v629 = vmul.f32 %v627, %v482
    %631 = vrot.lane.b32.xlu0 %v628, 64
    %v632 = vpop.permute.xlu0 %631
    %v634 = vmul.f32 %v627, %v632
    %636 = vrot.lane.b32.xlu0 %v634, 32
    %v637 = vpop.permute.xlu0 %636
    %v639 = vadd.f32 %v629, %v637
    %v640 = vtanh.pop %v639
    %642 = vrot.lane.b32.xlu0 %v640, 64
    %v643 = vpop.permute.xlu0 %642
    %v645 = vmul.f32 %v627, %v643
    %v646 = vxor.u32 %v621, 2147483648
    %v647 = vmul.f32 %v646, 1.442695
    %v648 = vpow.pop %v647
    %v649 = vadd.f32 %v648, 1.0
    %v650 = vrcp.pop %v649
    %v651 = vmul.f32 1.0, %v650
    %v652 = vtanh.pop %v621
    %v653 = vmul.f32 %v651, %v506
    %655 = vrot.lane.b32.xlu0 %v652, 64
    %v656 = vpop.permute.xlu0 %655
    %v658 = vmul.f32 %v651, %v656
    %660 = vrot.lane.b32.xlu0 %v658, 32
    %v661 = vpop.permute.xlu0 %660
    %v663 = vadd.f32 %v653, %v661
    %v664 = vtanh.pop %v663
    %666 = vrot.lane.b32.xlu0 %v664, 64
    %v667 = vpop.permute.xlu0 %666
    %v669 = vmul.f32 %v651, %v667
    %671 = vrot.lane.b32.xlu0 %v645, 32
    %v672 = vpop.permute.xlu0 %671
    %674 = vst.msk [vmem:[%s202] sm:$0x3] %vm196, %v672
    %676 = vrot.lane.b32.xlu0 %v669, 64
    %v677 = vpop.permute.xlu0 %676
    %679 = vst.msk [vmem:[%s4] sm:$0x3] %vm203, %v677
    %680 = vst.msk [vmem:[#allocation2] sm:$0x3] %vm196, %v672
    %681 = vrot.lane.b32.xlu0 %v669, 32
    %v682 = vpop.permute.xlu0 %681
    %s684 = scalar_lea.vmem [#allocation2], 2
    %685 = vst.msk [vmem:[%s684] sm:$0x3] %vm196, %v682
    %687 = vrot.lane.b32.xlu0 %v639, 96
    %v688 = vpop.permute.xlu0 %687
    %690 = vst.msk [vmem:[#allocation4] sm:$0x3] %vm196, %v688
    %692 = vrot.lane.b32.xlu0 %v663, 96
    %v693 = vpop.permute.xlu0 %692
    %s695 = scalar_lea.vmem [#allocation4], 2
    %696 = vst.msk [vmem:[%s695] sm:$0x3] %vm196, %v693
    // Predicated region
    $region18: #{listener_forward.5} parent=1 // pred_check
      _
    $region19: #{listener_forward.5} parent=1 // pred_check_branch
      %698 = sbr.rel (0) target = $region21
    $region20: #{listener_forward.5} parent=1 // pred_region
      _
    $region21: #{listener_forward.5} parent=1 // pred_fallthru
      _
    // Predicated region
    $region22: #{listener_forward.5} parent=1 // pred_check
      _
    $region23: #{listener_forward.5} parent=1 // pred_check_branch
      %700 = sbr.rel (0) target = $region25
    $region24: #{listener_forward.5} parent=1 // pred_region
      %s702 = ssub.s32 64, 64
      %703 = vsyncadd [#allocation3], %s702
      %s704 = sshll.u32 [#allocation2], 4
      %s705 = int_to_ptr.vmem [resolvable:$true] %s704
      %710 = dma.vmem_to_hbm [thread:$0]  %s705, 64, %s5, [#allocation3], 32, 32, 2
    $region25: #{listener_forward.5} parent=1 // pred_fallthru
      _
    // Predicated region
    $region26: #{listener_forward.5} parent=1 // pred_check
      _
    $region27: #{listener_forward.5} parent=1 // pred_check_branch
      %712 = sbr.rel (0) target = $region29
    $region28: #{listener_forward.5} parent=1 // pred_region
      %s714 = ssub.s32 64, 64
      %715 = vsyncadd [#allocation5], %s714
      %s716 = sshll.u32 [#allocation4], 4
      %s717 = int_to_ptr.vmem [resolvable:$true] %s716
      %722 = dma.vmem_to_hbm [thread:$0]  %s717, 64, %s6, [#allocation5], 32, 32, 2
    $region29: #{listener_forward.5} parent=1 // pred_fallthru
      _
    // Predicated region
    $region30: #{listener_forward.5} parent=1 // pred_check
      _
    $region31: #{listener_forward.5} parent=1 // pred_check_branch
      %724 = sbr.rel (0) target = $region33
    $region32: #{listener_forward.5} parent=1 // pred_region
      _
    $region33: #{listener_forward.5} parent=1 // pred_fallthru
      _
    // Predicated region
    $region34: #{listener_forward.5} parent=1 // pred_check
      _
    $region35: #{listener_forward.5} parent=1 // pred_check_branch
      %726 = sbr.rel (0) target = $region37
    $region36: #{listener_forward.5} parent=1 // pred_region
      %727 = dma.done [#allocation3], 64
    $region37: #{listener_forward.5} parent=1 // pred_fallthru
      _
    // Predicated region
    $region38: #{listener_forward.5} parent=1 // pred_check
      _
    $region39: #{listener_forward.5} parent=1 // pred_check_branch
      %729 = sbr.rel (0) target = $region41
    $region40: #{listener_forward.5} parent=1 // pred_region
      %730 = dma.done [#allocation5], 64
    $region41: #{listener_forward.5} parent=1 // pred_fallthru
      _
    %731 = vsyncpa [#allocation3], 1
    %732 = vsyncpa [#allocation5], 1

// kernel: listener_forward.4
$region0: #{listener_forward.4}
  #allocation0 [shape = 'u32[]', space=smem, size = 0x4, offset = 0x4, fixed_abs, tag = 'smem constant byte address 0x4 - core index']
  #allocation1 [shape = 'u32[144,128]{1,0:T(1,128)}', space=vmem, size = 0x12000, scoped, tag = 'internal scratch']
  %s0 = inlined_call_operand.vmem [shape: f32[8,2,128], index: 0, kind: input, shape index: {}]
  %s1 = inlined_call_operand.vmem [shape: f32[8,2,128], index: 1, kind: input, shape index: {}]
  %s2 = inlined_call_operand.vmem [shape: bf16[32,128], index: 2, kind: input, shape index: {}]
  %s3 = inlined_call_operand.vmem [shape: bf16[32,128], index: 3, kind: input, shape index: {}]
  %s4 = inlined_call_operand.vmem [shape: f32[8,2,64], index: 4, kind: output, shape index: {0}]
  %s5 = inlined_call_operand.hbm [shape: f32[2,2,32], index: 5, kind: output, shape index: {1}]
  %s6 = inlined_call_operand.hbm [shape: f32[2,2,32], index: 6, kind: output, shape index: {2}]
  %7 = xla_tuple %s4, %s5, %s6
  %s8 = sld [smem:[#allocation0]]
  $region42: #{listener_forward.4} parent=0
    _
  %s10 = ssub.s32 1, %s8
  %s11 = scalar_select 0, %s10, %s8
  $region1: #{listener_forward.4} parent=0
    #allocation2 [shape = 'u8[2048]{0}', space=vmem, size = 0x800, scoped, tag = 'output window, operand 1, single buffered']
    #allocation3 [shape = 's32[1]{0}', space=sflag, size = 0x4, scoped, tag = 'scoped memory for listener_forward.4']
    #allocation4 [shape = 'u8[2048]{0}', space=vmem, size = 0x800, scoped, tag = 'output window, operand 2, single buffered']
    #allocation5 [shape = 's32[1]{0}', space=sflag, size = 0x4, scoped, tag = 'scoped memory for listener_forward.4']
    %12 = vsyncpa [#allocation3], 0
    %13 = vsyncpa [#allocation5], 0
    // Predicated region
    $region2: #{listener_forward.4} parent=1 // pred_check
      _
    $region3: #{listener_forward.4} parent=1 // pred_check_branch
      %15 = sbr.rel (0) target = $region5
    $region4: #{listener_forward.4} parent=1 // pred_region
      _
    $region5: #{listener_forward.4} parent=1 // pred_fallthru
      _
    // Predicated region
    $region6: #{listener_forward.4} parent=1 // pred_check
      _
    $region7: #{listener_forward.4} parent=1 // pred_check_branch
      %17 = sbr.rel (0) target = $region9
    $region8: #{listener_forward.4} parent=1 // pred_region
      _
    $region9: #{listener_forward.4} parent=1 // pred_fallthru
      _
    // Predicated region
    $region10: #{listener_forward.4} parent=1 // pred_check
      _
    $region11: #{listener_forward.4} parent=1 // pred_check_branch
      %19 = sbr.rel (0) target = $region13
    $region12: #{listener_forward.4} parent=1 // pred_region
      _
    $region13: #{listener_forward.4} parent=1 // pred_fallthru
      _
    // Predicated region
    $region14: #{listener_forward.4} parent=1 // pred_check
      _
    $region15: #{listener_forward.4} parent=1 // pred_check_branch
      %21 = sbr.rel (0) target = $region17
    $region16: #{listener_forward.4} parent=1 // pred_region
      _
    $region17: #{listener_forward.4} parent=1 // pred_fallthru
      _
    %v23 = vld [vmem:[%s2] sm:$0xf]
    %v24 = vld [vmem:[%s2 + $0x4] sm:$0xf]
    %v25 = vld [vmem:[%s2 + $0x8] sm:$0xf]
    %v26 = vld [vmem:[%s2 + $0xc] sm:$0xf]
    %v27 = vld [vmem:[%s3] sm:$0xf]
    %v28 = vld [vmem:[%s3 + $0x4] sm:$0xf]
    %v29 = vld [vmem:[%s3 + $0x8] sm:$0xf]
    %v30 = vld [vmem:[%s3 + $0xc] sm:$0xf]
    %v31 = vld [vmem:[%s0] sm:$0x3]
    %v36 = vunpack.c.l.b16 %v23
    %v37 = vunpack.c.l.b16 %v24
    %v38 = vunpack.c.l.b16 %v25
    %v39 = vunpack.c.l.b16 %v26
    %v40 = vpack.c.b16 %v37, %v36
    %v41 = vpack.c.b16 %v39, %v38
    %vm44 = vcmask 261120
    %v46 = vsel %vm44, 0, 0
    %48 = vmatprep.subr.bf16.mxu0 0
    %49 = vmatpush1.bf16.msra.mxu0 %v40
    %50 = vmatprep.subr.bf16.mxu0 0
    %51 = vmatpush1.bf16.msra.mxu0 %v41
    %52 = vmatprep.subr.bf16.mxu0 0
    %53 = vmatpush1.bf16.msra.mxu0 0
    %54 = vmatprep.subr.bf16.mxu0 0
    %55 = vmatpush1.bf16.msra.mxu0 0
    %56 = vmatprep.subr.bf16.mxu0 0
    %57 = vmatpush1.bf16.msra.mxu0 0
    %58 = vmatprep.subr.bf16.mxu0 0
    %59 = vmatpush1.bf16.msra.mxu0 0
    %60 = vmatprep.subr.bf16.mxu0 0
    %61 = vmatpush1.bf16.msra.mxu0 0
    %62 = vmatprep.subr.bf16.mxu0 0
    %63 = vmatpush1.bf16.msra.mxu0 0
    %64 = vmatprep.subr.bf16.mxu0 0
    %65 = vmatpush1.bf16.msra.mxu0 0
    %66 = vmatprep.subr.bf16.mxu0 0
    %67 = vmatpush1.bf16.msra.mxu0 0
    %68 = vmatprep.subr.bf16.mxu0 0
    %69 = vmatpush1.bf16.msra.mxu0 0
    %70 = vmatprep.subr.bf16.mxu0 0
    %71 = vmatpush1.bf16.msra.mxu0 0
    %72 = vmatprep.subr.bf16.mxu0 0
    %73 = vmatpush1.bf16.msra.mxu0 0
    %74 = vmatprep.subr.bf16.mxu0 0
    %75 = vmatpush1.bf16.msra.mxu0 0
    %76 = vmatprep.subr.bf16.mxu0 0
    %77 = vmatpush1.bf16.msra.mxu0 0
    %78 = vmatprep.subr.bf16.mxu0 0
    %79 = vmatpush1.bf16.msra.mxu0 0
    %80 = vmatprep.mubr.bf16.mxu0 0
    %81 = vmatmul.mubr.bf16.gmra.mrb[0].mxu0 %v46
    %v82 = vpop.f32.mrb[0].mxu0
    %v83 = vadd.f32 0.0, %v82
    %v84 = vpop.f32.mrb[0].mxu0
    %v85 = vpop.f32.mrb[0].mxu0
    %v86 = vpop.f32.mrb[0].mxu0
    %87 = vdwg.mxu0
    %v88 = vadd.f32 %v31, %v83
    %s89 = scalar_lea.vmem %s1, 14
    %v90 = vld [vmem:[%s89] sm:$0x3]
    %v95 = vunpack.c.l.b16 %v27
    %v96 = vunpack.c.l.b16 %v28
    %v97 = vunpack.c.l.b16 %v29
    %v98 = vunpack.c.l.b16 %v30
    %v99 = vpack.c.b16 %v96, %v95
    %v100 = vpack.c.b16 %v98, %v97
    %103 = vmatprep.subr.bf16.mxu0 0
    %104 = vmatpush1.bf16.msra.mxu0 %v99
    %105 = vmatprep.subr.bf16.mxu0 0
    %106 = vmatpush1.bf16.msra.mxu0 %v100
    %107 = vmatprep.subr.bf16.mxu0 0
    %108 = vmatpush1.bf16.msra.mxu0 0
    %109 = vmatprep.subr.bf16.mxu0 0
    %110 = vmatpush1.bf16.msra.mxu0 0
    %111 = vmatprep.subr.bf16.mxu0 0
    %112 = vmatpush1.bf16.msra.mxu0 0
    %113 = vmatprep.subr.bf16.mxu0 0
    %114 = vmatpush1.bf16.msra.mxu0 0
    %115 = vmatprep.subr.bf16.mxu0 0
    %116 = vmatpush1.bf16.msra.mxu0 0
    %117 = vmatprep.subr.bf16.mxu0 0
    %118 = vmatpush1.bf16.msra.mxu0 0
    %119 = vmatprep.subr.bf16.mxu0 0
    %120 = vmatpush1.bf16.msra.mxu0 0
    %121 = vmatprep.subr.bf16.mxu0 0
    %122 = vmatpush1.bf16.msra.mxu0 0
    %123 = vmatprep.subr.bf16.mxu0 0
    %124 = vmatpush1.bf16.msra.mxu0 0
    %125 = vmatprep.subr.bf16.mxu0 0
    %126 = vmatpush1.bf16.msra.mxu0 0
    %127 = vmatprep.subr.bf16.mxu0 0
    %128 = vmatpush1.bf16.msra.mxu0 0
    %129 = vmatprep.subr.bf16.mxu0 0
    %130 = vmatpush1.bf16.msra.mxu0 0
    %131 = vmatprep.subr.bf16.mxu0 0
    %132 = vmatpush1.bf16.msra.mxu0 0
    %133 = vmatprep.subr.bf16.mxu0 0
    %134 = vmatpush1.bf16.msra.mxu0 0
    %135 = vmatprep.mubr.bf16.mxu0 0
    %136 = vmatmul.mubr.bf16.gmra.mrb[0].mxu0 %v46
    %v137 = vpop.f32.mrb[0].mxu0
    %v138 = vadd.f32 0.0, %v137
    %v139 = vpop.f32.mrb[0].mxu0
    %v140 = vpop.f32.mrb[0].mxu0
    %v141 = vpop.f32.mrb[0].mxu0
    %142 = vdwg.mxu0
    %v143 = vadd.f32 %v90, %v138
    %v144 = vxor.u32 %v88, 2147483648
    %v145 = vmul.f32 %v144, 1.442695
    %v146 = vpow.pop %v145
    %v147 = vadd.f32 %v146, 1.0
    %v148 = vrcp.pop %v147
    %v149 = vmul.f32 1.0, %v148
    %v150 = vtanh.pop %v88
    %v151 = vmul.f32 %v149, 0.0
    %153 = vrot.lane.b32.xlu0 %v150, 64
    %v154 = vpop.permute.xlu0 %153
    %v156 = vmul.f32 %v149, %v154
    %158 = vrot.lane.b32.xlu0 %v156, 32
    %v159 = vpop.permute.xlu0 %158
    %v161 = vadd.f32 %v151, %v159
    %v162 = vtanh.pop %v161
    %164 = vrot.lane.b32.xlu0 %v162, 64
    %v165 = vpop.permute.xlu0 %164
    %v167 = vmul.f32 %v149, %v165
    %v168 = vxor.u32 %v143, 2147483648
    %v169 = vmul.f32 %v168, 1.442695
    %v170 = vpow.pop %v169
    %v171 = vadd.f32 %v170, 1.0
    %v172 = vrcp.pop %v171
    %v173 = vmul.f32 1.0, %v172
    %v174 = vtanh.pop %v143
    %v175 = vmul.f32 %v173, 0.0
    %177 = vrot.lane.b32.xlu0 %v174, 64
    %v178 = vpop.permute.xlu0 %177
    %v180 = vmul.f32 %v173, %v178
    %182 = vrot.lane.b32.xlu0 %v180, 32
    %v183 = vpop.permute.xlu0 %182
    %v185 = vadd.f32 %v175, %v183
    %v186 = vtanh.pop %v185
    %188 = vrot.lane.b32.xlu0 %v186, 64
    %v189 = vpop.permute.xlu0 %188
    %v191 = vmul.f32 %v173, %v189
    %193 = vrot.lane.b32.xlu0 %v167, 32
    %v194 = vpop.permute.xlu0 %193
    %vm196 = vcmask 254976
    %197 = vst.msk [vmem:[%s4] sm:$0x3] %vm196, %v194
    %199 = vrot.lane.b32.xlu0 %v191, 64
    %v200 = vpop.permute.xlu0 %199
    %s202 = scalar_lea.vmem %s4, 14
    %vm203 = vcmask 517376
    %204 = vst.msk [vmem:[%s202] sm:$0x3] %vm203, %v200
    %s205 = scalar_lea.vmem %s0, 2
    %v206 = vld [vmem:[%s205] sm:$0x3]
    %v207 = vpack.c.bf16 %v167, %v167
    %209 = vrot.lane.b32.xlu0 %v207, 32
    %v210 = vpop.permute.xlu0 %209
    %v212 = vsel %vm44, %v210, 0
    %214 = vmatprep.subr.bf16.mxu0 0
    %215 = vmatpush1.bf16.msra.mxu0 %v40
    %216 = vmatprep.subr.bf16.mxu0 0
    %217 = vmatpush1.bf16.msra.mxu0 %v41
    %218 = vmatprep.subr.bf16.mxu0 0
    %219 = vmatpush1.bf16.msra.mxu0 0
    %220 = vmatprep.subr.bf16.mxu0 0
    %221 = vmatpush1.bf16.msra.mxu0 0
    %222 = vmatprep.subr.bf16.mxu0 0
    %223 = vmatpush1.bf16.msra.mxu0 0
    %224 = vmatprep.subr.bf16.mxu0 0
    %225 = vmatpush1.bf16.msra.mxu0 0
    %226 = vmatprep.subr.bf16.mxu0 0
    %227 = vmatpush1.bf16.msra.mxu0 0
    %228 = vmatprep.subr.bf16.mxu0 0
    %229 = vmatpush1.bf16.msra.mxu0 0
    %230 = vmatprep.subr.bf16.mxu0 0
    %231 = vmatpush1.bf16.msra.mxu0 0
    %232 = vmatprep.subr.bf16.mxu0 0
    %233 = vmatpush1.bf16.msra.mxu0 0
    %234 = vmatprep.subr.bf16.mxu0 0
    %235 = vmatpush1.bf16.msra.mxu0 0
    %236 = vmatprep.subr.bf16.mxu0 0
    %237 = vmatpush1.bf16.msra.mxu0 0
    %238 = vmatprep.subr.bf16.mxu0 0
    %239 = vmatpush1.bf16.msra.mxu0 0
    %240 = vmatprep.subr.bf16.mxu0 0
    %241 = vmatpush1.bf16.msra.mxu0 0
    %242 = vmatprep.subr.bf16.mxu0 0
    %243 = vmatpush1.bf16.msra.mxu0 0
    %244 = vmatprep.subr.bf16.mxu0 0
    %245 = vmatpush1.bf16.msra.mxu0 0
    %246 = vmatprep.mubr.bf16.mxu0 0
    %247 = vmatmul.mubr.bf16.gmra.mrb[0].mxu0 %v212
    %v248 = vpop.f32.mrb[0].mxu0
    %v249 = vadd.f32 0.0, %v248
    %v250 = vpop.f32.mrb[0].mxu0
    %v251 = vpop.f32.mrb[0].mxu0
    %v252 = vpop.f32.mrb[0].mxu0
    %253 = vdwg.mxu0
    %v254 = vadd.f32 %v206, %v249
    %s255 = scalar_lea.vmem %s1, 12
    %v256 = vld [vmem:[%s255] sm:$0x3]
    %v257 = vpack.c.bf16 %v191, %v191
    %259 = vrot.lane.b32.xlu0 %v257, 32
    %v260 = vpop.permute.xlu0 %259
    %v262 = vsel %vm44, %v260, 0
    %264 = vmatprep.subr.bf16.mxu0 0
    %265 = vmatpush1.bf16.msra.mxu0 %v99
    %266 = vmatprep.subr.bf16.mxu0 0
    %267 = vmatpush1.bf16.msra.mxu0 %v100
    %268 = vmatprep.subr.bf16.mxu0 0
    %269 = vmatpush1.bf16.msra.mxu0 0
    %270 = vmatprep.subr.bf16.mxu0 0
    %271 = vmatpush1.bf16.msra.mxu0 0
    %272 = vmatprep.subr.bf16.mxu0 0
    %273 = vmatpush1.bf16.msra.mxu0 0
    %274 = vmatprep.subr.bf16.mxu0 0
    %275 = vmatpush1.bf16.msra.mxu0 0
    %276 = vmatprep.subr.bf16.mxu0 0
    %277 = vmatpush1.bf16.msra.mxu0 0
    %278 = vmatprep.subr.bf16.mxu0 0
    %279 = vmatpush1.bf16.msra.mxu0 0
    %280 = vmatprep.subr.bf16.mxu0 0
    %281 = vmatpush1.bf16.msra.mxu0 0
    %282 = vmatprep.subr.bf16.mxu0 0
    %283 = vmatpush1.bf16.msra.mxu0 0
    %284 = vmatprep.subr.bf16.mxu0 0
    %285 = vmatpush1.bf16.msra.mxu0 0
    %286 = vmatprep.subr.bf16.mxu0 0
    %287 = vmatpush1.bf16.msra.mxu0 0
    %288 = vmatprep.subr.bf16.mxu0 0
    %289 = vmatpush1.bf16.msra.mxu0 0
    %290 = vmatprep.subr.bf16.mxu0 0
    %291 = vmatpush1.bf16.msra.mxu0 0
    %292 = vmatprep.subr.bf16.mxu0 0
    %293 = vmatpush1.bf16.msra.mxu0 0
    %294 = vmatprep.subr.bf16.mxu0 0
    %295 = vmatpush1.bf16.msra.mxu0 0
    %296 = vmatprep.mubr.bf16.mxu0 0
    %297 = vmatmul.mubr.bf16.gmra.mrb[0].mxu0 %v262
    %v298 = vpop.f32.mrb[0].mxu0
    %v299 = vadd.f32 0.0, %v298
    %v300 = vpop.f32.mrb[0].mxu0
    %v301 = vpop.f32.mrb[0].mxu0
    %v302 = vpop.f32.mrb[0].mxu0
    %303 = vdwg.mxu0
    %v304 = vadd.f32 %v256, %v299
    %v305 = vxor.u32 %v254, 2147483648
    %v306 = vmul.f32 %v305, 1.442695
    %v307 = vpow.pop %v306
    %v308 = vadd.f32 %v307, 1.0
    %v309 = vrcp.pop %v308
    %v310 = vmul.f32 1.0, %v309
    %v311 = vtanh.pop %v254
    %v312 = vmul.f32 %v310, %v161
    %314 = vrot.lane.b32.xlu0 %v311, 64
    %v315 = vpop.permute.xlu0 %314
    %v317 = vmul.f32 %v310, %v315
    %319 = vrot.lane.b32.xlu0 %v317, 32
    %v320 = vpop.permute.xlu0 %319
    %v322 = vadd.f32 %v312, %v320
    %v323 = vtanh.pop %v322
    %325 = vrot.lane.b32.xlu0 %v323, 64
    %v326 = vpop.permute.xlu0 %325
    %v328 = vmul.f32 %v310, %v326
    %v329 = vxor.u32 %v304, 2147483648
    %v330 = vmul.f32 %v329, 1.442695
    %v331 = vpow.pop %v330
    %v332 = vadd.f32 %v331, 1.0
    %v333 = vrcp.pop %v332
    %v334 = vmul.f32 1.0, %v333
    %v335 = vtanh.pop %v304
    %v336 = vmul.f32 %v334, %v185
    %338 = vrot.lane.b32.xlu0 %v335, 64
    %v339 = vpop.permute.xlu0 %338
    %v341 = vmul.f32 %v334, %v339
    %343 = vrot.lane.b32.xlu0 %v341, 32
    %v344 = vpop.permute.xlu0 %343
    %v346 = vadd.f32 %v336, %v344
    %v347 = vtanh.pop %v346
    %349 = vrot.lane.b32.xlu0 %v347, 64
    %v350 = vpop.permute.xlu0 %349
    %v352 = vmul.f32 %v334, %v350
    %354 = vrot.lane.b32.xlu0 %v328, 32
    %v355 = vpop.permute.xlu0 %354
    %s357 = scalar_lea.vmem %s4, 2
    %358 = vst.msk [vmem:[%s357] sm:$0x3] %vm196, %v355
    %360 = vrot.lane.b32.xlu0 %v352, 64
    %v361 = vpop.permute.xlu0 %360
    %s363 = scalar_lea.vmem %s4, 12
    %364 = vst.msk [vmem:[%s363] sm:$0x3] %vm203, %v361
    %s365 = scalar_lea.vmem %s0, 4
    %v366 = vld [vmem:[%s365] sm:$0x3]
    %v367 = vpack.c.bf16 %v328, %v328
    %369 = vrot.lane.b32.xlu0 %v367, 32
    %v370 = vpop.permute.xlu0 %369
    %v372 = vsel %vm44, %v370, 0
    %374 = vmatprep.subr.bf16.mxu0 0
    %375 = vmatpush1.bf16.msra.mxu0 %v40
    %376 = vmatprep.subr.bf16.mxu0 0
    %377 = vmatpush1.bf16.msra.mxu0 %v41
    %378 = vmatprep.subr.bf16.mxu0 0
    %379 = vmatpush1.bf16.msra.mxu0 0
    %380 = vmatprep.subr.bf16.mxu0 0
    %381 = vmatpush1.bf16.msra.mxu0 0
    %382 = vmatprep.subr.bf16.mxu0 0
    %383 = vmatpush1.bf16.msra.mxu0 0
    %384 = vmatprep.subr.bf16.mxu0 0
    %385 = vmatpush1.bf16.msra.mxu0 0
    %386 = vmatprep.subr.bf16.mxu0 0
    %387 = vmatpush1.bf16.msra.mxu0 0
    %388 = vmatprep.subr.bf16.mxu0 0
    %389 = vmatpush1.bf16.msra.mxu0 0
    %390 = vmatprep.subr.bf16.mxu0 0
    %391 = vmatpush1.bf16.msra.mxu0 0
    %392 = vmatprep.subr.bf16.mxu0 0
    %393 = vmatpush1.bf16.msra.mxu0 0
    %394 = vmatprep.subr.bf16.mxu0 0
    %395 = vmatpush1.bf16.msra.mxu0 0
    %396 = vmatprep.subr.bf16.mxu0 0
    %397 = vmatpush1.bf16.msra.mxu0 0
    %398 = vmatprep.subr.bf16.mxu0 0
    %399 = vmatpush1.bf16.msra.mxu0 0
    %400 = vmatprep.subr.bf16.mxu0 0
    %401 = vmatpush1.bf16.msra.mxu0 0
    %402 = vmatprep.subr.bf16.mxu0 0
    %403 = vmatpush1.bf16.msra.mxu0 0
    %404 = vmatprep.subr.bf16.mxu0 0
    %405 = vmatpush1.bf16.msra.mxu0 0
    %406 = vmatprep.mubr.bf16.mxu0 0
    %407 = vmatmul.mubr.bf16.gmra.mrb[0].mxu0 %v372
    %v408 = vpop.f32.mrb[0].mxu0
    %v409 = vadd.f32 0.0, %v408
    %v410 = vpop.f32.mrb[0].mxu0
    %v411 = vpop.f32.mrb[0].mxu0
    %v412 = vpop.f32.mrb[0].mxu0
    %413 = vdwg.mxu0
    %v414 = vadd.f32 %v366, %v409
    %s415 = scalar_lea.vmem %s1, 10
    %v416 = vld [vmem:[%s415] sm:$0x3]
    %v417 = vpack.c.bf16 %v352, %v352
    %419 = vrot.lane.b32.xlu0 %v417, 32
    %v420 = vpop.permute.xlu0 %419
    %v422 = vsel %vm44, %v420, 0
    %424 = vmatprep.subr.bf16.mxu0 0
    %425 = vmatpush1.bf16.msra.mxu0 %v99
    %426 = vmatprep.subr.bf16.mxu0 0
    %427 = vmatpush1.bf16.msra.mxu0 %v100
    %428 = vmatprep.subr.bf16.mxu0 0
    %429 = vmatpush1.bf16.msra.mxu0 0
    %430 = vmatprep.subr.bf16.mxu0 0
    %431 = vmatpush1.bf16.msra.mxu0 0
    %432 = vmatprep.subr.bf16.mxu0 0
    %433 = vmatpush1.bf16.msra.mxu0 0
    %434 = vmatprep.subr.bf16.mxu0 0
    %435 = vmatpush1.bf16.msra.mxu0 0
    %436 = vmatprep.subr.bf16.mxu0 0
    %437 = vmatpush1.bf16.msra.mxu0 0
    %438 = vmatprep.subr.bf16.mxu0 0
    %439 = vmatpush1.bf16.msra.mxu0 0
    %440 = vmatprep.subr.bf16.mxu0 0
    %441 = vmatpush1.bf16.msra.mxu0 0
    %442 = vmatprep.subr.bf16.mxu0 0
    %443 = vmatpush1.bf16.msra.mxu0 0
    %444 = vmatprep.subr.bf16.mxu0 0
    %445 = vmatpush1.bf16.msra.mxu0 0
    %446 = vmatprep.subr.bf16.mxu0 0
    %447 = vmatpush1.bf16.msra.mxu0 0
    %448 = vmatprep.subr.bf16.mxu0 0
    %449 = vmatpush1.bf16.msra.mxu0 0
    %450 = vmatprep.subr.bf16.mxu0 0
    %451 = vmatpush1.bf16.msra.mxu0 0
    %452 = vmatprep.subr.bf16.mxu0 0
    %453 = vmatpush1.bf16.msra.mxu0 0
    %454 = vmatprep.subr.bf16.mxu0 0
    %455 = vmatpush1.bf16.msra.mxu0 0
    %456 = vmatprep.mubr.bf16.mxu0 0
    %457 = vmatmul.mubr.bf16.gmra.mrb[0].mxu0 %v422
    %v458 = vpop.f32.mrb[0].mxu0
    %v459 = vadd.f32 0.0, %v458
    %v460 = vpop.f32.mrb[0].mxu0
    %v461 = vpop.f32.mrb[0].mxu0
    %v462 = vpop.f32.mrb[0].mxu0
    %463 = vdwg.mxu0
    %v464 = vadd.f32 %v416, %v459
    %v465 = vxor.u32 %v414, 2147483648
    %v466 = vmul.f32 %v465, 1.442695
    %v467 = vpow.pop %v466
    %v468 = vadd.f32 %v467, 1.0
    %v469 = vrcp.pop %v468
    %v470 = vmul.f32 1.0, %v469
    %v471 = vtanh.pop %v414
    %v472 = vmul.f32 %v470, %v322
    %474 = vrot.lane.b32.xlu0 %v471, 64
    %v475 = vpop.permute.xlu0 %474
    %v477 = vmul.f32 %v470, %v475
    %479 = vrot.lane.b32.xlu0 %v477, 32
    %v480 = vpop.permute.xlu0 %479
    %v482 = vadd.f32 %v472, %v480
    %v483 = vtanh.pop %v482
    %485 = vrot.lane.b32.xlu0 %v483, 64
    %v486 = vpop.permute.xlu0 %485
    %v488 = vmul.f32 %v470, %v486
    %v489 = vxor.u32 %v464, 2147483648
    %v490 = vmul.f32 %v489, 1.442695
    %v491 = vpow.pop %v490
    %v492 = vadd.f32 %v491, 1.0
    %v493 = vrcp.pop %v492
    %v494 = vmul.f32 1.0, %v493
    %v495 = vtanh.pop %v464
    %v496 = vmul.f32 %v494, %v346
    %498 = vrot.lane.b32.xlu0 %v495, 64
    %v499 = vpop.permute.xlu0 %498
    %v501 = vmul.f32 %v494, %v499
    %503 = vrot.lane.b32.xlu0 %v501, 32
    %v504 = vpop.permute.xlu0 %503
    %v506 = vadd.f32 %v496, %v504
    %v507 = vtanh.pop %v506
    %509 = vrot.lane.b32.xlu0 %v507, 64
    %v510 = vpop.permute.xlu0 %509
    %v512 = vmul.f32 %v494, %v510
    %514 = vrot.lane.b32.xlu0 %v488, 32
    %v515 = vpop.permute.xlu0 %514
    %s517 = scalar_lea.vmem %s4, 4
    %518 = vst.msk [vmem:[%s517] sm:$0x3] %vm196, %v515
    %520 = vrot.lane.b32.xlu0 %v512, 64
    %v521 = vpop.permute.xlu0 %520
    %s523 = scalar_lea.vmem %s4, 10
    %524 = vst.msk [vmem:[%s523] sm:$0x3] %vm203, %v521
    %s525 = scalar_lea.vmem %s0, 6
    %v526 = vld [vmem:[%s525] sm:$0x3]
    %v527 = vpack.c.bf16 %v488, %v488
    %529 = vrot.lane.b32.xlu0 %v527, 32
    %v530 = vpop.permute.xlu0 %529
    %v532 = vsel %vm44, %v530, 0
    %534 = vmatprep.subr.bf16.mxu0 0
    %535 = vmatpush1.bf16.msra.mxu0 %v40
    %536 = vmatprep.subr.bf16.mxu0 0
    %537 = vmatpush1.bf16.msra.mxu0 %v41
    %538 = vmatprep.subr.bf16.mxu0 0
    %539 = vmatpush1.bf16.msra.mxu0 0
    %540 = vmatprep.subr.bf16.mxu0 0
    %541 = vmatpush1.bf16.msra.mxu0 0
    %542 = vmatprep.subr.bf16.mxu0 0
    %543 = vmatpush1.bf16.msra.mxu0 0
    %544 = vmatprep.subr.bf16.mxu0 0
    %545 = vmatpush1.bf16.msra.mxu0 0
    %546 = vmatprep.subr.bf16.mxu0 0
    %547 = vmatpush1.bf16.msra.mxu0 0
    %548 = vmatprep.subr.bf16.mxu0 0
    %549 = vmatpush1.bf16.msra.mxu0 0
    %550 = vmatprep.subr.bf16.mxu0 0
    %551 = vmatpush1.bf16.msra.mxu0 0
    %552 = vmatprep.subr.bf16.mxu0 0
    %553 = vmatpush1.bf16.msra.mxu0 0
    %554 = vmatprep.subr.bf16.mxu0 0
    %555 = vmatpush1.bf16.msra.mxu0 0
    %556 = vmatprep.subr.bf16.mxu0 0
    %557 = vmatpush1.bf16.msra.mxu0 0
    %558 = vmatprep.subr.bf16.mxu0 0
    %559 = vmatpush1.bf16.msra.mxu0 0
    %560 = vmatprep.subr.bf16.mxu0 0
    %561 = vmatpush1.bf16.msra.mxu0 0
    %562 = vmatprep.subr.bf16.mxu0 0
    %563 = vmatpush1.bf16.msra.mxu0 0
    %564 = vmatprep.subr.bf16.mxu0 0
    %565 = vmatpush1.bf16.msra.mxu0 0
    %566 = vmatprep.mubr.bf16.mxu0 0
    %567 = vmatmul.mubr.bf16.gmra.mrb[0].mxu0 %v532
    %v568 = vpop.f32.mrb[0].mxu0
    %v569 = vadd.f32 0.0, %v568
    %v570 = vpop.f32.mrb[0].mxu0
    %v571 = vpop.f32.mrb[0].mxu0
    %v572 = vpop.f32.mrb[0].mxu0
    %573 = vdwg.mxu0
    %v574 = vadd.f32 %v526, %v569
    %s575 = scalar_lea.vmem %s1, 8
    %v576 = vld [vmem:[%s575] sm:$0x3]
    %v577 = vpack.c.bf16 %v512, %v512
    %579 = vrot.lane.b32.xlu0 %v577, 32
    %v580 = vpop.permute.xlu0 %579
    %v582 = vsel %vm44, %v580, 0
    %584 = vmatprep.subr.bf16.mxu0 0
    %585 = vmatpush1.bf16.msra.mxu0 %v99
    %586 = vmatprep.subr.bf16.mxu0 0
    %587 = vmatpush1.bf16.msra.mxu0 %v100
    %588 = vmatprep.subr.bf16.mxu0 0
    %589 = vmatpush1.bf16.msra.mxu0 0
    %590 = vmatprep.subr.bf16.mxu0 0
    %591 = vmatpush1.bf16.msra.mxu0 0
    %592 = vmatprep.subr.bf16.mxu0 0
    %593 = vmatpush1.bf16.msra.mxu0 0
    %594 = vmatprep.subr.bf16.mxu0 0
    %595 = vmatpush1.bf16.msra.mxu0 0
    %596 = vmatprep.subr.bf16.mxu0 0
    %597 = vmatpush1.bf16.msra.mxu0 0
    %598 = vmatprep.subr.bf16.mxu0 0
    %599 = vmatpush1.bf16.msra.mxu0 0
    %600 = vmatprep.subr.bf16.mxu0 0
    %601 = vmatpush1.bf16.msra.mxu0 0
    %602 = vmatprep.subr.bf16.mxu0 0
    %603 = vmatpush1.bf16.msra.mxu0 0
    %604 = vmatprep.subr.bf16.mxu0 0
    %605 = vmatpush1.bf16.msra.mxu0 0
    %606 = vmatprep.subr.bf16.mxu0 0
    %607 = vmatpush1.bf16.msra.mxu0 0
    %608 = vmatprep.subr.bf16.mxu0 0
    %609 = vmatpush1.bf16.msra.mxu0 0
    %610 = vmatprep.subr.bf16.mxu0 0
    %611 = vmatpush1.bf16.msra.mxu0 0
    %612 = vmatprep.subr.bf16.mxu0 0
    %613 = vmatpush1.bf16.msra.mxu0 0
    %614 = vmatprep.subr.bf16.mxu0 0
    %615 = vmatpush1.bf16.msra.mxu0 0
    %616 = vmatprep.mubr.bf16.mxu0 0
    %617 = vmatmul.mubr.bf16.gmra.mrb[0].mxu0 %v582
    %v618 = vpop.f32.mrb[0].mxu0
    %v619 = vadd.f32 0.0, %v618
    %v620 = vpop.f32.mrb[0].mxu0
    %v621 = vpop.f32.mrb[0].mxu0
    %v622 = vpop.f32.mrb[0].mxu0
    %623 = vdwg.mxu0
    %v624 = vadd.f32 %v576, %v619
    %v625 = vxor.u32 %v574, 2147483648
    %v626 = vmul.f32 %v625, 1.442695
    %v627 = vpow.pop %v626
    %v628 = vadd.f32 %v627, 1.0
    %v629 = vrcp.pop %v628
    %v630 = vmul.f32 1.0, %v629
    %v631 = vtanh.pop %v574
    %v632 = vmul.f32 %v630, %v482
    %634 = vrot.lane.b32.xlu0 %v631, 64
    %v635 = vpop.permute.xlu0 %634
    %v637 = vmul.f32 %v630, %v635
    %639 = vrot.lane.b32.xlu0 %v637, 32
    %v640 = vpop.permute.xlu0 %639
    %v642 = vadd.f32 %v632, %v640
    %v643 = vtanh.pop %v642
    %645 = vrot.lane.b32.xlu0 %v643, 64
    %v646 = vpop.permute.xlu0 %645
    %v648 = vmul.f32 %v630, %v646
    %v649 = vxor.u32 %v624, 2147483648
    %v650 = vmul.f32 %v649, 1.442695
    %v651 = vpow.pop %v650
    %v652 = vadd.f32 %v651, 1.0
    %v653 = vrcp.pop %v652
    %v654 = vmul.f32 1.0, %v653
    %v655 = vtanh.pop %v624
    %v656 = vmul.f32 %v654, %v506
    %658 = vrot.lane.b32.xlu0 %v655, 64
    %v659 = vpop.permute.xlu0 %658
    %v661 = vmul.f32 %v654, %v659
    %663 = vrot.lane.b32.xlu0 %v661, 32
    %v664 = vpop.permute.xlu0 %663
    %v666 = vadd.f32 %v656, %v664
    %v667 = vtanh.pop %v666
    %669 = vrot.lane.b32.xlu0 %v667, 64
    %v670 = vpop.permute.xlu0 %669
    %v672 = vmul.f32 %v654, %v670
    %674 = vrot.lane.b32.xlu0 %v648, 32
    %v675 = vpop.permute.xlu0 %674
    %s677 = scalar_lea.vmem %s4, 6
    %678 = vst.msk [vmem:[%s677] sm:$0x3] %vm196, %v675
    %680 = vrot.lane.b32.xlu0 %v672, 64
    %v681 = vpop.permute.xlu0 %680
    %s683 = scalar_lea.vmem %s4, 8
    %684 = vst.msk [vmem:[%s683] sm:$0x3] %vm203, %v681
    %s685 = scalar_lea.vmem %s0, 8
    %v686 = vld [vmem:[%s685] sm:$0x3]
    %v687 = vpack.c.bf16 %v648, %v648
    %689 = vrot.lane.b32.xlu0 %v687, 32
    %v690 = vpop.permute.xlu0 %689
    %v692 = vsel %vm44, %v690, 0
    %694 = vmatprep.subr.bf16.mxu0 0
    %695 = vmatpush1.bf16.msra.mxu0 %v40
    %696 = vmatprep.subr.bf16.mxu0 0
    %697 = vmatpush1.bf16.msra.mxu0 %v41
    %698 = vmatprep.subr.bf16.mxu0 0
    %699 = vmatpush1.bf16.msra.mxu0 0
    %700 = vmatprep.subr.bf16.mxu0 0
    %701 = vmatpush1.bf16.msra.mxu0 0
    %702 = vmatprep.subr.bf16.mxu0 0
    %703 = vmatpush1.bf16.msra.mxu0 0
    %704 = vmatprep.subr.bf16.mxu0 0
    %705 = vmatpush1.bf16.msra.mxu0 0
    %706 = vmatprep.subr.bf16.mxu0 0
    %707 = vmatpush1.bf16.msra.mxu0 0
    %708 = vmatprep.subr.bf16.mxu0 0
    %709 = vmatpush1.bf16.msra.mxu0 0
    %710 = vmatprep.subr.bf16.mxu0 0
    %711 = vmatpush1.bf16.msra.mxu0 0
    %712 = vmatprep.subr.bf16.mxu0 0
    %713 = vmatpush1.bf16.msra.mxu0 0
    %714 = vmatprep.subr.bf16.mxu0 0
    %715 = vmatpush1.bf16.msra.mxu0 0
    %716 = vmatprep.subr.bf16.mxu0 0
    %717 = vmatpush1.bf16.msra.mxu0 0
    %718 = vmatprep.subr.bf16.mxu0 0
    %719 = vmatpush1.bf16.msra.mxu0 0
    %720 = vmatprep.subr.bf16.mxu0 0
    %721 = vmatpush1.bf16.msra.mxu0 0
    %722 = vmatprep.subr.bf16.mxu0 0
    %723 = vmatpush1.bf16.msra.mxu0 0
    %724 = vmatprep.subr.bf16.mxu0 0
    %725 = vmatpush1.bf16.msra.mxu0 0
    %726 = vmatprep.mubr.bf16.mxu0 0
    %727 = vmatmul.mubr.bf16.gmra.mrb[0].mxu0 %v692
    %v728 = vpop.f32.mrb[0].mxu0
    %v729 = vadd.f32 0.0, %v728
    %v730 = vpop.f32.mrb[0].mxu0
    %v731 = vpop.f32.mrb[0].mxu0
    %v732 = vpop.f32.mrb[0].mxu0
    %733 = vdwg.mxu0
    %v734 = vadd.f32 %v686, %v729
    %s735 = scalar_lea.vmem %s1, 6
    %v736 = vld [vmem:[%s735] sm:$0x3]
    %v737 = vpack.c.bf16 %v672, %v672
    %739 = vrot.lane.b32.xlu0 %v737, 32
    %v740 = vpop.permute.xlu0 %739
    %v742 = vsel %vm44, %v740, 0
    %744 = vmatprep.subr.bf16.mxu0 0
    %745 = vmatpush1.bf16.msra.mxu0 %v99
    %746 = vmatprep.subr.bf16.mxu0 0
    %747 = vmatpush1.bf16.msra.mxu0 %v100
    %748 = vmatprep.subr.bf16.mxu0 0
    %749 = vmatpush1.bf16.msra.mxu0 0
    %750 = vmatprep.subr.bf16.mxu0 0
    %751 = vmatpush1.bf16.msra.mxu0 0
    %752 = vmatprep.subr.bf16.mxu0 0
    %753 = vmatpush1.bf16.msra.mxu0 0
    %754 = vmatprep.subr.bf16.mxu0 0
    %755 = vmatpush1.bf16.msra.mxu0 0
    %756 = vmatprep.subr.bf16.mxu0 0
    %757 = vmatpush1.bf16.msra.mxu0 0
    %758 = vmatprep.subr.bf16.mxu0 0
    %759 = vmatpush1.bf16.msra.mxu0 0
    %760 = vmatprep.subr.bf16.mxu0 0
    %761 = vmatpush1.bf16.msra.mxu0 0
    %762 = vmatprep.subr.bf16.mxu0 0
    %763 = vmatpush1.bf16.msra.mxu0 0
    %764 = vmatprep.subr.bf16.mxu0 0
    %765 = vmatpush1.bf16.msra.mxu0 0
    %766 = vmatprep.subr.bf16.mxu0 0
    %767 = vmatpush1.bf16.msra.mxu0 0
    %768 = vmatprep.subr.bf16.mxu0 0
    %769 = vmatpush1.bf16.msra.mxu0 0
    %770 = vmatprep.subr.bf16.mxu0 0
    %771 = vmatpush1.bf16.msra.mxu0 0
    %772 = vmatprep.subr.bf16.mxu0 0
    %773 = vmatpush1.bf16.msra.mxu0 0
    %774 = vmatprep.subr.bf16.mxu0 0
    %775 = vmatpush1.bf16.msra.mxu0 0
    %776 = vmatprep.mubr.bf16.mxu0 0
    %777 = vmatmul.mubr.bf16.gmra.mrb[0].mxu0 %v742
    %v778 = vpop.f32.mrb[0].mxu0
    %v779 = vadd.f32 0.0, %v778
    %v780 = vpop.f32.mrb[0].mxu0
    %v781 = vpop.f32.mrb[0].mxu0
    %v782 = vpop.f32.mrb[0].mxu0
    %783 = vdwg.mxu0
    %v784 = vadd.f32 %v736, %v779
    %v785 = vxor.u32 %v734, 2147483648
    %v786 = vmul.f32 %v785, 1.442695
    %v787 = vpow.pop %v786
    %v788 = vadd.f32 %v787, 1.0
    %v789 = vrcp.pop %v788
    %v790 = vmul.f32 1.0, %v789
    %v791 = vtanh.pop %v734
    %v792 = vmul.f32 %v790, %v642
    %794 = vrot.lane.b32.xlu0 %v791, 64
    %v795 = vpop.permute.xlu0 %794
    %v797 = vmul.f32 %v790, %v795
    %799 = vrot.lane.b32.xlu0 %v797, 32
    %v800 = vpop.permute.xlu0 %799
    %v802 = vadd.f32 %v792, %v800
    %v803 = vtanh.pop %v802
    %805 = vrot.lane.b32.xlu0 %v803, 64
    %v806 = vpop.permute.xlu0 %805
    %v808 = vmul.f32 %v790, %v806
    %v809 = vxor.u32 %v784, 2147483648
    %v810 = vmul.f32 %v809, 1.442695
    %v811 = vpow.pop %v810
    %v812 = vadd.f32 %v811, 1.0
    %v813 = vrcp.pop %v812
    %v814 = vmul.f32 1.0, %v813
    %v815 = vtanh.pop %v784
    %v816 = vmul.f32 %v814, %v666
    %818 = vrot.lane.b32.xlu0 %v815, 64
    %v819 = vpop.permute.xlu0 %818
    %v821 = vmul.f32 %v814, %v819
    %823 = vrot.lane.b32.xlu0 %v821, 32
    %v824 = vpop.permute.xlu0 %823
    %v826 = vadd.f32 %v816, %v824
    %v827 = vtanh.pop %v826
    %829 = vrot.lane.b32.xlu0 %v827, 64
    %v830 = vpop.permute.xlu0 %829
    %v832 = vmul.f32 %v814, %v830
    %834 = vrot.lane.b32.xlu0 %v808, 32
    %v835 = vpop.permute.xlu0 %834
    %837 = vst.msk [vmem:[%s683] sm:$0x3] %vm196, %v835
    %839 = vrot.lane.b32.xlu0 %v832, 64
    %v840 = vpop.permute.xlu0 %839
    %842 = vst.msk [vmem:[%s677] sm:$0x3] %vm203, %v840
    %s843 = scalar_lea.vmem %s0, 10
    %v844 = vld [vmem:[%s843] sm:$0x3]
    %v845 = vpack.c.bf16 %v808, %v808
    %847 = vrot.lane.b32.xlu0 %v845, 32
    %v848 = vpop.permute.xlu0 %847
    %v850 = vsel %vm44, %v848, 0
    %852 = vmatprep.subr.bf16.mxu0 0
    %853 = vmatpush1.bf16.msra.mxu0 %v40
    %854 = vmatprep.subr.bf16.mxu0 0
    %855 = vmatpush1.bf16.msra.mxu0 %v41
    %856 = vmatprep.subr.bf16.mxu0 0
    %857 = vmatpush1.bf16.msra.mxu0 0
    %858 = vmatprep.subr.bf16.mxu0 0
    %859 = vmatpush1.bf16.msra.mxu0 0
    %860 = vmatprep.subr.bf16.mxu0 0
    %861 = vmatpush1.bf16.msra.mxu0 0
    %862 = vmatprep.subr.bf16.mxu0 0
    %863 = vmatpush1.bf16.msra.mxu0 0
    %864 = vmatprep.subr.bf16.mxu0 0
    %865 = vmatpush1.bf16.msra.mxu0 0
    %866 = vmatprep.subr.bf16.mxu0 0
    %867 = vmatpush1.bf16.msra.mxu0 0
    %868 = vmatprep.subr.bf16.mxu0 0
    %869 = vmatpush1.bf16.msra.mxu0 0
    %870 = vmatprep.subr.bf16.mxu0 0
    %871 = vmatpush1.bf16.msra.mxu0 0
    %872 = vmatprep.subr.bf16.mxu0 0
    %873 = vmatpush1.bf16.msra.mxu0 0
    %874 = vmatprep.subr.bf16.mxu0 0
    %875 = vmatpush1.bf16.msra.mxu0 0
    %876 = vmatprep.subr.bf16.mxu0 0
    %877 = vmatpush1.bf16.msra.mxu0 0
    %878 = vmatprep.subr.bf16.mxu0 0
    %879 = vmatpush1.bf16.msra.mxu0 0
    %880 = vmatprep.subr.bf16.mxu0 0
    %881 = vmatpush1.bf16.msra.mxu0 0
    %882 = vmatprep.subr.bf16.mxu0 0
    %883 = vmatpush1.bf16.msra.mxu0 0
    %884 = vmatprep.mubr.bf16.mxu0 0
    %885 = vmatmul.mubr.bf16.gmra.mrb[0].mxu0 %v850
    %v886 = vpop.f32.mrb[0].mxu0
    %v887 = vadd.f32 0.0, %v886
    %v888 = vpop.f32.mrb[0].mxu0
    %v889 = vpop.f32.mrb[0].mxu0
    %v890 = vpop.f32.mrb[0].mxu0
    %891 = vdwg.mxu0
    %v892 = vadd.f32 %v844, %v887
    %s893 = scalar_lea.vmem %s1, 4
    %v894 = vld [vmem:[%s893] sm:$0x3]
    %v895 = vpack.c.bf16 %v832, %v832
    %897 = vrot.lane.b32.xlu0 %v895, 32
    %v898 = vpop.permute.xlu0 %897
    %v900 = vsel %vm44, %v898, 0
    %902 = vmatprep.subr.bf16.mxu0 0
    %903 = vmatpush1.bf16.msra.mxu0 %v99
    %904 = vmatprep.subr.bf16.mxu0 0
    %905 = vmatpush1.bf16.msra.mxu0 %v100
    %906 = vmatprep.subr.bf16.mxu0 0
    %907 = vmatpush1.bf16.msra.mxu0 0
    %908 = vmatprep.subr.bf16.mxu0 0
    %909 = vmatpush1.bf16.msra.mxu0 0
    %910 = vmatprep.subr.bf16.mxu0 0
    %911 = vmatpush1.bf16.msra.mxu0 0
    %912 = vmatprep.subr.bf16.mxu0 0
    %913 = vmatpush1.bf16.msra.mxu0 0
    %914 = vmatprep.subr.bf16.mxu0 0
    %915 = vmatpush1.bf16.msra.mxu0 0
    %916 = vmatprep.subr.bf16.mxu0 0
    %917 = vmatpush1.bf16.msra.mxu0 0
    %918 = vmatprep.subr.bf16.mxu0 0
    %919 = vmatpush1.bf16.msra.mxu0 0
    %920 = vmatprep.subr.bf16.mxu0 0
    %921 = vmatpush1.bf16.msra.mxu0 0
    %922 = vmatprep.subr.bf16.mxu0 0
    %923 = vmatpush1.bf16.msra.mxu0 0
    %924 = vmatprep.subr.bf16.mxu0 0
    %925 = vmatpush1.bf16.msra.mxu0 0
    %926 = vmatprep.subr.bf16.mxu0 0
    %927 = vmatpush1.bf16.msra.mxu0 0
    %928 = vmatprep.subr.bf16.mxu0 0
    %929 = vmatpush1.bf16.msra.mxu0 0
    %930 = vmatprep.subr.bf16.mxu0 0
    %931 = vmatpush1.bf16.msra.mxu0 0
    %932 = vmatprep.subr.bf16.mxu0 0
    %933 = vmatpush1.bf16.msra.mxu0 0
    %934 = vmatprep.mubr.bf16.mxu0 0
    %935 = vmatmul.mubr.bf16.gmra.mrb[0].mxu0 %v900
    %v936 = vpop.f32.mrb[0].mxu0
    %v937 = vadd.f32 0.0, %v936
    %v938 = vpop.f32.mrb[0].mxu0
    %v939 = vpop.f32.mrb[0].mxu0
    %v940 = vpop.f32.mrb[0].mxu0
    %941 = vdwg.mxu0
    %v942 = vadd.f32 %v894, %v937
    %v943 = vxor.u32 %v892, 2147483648
    %v944 = vmul.f32 %v943, 1.442695
    %v945 = vpow.pop %v944
    %v946 = vadd.f32 %v945, 1.0
    %v947 = vrcp.pop %v946
    %v948 = vmul.f32 1.0, %v947
    %v949 = vtanh.pop %v892
    %v950 = vmul.f32 %v948, %v802
    %952 = vrot.lane.b32.xlu0 %v949, 64
    %v953 = vpop.permute.xlu0 %952
    %v955 = vmul.f32 %v948, %v953
    %957 = vrot.lane.b32.xlu0 %v955, 32
    %v958 = vpop.permute.xlu0 %957
    %v960 = vadd.f32 %v950, %v958
    %v961 = vtanh.pop %v960
    %963 = vrot.lane.b32.xlu0 %v961, 64
    %v964 = vpop.permute.xlu0 %963
    %v966 = vmul.f32 %v948, %v964
    %v967 = vxor.u32 %v942, 2147483648
    %v968 = vmul.f32 %v967, 1.442695
    %v969 = vpow.pop %v968
    %v970 = vadd.f32 %v969, 1.0
    %v971 = vrcp.pop %v970
    %v972 = vmul.f32 1.0, %v971
    %v973 = vtanh.pop %v942
    %v974 = vmul.f32 %v972, %v826
    %976 = vrot.lane.b32.xlu0 %v973, 64
    %v977 = vpop.permute.xlu0 %976
    %v979 = vmul.f32 %v972, %v977
    %981 = vrot.lane.b32.xlu0 %v979, 32
    %v982 = vpop.permute.xlu0 %981
    %v984 = vadd.f32 %v974, %v982
    %v985 = vtanh.pop %v984
    %987 = vrot.lane.b32.xlu0 %v985, 64
    %v988 = vpop.permute.xlu0 %987
    %v990 = vmul.f32 %v972, %v988
    %992 = vrot.lane.b32.xlu0 %v966, 32
    %v993 = vpop.permute.xlu0 %992
    %995 = vst.msk [vmem:[%s523] sm:$0x3] %vm196, %v993
    %997 = vrot.lane.b32.xlu0 %v990, 64
    %v998 = vpop.permute.xlu0 %997
    %1000 = vst.msk [vmem:[%s517] sm:$0x3] %vm203, %v998
    %s1001 = scalar_lea.vmem %s0, 12
    %v1002 = vld [vmem:[%s1001] sm:$0x3]
    %v1003 = vpack.c.bf16 %v966, %v966
    %1005 = vrot.lane.b32.xlu0 %v1003, 32
    %v1006 = vpop.permute.xlu0 %1005
    %v1008 = vsel %vm44, %v1006, 0
    %1010 = vmatprep.subr.bf16.mxu0 0
    %1011 = vmatpush1.bf16.msra.mxu0 %v40
    %1012 = vmatprep.subr.bf16.mxu0 0
    %1013 = vmatpush1.bf16.msra.mxu0 %v41
    %1014 = vmatprep.subr.bf16.mxu0 0
    %1015 = vmatpush1.bf16.msra.mxu0 0
    %1016 = vmatprep.subr.bf16.mxu0 0
    %1017 = vmatpush1.bf16.msra.mxu0 0
    %1018 = vmatprep.subr.bf16.mxu0 0
    %1019 = vmatpush1.bf16.msra.mxu0 0
    %1020 = vmatprep.subr.bf16.mxu0 0
    %1021 = vmatpush1.bf16.msra.mxu0 0
    %1022 = vmatprep.subr.bf16.mxu0 0
    %1023 = vmatpush1.bf16.msra.mxu0 0
    %1024 = vmatprep.subr.bf16.mxu0 0
    %1025 = vmatpush1.bf16.msra.mxu0 0
    %1026 = vmatprep.subr.bf16.mxu0 0
    %1027 = vmatpush1.bf16.msra.mxu0 0
    %1028 = vmatprep.subr.bf16.mxu0 0
    %1029 = vmatpush1.bf16.msra.mxu0 0
    %1030 = vmatprep.subr.bf16.mxu0 0
    %1031 = vmatpush1.bf16.msra.mxu0 0
    %1032 = vmatprep.subr.bf16.mxu0 0
    %1033 = vmatpush1.bf16.msra.mxu0 0
    %1034 = vmatprep.subr.bf16.mxu0 0
    %1035 = vmatpush1.bf16.msra.mxu0 0
    %1036 = vmatprep.subr.bf16.mxu0 0
    %1037 = vmatpush1.bf16.msra.mxu0 0
    %1038 = vmatprep.subr.bf16.mxu0 0
    %1039 = vmatpush1.bf16.msra.mxu0 0
    %1040 = vmatprep.subr.bf16.mxu0 0
    %1041 = vmatpush1.bf16.msra.mxu0 0
    %1042 = vmatprep.mubr.bf16.mxu0 0
    %1043 = vmatmul.mubr.bf16.gmra.mrb[0].mxu0 %v1008
    %v1044 = vpop.f32.mrb[0].mxu0
    %v1045 = vadd.f32 0.0, %v1044
    %v1046 = vpop.f32.mrb[0].mxu0
    %v1047 = vpop.f32.mrb[0].mxu0
    %v1048 = vpop.f32.mrb[0].mxu0
    %1049 = vdwg.mxu0
    %v1050 = vadd.f32 %v1002, %v1045
    %s1051 = scalar_lea.vmem %s1, 2
    %v1052 = vld [vmem:[%s1051] sm:$0x3]
    %v1053 = vpack.c.bf16 %v990, %v990
    %1055 = vrot.lane.b32.xlu0 %v1053, 32
    %v1056 = vpop.permute.xlu0 %1055
    %v1058 = vsel %vm44, %v1056, 0
    %1060 = vmatprep.subr.bf16.mxu0 0
    %1061 = vmatpush1.bf16.msra.mxu0 %v99
    %1062 = vmatprep.subr.bf16.mxu0 0
    %1063 = vmatpush1.bf16.msra.mxu0 %v100
    %1064 = vmatprep.subr.bf16.mxu0 0
    %1065 = vmatpush1.bf16.msra.mxu0 0
    %1066 = vmatprep.subr.bf16.mxu0 0
    %1067 = vmatpush1.bf16.msra.mxu0 0
    %1068 = vmatprep.subr.bf16.mxu0 0
    %1069 = vmatpush1.bf16.msra.mxu0 0
    %1070 = vmatprep.subr.bf16.mxu0 0
    %1071 = vmatpush1.bf16.msra.mxu0 0
    %1072 = vmatprep.subr.bf16.mxu0 0
    %1073 = vmatpush1.bf16.msra.mxu0 0
    %1074 = vmatprep.subr.bf16.mxu0 0
    %1075 = vmatpush1.bf16.msra.mxu0 0
    %1076 = vmatprep.subr.bf16.mxu0 0
    %1077 = vmatpush1.bf16.msra.mxu0 0
    %1078 = vmatprep.subr.bf16.mxu0 0
    %1079 = vmatpush1.bf16.msra.mxu0 0
    %1080 = vmatprep.subr.bf16.mxu0 0
    %1081 = vmatpush1.bf16.msra.mxu0 0
    %1082 = vmatprep.subr.bf16.mxu0 0
    %1083 = vmatpush1.bf16.msra.mxu0 0
    %1084 = vmatprep.subr.bf16.mxu0 0
    %1085 = vmatpush1.bf16.msra.mxu0 0
    %1086 = vmatprep.subr.bf16.mxu0 0
    %1087 = vmatpush1.bf16.msra.mxu0 0
    %1088 = vmatprep.subr.bf16.mxu0 0
    %1089 = vmatpush1.bf16.msra.mxu0 0
    %1090 = vmatprep.subr.bf16.mxu0 0
    %1091 = vmatpush1.bf16.msra.mxu0 0
    %1092 = vmatprep.mubr.bf16.mxu0 0
    %1093 = vmatmul.mubr.bf16.gmra.mrb[0].mxu0 %v1058
    %v1094 = vpop.f32.mrb[0].mxu0
    %v1095 = vadd.f32 0.0, %v1094
    %v1096 = vpop.f32.mrb[0].mxu0
    %v1097 = vpop.f32.mrb[0].mxu0
    %v1098 = vpop.f32.mrb[0].mxu0
    %1099 = vdwg.mxu0
    %v1100 = vadd.f32 %v1052, %v1095
    %v1101 = vxor.u32 %v1050, 2147483648
    %v1102 = vmul.f32 %v1101, 1.442695
    %v1103 = vpow.pop %v1102
    %v1104 = vadd.f32 %v1103, 1.0
    %v1105 = vrcp.pop %v1104
    %v1106 = vmul.f32 1.0, %v1105
    %v1107 = vtanh.pop %v1050
    %v1108 = vmul.f32 %v1106, %v960
    %1110 = vrot.lane.b32.xlu0 %v1107, 64
    %v1111 = vpop.permute.xlu0 %1110
    %v1113 = vmul.f32 %v1106, %v1111
    %1115 = vrot.lane.b32.xlu0 %v1113, 32
    %v1116 = vpop.permute.xlu0 %1115
    %v1118 = vadd.f32 %v1108, %v1116
    %v1119 = vtanh.pop %v1118
    %1121 = vrot.lane.b32.xlu0 %v1119, 64
    %v1122 = vpop.permute.xlu0 %1121
    %v1124 = vmul.f32 %v1106, %v1122
    %v1125 = vxor.u32 %v1100, 2147483648
    %v1126 = vmul.f32 %v1125, 1.442695
    %v1127 = vpow.pop %v1126
    %v1128 = vadd.f32 %v1127, 1.0
    %v1129 = vrcp.pop %v1128
    %v1130 = vmul.f32 1.0, %v1129
    %v1131 = vtanh.pop %v1100
    %v1132 = vmul.f32 %v1130, %v984
    %1134 = vrot.lane.b32.xlu0 %v1131, 64
    %v1135 = vpop.permute.xlu0 %1134
    %v1137 = vmul.f32 %v1130, %v1135
    %1139 = vrot.lane.b32.xlu0 %v1137, 32
    %v1140 = vpop.permute.xlu0 %1139
    %v1142 = vadd.f32 %v1132, %v1140
    %v1143 = vtanh.pop %v1142
    %1145 = vrot.lane.b32.xlu0 %v1143, 64
    %v1146 = vpop.permute.xlu0 %1145
    %v1148 = vmul.f32 %v1130, %v1146
    %1150 = vrot.lane.b32.xlu0 %v1124, 32
    %v1151 = vpop.permute.xlu0 %1150
    %1153 = vst.msk [vmem:[%s363] sm:$0x3] %vm196, %v1151
    %1155 = vrot.lane.b32.xlu0 %v1148, 64
    %v1156 = vpop.permute.xlu0 %1155
    %1158 = vst.msk [vmem:[%s357] sm:$0x3] %vm203, %v1156
    %s1159 = scalar_lea.vmem %s0, 14
    %v1160 = vld [vmem:[%s1159] sm:$0x3]
    %v1161 = vpack.c.bf16 %v1124, %v1124
    %1163 = vrot.lane.b32.xlu0 %v1161, 32
    %v1164 = vpop.permute.xlu0 %1163
    %v1166 = vsel %vm44, %v1164, 0
    %1168 = vmatprep.subr.bf16.mxu0 0
    %1169 = vmatpush1.bf16.msra.mxu0 %v40
    %1170 = vmatprep.subr.bf16.mxu0 0
    %1171 = vmatpush1.bf16.msra.mxu0 %v41
    %1172 = vmatprep.subr.bf16.mxu0 0
    %1173 = vmatpush1.bf16.msra.mxu0 0
    %1174 = vmatprep.subr.bf16.mxu0 0
    %1175 = vmatpush1.bf16.msra.mxu0 0
    %1176 = vmatprep.subr.bf16.mxu0 0
    %1177 = vmatpush1.bf16.msra.mxu0 0
    %1178 = vmatprep.subr.bf16.mxu0 0
    %1179 = vmatpush1.bf16.msra.mxu0 0
    %1180 = vmatprep.subr.bf16.mxu0 0
    %1181 = vmatpush1.bf16.msra.mxu0 0
    %1182 = vmatprep.subr.bf16.mxu0 0
    %1183 = vmatpush1.bf16.msra.mxu0 0
    %1184 = vmatprep.subr.bf16.mxu0 0
    %1185 = vmatpush1.bf16.msra.mxu0 0
    %1186 = vmatprep.subr.bf16.mxu0 0
    %1187 = vmatpush1.bf16.msra.mxu0 0
    %1188 = vmatprep.subr.bf16.mxu0 0
    %1189 = vmatpush1.bf16.msra.mxu0 0
    %1190 = vmatprep.subr.bf16.mxu0 0
    %1191 = vmatpush1.bf16.msra.mxu0 0
    %1192 = vmatprep.subr.bf16.mxu0 0
    %1193 = vmatpush1.bf16.msra.mxu0 0
    %1194 = vmatprep.subr.bf16.mxu0 0
    %1195 = vmatpush1.bf16.msra.mxu0 0
    %1196 = vmatprep.subr.bf16.mxu0 0
    %1197 = vmatpush1.bf16.msra.mxu0 0
    %1198 = vmatprep.subr.bf16.mxu0 0
    %1199 = vmatpush1.bf16.msra.mxu0 0
    %1200 = vmatprep.mubr.bf16.mxu0 0
    %1201 = vmatmul.mubr.bf16.gmra.mrb[0].mxu0 %v1166
    %v1202 = vpop.f32.mrb[0].mxu0
    %v1203 = vadd.f32 0.0, %v1202
    %v1204 = vpop.f32.mrb[0].mxu0
    %v1205 = vpop.f32.mrb[0].mxu0
    %v1206 = vpop.f32.mrb[0].mxu0
    %1207 = vdwg.mxu0
    %v1208 = vadd.f32 %v1160, %v1203
    %v1209 = vld [vmem:[%s1] sm:$0x3]
    %v1210 = vpack.c.bf16 %v1148, %v1148
    %1212 = vrot.lane.b32.xlu0 %v1210, 32
    %v1213 = vpop.permute.xlu0 %1212
    %v1215 = vsel %vm44, %v1213, 0
    %1217 = vmatprep.subr.bf16.mxu0 0
    %1218 = vmatpush1.bf16.msra.mxu0 %v99
    %1219 = vmatprep.subr.bf16.mxu0 0
    %1220 = vmatpush1.bf16.msra.mxu0 %v100
    %1221 = vmatprep.subr.bf16.mxu0 0
    %1222 = vmatpush1.bf16.msra.mxu0 0
    %1223 = vmatprep.subr.bf16.mxu0 0
    %1224 = vmatpush1.bf16.msra.mxu0 0
    %1225 = vmatprep.subr.bf16.mxu0 0
    %1226 = vmatpush1.bf16.msra.mxu0 0
    %1227 = vmatprep.subr.bf16.mxu0 0
    %1228 = vmatpush1.bf16.msra.mxu0 0
    %1229 = vmatprep.subr.bf16.mxu0 0
    %1230 = vmatpush1.bf16.msra.mxu0 0
    %1231 = vmatprep.subr.bf16.mxu0 0
    %1232 = vmatpush1.bf16.msra.mxu0 0
    %1233 = vmatprep.subr.bf16.mxu0 0
    %1234 = vmatpush1.bf16.msra.mxu0 0
    %1235 = vmatprep.subr.bf16.mxu0 0
    %1236 = vmatpush1.bf16.msra.mxu0 0
    %1237 = vmatprep.subr.bf16.mxu0 0
    %1238 = vmatpush1.bf16.msra.mxu0 0
    %1239 = vmatprep.subr.bf16.mxu0 0
    %1240 = vmatpush1.bf16.msra.mxu0 0
    %1241 = vmatprep.subr.bf16.mxu0 0
    %1242 = vmatpush1.bf16.msra.mxu0 0
    %1243 = vmatprep.subr.bf16.mxu0 0
    %1244 = vmatpush1.bf16.msra.mxu0 0
    %1245 = vmatprep.subr.bf16.mxu0 0
    %1246 = vmatpush1.bf16.msra.mxu0 0
    %1247 = vmatprep.subr.bf16.mxu0 0
    %1248 = vmatpush1.bf16.msra.mxu0 0
    %1249 = vmatprep.mubr.bf16.mxu0 0
    %1250 = vmatmul.mubr.bf16.gmra.mrb[0].mxu0 %v1215
    %v1251 = vpop.f32.mrb[0].mxu0
    %v1252 = vadd.f32 0.0, %v1251
    %v1253 = vpop.f32.mrb[0].mxu0
    %v1254 = vpop.f32.mrb[0].mxu0
    %v1255 = vpop.f32.mrb[0].mxu0
    %1256 = vdwg.mxu0
    %v1257 = vadd.f32 %v1209, %v1252
    %v1258 = vxor.u32 %v1208, 2147483648
    %v1259 = vmul.f32 %v1258, 1.442695
    %v1260 = vpow.pop %v1259
    %v1261 = vadd.f32 %v1260, 1.0
    %v1262 = vrcp.pop %v1261
    %v1263 = vmul.f32 1.0, %v1262
    %v1264 = vtanh.pop %v1208
    %v1265 = vmul.f32 %v1263, %v1118
    %1267 = vrot.lane.b32.xlu0 %v1264, 64
    %v1268 = vpop.permute.xlu0 %1267
    %v1270 = vmul.f32 %v1263, %v1268
    %1272 = vrot.lane.b32.xlu0 %v1270, 32
    %v1273 = vpop.permute.xlu0 %1272
    %v1275 = vadd.f32 %v1265, %v1273
    %v1276 = vtanh.pop %v1275
    %1278 = vrot.lane.b32.xlu0 %v1276, 64
    %v1279 = vpop.permute.xlu0 %1278
    %v1281 = vmul.f32 %v1263, %v1279
    %v1282 = vxor.u32 %v1257, 2147483648
    %v1283 = vmul.f32 %v1282, 1.442695
    %v1284 = vpow.pop %v1283
    %v1285 = vadd.f32 %v1284, 1.0
    %v1286 = vrcp.pop %v1285
    %v1287 = vmul.f32 1.0, %v1286
    %v1288 = vtanh.pop %v1257
    %v1289 = vmul.f32 %v1287, %v1142
    %1291 = vrot.lane.b32.xlu0 %v1288, 64
    %v1292 = vpop.permute.xlu0 %1291
    %v1294 = vmul.f32 %v1287, %v1292
    %1296 = vrot.lane.b32.xlu0 %v1294, 32
    %v1297 = vpop.permute.xlu0 %1296
    %v1299 = vadd.f32 %v1289, %v1297
    %v1300 = vtanh.pop %v1299
    %1302 = vrot.lane.b32.xlu0 %v1300, 64
    %v1303 = vpop.permute.xlu0 %1302
    %v1305 = vmul.f32 %v1287, %v1303
    %1307 = vrot.lane.b32.xlu0 %v1281, 32
    %v1308 = vpop.permute.xlu0 %1307
    %1310 = vst.msk [vmem:[%s202] sm:$0x3] %vm196, %v1308
    %1312 = vrot.lane.b32.xlu0 %v1305, 64
    %v1313 = vpop.permute.xlu0 %1312
    %1315 = vst.msk [vmem:[%s4] sm:$0x3] %vm203, %v1313
    %1316 = vst.msk [vmem:[#allocation2] sm:$0x3] %vm196, %v1308
    %1317 = vrot.lane.b32.xlu0 %v1305, 32
    %v1318 = vpop.permute.xlu0 %1317
    %s1320 = scalar_lea.vmem [#allocation2], 2
    %1321 = vst.msk [vmem:[%s1320] sm:$0x3] %vm196, %v1318
    %1323 = vrot.lane.b32.xlu0 %v1275, 96
    %v1324 = vpop.permute.xlu0 %1323
    %1326 = vst.msk [vmem:[#allocation4] sm:$0x3] %vm196, %v1324
    %1328 = vrot.lane.b32.xlu0 %v1299, 96
    %v1329 = vpop.permute.xlu0 %1328
    %s1331 = scalar_lea.vmem [#allocation4], 2
    %1332 = vst.msk [vmem:[%s1331] sm:$0x3] %vm196, %v1329
    // Predicated region
    $region18: #{listener_forward.4} parent=1 // pred_check
      _
    $region19: #{listener_forward.4} parent=1 // pred_check_branch
      %1334 = sbr.rel (0) target = $region21
    $region20: #{listener_forward.4} parent=1 // pred_region
      _
    $region21: #{listener_forward.4} parent=1 // pred_fallthru
      _
    // Predicated region
    $region22: #{listener_forward.4} parent=1 // pred_check
      _
    $region23: #{listener_forward.4} parent=1 // pred_check_branch
      %1336 = sbr.rel (0) target = $region25
    $region24: #{listener_forward.4} parent=1 // pred_region
      %s1338 = ssub.s32 64, 64
      %1339 = vsyncadd [#allocation3], %s1338
      %s1340 = sshll.u32 [#allocation2], 4
      %s1341 = int_to_ptr.vmem [resolvable:$true] %s1340
      %1346 = dma.vmem_to_hbm [thread:$0]  %s1341, 64, %s5, [#allocation3], 32, 32, 2
    $region25: #{listener_forward.4} parent=1 // pred_fallthru
      _
    // Predicated region
    $region26: #{listener_forward.4} parent=1 // pred_check
      _
    $region27: #{listener_forward.4} parent=1 // pred_check_branch
      %1348 = sbr.rel (0) target = $region29
    $region28: #{listener_forward.4} parent=1 // pred_region
      %s1350 = ssub.s32 64, 64
      %1351 = vsyncadd [#allocation5], %s1350
      %s1352 = sshll.u32 [#allocation4], 4
      %s1353 = int_to_ptr.vmem [resolvable:$true] %s1352
      %1358 = dma.vmem_to_hbm [thread:$0]  %s1353, 64, %s6, [#allocation5], 32, 32, 2
    $region29: #{listener_forward.4} parent=1 // pred_fallthru
      _
    // Predicated region
    $region30: #{listener_forward.4} parent=1 // pred_check
      _
    $region31: #{listener_forward.4} parent=1 // pred_check_branch
      %1360 = sbr.rel (0) target = $region33
    $region32: #{listener_forward.4} parent=1 // pred_region
      _
    $region33: #{listener_forward.4} parent=1 // pred_fallthru
      _
    // Predicated region
    $region34: #{listener_forward.4} parent=1 // pred_check
      _
    $region35: #{listener_forward.4} parent=1 // pred_check_branch
      %1362 = sbr.rel (0) target = $region37
    $region36: #{listener_forward.4} parent=1 // pred_region
      %1363 = dma.done [#allocation3], 64
    $region37: #{listener_forward.4} parent=1 // pred_fallthru
      _
    // Predicated region
    $region38: #{listener_forward.4} parent=1 // pred_check
      _
    $region39: #{listener_forward.4} parent=1 // pred_check_branch
      %1365 = sbr.rel (0) target = $region41
    $region40: #{listener_forward.4} parent=1 // pred_region
      %1366 = dma.done [#allocation5], 64
    $region41: #{listener_forward.4} parent=1 // pred_fallthru
      _
    %1367 = vsyncpa [#allocation3], 1
    %1368 = vsyncpa [#allocation5], 1

// kernel: listener_forward.3
$region0: #{listener_forward.3}
  #allocation0 [shape = 'u32[]', space=smem, size = 0x4, offset = 0x4, fixed_abs, tag = 'smem constant byte address 0x4 - core index']
  #allocation1 [shape = 'u32[144,128]{1,0:T(1,128)}', space=vmem, size = 0x12000, scoped, tag = 'internal scratch']
  %s0 = inlined_call_operand.vmem [shape: f32[16,2,128], index: 0, kind: input, shape index: {}]
  %s1 = inlined_call_operand.vmem [shape: f32[16,2,128], index: 1, kind: input, shape index: {}]
  %s2 = inlined_call_operand.vmem [shape: bf16[32,128], index: 2, kind: input, shape index: {}]
  %s3 = inlined_call_operand.vmem [shape: bf16[32,128], index: 3, kind: input, shape index: {}]
  %s4 = inlined_call_operand.vmem [shape: f32[16,2,64], index: 4, kind: output, shape index: {0}]
  %s5 = inlined_call_operand.hbm [shape: f32[2,2,32], index: 5, kind: output, shape index: {1}]
  %s6 = inlined_call_operand.hbm [shape: f32[2,2,32], index: 6, kind: output, shape index: {2}]
  %7 = xla_tuple %s4, %s5, %s6
  %s8 = sld [smem:[#allocation0]]
  $region42: #{listener_forward.3} parent=0
    _
  %s10 = ssub.s32 1, %s8
  %s11 = scalar_select 0, %s10, %s8
  $region1: #{listener_forward.3} parent=0
    #allocation2 [shape = 'u8[2048]{0}', space=vmem, size = 0x800, scoped, tag = 'output window, operand 1, single buffered']
    #allocation3 [shape = 's32[1]{0}', space=sflag, size = 0x4, scoped, tag = 'scoped memory for listener_forward.3']
    #allocation4 [shape = 'u8[2048]{0}', space=vmem, size = 0x800, scoped, tag = 'output window, operand 2, single buffered']
    #allocation5 [shape = 's32[1]{0}', space=sflag, size = 0x4, scoped, tag = 'scoped memory for listener_forward.3']
    %12 = vsyncpa [#allocation3], 0
    %13 = vsyncpa [#allocation5], 0
    // Predicated region
    $region2: #{listener_forward.3} parent=1 // pred_check
      _
    $region3: #{listener_forward.3} parent=1 // pred_check_branch
      %15 = sbr.rel (0) target = $region5
    $region4: #{listener_forward.3} parent=1 // pred_region
      _
    $region5: #{listener_forward.3} parent=1 // pred_fallthru
      _
    // Predicated region
    $region6: #{listener_forward.3} parent=1 // pred_check
      _
    $region7: #{listener_forward.3} parent=1 // pred_check_branch
      %17 = sbr.rel (0) target = $region9
    $region8: #{listener_forward.3} parent=1 // pred_region
      _
    $region9: #{listener_forward.3} parent=1 // pred_fallthru
      _
    // Predicated region
    $region10: #{listener_forward.3} parent=1 // pred_check
      _
    $region11: #{listener_forward.3} parent=1 // pred_check_branch
      %19 = sbr.rel (0) target = $region13
    $region12: #{listener_forward.3} parent=1 // pred_region
      _
    $region13: #{listener_forward.3} parent=1 // pred_fallthru
      _
    // Predicated region
    $region14: #{listener_forward.3} parent=1 // pred_check
      _
    $region15: #{listener_forward.3} parent=1 // pred_check_branch
      %21 = sbr.rel (0) target = $region17
    $region16: #{listener_forward.3} parent=1 // pred_region
      _
    $region17: #{listener_forward.3} parent=1 // pred_fallthru
      _
    %v23 = vld [vmem:[%s2] sm:$0xf]
    %v24 = vld [vmem:[%s2 + $0x4] sm:$0xf]
    %v25 = vld [vmem:[%s2 + $0x8] sm:$0xf]
    %v26 = vld [vmem:[%s2 + $0xc] sm:$0xf]
    %v27 = vld [vmem:[%s3] sm:$0xf]
    %v28 = vld [vmem:[%s3 + $0x4] sm:$0xf]
    %v29 = vld [vmem:[%s3 + $0x8] sm:$0xf]
    %v30 = vld [vmem:[%s3 + $0xc] sm:$0xf]
    %v31 = vld [vmem:[%s0] sm:$0x3]
    %v36 = vunpack.c.l.b16 %v23
    %v37 = vunpack.c.l.b16 %v24
    %v38 = vunpack.c.l.b16 %v25
    %v39 = vunpack.c.l.b16 %v26
    %v40 = vpack.c.b16 %v37, %v36
    %v41 = vpack.c.b16 %v39, %v38
    %vm44 = vcmask 261120
    %v46 = vsel %vm44, 0, 0
    %48 = vmatprep.subr.bf16.mxu0 0
    %49 = vmatpush1.bf16.msra.mxu0 %v40
    %50 = vmatprep.subr.bf16.mxu0 0
    %51 = vmatpush1.bf16.msra.mxu0 %v41
    %52 = vmatprep.subr.bf16.mxu0 0
    %53 = vmatpush1.bf16.msra.mxu0 0
    %54 = vmatprep.subr.bf16.mxu0 0
    %55 = vmatpush1.bf16.msra.mxu0 0
    %56 = vmatprep.subr.bf16.mxu0 0
    %57 = vmatpush1.bf16.msra.mxu0 0
    %58 = vmatprep.subr.bf16.mxu0 0
    %59 = vmatpush1.bf16.msra.mxu0 0
    %60 = vmatprep.subr.bf16.mxu0 0
    %61 = vmatpush1.bf16.msra.mxu0 0
    %62 = vmatprep.subr.bf16.mxu0 0
    %63 = vmatpush1.bf16.msra.mxu0 0
    %64 = vmatprep.subr.bf16.mxu0 0
    %65 = vmatpush1.bf16.msra.mxu0 0
    %66 = vmatprep.subr.bf16.mxu0 0
    %67 = vmatpush1.bf16.msra.mxu0 0
    %68 = vmatprep.subr.bf16.mxu0 0
    %69 = vmatpush1.bf16.msra.mxu0 0
    %70 = vmatprep.subr.bf16.mxu0 0
    %71 = vmatpush1.bf16.msra.mxu0 0
    %72 = vmatprep.subr.bf16.mxu0 0
    %73 = vmatpush1.bf16.msra.mxu0 0
    %74 = vmatprep.subr.bf16.mxu0 0
    %75 = vmatpush1.bf16.msra.mxu0 0
    %76 = vmatprep.subr.bf16.mxu0 0
    %77 = vmatpush1.bf16.msra.mxu0 0
    %78 = vmatprep.subr.bf16.mxu0 0
    %79 = vmatpush1.bf16.msra.mxu0 0
    %80 = vmatprep.mubr.bf16.mxu0 0
    %81 = vmatmul.mubr.bf16.gmra.mrb[0].mxu0 %v46
    %v82 = vpop.f32.mrb[0].mxu0
    %v83 = vadd.f32 0.0, %v82
    %v84 = vpop.f32.mrb[0].mxu0
    %v85 = vpop.f32.mrb[0].mxu0
    %v86 = vpop.f32.mrb[0].mxu0
    %87 = vdwg.mxu0
    %v88 = vadd.f32 %v31, %v83
    %s89 = scalar_lea.vmem %s1, 30
    %v90 = vld [vmem:[%s89] sm:$0x3]
    %v95 = vunpack.c.l.b16 %v27
    %v96 = vunpack.c.l.b16 %v28
    %v97 = vunpack.c.l.b16 %v29
    %v98 = vunpack.c.l.b16 %v30
    %v99 = vpack.c.b16 %v96, %v95
    %v100 = vpack.c.b16 %v98, %v97
    %103 = vmatprep.subr.bf16.mxu0 0
    %104 = vmatpush1.bf16.msra.mxu0 %v99
    %105 = vmatprep.subr.bf16.mxu0 0
    %106 = vmatpush1.bf16.msra.mxu0 %v100
    %107 = vmatprep.subr.bf16.mxu0 0
    %108 = vmatpush1.bf16.msra.mxu0 0
    %109 = vmatprep.subr.bf16.mxu0 0
    %110 = vmatpush1.bf16.msra.mxu0 0
    %111 = vmatprep.subr.bf16.mxu0 0
    %112 = vmatpush1.bf16.msra.mxu0 0
    %113 = vmatprep.subr.bf16.mxu0 0
    %114 = vmatpush1.bf16.msra.mxu0 0
    %115 = vmatprep.subr.bf16.mxu0 0
    %116 = vmatpush1.bf16.msra.mxu0 0
    %117 = vmatprep.subr.bf16.mxu0 0
    %118 = vmatpush1.bf16.msra.mxu0 0
    %119 = vmatprep.subr.bf16.mxu0 0
    %120 = vmatpush1.bf16.msra.mxu0 0
    %121 = vmatprep.subr.bf16.mxu0 0
    %122 = vmatpush1.bf16.msra.mxu0 0
    %123 = vmatprep.subr.bf16.mxu0 0
    %124 = vmatpush1.bf16.msra.mxu0 0
    %125 = vmatprep.subr.bf16.mxu0 0
    %126 = vmatpush1.bf16.msra.mxu0 0
    %127 = vmatprep.subr.bf16.mxu0 0
    %128 = vmatpush1.bf16.msra.mxu0 0
    %129 = vmatprep.subr.bf16.mxu0 0
    %130 = vmatpush1.bf16.msra.mxu0 0
    %131 = vmatprep.subr.bf16.mxu0 0
    %132 = vmatpush1.bf16.msra.mxu0 0
    %133 = vmatprep.subr.bf16.mxu0 0
    %134 = vmatpush1.bf16.msra.mxu0 0
    %135 = vmatprep.mubr.bf16.mxu0 0
    %136 = vmatmul.mubr.bf16.gmra.mrb[0].mxu0 %v46
    %v137 = vpop.f32.mrb[0].mxu0
    %v138 = vadd.f32 0.0, %v137
    %v139 = vpop.f32.mrb[0].mxu0
    %v140 = vpop.f32.mrb[0].mxu0
    %v141 = vpop.f32.mrb[0].mxu0
    %142 = vdwg.mxu0
    %v143 = vadd.f32 %v90, %v138
    %v144 = vxor.u32 %v88, 2147483648
    %v145 = vmul.f32 %v144, 1.442695
    %v146 = vpow.pop %v145
    %v147 = vadd.f32 %v146, 1.0
    %v148 = vrcp.pop %v147
    %v149 = vmul.f32 1.0, %v148
    %v150 = vtanh.pop %v88
    %v151 = vmul.f32 %v149, 0.0
    %153 = vrot.lane.b32.xlu0 %v150, 64
    %v154 = vpop.permute.xlu0 %153
    %v156 = vmul.f32 %v149, %v154
    %158 = vrot.lane.b32.xlu0 %v156, 32
    %v159 = vpop.permute.xlu0 %158
    %v161 = vadd.f32 %v151, %v159
    %v162 = vtanh.pop %v161
    %164 = vrot.lane.b32.xlu0 %v162, 64
    %v165 = vpop.permute.xlu0 %164
    %v167 = vmul.f32 %v149, %v165
    %v168 = vxor.u32 %v143, 2147483648
    %v169 = vmul.f32 %v168, 1.442695
    %v170 = vpow.pop %v169
    %v171 = vadd.f32 %v170, 1.0
    %v172 = vrcp.pop %v171
    %v173 = vmul.f32 1.0, %v172
    %v174 = vtanh.pop %v143
    %v175 = vmul.f32 %v173, 0.0
    %177 = vrot.lane.b32.xlu0 %v174, 64
    %v178 = vpop.permute.xlu0 %177
    %v180 = vmul.f32 %v173, %v178
    %182 = vrot.lane.b32.xlu0 %v180, 32
    %v183 = vpop.permute.xlu0 %182
    %v185 = vadd.f32 %v175, %v183
    %v186 = vtanh.pop %v185
    %188 = vrot.lane.b32.xlu0 %v186, 64
    %v189 = vpop.permute.xlu0 %188
    %v191 = vmul.f32 %v173, %v189
    %193 = vrot.lane.b32.xlu0 %v167, 32
    %v194 = vpop.permute.xlu0 %193
    %vm196 = vcmask 254976
    %197 = vst.msk [vmem:[%s4] sm:$0x3] %vm196, %v194
    %199 = vrot.lane.b32.xlu0 %v191, 64
    %v200 = vpop.permute.xlu0 %199
    %s202 = scalar_lea.vmem %s4, 30
    %vm203 = vcmask 517376
    %204 = vst.msk [vmem:[%s202] sm:$0x3] %vm203, %v200
    %s205 = scalar_lea.vmem %s0, 2
    %v206 = vld [vmem:[%s205] sm:$0x3]
    %v207 = vpack.c.bf16 %v167, %v167
    %209 = vrot.lane.b32.xlu0 %v207, 32
    %v210 = vpop.permute.xlu0 %209
    %v212 = vsel %vm44, %v210, 0
    %214 = vmatprep.subr.bf16.mxu0 0
    %215 = vmatpush1.bf16.msra.mxu0 %v40
    %216 = vmatprep.subr.bf16.mxu0 0
    %217 = vmatpush1.bf16.msra.mxu0 %v41
    %218 = vmatprep.subr.bf16.mxu0 0
    %219 = vmatpush1.bf16.msra.mxu0 0
    %220 = vmatprep.subr.bf16.mxu0 0
    %221 = vmatpush1.bf16.msra.mxu0 0
    %222 = vmatprep.subr.bf16.mxu0 0
    %223 = vmatpush1.bf16.msra.mxu0 0
    %224 = vmatprep.subr.bf16.mxu0 0
    %225 = vmatpush1.bf16.msra.mxu0 0
    %226 = vmatprep.subr.bf16.mxu0 0
    %227 = vmatpush1.bf16.msra.mxu0 0
    %228 = vmatprep.subr.bf16.mxu0 0
    %229 = vmatpush1.bf16.msra.mxu0 0
    %230 = vmatprep.subr.bf16.mxu0 0
    %231 = vmatpush1.bf16.msra.mxu0 0
    %232 = vmatprep.subr.bf16.mxu0 0
    %233 = vmatpush1.bf16.msra.mxu0 0
    %234 = vmatprep.subr.bf16.mxu0 0
    %235 = vmatpush1.bf16.msra.mxu0 0
    %236 = vmatprep.subr.bf16.mxu0 0
    %237 = vmatpush1.bf16.msra.mxu0 0
    %238 = vmatprep.subr.bf16.mxu0 0
    %239 = vmatpush1.bf16.msra.mxu0 0
    %240 = vmatprep.subr.bf16.mxu0 0
    %241 = vmatpush1.bf16.msra.mxu0 0
    %242 = vmatprep.subr.bf16.mxu0 0
    %243 = vmatpush1.bf16.msra.mxu0 0
    %244 = vmatprep.subr.bf16.mxu0 0
    %245 = vmatpush1.bf16.msra.mxu0 0
    %246 = vmatprep.mubr.bf16.mxu0 0
    %247 = vmatmul.mubr.bf16.gmra.mrb[0].mxu0 %v212
    %v248 = vpop.f32.mrb[0].mxu0
    %v249 = vadd.f32 0.0, %v248
    %v250 = vpop.f32.mrb[0].mxu0
    %v251 = vpop.f32.mrb[0].mxu0
    %v252 = vpop.f32.mrb[0].mxu0
    %253 = vdwg.mxu0
    %v254 = vadd.f32 %v206, %v249
    %s255 = scalar_lea.vmem %s1, 28
    %v256 = vld [vmem:[%s255] sm:$0x3]
    %v257 = vpack.c.bf16 %v191, %v191
    %259 = vrot.lane.b32.xlu0 %v257, 32
    %v260 = vpop.permute.xlu0 %259
    %v262 = vsel %vm44, %v260, 0
    %264 = vmatprep.subr.bf16.mxu0 0
    %265 = vmatpush1.bf16.msra.mxu0 %v99
    %266 = vmatprep.subr.bf16.mxu0 0
    %267 = vmatpush1.bf16.msra.mxu0 %v100
    %268 = vmatprep.subr.bf16.mxu0 0
    %269 = vmatpush1.bf16.msra.mxu0 0
    %270 = vmatprep.subr.bf16.mxu0 0
    %271 = vmatpush1.bf16.msra.mxu0 0
    %272 = vmatprep.subr.bf16.mxu0 0
    %273 = vmatpush1.bf16.msra.mxu0 0
    %274 = vmatprep.subr.bf16.mxu0 0
    %275 = vmatpush1.bf16.msra.mxu0 0
    %276 = vmatprep.subr.bf16.mxu0 0
    %277 = vmatpush1.bf16.msra.mxu0 0
    %278 = vmatprep.subr.bf16.mxu0 0
    %279 = vmatpush1.bf16.msra.mxu0 0
    %280 = vmatprep.subr.bf16.mxu0 0
    %281 = vmatpush1.bf16.msra.mxu0 0
    %282 = vmatprep.subr.bf16.mxu0 0
    %283 = vmatpush1.bf16.msra.mxu0 0
    %284 = vmatprep.subr.bf16.mxu0 0
    %285 = vmatpush1.bf16.msra.mxu0 0
    %286 = vmatprep.subr.bf16.mxu0 0
    %287 = vmatpush1.bf16.msra.mxu0 0
    %288 = vmatprep.subr.bf16.mxu0 0
    %289 = vmatpush1.bf16.msra.mxu0 0
    %290 = vmatprep.subr.bf16.mxu0 0
    %291 = vmatpush1.bf16.msra.mxu0 0
    %292 = vmatprep.subr.bf16.mxu0 0
    %293 = vmatpush1.bf16.msra.mxu0 0
    %294 = vmatprep.subr.bf16.mxu0 0
    %295 = vmatpush1.bf16.msra.mxu0 0
    %296 = vmatprep.mubr.bf16.mxu0 0
    %297 = vmatmul.mubr.bf16.gmra.mrb[0].mxu0 %v262
    %v298 = vpop.f32.mrb[0].mxu0
    %v299 = vadd.f32 0.0, %v298
    %v300 = vpop.f32.mrb[0].mxu0
    %v301 = vpop.f32.mrb[0].mxu0
    %v302 = vpop.f32.mrb[0].mxu0
    %303 = vdwg.mxu0
    %v304 = vadd.f32 %v256, %v299
    %v305 = vxor.u32 %v254, 2147483648
    %v306 = vmul.f32 %v305, 1.442695
    %v307 = vpow.pop %v306
    %v308 = vadd.f32 %v307, 1.0
    %v309 = vrcp.pop %v308
    %v310 = vmul.f32 1.0, %v309
    %v311 = vtanh.pop %v254
    %v312 = vmul.f32 %v310, %v161
    %314 = vrot.lane.b32.xlu0 %v311, 64
    %v315 = vpop.permute.xlu0 %314
    %v317 = vmul.f32 %v310, %v315
    %319 = vrot.lane.b32.xlu0 %v317, 32
    %v320 = vpop.permute.xlu0 %319
    %v322 = vadd.f32 %v312, %v320
    %v323 = vtanh.pop %v322
    %325 = vrot.lane.b32.xlu0 %v323, 64
    %v326 = vpop.permute.xlu0 %325
    %v328 = vmul.f32 %v310, %v326
    %v329 = vxor.u32 %v304, 2147483648
    %v330 = vmul.f32 %v329, 1.442695
    %v331 = vpow.pop %v330
    %v332 = vadd.f32 %v331, 1.0
    %v333 = vrcp.pop %v332
    %v334 = vmul.f32 1.0, %v333
    %v335 = vtanh.pop %v304
    %v336 = vmul.f32 %v334, %v185
    %338 = vrot.lane.b32.xlu0 %v335, 64
    %v339 = vpop.permute.xlu0 %338
    %v341 = vmul.f32 %v334, %v339
    %343 = vrot.lane.b32.xlu0 %v341, 32
    %v344 = vpop.permute.xlu0 %343
    %v346 = vadd.f32 %v336, %v344
    %v347 = vtanh.pop %v346
    %349 = vrot.lane.b32.xlu0 %v347, 64
    %v350 = vpop.permute.xlu0 %349
    %v352 = vmul.f32 %v334, %v350
    %354 = vrot.lane.b32.xlu0 %v328, 32
    %v355 = vpop.permute.xlu0 %354
    %s357 = scalar_lea.vmem %s4, 2
    %358 = vst.msk [vmem:[%s357] sm:$0x3] %vm196, %v355
    %360 = vrot.lane.b32.xlu0 %v352, 64
    %v361 = vpop.permute.xlu0 %360
    %s363 = scalar_lea.vmem %s4, 28
    %364 = vst.msk [vmem:[%s363] sm:$0x3] %vm203, %v361
    %s365 = scalar_lea.vmem %s0, 4
    %v366 = vld [vmem:[%s365] sm:$0x3]
    %v367 = vpack.c.bf16 %v328, %v328
    %369 = vrot.lane.b32.xlu0 %v367, 32
    %v370 = vpop.permute.xlu0 %369
    %v372 = vsel %vm44, %v370, 0
    %374 = vmatprep.subr.bf16.mxu0 0
    %375 = vmatpush1.bf16.msra.mxu0 %v40
    %376 = vmatprep.subr.bf16.mxu0 0
    %377 = vmatpush1.bf16.msra.mxu0 %v41
    %378 = vmatprep.subr.bf16.mxu0 0
    %379 = vmatpush1.bf16.msra.mxu0 0
    %380 = vmatprep.subr.bf16.mxu0 0
    %381 = vmatpush1.bf16.msra.mxu0 0
    %382 = vmatprep.subr.bf16.mxu0 0
    %383 = vmatpush1.bf16.msra.mxu0 0
    %384 = vmatprep.subr.bf16.mxu0 0
    %385 = vmatpush1.bf16.msra.mxu0 0
    %386 = vmatprep.subr.bf16.mxu0 0
    %387 = vmatpush1.bf16.msra.mxu0 0
    %388 = vmatprep.subr.bf16.mxu0 0
    %389 = vmatpush1.bf16.msra.mxu0 0
    %390 = vmatprep.subr.bf16.mxu0 0
    %391 = vmatpush1.bf16.msra.mxu0 0
    %392 = vmatprep.subr.bf16.mxu0 0
    %393 = vmatpush1.bf16.msra.mxu0 0
    %394 = vmatprep.subr.bf16.mxu0 0
    %395 = vmatpush1.bf16.msra.mxu0 0
    %396 = vmatprep.subr.bf16.mxu0 0
    %397 = vmatpush1.bf16.msra.mxu0 0
    %398 = vmatprep.subr.bf16.mxu0 0
    %399 = vmatpush1.bf16.msra.mxu0 0
    %400 = vmatprep.subr.bf16.mxu0 0
    %401 = vmatpush1.bf16.msra.mxu0 0
    %402 = vmatprep.subr.bf16.mxu0 0
    %403 = vmatpush1.bf16.msra.mxu0 0
    %404 = vmatprep.subr.bf16.mxu0 0
    %405 = vmatpush1.bf16.msra.mxu0 0
    %406 = vmatprep.mubr.bf16.mxu0 0
    %407 = vmatmul.mubr.bf16.gmra.mrb[0].mxu0 %v372
    %v408 = vpop.f32.mrb[0].mxu0
    %v409 = vadd.f32 0.0, %v408
    %v410 = vpop.f32.mrb[0].mxu0
    %v411 = vpop.f32.mrb[0].mxu0
    %v412 = vpop.f32.mrb[0].mxu0
    %413 = vdwg.mxu0
    %v414 = vadd.f32 %v366, %v409
    %s415 = scalar_lea.vmem %s1, 26
    %v416 = vld [vmem:[%s415] sm:$0x3]
    %v417 = vpack.c.bf16 %v352, %v352
    %419 = vrot.lane.b32.xlu0 %v417, 32
    %v420 = vpop.permute.xlu0 %419
    %v422 = vsel %vm44, %v420, 0
    %424 = vmatprep.subr.bf16.mxu0 0
    %425 = vmatpush1.bf16.msra.mxu0 %v99
    %426 = vmatprep.subr.bf16.mxu0 0
    %427 = vmatpush1.bf16.msra.mxu0 %v100
    %428 = vmatprep.subr.bf16.mxu0 0
    %429 = vmatpush1.bf16.msra.mxu0 0
    %430 = vmatprep.subr.bf16.mxu0 0
    %431 = vmatpush1.bf16.msra.mxu0 0
    %432 = vmatprep.subr.bf16.mxu0 0
    %433 = vmatpush1.bf16.msra.mxu0 0
    %434 = vmatprep.subr.bf16.mxu0 0
    %435 = vmatpush1.bf16.msra.mxu0 0
    %436 = vmatprep.subr.bf16.mxu0 0
    %437 = vmatpush1.bf16.msra.mxu0 0
    %438 = vmatprep.subr.bf16.mxu0 0
    %439 = vmatpush1.bf16.msra.mxu0 0
    %440 = vmatprep.subr.bf16.mxu0 0
    %441 = vmatpush1.bf16.msra.mxu0 0
    %442 = vmatprep.subr.bf16.mxu0 0
    %443 = vmatpush1.bf16.msra.mxu0 0
    %444 = vmatprep.subr.bf16.mxu0 0
    %445 = vmatpush1.bf16.msra.mxu0 0
    %446 = vmatprep.subr.bf16.mxu0 0
    %447 = vmatpush1.bf16.msra.mxu0 0
    %448 = vmatprep.subr.bf16.mxu0 0
    %449 = vmatpush1.bf16.msra.mxu0 0
    %450 = vmatprep.subr.bf16.mxu0 0
    %451 = vmatpush1.bf16.msra.mxu0 0
    %452 = vmatprep.subr.bf16.mxu0 0
    %453 = vmatpush1.bf16.msra.mxu0 0
    %454 = vmatprep.subr.bf16.mxu0 0
    %455 = vmatpush1.bf16.msra.mxu0 0
    %456 = vmatprep.mubr.bf16.mxu0 0
    %457 = vmatmul.mubr.bf16.gmra.mrb[0].mxu0 %v422
    %v458 = vpop.f32.mrb[0].mxu0
    %v459 = vadd.f32 0.0, %v458
    %v460 = vpop.f32.mrb[0].mxu0
    %v461 = vpop.f32.mrb[0].mxu0
    %v462 = vpop.f32.mrb[0].mxu0
    %463 = vdwg.mxu0
    %v464 = vadd.f32 %v416, %v459
    %v465 = vxor.u32 %v414, 2147483648
    %v466 = vmul.f32 %v465, 1.442695
    %v467 = vpow.pop %v466
    %v468 = vadd.f32 %v467, 1.0
    %v469 = vrcp.pop %v468
    %v470 = vmul.f32 1.0, %v469
    %v471 = vtanh.pop %v414
    %v472 = vmul.f32 %v470, %v322
    %474 = vrot.lane.b32.xlu0 %v471, 64
    %v475 = vpop.permute.xlu0 %474
    %v477 = vmul.f32 %v470, %v475
    %479 = vrot.lane.b32.xlu0 %v477, 32
    %v480 = vpop.permute.xlu0 %479
    %v482 = vadd.f32 %v472, %v480
    %v483 = vtanh.pop %v482
    %485 = vrot.lane.b32.xlu0 %v483, 64
    %v486 = vpop.permute.xlu0 %485
    %v488 = vmul.f32 %v470, %v486
    %v489 = vxor.u32 %v464, 2147483648
    %v490 = vmul.f32 %v489, 1.442695
    %v491 = vpow.pop %v490
    %v492 = vadd.f32 %v491, 1.0
    %v493 = vrcp.pop %v492
    %v494 = vmul.f32 1.0, %v493
    %v495 = vtanh.pop %v464
    %v496 = vmul.f32 %v494, %v346
    %498 = vrot.lane.b32.xlu0 %v495, 64
    %v499 = vpop.permute.xlu0 %498
    %v501 = vmul.f32 %v494, %v499
    %503 = vrot.lane.b32.xlu0 %v501, 32
    %v504 = vpop.permute.xlu0 %503
    %v506 = vadd.f32 %v496, %v504
    %v507 = vtanh.pop %v506
    %509 = vrot.lane.b32.xlu0 %v507, 64
    %v510 = vpop.permute.xlu0 %509
    %v512 = vmul.f32 %v494, %v510
    %514 = vrot.lane.b32.xlu0 %v488, 32
    %v515 = vpop.permute.xlu0 %514
    %s517 = scalar_lea.vmem %s4, 4
    %518 = vst.msk [vmem:[%s517] sm:$0x3] %vm196, %v515
    %520 = vrot.lane.b32.xlu0 %v512, 64
    %v521 = vpop.permute.xlu0 %520
    %s523 = scalar_lea.vmem %s4, 26
    %524 = vst.msk [vmem:[%s523] sm:$0x3] %vm203, %v521
    %s525 = scalar_lea.vmem %s0, 6
    %v526 = vld [vmem:[%s525] sm:$0x3]
    %v527 = vpack.c.bf16 %v488, %v488
    %529 = vrot.lane.b32.xlu0 %v527, 32
    %v530 = vpop.permute.xlu0 %529
    %v532 = vsel %vm44, %v530, 0
    %534 = vmatprep.subr.bf16.mxu0 0
    %535 = vmatpush1.bf16.msra.mxu0 %v40
    %536 = vmatprep.subr.bf16.mxu0 0
    %537 = vmatpush1.bf16.msra.mxu0 %v41
    %538 = vmatprep.subr.bf16.mxu0 0
    %539 = vmatpush1.bf16.msra.mxu0 0
    %540 = vmatprep.subr.bf16.mxu0 0
    %541 = vmatpush1.bf16.msra.mxu0 0
    %542 = vmatprep.subr.bf16.mxu0 0
    %543 = vmatpush1.bf16.msra.mxu0 0
    %544 = vmatprep.subr.bf16.mxu0 0
    %545 = vmatpush1.bf16.msra.mxu0 0
    %546 = vmatprep.subr.bf16.mxu0 0
    %547 = vmatpush1.bf16.msra.mxu0 0
    %548 = vmatprep.subr.bf16.mxu0 0
    %549 = vmatpush1.bf16.msra.mxu0 0
    %550 = vmatprep.subr.bf16.mxu0 0
    %551 = vmatpush1.bf16.msra.mxu0 0
    %552 = vmatprep.subr.bf16.mxu0 0
    %553 = vmatpush1.bf16.msra.mxu0 0
    %554 = vmatprep.subr.bf16.mxu0 0
    %555 = vmatpush1.bf16.msra.mxu0 0
    %556 = vmatprep.subr.bf16.mxu0 0
    %557 = vmatpush1.bf16.msra.mxu0 0
    %558 = vmatprep.subr.bf16.mxu0 0
    %559 = vmatpush1.bf16.msra.mxu0 0
    %560 = vmatprep.subr.bf16.mxu0 0
    %561 = vmatpush1.bf16.msra.mxu0 0
    %562 = vmatprep.subr.bf16.mxu0 0
    %563 = vmatpush1.bf16.msra.mxu0 0
    %564 = vmatprep.subr.bf16.mxu0 0
    %565 = vmatpush1.bf16.msra.mxu0 0
    %566 = vmatprep.mubr.bf16.mxu0 0
    %567 = vmatmul.mubr.bf16.gmra.mrb[0].mxu0 %v532
    %v568 = vpop.f32.mrb[0].mxu0
    %v569 = vadd.f32 0.0, %v568
    %v570 = vpop.f32.mrb[0].mxu0
    %v571 = vpop.f32.mrb[0].mxu0
    %v572 = vpop.f32.mrb[0].mxu0
    %573 = vdwg.mxu0
    %v574 = vadd.f32 %v526, %v569
    %s575 = scalar_lea.vmem %s1, 24
    %v576 = vld [vmem:[%s575] sm:$0x3]
    %v577 = vpack.c.bf16 %v512, %v512
    %579 = vrot.lane.b32.xlu0 %v577, 32
    %v580 = vpop.permute.xlu0 %579
    %v582 = vsel %vm44, %v580, 0
    %584 = vmatprep.subr.bf16.mxu0 0
    %585 = vmatpush1.bf16.msra.mxu0 %v99
    %586 = vmatprep.subr.bf16.mxu0 0
    %587 = vmatpush1.bf16.msra.mxu0 %v100
    %588 = vmatprep.subr.bf16.mxu0 0
    %589 = vmatpush1.bf16.msra.mxu0 0
    %590 = vmatprep.subr.bf16.mxu0 0
    %591 = vmatpush1.bf16.msra.mxu0 0
    %592 = vmatprep.subr.bf16.mxu0 0
    %593 = vmatpush1.bf16.msra.mxu0 0
    %594 = vmatprep.subr.bf16.mxu0 0
    %595 = vmatpush1.bf16.msra.mxu0 0
    %596 = vmatprep.subr.bf16.mxu0 0
    %597 = vmatpush1.bf16.msra.mxu0 0
    %598 = vmatprep.subr.bf16.mxu0 0
    %599 = vmatpush1.bf16.msra.mxu0 0
    %600 = vmatprep.subr.bf16.mxu0 0
    %601 = vmatpush1.bf16.msra.mxu0 0
    %602 = vmatprep.subr.bf16.mxu0 0
    %603 = vmatpush1.bf16.msra.mxu0 0
    %604 = vmatprep.subr.bf16.mxu0 0
    %605 = vmatpush1.bf16.msra.mxu0 0
    %606 = vmatprep.subr.bf16.mxu0 0
    %607 = vmatpush1.bf16.msra.mxu0 0
    %608 = vmatprep.subr.bf16.mxu0 0
    %609 = vmatpush1.bf16.msra.mxu0 0
    %610 = vmatprep.subr.bf16.mxu0 0
    %611 = vmatpush1.bf16.msra.mxu0 0
    %612 = vmatprep.subr.bf16.mxu0 0
    %613 = vmatpush1.bf16.msra.mxu0 0
    %614 = vmatprep.subr.bf16.mxu0 0
    %615 = vmatpush1.bf16.msra.mxu0 0
    %616 = vmatprep.mubr.bf16.mxu0 0
    %617 = vmatmul.mubr.bf16.gmra.mrb[0].mxu0 %v582
    %v618 = vpop.f32.mrb[0].mxu0
    %v619 = vadd.f32 0.0, %v618
    %v620 = vpop.f32.mrb[0].mxu0
    %v621 = vpop.f32.mrb[0].mxu0
    %v622 = vpop.f32.mrb[0].mxu0
    %623 = vdwg.mxu0
    %v624 = vadd.f32 %v576, %v619
    %v625 = vxor.u32 %v574, 2147483648
    %v626 = vmul.f32 %v625, 1.442695
    %v627 = vpow.pop %v626
    %v628 = vadd.f32 %v627, 1.0
    %v629 = vrcp.pop %v628
    %v630 = vmul.f32 1.0, %v629
    %v631 = vtanh.pop %v574
    %v632 = vmul.f32 %v630, %v482
    %634 = vrot.lane.b32.xlu0 %v631, 64
    %v635 = vpop.permute.xlu0 %634
    %v637 = vmul.f32 %v630, %v635
    %639 = vrot.lane.b32.xlu0 %v637, 32
    %v640 = vpop.permute.xlu0 %639
    %v642 = vadd.f32 %v632, %v640
    %v643 = vtanh.pop %v642
    %645 = vrot.lane.b32.xlu0 %v643, 64
    %v646 = vpop.permute.xlu0 %645
    %v648 = vmul.f32 %v630, %v646
    %v649 = vxor.u32 %v624, 2147483648
    %v650 = vmul.f32 %v649, 1.442695
    %v651 = vpow.pop %v650
    %v652 = vadd.f32 %v651, 1.0
    %v653 = vrcp.pop %v652
    %v654 = vmul.f32 1.0, %v653
    %v655 = vtanh.pop %v624
    %v656 = vmul.f32 %v654, %v506
    %658 = vrot.lane.b32.xlu0 %v655, 64
    %v659 = vpop.permute.xlu0 %658
    %v661 = vmul.f32 %v654, %v659
    %663 = vrot.lane.b32.xlu0 %v661, 32
    %v664 = vpop.permute.xlu0 %663
    %v666 = vadd.f32 %v656, %v664
    %v667 = vtanh.pop %v666
    %669 = vrot.lane.b32.xlu0 %v667, 64
    %v670 = vpop.permute.xlu0 %669
    %v672 = vmul.f32 %v654, %v670
    %674 = vrot.lane.b32.xlu0 %v648, 32
    %v675 = vpop.permute.xlu0 %674
    %s677 = scalar_lea.vmem %s4, 6
    %678 = vst.msk [vmem:[%s677] sm:$0x3] %vm196, %v675
    %680 = vrot.lane.b32.xlu0 %v672, 64
    %v681 = vpop.permute.xlu0 %680
    %s683 = scalar_lea.vmem %s4, 24
    %684 = vst.msk [vmem:[%s683] sm:$0x3] %vm203, %v681
    %s685 = scalar_lea.vmem %s0, 8
    %v686 = vld [vmem:[%s685] sm:$0x3]
    %v687 = vpack.c.bf16 %v648, %v648
    %689 = vrot.lane.b32.xlu0 %v687, 32
    %v690 = vpop.permute.xlu0 %689
    %v692 = vsel %vm44, %v690, 0
    %694 = vmatprep.subr.bf16.mxu0 0
    %695 = vmatpush1.bf16.msra.mxu0 %v40
    %696 = vmatprep.subr.bf16.mxu0 0
    %697 = vmatpush1.bf16.msra.mxu0 %v41
    %698 = vmatprep.subr.bf16.mxu0 0
    %699 = vmatpush1.bf16.msra.mxu0 0
    %700 = vmatprep.subr.bf16.mxu0 0
    %701 = vmatpush1.bf16.msra.mxu0 0
    %702 = vmatprep.subr.bf16.mxu0 0
    %703 = vmatpush1.bf16.msra.mxu0 0
    %704 = vmatprep.subr.bf16.mxu0 0
    %705 = vmatpush1.bf16.msra.mxu0 0
    %706 = vmatprep.subr.bf16.mxu0 0
    %707 = vmatpush1.bf16.msra.mxu0 0
    %708 = vmatprep.subr.bf16.mxu0 0
    %709 = vmatpush1.bf16.msra.mxu0 0
    %710 = vmatprep.subr.bf16.mxu0 0
    %711 = vmatpush1.bf16.msra.mxu0 0
    %712 = vmatprep.subr.bf16.mxu0 0
    %713 = vmatpush1.bf16.msra.mxu0 0
    %714 = vmatprep.subr.bf16.mxu0 0
    %715 = vmatpush1.bf16.msra.mxu0 0
    %716 = vmatprep.subr.bf16.mxu0 0
    %717 = vmatpush1.bf16.msra.mxu0 0
    %718 = vmatprep.subr.bf16.mxu0 0
    %719 = vmatpush1.bf16.msra.mxu0 0
    %720 = vmatprep.subr.bf16.mxu0 0
    %721 = vmatpush1.bf16.msra.mxu0 0
    %722 = vmatprep.subr.bf16.mxu0 0
    %723 = vmatpush1.bf16.msra.mxu0 0
    %724 = vmatprep.subr.bf16.mxu0 0
    %725 = vmatpush1.bf16.msra.mxu0 0
    %726 = vmatprep.mubr.bf16.mxu0 0
    %727 = vmatmul.mubr.bf16.gmra.mrb[0].mxu0 %v692
    %v728 = vpop.f32.mrb[0].mxu0
    %v729 = vadd.f32 0.0, %v728
    %v730 = vpop.f32.mrb[0].mxu0
    %v731 = vpop.f32.mrb[0].mxu0
    %v732 = vpop.f32.mrb[0].mxu0
    %733 = vdwg.mxu0
    %v734 = vadd.f32 %v686, %v729
    %s735 = scalar_lea.vmem %s1, 22
    %v736 = vld [vmem:[%s735] sm:$0x3]
    %v737 = vpack.c.bf16 %v672, %v672
    %739 = vrot.lane.b32.xlu0 %v737, 32
    %v740 = vpop.permute.xlu0 %739
    %v742 = vsel %vm44, %v740, 0
    %744 = vmatprep.subr.bf16.mxu0 0
    %745 = vmatpush1.bf16.msra.mxu0 %v99
    %746 = vmatprep.subr.bf16.mxu0 0
    %747 = vmatpush1.bf16.msra.mxu0 %v100
    %748 = vmatprep.subr.bf16.mxu0 0
    %749 = vmatpush1.bf16.msra.mxu0 0
    %750 = vmatprep.subr.bf16.mxu0 0
    %751 = vmatpush1.bf16.msra.mxu0 0
    %752 = vmatprep.subr.bf16.mxu0 0
    %753 = vmatpush1.bf16.msra.mxu0 0
    %754 = vmatprep.subr.bf16.mxu0 0
    %755 = vmatpush1.bf16.msra.mxu0 0
    %756 = vmatprep.subr.bf16.mxu0 0
    %757 = vmatpush1.bf16.msra.mxu0 0
    %758 = vmatprep.subr.bf16.mxu0 0
    %759 = vmatpush1.bf16.msra.mxu0 0
    %760 = vmatprep.subr.bf16.mxu0 0
    %761 = vmatpush1.bf16.msra.mxu0 0
    %762 = vmatprep.subr.bf16.mxu0 0
    %763 = vmatpush1.bf16.msra.mxu0 0
    %764 = vmatprep.subr.bf16.mxu0 0
    %765 = vmatpush1.bf16.msra.mxu0 0
    %766 = vmatprep.subr.bf16.mxu0 0
    %767 = vmatpush1.bf16.msra.mxu0 0
    %768 = vmatprep.subr.bf16.mxu0 0
    %769 = vmatpush1.bf16.msra.mxu0 0
    %770 = vmatprep.subr.bf16.mxu0 0
    %771 = vmatpush1.bf16.msra.mxu0 0
    %772 = vmatprep.subr.bf16.mxu0 0
    %773 = vmatpush1.bf16.msra.mxu0 0
    %774 = vmatprep.subr.bf16.mxu0 0
    %775 = vmatpush1.bf16.msra.mxu0 0
    %776 = vmatprep.mubr.bf16.mxu0 0
    %777 = vmatmul.mubr.bf16.gmra.mrb[0].mxu0 %v742
    %v778 = vpop.f32.mrb[0].mxu0
    %v779 = vadd.f32 0.0, %v778
    %v780 = vpop.f32.mrb[0].mxu0
    %v781 = vpop.f32.mrb[0].mxu0
    %v782 = vpop.f32.mrb[0].mxu0
    %783 = vdwg.mxu0
    %v784 = vadd.f32 %v736, %v779
    %v785 = vxor.u32 %v734, 2147483648
    %v786 = vmul.f32 %v785, 1.442695
    %v787 = vpow.pop %v786
    %v788 = vadd.f32 %v787, 1.0
    %v789 = vrcp.pop %v788
    %v790 = vmul.f32 1.0, %v789
    %v791 = vtanh.pop %v734
    %v792 = vmul.f32 %v790, %v642
    %794 = vrot.lane.b32.xlu0 %v791, 64
    %v795 = vpop.permute.xlu0 %794
    %v797 = vmul.f32 %v790, %v795
    %799 = vrot.lane.b32.xlu0 %v797, 32
    %v800 = vpop.permute.xlu0 %799
    %v802 = vadd.f32 %v792, %v800
    %v803 = vtanh.pop %v802
    %805 = vrot.lane.b32.xlu0 %v803, 64
    %v806 = vpop.permute.xlu0 %805
    %v808 = vmul.f32 %v790, %v806
    %v809 = vxor.u32 %v784, 2147483648
    %v810 = vmul.f32 %v809, 1.442695
    %v811 = vpow.pop %v810
    %v812 = vadd.f32 %v811, 1.0
    %v813 = vrcp.pop %v812
    %v814 = vmul.f32 1.0, %v813
    %v815 = vtanh.pop %v784
    %v816 = vmul.f32 %v814, %v666
    %818 = vrot.lane.b32.xlu0 %v815, 64
    %v819 = vpop.permute.xlu0 %818
    %v821 = vmul.f32 %v814, %v819
    %823 = vrot.lane.b32.xlu0 %v821, 32
    %v824 = vpop.permute.xlu0 %823
    %v826 = vadd.f32 %v816, %v824
    %v827 = vtanh.pop %v826
    %829 = vrot.lane.b32.xlu0 %v827, 64
    %v830 = vpop.permute.xlu0 %829
    %v832 = vmul.f32 %v814, %v830
    %834 = vrot.lane.b32.xlu0 %v808, 32
    %v835 = vpop.permute.xlu0 %834
    %s837 = scalar_lea.vmem %s4, 8
    %838 = vst.msk [vmem:[%s837] sm:$0x3] %vm196, %v835
    %840 = vrot.lane.b32.xlu0 %v832, 64
    %v841 = vpop.permute.xlu0 %840
    %s843 = scalar_lea.vmem %s4, 22
    %844 = vst.msk [vmem:[%s843] sm:$0x3] %vm203, %v841
    %s845 = scalar_lea.vmem %s0, 10
    %v846 = vld [vmem:[%s845] sm:$0x3]
    %v847 = vpack.c.bf16 %v808, %v808
    %849 = vrot.lane.b32.xlu0 %v847, 32
    %v850 = vpop.permute.xlu0 %849
    %v852 = vsel %vm44, %v850, 0
    %854 = vmatprep.subr.bf16.mxu0 0
    %855 = vmatpush1.bf16.msra.mxu0 %v40
    %856 = vmatprep.subr.bf16.mxu0 0
    %857 = vmatpush1.bf16.msra.mxu0 %v41
    %858 = vmatprep.subr.bf16.mxu0 0
    %859 = vmatpush1.bf16.msra.mxu0 0
    %860 = vmatprep.subr.bf16.mxu0 0
    %861 = vmatpush1.bf16.msra.mxu0 0
    %862 = vmatprep.subr.bf16.mxu0 0
    %863 = vmatpush1.bf16.msra.mxu0 0
    %864 = vmatprep.subr.bf16.mxu0 0
    %865 = vmatpush1.bf16.msra.mxu0 0
    %866 = vmatprep.subr.bf16.mxu0 0
    %867 = vmatpush1.bf16.msra.mxu0 0
    %868 = vmatprep.subr.bf16.mxu0 0
    %869 = vmatpush1.bf16.msra.mxu0 0
    %870 = vmatprep.subr.bf16.mxu0 0
    %871 = vmatpush1.bf16.msra.mxu0 0
    %872 = vmatprep.subr.bf16.mxu0 0
    %873 = vmatpush1.bf16.msra.mxu0 0
    %874 = vmatprep.subr.bf16.mxu0 0
    %875 = vmatpush1.bf16.msra.mxu0 0
    %876 = vmatprep.subr.bf16.mxu0 0
    %877 = vmatpush1.bf16.msra.mxu0 0
    %878 = vmatprep.subr.bf16.mxu0 0
    %879 = vmatpush1.bf16.msra.mxu0 0
    %880 = vmatprep.subr.bf16.mxu0 0
    %881 = vmatpush1.bf16.msra.mxu0 0
    %882 = vmatprep.subr.bf16.mxu0 0
    %883 = vmatpush1.bf16.msra.mxu0 0
    %884 = vmatprep.subr.bf16.mxu0 0
    %885 = vmatpush1.bf16.msra.mxu0 0
    %886 = vmatprep.mubr.bf16.mxu0 0
    %887 = vmatmul.mubr.bf16.gmra.mrb[0].mxu0 %v852
    %v888 = vpop.f32.mrb[0].mxu0
    %v889 = vadd.f32 0.0, %v888
    %v890 = vpop.f32.mrb[0].mxu0
    %v891 = vpop.f32.mrb[0].mxu0
    %v892 = vpop.f32.mrb[0].mxu0
    %893 = vdwg.mxu0
    %v894 = vadd.f32 %v846, %v889
    %s895 = scalar_lea.vmem %s1, 20
    %v896 = vld [vmem:[%s895] sm:$0x3]
    %v897 = vpack.c.bf16 %v832, %v832
    %899 = vrot.lane.b32.xlu0 %v897, 32
    %v900 = vpop.permute.xlu0 %899
    %v902 = vsel %vm44, %v900, 0
    %904 = vmatprep.subr.bf16.mxu0 0
    %905 = vmatpush1.bf16.msra.mxu0 %v99
    %906 = vmatprep.subr.bf16.mxu0 0
    %907 = vmatpush1.bf16.msra.mxu0 %v100
    %908 = vmatprep.subr.bf16.mxu0 0
    %909 = vmatpush1.bf16.msra.mxu0 0
    %910 = vmatprep.subr.bf16.mxu0 0
    %911 = vmatpush1.bf16.msra.mxu0 0
    %912 = vmatprep.subr.bf16.mxu0 0
    %913 = vmatpush1.bf16.msra.mxu0 0
    %914 = vmatprep.subr.bf16.mxu0 0
    %915 = vmatpush1.bf16.msra.mxu0 0
    %916 = vmatprep.subr.bf16.mxu0 0
    %917 = vmatpush1.bf16.msra.mxu0 0
    %918 = vmatprep.subr.bf16.mxu0 0
    %919 = vmatpush1.bf16.msra.mxu0 0
    %920 = vmatprep.subr.bf16.mxu0 0
    %921 = vmatpush1.bf16.msra.mxu0 0
    %922 = vmatprep.subr.bf16.mxu0 0
    %923 = vmatpush1.bf16.msra.mxu0 0
    %924 = vmatprep.subr.bf16.mxu0 0
    %925 = vmatpush1.bf16.msra.mxu0 0
    %926 = vmatprep.subr.bf16.mxu0 0
    %927 = vmatpush1.bf16.msra.mxu0 0
    %928 = vmatprep.subr.bf16.mxu0 0
    %929 = vmatpush1.bf16.msra.mxu0 0
    %930 = vmatprep.subr.bf16.mxu0 0
    %931 = vmatpush1.bf16.msra.mxu0 0
    %932 = vmatprep.subr.bf16.mxu0 0
    %933 = vmatpush1.bf16.msra.mxu0 0
    %934 = vmatprep.subr.bf16.mxu0 0
    %935 = vmatpush1.bf16.msra.mxu0 0
    %936 = vmatprep.mubr.bf16.mxu0 0
    %937 = vmatmul.mubr.bf16.gmra.mrb[0].mxu0 %v902
    %v938 = vpop.f32.mrb[0].mxu0
    %v939 = vadd.f32 0.0, %v938
    %v940 = vpop.f32.mrb[0].mxu0
    %v941 = vpop.f32.mrb[0].mxu0
    %v942 = vpop.f32.mrb[0].mxu0
    %943 = vdwg.mxu0
    %v944 = vadd.f32 %v896, %v939
    %v945 = vxor.u32 %v894, 2147483648
    %v946 = vmul.f32 %v945, 1.442695
    %v947 = vpow.pop %v946
    %v948 = vadd.f32 %v947, 1.0
    %v949 = vrcp.pop %v948
    %v950 = vmul.f32 1.0, %v949
    %v951 = vtanh.pop %v894
    %v952 = vmul.f32 %v950, %v802
    %954 = vrot.lane.b32.xlu0 %v951, 64
    %v955 = vpop.permute.xlu0 %954
    %v957 = vmul.f32 %v950, %v955
    %959 = vrot.lane.b32.xlu0 %v957, 32
    %v960 = vpop.permute.xlu0 %959
    %v962 = vadd.f32 %v952, %v960
    %v963 = vtanh.pop %v962
    %965 = vrot.lane.b32.xlu0 %v963, 64
    %v966 = vpop.permute.xlu0 %965
    %v968 = vmul.f32 %v950, %v966
    %v969 = vxor.u32 %v944, 2147483648
    %v970 = vmul.f32 %v969, 1.442695
    %v971 = vpow.pop %v970
    %v972 = vadd.f32 %v971, 1.0
    %v973 = vrcp.pop %v972
    %v974 = vmul.f32 1.0, %v973
    %v975 = vtanh.pop %v944
    %v976 = vmul.f32 %v974, %v826
    %978 = vrot.lane.b32.xlu0 %v975, 64
    %v979 = vpop.permute.xlu0 %978
    %v981 = vmul.f32 %v974, %v979
    %983 = vrot.lane.b32.xlu0 %v981, 32
    %v984 = vpop.permute.xlu0 %983
    %v986 = vadd.f32 %v976, %v984
    %v987 = vtanh.pop %v986
    %989 = vrot.lane.b32.xlu0 %v987, 64
    %v990 = vpop.permute.xlu0 %989
    %v992 = vmul.f32 %v974, %v990
    %994 = vrot.lane.b32.xlu0 %v968, 32
    %v995 = vpop.permute.xlu0 %994
    %s997 = scalar_lea.vmem %s4, 10
    %998 = vst.msk [vmem:[%s997] sm:$0x3] %vm196, %v995
    %1000 = vrot.lane.b32.xlu0 %v992, 64
    %v1001 = vpop.permute.xlu0 %1000
    %s1003 = scalar_lea.vmem %s4, 20
    %1004 = vst.msk [vmem:[%s1003] sm:$0x3] %vm203, %v1001
    %s1005 = scalar_lea.vmem %s0, 12
    %v1006 = vld [vmem:[%s1005] sm:$0x3]
    %v1007 = vpack.c.bf16 %v968, %v968
    %1009 = vrot.lane.b32.xlu0 %v1007, 32
    %v1010 = vpop.permute.xlu0 %1009
    %v1012 = vsel %vm44, %v1010, 0
    %1014 = vmatprep.subr.bf16.mxu0 0
    %1015 = vmatpush1.bf16.msra.mxu0 %v40
    %1016 = vmatprep.subr.bf16.mxu0 0
    %1017 = vmatpush1.bf16.msra.mxu0 %v41
    %1018 = vmatprep.subr.bf16.mxu0 0
    %1019 = vmatpush1.bf16.msra.mxu0 0
    %1020 = vmatprep.subr.bf16.mxu0 0
    %1021 = vmatpush1.bf16.msra.mxu0 0
    %1022 = vmatprep.subr.bf16.mxu0 0
    %1023 = vmatpush1.bf16.msra.mxu0 0
    %1024 = vmatprep.subr.bf16.mxu0 0
    %1025 = vmatpush1.bf16.msra.mxu0 0
    %1026 = vmatprep.subr.bf16.mxu0 0
    %1027 = vmatpush1.bf16.msra.mxu0 0
    %1028 = vmatprep.subr.bf16.mxu0 0
    %1029 = vmatpush1.bf16.msra.mxu0 0
    %1030 = vmatprep.subr.bf16.mxu0 0
    %1031 = vmatpush1.bf16.msra.mxu0 0
    %1032 = vmatprep.subr.bf16.mxu0 0
    %1033 = vmatpush1.bf16.msra.mxu0 0
    %1034 = vmatprep.subr.bf16.mxu0 0
    %1035 = vmatpush1.bf16.msra.mxu0 0
    %1036 = vmatprep.subr.bf16.mxu0 0
    %1037 = vmatpush1.bf16.msra.mxu0 0
    %1038 = vmatprep.subr.bf16.mxu0 0
    %1039 = vmatpush1.bf16.msra.mxu0 0
    %1040 = vmatprep.subr.bf16.mxu0 0
    %1041 = vmatpush1.bf16.msra.mxu0 0
    %1042 = vmatprep.subr.bf16.mxu0 0
    %1043 = vmatpush1.bf16.msra.mxu0 0
    %1044 = vmatprep.subr.bf16.mxu0 0
    %1045 = vmatpush1.bf16.msra.mxu0 0
    %1046 = vmatprep.mubr.bf16.mxu0 0
    %1047 = vmatmul.mubr.bf16.gmra.mrb[0].mxu0 %v1012
    %v1048 = vpop.f32.mrb[0].mxu0
    %v1049 = vadd.f32 0.0, %v1048
    %v1050 = vpop.f32.mrb[0].mxu0
    %v1051 = vpop.f32.mrb[0].mxu0
    %v1052 = vpop.f32.mrb[0].mxu0
    %1053 = vdwg.mxu0
    %v1054 = vadd.f32 %v1006, %v1049
    %s1055 = scalar_lea.vmem %s1, 18
    %v1056 = vld [vmem:[%s1055] sm:$0x3]
    %v1057 = vpack.c.bf16 %v992, %v992
    %1059 = vrot.lane.b32.xlu0 %v1057, 32
    %v1060 = vpop.permute.xlu0 %1059
    %v1062 = vsel %vm44, %v1060, 0
    %1064 = vmatprep.subr.bf16.mxu0 0
    %1065 = vmatpush1.bf16.msra.mxu0 %v99
    %1066 = vmatprep.subr.bf16.mxu0 0
    %1067 = vmatpush1.bf16.msra.mxu0 %v100
    %1068 = vmatprep.subr.bf16.mxu0 0
    %1069 = vmatpush1.bf16.msra.mxu0 0
    %1070 = vmatprep.subr.bf16.mxu0 0
    %1071 = vmatpush1.bf16.msra.mxu0 0
    %1072 = vmatprep.subr.bf16.mxu0 0
    %1073 = vmatpush1.bf16.msra.mxu0 0
    %1074 = vmatprep.subr.bf16.mxu0 0
    %1075 = vmatpush1.bf16.msra.mxu0 0
    %1076 = vmatprep.subr.bf16.mxu0 0
    %1077 = vmatpush1.bf16.msra.mxu0 0
    %1078 = vmatprep.subr.bf16.mxu0 0
    %1079 = vmatpush1.bf16.msra.mxu0 0
    %1080 = vmatprep.subr.bf16.mxu0 0
    %1081 = vmatpush1.bf16.msra.mxu0 0
    %1082 = vmatprep.subr.bf16.mxu0 0
    %1083 = vmatpush1.bf16.msra.mxu0 0
    %1084 = vmatprep.subr.bf16.mxu0 0
    %1085 = vmatpush1.bf16.msra.mxu0 0
    %1086 = vmatprep.subr.bf16.mxu0 0
    %1087 = vmatpush1.bf16.msra.mxu0 0
    %1088 = vmatprep.subr.bf16.mxu0 0
    %1089 = vmatpush1.bf16.msra.mxu0 0
    %1090 = vmatprep.subr.bf16.mxu0 0
    %1091 = vmatpush1.bf16.msra.mxu0 0
    %1092 = vmatprep.subr.bf16.mxu0 0
    %1093 = vmatpush1.bf16.msra.mxu0 0
    %1094 = vmatprep.subr.bf16.mxu0 0
    %1095 = vmatpush1.bf16.msra.mxu0 0
    %1096 = vmatprep.mubr.bf16.mxu0 0
    %1097 = vmatmul.mubr.bf16.gmra.mrb[0].mxu0 %v1062
    %v1098 = vpop.f32.mrb[0].mxu0
    %v1099 = vadd.f32 0.0, %v1098
    %v1100 = vpop.f32.mrb[0].mxu0
    %v1101 = vpop.f32.mrb[0].mxu0
    %v1102 = vpop.f32.mrb[0].mxu0
    %1103 = vdwg.mxu0
    %v1104 = vadd.f32 %v1056, %v1099
    %v1105 = vxor.u32 %v1054, 2147483648
    %v1106 = vmul.f32 %v1105, 1.442695
    %v1107 = vpow.pop %v1106
    %v1108 = vadd.f32 %v1107, 1.0
    %v1109 = vrcp.pop %v1108
    %v1110 = vmul.f32 1.0, %v1109
    %v1111 = vtanh.pop %v1054
    %v1112 = vmul.f32 %v1110, %v962
    %1114 = vrot.lane.b32.xlu0 %v1111, 64
    %v1115 = vpop.permute.xlu0 %1114
    %v1117 = vmul.f32 %v1110, %v1115
    %1119 = vrot.lane.b32.xlu0 %v1117, 32
    %v1120 = vpop.permute.xlu0 %1119
    %v1122 = vadd.f32 %v1112, %v1120
    %v1123 = vtanh.pop %v1122
    %1125 = vrot.lane.b32.xlu0 %v1123, 64
    %v1126 = vpop.permute.xlu0 %1125
    %v1128 = vmul.f32 %v1110, %v1126
    %v1129 = vxor.u32 %v1104, 2147483648
    %v1130 = vmul.f32 %v1129, 1.442695
    %v1131 = vpow.pop %v1130
    %v1132 = vadd.f32 %v1131, 1.0
    %v1133 = vrcp.pop %v1132
    %v1134 = vmul.f32 1.0, %v1133
    %v1135 = vtanh.pop %v1104
    %v1136 = vmul.f32 %v1134, %v986
    %1138 = vrot.lane.b32.xlu0 %v1135, 64
    %v1139 = vpop.permute.xlu0 %1138
    %v1141 = vmul.f32 %v1134, %v1139
    %1143 = vrot.lane.b32.xlu0 %v1141, 32
    %v1144 = vpop.permute.xlu0 %1143
    %v1146 = vadd.f32 %v1136, %v1144
    %v1147 = vtanh.pop %v1146
    %1149 = vrot.lane.b32.xlu0 %v1147, 64
    %v1150 = vpop.permute.xlu0 %1149
    %v1152 = vmul.f32 %v1134, %v1150
    %1154 = vrot.lane.b32.xlu0 %v1128, 32
    %v1155 = vpop.permute.xlu0 %1154
    %s1157 = scalar_lea.vmem %s4, 12
    %1158 = vst.msk [vmem:[%s1157] sm:$0x3] %vm196, %v1155
    %1160 = vrot.lane.b32.xlu0 %v1152, 64
    %v1161 = vpop.permute.xlu0 %1160
    %s1163 = scalar_lea.vmem %s4, 18
    %1164 = vst.msk [vmem:[%s1163] sm:$0x3] %vm203, %v1161
    %s1165 = scalar_lea.vmem %s0, 14
    %v1166 = vld [vmem:[%s1165] sm:$0x3]
    %v1167 = vpack.c.bf16 %v1128, %v1128
    %1169 = vrot.lane.b32.xlu0 %v1167, 32
    %v1170 = vpop.permute.xlu0 %1169
    %v1172 = vsel %vm44, %v1170, 0
    %1174 = vmatprep.subr.bf16.mxu0 0
    %1175 = vmatpush1.bf16.msra.mxu0 %v40
    %1176 = vmatprep.subr.bf16.mxu0 0
    %1177 = vmatpush1.bf16.msra.mxu0 %v41
    %1178 = vmatprep.subr.bf16.mxu0 0
    %1179 = vmatpush1.bf16.msra.mxu0 0
    %1180 = vmatprep.subr.bf16.mxu0 0
    %1181 = vmatpush1.bf16.msra.mxu0 0
    %1182 = vmatprep.subr.bf16.mxu0 0
    %1183 = vmatpush1.bf16.msra.mxu0 0
    %1184 = vmatprep.subr.bf16.mxu0 0
    %1185 = vmatpush1.bf16.msra.mxu0 0
    %1186 = vmatprep.subr.bf16.mxu0 0
    %1187 = vmatpush1.bf16.msra.mxu0 0
    %1188 = vmatprep.subr.bf16.mxu0 0
    %1189 = vmatpush1.bf16.msra.mxu0 0
    %1190 = vmatprep.subr.bf16.mxu0 0
    %1191 = vmatpush1.bf16.msra.mxu0 0
    %1192 = vmatprep.subr.bf16.mxu0 0
    %1193 = vmatpush1.bf16.msra.mxu0 0
    %1194 = vmatprep.subr.bf16.mxu0 0
    %1195 = vmatpush1.bf16.msra.mxu0 0
    %1196 = vmatprep.subr.bf16.mxu0 0
    %1197 = vmatpush1.bf16.msra.mxu0 0
    %1198 = vmatprep.subr.bf16.mxu0 0
    %1199 = vmatpush1.bf16.msra.mxu0 0
    %1200 = vmatprep.subr.bf16.mxu0 0
    %1201 = vmatpush1.bf16.msra.mxu0 0
    %1202 = vmatprep.subr.bf16.mxu0 0
    %1203 = vmatpush1.bf16.msra.mxu0 0
    %1204 = vmatprep.subr.bf16.mxu0 0
    %1205 = vmatpush1.bf16.msra.mxu0 0
    %1206 = vmatprep.mubr.bf16.mxu0 0
    %1207 = vmatmul.mubr.bf16.gmra.mrb[0].mxu0 %v1172
    %v1208 = vpop.f32.mrb[0].mxu0
    %v1209 = vadd.f32 0.0, %v1208
    %v1210 = vpop.f32.mrb[0].mxu0
    %v1211 = vpop.f32.mrb[0].mxu0
    %v1212 = vpop.f32.mrb[0].mxu0
    %1213 = vdwg.mxu0
    %v1214 = vadd.f32 %v1166, %v1209
    %s1215 = scalar_lea.vmem %s1, 16
    %v1216 = vld [vmem:[%s1215] sm:$0x3]
    %v1217 = vpack.c.bf16 %v1152, %v1152
    %1219 = vrot.lane.b32.xlu0 %v1217, 32
    %v1220 = vpop.permute.xlu0 %1219
    %v1222 = vsel %vm44, %v1220, 0
    %1224 = vmatprep.subr.bf16.mxu0 0
    %1225 = vmatpush1.bf16.msra.mxu0 %v99
    %1226 = vmatprep.subr.bf16.mxu0 0
    %1227 = vmatpush1.bf16.msra.mxu0 %v100
    %1228 = vmatprep.subr.bf16.mxu0 0
    %1229 = vmatpush1.bf16.msra.mxu0 0
    %1230 = vmatprep.subr.bf16.mxu0 0
    %1231 = vmatpush1.bf16.msra.mxu0 0
    %1232 = vmatprep.subr.bf16.mxu0 0
    %1233 = vmatpush1.bf16.msra.mxu0 0
    %1234 = vmatprep.subr.bf16.mxu0 0
    %1235 = vmatpush1.bf16.msra.mxu0 0
    %1236 = vmatprep.subr.bf16.mxu0 0
    %1237 = vmatpush1.bf16.msra.mxu0 0
    %1238 = vmatprep.subr.bf16.mxu0 0
    %1239 = vmatpush1.bf16.msra.mxu0 0
    %1240 = vmatprep.subr.bf16.mxu0 0
    %1241 = vmatpush1.bf16.msra.mxu0 0
    %1242 = vmatprep.subr.bf16.mxu0 0
    %1243 = vmatpush1.bf16.msra.mxu0 0
    %1244 = vmatprep.subr.bf16.mxu0 0
    %1245 = vmatpush1.bf16.msra.mxu0 0
    %1246 = vmatprep.subr.bf16.mxu0 0
    %1247 = vmatpush1.bf16.msra.mxu0 0
    %1248 = vmatprep.subr.bf16.mxu0 0
    %1249 = vmatpush1.bf16.msra.mxu0 0
    %1250 = vmatprep.subr.bf16.mxu0 0
    %1251 = vmatpush1.bf16.msra.mxu0 0
    %1252 = vmatprep.subr.bf16.mxu0 0
    %1253 = vmatpush1.bf16.msra.mxu0 0
    %1254 = vmatprep.subr.bf16.mxu0 0
    %1255 = vmatpush1.bf16.msra.mxu0 0
    %1256 = vmatprep.mubr.bf16.mxu0 0
    %1257 = vmatmul.mubr.bf16.gmra.mrb[0].mxu0 %v1222
    %v1258 = vpop.f32.mrb[0].mxu0
    %v1259 = vadd.f32 0.0, %v1258
    %v1260 = vpop.f32.mrb[0].mxu0
    %v1261 = vpop.f32.mrb[0].mxu0
    %v1262 = vpop.f32.mrb[0].mxu0
    %1263 = vdwg.mxu0
    %v1264 = vadd.f32 %v1216, %v1259
    %v1265 = vxor.u32 %v1214, 2147483648
    %v1266 = vmul.f32 %v1265, 1.442695
    %v1267 = vpow.pop %v1266
    %v1268 = vadd.f32 %v1267, 1.0
    %v1269 = vrcp.pop %v1268
    %v1270 = vmul.f32 1.0, %v1269
    %v1271 = vtanh.pop %v1214
    %v1272 = vmul.f32 %v1270, %v1122
    %1274 = vrot.lane.b32.xlu0 %v1271, 64
    %v1275 = vpop.permute.xlu0 %1274
    %v1277 = vmul.f32 %v1270, %v1275
    %1279 = vrot.lane.b32.xlu0 %v1277, 32
    %v1280 = vpop.permute.xlu0 %1279
    %v1282 = vadd.f32 %v1272, %v1280
    %v1283 = vtanh.pop %v1282
    %1285 = vrot.lane.b32.xlu0 %v1283, 64
    %v1286 = vpop.permute.xlu0 %1285
    %v1288 = vmul.f32 %v1270, %v1286
    %v1289 = vxor.u32 %v1264, 2147483648
    %v1290 = vmul.f32 %v1289, 1.442695
    %v1291 = vpow.pop %v1290
    %v1292 = vadd.f32 %v1291, 1.0
    %v1293 = vrcp.pop %v1292
    %v1294 = vmul.f32 1.0, %v1293
    %v1295 = vtanh.pop %v1264
    %v1296 = vmul.f32 %v1294, %v1146
    %1298 = vrot.lane.b32.xlu0 %v1295, 64
    %v1299 = vpop.permute.xlu0 %1298
    %v1301 = vmul.f32 %v1294, %v1299
    %1303 = vrot.lane.b32.xlu0 %v1301, 32
    %v1304 = vpop.permute.xlu0 %1303
    %v1306 = vadd.f32 %v1296, %v1304
    %v1307 = vtanh.pop %v1306
    %1309 = vrot.lane.b32.xlu0 %v1307, 64
    %v1310 = vpop.permute.xlu0 %1309
    %v1312 = vmul.f32 %v1294, %v1310
    %1314 = vrot.lane.b32.xlu0 %v1288, 32
    %v1315 = vpop.permute.xlu0 %1314
    %s1317 = scalar_lea.vmem %s4, 14
    %1318 = vst.msk [vmem:[%s1317] sm:$0x3] %vm196, %v1315
    %1320 = vrot.lane.b32.xlu0 %v1312, 64
    %v1321 = vpop.permute.xlu0 %1320
    %s1323 = scalar_lea.vmem %s4, 16
    %1324 = vst.msk [vmem:[%s1323] sm:$0x3] %vm203, %v1321
    %s1325 = scalar_lea.vmem %s0, 16
    %v1326 = vld [vmem:[%s1325] sm:$0x3]
    %v1327 = vpack.c.bf16 %v1288, %v1288
    %1329 = vrot.lane.b32.xlu0 %v1327, 32
    %v1330 = vpop.permute.xlu0 %1329
    %v1332 = vsel %vm44, %v1330, 0
    %1334 = vmatprep.subr.bf16.mxu0 0
    %1335 = vmatpush1.bf16.msra.mxu0 %v40
    %1336 = vmatprep.subr.bf16.mxu0 0
    %1337 = vmatpush1.bf16.msra.mxu0 %v41
    %1338 = vmatprep.subr.bf16.mxu0 0
    %1339 = vmatpush1.bf16.msra.mxu0 0
    %1340 = vmatprep.subr.bf16.mxu0 0
    %1341 = vmatpush1.bf16.msra.mxu0 0
    %1342 = vmatprep.subr.bf16.mxu0 0
    %1343 = vmatpush1.bf16.msra.mxu0 0
    %1344 = vmatprep.subr.bf16.mxu0 0
    %1345 = vmatpush1.bf16.msra.mxu0 0
    %1346 = vmatprep.subr.bf16.mxu0 0
    %1347 = vmatpush1.bf16.msra.mxu0 0
    %1348 = vmatprep.subr.bf16.mxu0 0
    %1349 = vmatpush1.bf16.msra.mxu0 0
    %1350 = vmatprep.subr.bf16.mxu0 0
    %1351 = vmatpush1.bf16.msra.mxu0 0
    %1352 = vmatprep.subr.bf16.mxu0 0
    %1353 = vmatpush1.bf16.msra.mxu0 0
    %1354 = vmatprep.subr.bf16.mxu0 0
    %1355 = vmatpush1.bf16.msra.mxu0 0
    %1356 = vmatprep.subr.bf16.mxu0 0
    %1357 = vmatpush1.bf16.msra.mxu0 0
    %1358 = vmatprep.subr.bf16.mxu0 0
    %1359 = vmatpush1.bf16.msra.mxu0 0
    %1360 = vmatprep.subr.bf16.mxu0 0
    %1361 = vmatpush1.bf16.msra.mxu0 0
    %1362 = vmatprep.subr.bf16.mxu0 0
    %1363 = vmatpush1.bf16.msra.mxu0 0
    %1364 = vmatprep.subr.bf16.mxu0 0
    %1365 = vmatpush1.bf16.msra.mxu0 0
    %1366 = vmatprep.mubr.bf16.mxu0 0
    %1367 = vmatmul.mubr.bf16.gmra.mrb[0].mxu0 %v1332
    %v1368 = vpop.f32.mrb[0].mxu0
    %v1369 = vadd.f32 0.0, %v1368
    %v1370 = vpop.f32.mrb[0].mxu0
    %v1371 = vpop.f32.mrb[0].mxu0
    %v1372 = vpop.f32.mrb[0].mxu0
    %1373 = vdwg.mxu0
    %v1374 = vadd.f32 %v1326, %v1369
    %s1375 = scalar_lea.vmem %s1, 14
    %v1376 = vld [vmem:[%s1375] sm:$0x3]
    %v1377 = vpack.c.bf16 %v1312, %v1312
    %1379 = vrot.lane.b32.xlu0 %v1377, 32
    %v1380 = vpop.permute.xlu0 %1379
    %v1382 = vsel %vm44, %v1380, 0
    %1384 = vmatprep.subr.bf16.mxu0 0
    %1385 = vmatpush1.bf16.msra.mxu0 %v99
    %1386 = vmatprep.subr.bf16.mxu0 0
    %1387 = vmatpush1.bf16.msra.mxu0 %v100
    %1388 = vmatprep.subr.bf16.mxu0 0
    %1389 = vmatpush1.bf16.msra.mxu0 0
    %1390 = vmatprep.subr.bf16.mxu0 0
    %1391 = vmatpush1.bf16.msra.mxu0 0
    %1392 = vmatprep.subr.bf16.mxu0 0
    %1393 = vmatpush1.bf16.msra.mxu0 0
    %1394 = vmatprep.subr.bf16.mxu0 0
    %1395 = vmatpush1.bf16.msra.mxu0 0
    %1396 = vmatprep.subr.bf16.mxu0 0
    %1397 = vmatpush1.bf16.msra.mxu0 0
    %1398 = vmatprep.subr.bf16.mxu0 0
    %1399 = vmatpush1.bf16.msra.mxu0 0
    %1400 = vmatprep.subr.bf16.mxu0 0
    %1401 = vmatpush1.bf16.msra.mxu0 0
    %1402 = vmatprep.subr.bf16.mxu0 0
    %1403 = vmatpush1.bf16.msra.mxu0 0
    %1404 = vmatprep.subr.bf16.mxu0 0
    %1405 = vmatpush1.bf16.msra.mxu0 0
    %1406 = vmatprep.subr.bf16.mxu0 0
    %1407 = vmatpush1.bf16.msra.mxu0 0
    %1408 = vmatprep.subr.bf16.mxu0 0
    %1409 = vmatpush1.bf16.msra.mxu0 0
    %1410 = vmatprep.subr.bf16.mxu0 0
    %1411 = vmatpush1.bf16.msra.mxu0 0
    %1412 = vmatprep.subr.bf16.mxu0 0
    %1413 = vmatpush1.bf16.msra.mxu0 0
    %1414 = vmatprep.subr.bf16.mxu0 0
    %1415 = vmatpush1.bf16.msra.mxu0 0
    %1416 = vmatprep.mubr.bf16.mxu0 0
    %1417 = vmatmul.mubr.bf16.gmra.mrb[0].mxu0 %v1382
    %v1418 = vpop.f32.mrb[0].mxu0
    %v1419 = vadd.f32 0.0, %v1418
    %v1420 = vpop.f32.mrb[0].mxu0
    %v1421 = vpop.f32.mrb[0].mxu0
    %v1422 = vpop.f32.mrb[0].mxu0
    %1423 = vdwg.mxu0
    %v1424 = vadd.f32 %v1376, %v1419
    %v1425 = vxor.u32 %v1374, 2147483648
    %v1426 = vmul.f32 %v1425, 1.442695
    %v1427 = vpow.pop %v1426
    %v1428 = vadd.f32 %v1427, 1.0
    %v1429 = vrcp.pop %v1428
    %v1430 = vmul.f32 1.0, %v1429
    %v1431 = vtanh.pop %v1374
    %v1432 = vmul.f32 %v1430, %v1282
    %1434 = vrot.lane.b32.xlu0 %v1431, 64
    %v1435 = vpop.permute.xlu0 %1434
    %v1437 = vmul.f32 %v1430, %v1435
    %1439 = vrot.lane.b32.xlu0 %v1437, 32
    %v1440 = vpop.permute.xlu0 %1439
    %v1442 = vadd.f32 %v1432, %v1440
    %v1443 = vtanh.pop %v1442
    %1445 = vrot.lane.b32.xlu0 %v1443, 64
    %v1446 = vpop.permute.xlu0 %1445
    %v1448 = vmul.f32 %v1430, %v1446
    %v1449 = vxor.u32 %v1424, 2147483648
    %v1450 = vmul.f32 %v1449, 1.442695
    %v1451 = vpow.pop %v1450
    %v1452 = vadd.f32 %v1451, 1.0
    %v1453 = vrcp.pop %v1452
    %v1454 = vmul.f32 1.0, %v1453
    %v1455 = vtanh.pop %v1424
    %v1456 = vmul.f32 %v1454, %v1306
    %1458 = vrot.lane.b32.xlu0 %v1455, 64
    %v1459 = vpop.permute.xlu0 %1458
    %v1461 = vmul.f32 %v1454, %v1459
    %1463 = vrot.lane.b32.xlu0 %v1461, 32
    %v1464 = vpop.permute.xlu0 %1463
    %v1466 = vadd.f32 %v1456, %v1464
    %v1467 = vtanh.pop %v1466
    %1469 = vrot.lane.b32.xlu0 %v1467, 64
    %v1470 = vpop.permute.xlu0 %1469
    %v1472 = vmul.f32 %v1454, %v1470
    %1474 = vrot.lane.b32.xlu0 %v1448, 32
    %v1475 = vpop.permute.xlu0 %1474
    %1477 = vst.msk [vmem:[%s1323] sm:$0x3] %vm196, %v1475
    %1479 = vrot.lane.b32.xlu0 %v1472, 64
    %v1480 = vpop.permute.xlu0 %1479
    %1482 = vst.msk [vmem:[%s1317] sm:$0x3] %vm203, %v1480
    %s1483 = scalar_lea.vmem %s0, 18
    %v1484 = vld [vmem:[%s1483] sm:$0x3]
    %v1485 = vpack.c.bf16 %v1448, %v1448
    %1487 = vrot.lane.b32.xlu0 %v1485, 32
    %v1488 = vpop.permute.xlu0 %1487
    %v1490 = vsel %vm44, %v1488, 0
    %1492 = vmatprep.subr.bf16.mxu0 0
    %1493 = vmatpush1.bf16.msra.mxu0 %v40
    %1494 = vmatprep.subr.bf16.mxu0 0
    %1495 = vmatpush1.bf16.msra.mxu0 %v41
    %1496 = vmatprep.subr.bf16.mxu0 0
    %1497 = vmatpush1.bf16.msra.mxu0 0
    %1498 = vmatprep.subr.bf16.mxu0 0
    %1499 = vmatpush1.bf16.msra.mxu0 0
    %1500 = vmatprep.subr.bf16.mxu0 0
    %1501 = vmatpush1.bf16.msra.mxu0 0
    %1502 = vmatprep.subr.bf16.mxu0 0
    %1503 = vmatpush1.bf16.msra.mxu0 0
    %1504 = vmatprep.subr.bf16.mxu0 0
    %1505 = vmatpush1.bf16.msra.mxu0 0
    %1506 = vmatprep.subr.bf16.mxu0 0
    %1507 = vmatpush1.bf16.msra.mxu0 0
    %1508 = vmatprep.subr.bf16.mxu0 0
    %1509 = vmatpush1.bf16.msra.mxu0 0
    %1510 = vmatprep.subr.bf16.mxu0 0
    %1511 = vmatpush1.bf16.msra.mxu0 0
    %1512 = vmatprep.subr.bf16.mxu0 0
    %1513 = vmatpush1.bf16.msra.mxu0 0
    %1514 = vmatprep.subr.bf16.mxu0 0
    %1515 = vmatpush1.bf16.msra.mxu0 0
    %1516 = vmatprep.subr.bf16.mxu0 0
    %1517 = vmatpush1.bf16.msra.mxu0 0
    %1518 = vmatprep.subr.bf16.mxu0 0
    %1519 = vmatpush1.bf16.msra.mxu0 0
    %1520 = vmatprep.subr.bf16.mxu0 0
    %1521 = vmatpush1.bf16.msra.mxu0 0
    %1522 = vmatprep.subr.bf16.mxu0 0
    %1523 = vmatpush1.bf16.msra.mxu0 0
    %1524 = vmatprep.mubr.bf16.mxu0 0
    %1525 = vmatmul.mubr.bf16.gmra.mrb[0].mxu0 %v1490
    %v1526 = vpop.f32.mrb[0].mxu0
    %v1527 = vadd.f32 0.0, %v1526
    %v1528 = vpop.f32.mrb[0].mxu0
    %v1529 = vpop.f32.mrb[0].mxu0
    %v1530 = vpop.f32.mrb[0].mxu0
    %1531 = vdwg.mxu0
    %v1532 = vadd.f32 %v1484, %v1527
    %s1533 = scalar_lea.vmem %s1, 12
    %v1534 = vld [vmem:[%s1533] sm:$0x3]
    %v1535 = vpack.c.bf16 %v1472, %v1472
    %1537 = vrot.lane.b32.xlu0 %v1535, 32
    %v1538 = vpop.permute.xlu0 %1537
    %v1540 = vsel %vm44, %v1538, 0
    %1542 = vmatprep.subr.bf16.mxu0 0
    %1543 = vmatpush1.bf16.msra.mxu0 %v99
    %1544 = vmatprep.subr.bf16.mxu0 0
    %1545 = vmatpush1.bf16.msra.mxu0 %v100
    %1546 = vmatprep.subr.bf16.mxu0 0
    %1547 = vmatpush1.bf16.msra.mxu0 0
    %1548 = vmatprep.subr.bf16.mxu0 0
    %1549 = vmatpush1.bf16.msra.mxu0 0
    %1550 = vmatprep.subr.bf16.mxu0 0
    %1551 = vmatpush1.bf16.msra.mxu0 0
    %1552 = vmatprep.subr.bf16.mxu0 0
    %1553 = vmatpush1.bf16.msra.mxu0 0
    %1554 = vmatprep.subr.bf16.mxu0 0
    %1555 = vmatpush1.bf16.msra.mxu0 0
    %1556 = vmatprep.subr.bf16.mxu0 0
    %1557 = vmatpush1.bf16.msra.mxu0 0
    %1558 = vmatprep.subr.bf16.mxu0 0
    %1559 = vmatpush1.bf16.msra.mxu0 0
    %1560 = vmatprep.subr.bf16.mxu0 0
    %1561 = vmatpush1.bf16.msra.mxu0 0
    %1562 = vmatprep.subr.bf16.mxu0 0
    %1563 = vmatpush1.bf16.msra.mxu0 0
    %1564 = vmatprep.subr.bf16.mxu0 0
    %1565 = vmatpush1.bf16.msra.mxu0 0
    %1566 = vmatprep.subr.bf16.mxu0 0
    %1567 = vmatpush1.bf16.msra.mxu0 0
    %1568 = vmatprep.subr.bf16.mxu0 0
    %1569 = vmatpush1.bf16.msra.mxu0 0
    %1570 = vmatprep.subr.bf16.mxu0 0
    %1571 = vmatpush1.bf16.msra.mxu0 0
    %1572 = vmatprep.subr.bf16.mxu0 0
    %1573 = vmatpush1.bf16.msra.mxu0 0
    %1574 = vmatprep.mubr.bf16.mxu0 0
    %1575 = vmatmul.mubr.bf16.gmra.mrb[0].mxu0 %v1540
    %v1576 = vpop.f32.mrb[0].mxu0
    %v1577 = vadd.f32 0.0, %v1576
    %v1578 = vpop.f32.mrb[0].mxu0
    %v1579 = vpop.f32.mrb[0].mxu0
    %v1580 = vpop.f32.mrb[0].mxu0
    %1581 = vdwg.mxu0
    %v1582 = vadd.f32 %v1534, %v1577
    %v1583 = vxor.u32 %v1532, 2147483648
    %v1584 = vmul.f32 %v1583, 1.442695
    %v1585 = vpow.pop %v1584
    %v1586 = vadd.f32 %v1585, 1.0
    %v1587 = vrcp.pop %v1586
    %v1588 = vmul.f32 1.0, %v1587
    %v1589 = vtanh.pop %v1532
    %v1590 = vmul.f32 %v1588, %v1442
    %1592 = vrot.lane.b32.xlu0 %v1589, 64
    %v1593 = vpop.permute.xlu0 %1592
    %v1595 = vmul.f32 %v1588, %v1593
    %1597 = vrot.lane.b32.xlu0 %v1595, 32
    %v1598 = vpop.permute.xlu0 %1597
    %v1600 = vadd.f32 %v1590, %v1598
    %v1601 = vtanh.pop %v1600
    %1603 = vrot.lane.b32.xlu0 %v1601, 64
    %v1604 = vpop.permute.xlu0 %1603
    %v1606 = vmul.f32 %v1588, %v1604
    %v1607 = vxor.u32 %v1582, 2147483648
    %v1608 = vmul.f32 %v1607, 1.442695
    %v1609 = vpow.pop %v1608
    %v1610 = vadd.f32 %v1609, 1.0
    %v1611 = vrcp.pop %v1610
    %v1612 = vmul.f32 1.0, %v1611
    %v1613 = vtanh.pop %v1582
    %v1614 = vmul.f32 %v1612, %v1466
    %1616 = vrot.lane.b32.xlu0 %v1613, 64
    %v1617 = vpop.permute.xlu0 %1616
    %v1619 = vmul.f32 %v1612, %v1617
    %1621 = vrot.lane.b32.xlu0 %v1619, 32
    %v1622 = vpop.permute.xlu0 %1621
    %v1624 = vadd.f32 %v1614, %v1622
    %v1625 = vtanh.pop %v1624
    %1627 = vrot.lane.b32.xlu0 %v1625, 64
    %v1628 = vpop.permute.xlu0 %1627
    %v1630 = vmul.f32 %v1612, %v1628
    %1632 = vrot.lane.b32.xlu0 %v1606, 32
    %v1633 = vpop.permute.xlu0 %1632
    %1635 = vst.msk [vmem:[%s1163] sm:$0x3] %vm196, %v1633
    %1637 = vrot.lane.b32.xlu0 %v1630, 64
    %v1638 = vpop.permute.xlu0 %1637
    %1640 = vst.msk [vmem:[%s1157] sm:$0x3] %vm203, %v1638
    %s1641 = scalar_lea.vmem %s0, 20
    %v1642 = vld [vmem:[%s1641] sm:$0x3]
    %v1643 = vpack.c.bf16 %v1606, %v1606
    %1645 = vrot.lane.b32.xlu0 %v1643, 32
    %v1646 = vpop.permute.xlu0 %1645
    %v1648 = vsel %vm44, %v1646, 0
    %1650 = vmatprep.subr.bf16.mxu0 0
    %1651 = vmatpush1.bf16.msra.mxu0 %v40
    %1652 = vmatprep.subr.bf16.mxu0 0
    %1653 = vmatpush1.bf16.msra.mxu0 %v41
    %1654 = vmatprep.subr.bf16.mxu0 0
    %1655 = vmatpush1.bf16.msra.mxu0 0
    %1656 = vmatprep.subr.bf16.mxu0 0
    %1657 = vmatpush1.bf16.msra.mxu0 0
    %1658 = vmatprep.subr.bf16.mxu0 0
    %1659 = vmatpush1.bf16.msra.mxu0 0
    %1660 = vmatprep.subr.bf16.mxu0 0
    %1661 = vmatpush1.bf16.msra.mxu0 0
    %1662 = vmatprep.subr.bf16.mxu0 0
    %1663 = vmatpush1.bf16.msra.mxu0 0
    %1664 = vmatprep.subr.bf16.mxu0 0
    %1665 = vmatpush1.bf16.msra.mxu0 0
    %1666 = vmatprep.subr.bf16.mxu0 0
    %1667 = vmatpush1.bf16.msra.mxu0 0
    %1668 = vmatprep.subr.bf16.mxu0 0
    %1669 = vmatpush1.bf16.msra.mxu0 0
    %1670 = vmatprep.subr.bf16.mxu0 0
    %1671 = vmatpush1.bf16.msra.mxu0 0
    %1672 = vmatprep.subr.bf16.mxu0 0
    %1673 = vmatpush1.bf16.msra.mxu0 0
    %1674 = vmatprep.subr.bf16.mxu0 0
    %1675 = vmatpush1.bf16.msra.mxu0 0
    %1676 = vmatprep.subr.bf16.mxu0 0
    %1677 = vmatpush1.bf16.msra.mxu0 0
    %1678 = vmatprep.subr.bf16.mxu0 0
    %1679 = vmatpush1.bf16.msra.mxu0 0
    %1680 = vmatprep.subr.bf16.mxu0 0
    %1681 = vmatpush1.bf16.msra.mxu0 0
    %1682 = vmatprep.mubr.bf16.mxu0 0
    %1683 = vmatmul.mubr.bf16.gmra.mrb[0].mxu0 %v1648
    %v1684 = vpop.f32.mrb[0].mxu0
    %v1685 = vadd.f32 0.0, %v1684
    %v1686 = vpop.f32.mrb[0].mxu0
    %v1687 = vpop.f32.mrb[0].mxu0
    %v1688 = vpop.f32.mrb[0].mxu0
    %1689 = vdwg.mxu0
    %v1690 = vadd.f32 %v1642, %v1685
    %s1691 = scalar_lea.vmem %s1, 10
    %v1692 = vld [vmem:[%s1691] sm:$0x3]
    %v1693 = vpack.c.bf16 %v1630, %v1630
    %1695 = vrot.lane.b32.xlu0 %v1693, 32
    %v1696 = vpop.permute.xlu0 %1695
    %v1698 = vsel %vm44, %v1696, 0
    %1700 = vmatprep.subr.bf16.mxu0 0
    %1701 = vmatpush1.bf16.msra.mxu0 %v99
    %1702 = vmatprep.subr.bf16.mxu0 0
    %1703 = vmatpush1.bf16.msra.mxu0 %v100
    %1704 = vmatprep.subr.bf16.mxu0 0
    %1705 = vmatpush1.bf16.msra.mxu0 0
    %1706 = vmatprep.subr.bf16.mxu0 0
    %1707 = vmatpush1.bf16.msra.mxu0 0
    %1708 = vmatprep.subr.bf16.mxu0 0
    %1709 = vmatpush1.bf16.msra.mxu0 0
    %1710 = vmatprep.subr.bf16.mxu0 0
    %1711 = vmatpush1.bf16.msra.mxu0 0
    %1712 = vmatprep.subr.bf16.mxu0 0
    %1713 = vmatpush1.bf16.msra.mxu0 0
    %1714 = vmatprep.subr.bf16.mxu0 0
    %1715 = vmatpush1.bf16.msra.mxu0 0
    %1716 = vmatprep.subr.bf16.mxu0 0
    %1717 = vmatpush1.bf16.msra.mxu0 0
    %1718 = vmatprep.subr.bf16.mxu0 0
    %1719 = vmatpush1.bf16.msra.mxu0 0
    %1720 = vmatprep.subr.bf16.mxu0 0
    %1721 = vmatpush1.bf16.msra.mxu0 0
    %1722 = vmatprep.subr.bf16.mxu0 0
    %1723 = vmatpush1.bf16.msra.mxu0 0
    %1724 = vmatprep.subr.bf16.mxu0 0
    %1725 = vmatpush1.bf16.msra.mxu0 0
    %1726 = vmatprep.subr.bf16.mxu0 0
    %1727 = vmatpush1.bf16.msra.mxu0 0
    %1728 = vmatprep.subr.bf16.mxu0 0
    %1729 = vmatpush1.bf16.msra.mxu0 0
    %1730 = vmatprep.subr.bf16.mxu0 0
    %1731 = vmatpush1.bf16.msra.mxu0 0
    %1732 = vmatprep.mubr.bf16.mxu0 0
    %1733 = vmatmul.mubr.bf16.gmra.mrb[0].mxu0 %v1698
    %v1734 = vpop.f32.mrb[0].mxu0
    %v1735 = vadd.f32 0.0, %v1734
    %v1736 = vpop.f32.mrb[0].mxu0
    %v1737 = vpop.f32.mrb[0].mxu0
    %v1738 = vpop.f32.mrb[0].mxu0
    %1739 = vdwg.mxu0
    %v1740 = vadd.f32 %v1692, %v1735
    %v1741 = vxor.u32 %v1690, 2147483648
    %v1742 = vmul.f32 %v1741, 1.442695
    %v1743 = vpow.pop %v1742
    %v1744 = vadd.f32 %v1743, 1.0
    %v1745 = vrcp.pop %v1744
    %v1746 = vmul.f32 1.0, %v1745
    %v1747 = vtanh.pop %v1690
    %v1748 = vmul.f32 %v1746, %v1600
    %1750 = vrot.lane.b32.xlu0 %v1747, 64
    %v1751 = vpop.permute.xlu0 %1750
    %v1753 = vmul.f32 %v1746, %v1751
    %1755 = vrot.lane.b32.xlu0 %v1753, 32
    %v1756 = vpop.permute.xlu0 %1755
    %v1758 = vadd.f32 %v1748, %v1756
    %v1759 = vtanh.pop %v1758
    %1761 = vrot.lane.b32.xlu0 %v1759, 64
    %v1762 = vpop.permute.xlu0 %1761
    %v1764 = vmul.f32 %v1746, %v1762
    %v1765 = vxor.u32 %v1740, 2147483648
    %v1766 = vmul.f32 %v1765, 1.442695
    %v1767 = vpow.pop %v1766
    %v1768 = vadd.f32 %v1767, 1.0
    %v1769 = vrcp.pop %v1768
    %v1770 = vmul.f32 1.0, %v1769
    %v1771 = vtanh.pop %v1740
    %v1772 = vmul.f32 %v1770, %v1624
    %1774 = vrot.lane.b32.xlu0 %v1771, 64
    %v1775 = vpop.permute.xlu0 %1774
    %v1777 = vmul.f32 %v1770, %v1775
    %1779 = vrot.lane.b32.xlu0 %v1777, 32
    %v1780 = vpop.permute.xlu0 %1779
    %v1782 = vadd.f32 %v1772, %v1780
    %v1783 = vtanh.pop %v1782
    %1785 = vrot.lane.b32.xlu0 %v1783, 64
    %v1786 = vpop.permute.xlu0 %1785
    %v1788 = vmul.f32 %v1770, %v1786
    %1790 = vrot.lane.b32.xlu0 %v1764, 32
    %v1791 = vpop.permute.xlu0 %1790
    %1793 = vst.msk [vmem:[%s1003] sm:$0x3] %vm196, %v1791
    %1795 = vrot.lane.b32.xlu0 %v1788, 64
    %v1796 = vpop.permute.xlu0 %1795
    %1798 = vst.msk [vmem:[%s997] sm:$0x3] %vm203, %v1796
    %s1799 = scalar_lea.vmem %s0, 22
    %v1800 = vld [vmem:[%s1799] sm:$0x3]
    %v1801 = vpack.c.bf16 %v1764, %v1764
    %1803 = vrot.lane.b32.xlu0 %v1801, 32
    %v1804 = vpop.permute.xlu0 %1803
    %v1806 = vsel %vm44, %v1804, 0
    %1808 = vmatprep.subr.bf16.mxu0 0
    %1809 = vmatpush1.bf16.msra.mxu0 %v40
    %1810 = vmatprep.subr.bf16.mxu0 0
    %1811 = vmatpush1.bf16.msra.mxu0 %v41
    %1812 = vmatprep.subr.bf16.mxu0 0
    %1813 = vmatpush1.bf16.msra.mxu0 0
    %1814 = vmatprep.subr.bf16.mxu0 0
    %1815 = vmatpush1.bf16.msra.mxu0 0
    %1816 = vmatprep.subr.bf16.mxu0 0
    %1817 = vmatpush1.bf16.msra.mxu0 0
    %1818 = vmatprep.subr.bf16.mxu0 0
    %1819 = vmatpush1.bf16.msra.mxu0 0
    %1820 = vmatprep.subr.bf16.mxu0 0
    %1821 = vmatpush1.bf16.msra.mxu0 0
    %1822 = vmatprep.subr.bf16.mxu0 0
    %1823 = vmatpush1.bf16.msra.mxu0 0
    %1824 = vmatprep.subr.bf16.mxu0 0
    %1825 = vmatpush1.bf16.msra.mxu0 0
    %1826 = vmatprep.subr.bf16.mxu0 0
    %1827 = vmatpush1.bf16.msra.mxu0 0
    %1828 = vmatprep.subr.bf16.mxu0 0
    %1829 = vmatpush1.bf16.msra.mxu0 0
    %1830 = vmatprep.subr.bf16.mxu0 0
    %1831 = vmatpush1.bf16.msra.mxu0 0
    %1832 = vmatprep.subr.bf16.mxu0 0
    %1833 = vmatpush1.bf16.msra.mxu0 0
    %1834 = vmatprep.subr.bf16.mxu0 0
    %1835 = vmatpush1.bf16.msra.mxu0 0
    %1836 = vmatprep.subr.bf16.mxu0 0
    %1837 = vmatpush1.bf16.msra.mxu0 0
    %1838 = vmatprep.subr.bf16.mxu0 0
    %1839 = vmatpush1.bf16.msra.mxu0 0
    %1840 = vmatprep.mubr.bf16.mxu0 0
    %1841 = vmatmul.mubr.bf16.gmra.mrb[0].mxu0 %v1806
    %v1842 = vpop.f32.mrb[0].mxu0
    %v1843 = vadd.f32 0.0, %v1842
    %v1844 = vpop.f32.mrb[0].mxu0
    %v1845 = vpop.f32.mrb[0].mxu0
    %v1846 = vpop.f32.mrb[0].mxu0
    %1847 = vdwg.mxu0
    %v1848 = vadd.f32 %v1800, %v1843
    %s1849 = scalar_lea.vmem %s1, 8
    %v1850 = vld [vmem:[%s1849] sm:$0x3]
    %v1851 = vpack.c.bf16 %v1788, %v1788
    %1853 = vrot.lane.b32.xlu0 %v1851, 32
    %v1854 = vpop.permute.xlu0 %1853
    %v1856 = vsel %vm44, %v1854, 0
    %1858 = vmatprep.subr.bf16.mxu0 0
    %1859 = vmatpush1.bf16.msra.mxu0 %v99
    %1860 = vmatprep.subr.bf16.mxu0 0
    %1861 = vmatpush1.bf16.msra.mxu0 %v100
    %1862 = vmatprep.subr.bf16.mxu0 0
    %1863 = vmatpush1.bf16.msra.mxu0 0
    %1864 = vmatprep.subr.bf16.mxu0 0
    %1865 = vmatpush1.bf16.msra.mxu0 0
    %1866 = vmatprep.subr.bf16.mxu0 0
    %1867 = vmatpush1.bf16.msra.mxu0 0
    %1868 = vmatprep.subr.bf16.mxu0 0
    %1869 = vmatpush1.bf16.msra.mxu0 0
    %1870 = vmatprep.subr.bf16.mxu0 0
    %1871 = vmatpush1.bf16.msra.mxu0 0
    %1872 = vmatprep.subr.bf16.mxu0 0
    %1873 = vmatpush1.bf16.msra.mxu0 0
    %1874 = vmatprep.subr.bf16.mxu0 0
    %1875 = vmatpush1.bf16.msra.mxu0 0
    %1876 = vmatprep.subr.bf16.mxu0 0
    %1877 = vmatpush1.bf16.msra.mxu0 0
    %1878 = vmatprep.subr.bf16.mxu0 0
    %1879 = vmatpush1.bf16.msra.mxu0 0
    %1880 = vmatprep.subr.bf16.mxu0 0
    %1881 = vmatpush1.bf16.msra.mxu0 0
    %1882 = vmatprep.subr.bf16.mxu0 0
    %1883 = vmatpush1.bf16.msra.mxu0 0
    %1884 = vmatprep.subr.bf16.mxu0 0
    %1885 = vmatpush1.bf16.msra.mxu0 0
    %1886 = vmatprep.subr.bf16.mxu0 0
    %1887 = vmatpush1.bf16.msra.mxu0 0
    %1888 = vmatprep.subr.bf16.mxu0 0
    %1889 = vmatpush1.bf16.msra.mxu0 0
    %1890 = vmatprep.mubr.bf16.mxu0 0
    %1891 = vmatmul.mubr.bf16.gmra.mrb[0].mxu0 %v1856
    %v1892 = vpop.f32.mrb[0].mxu0
    %v1893 = vadd.f32 0.0, %v1892
    %v1894 = vpop.f32.mrb[0].mxu0
    %v1895 = vpop.f32.mrb[0].mxu0
    %v1896 = vpop.f32.mrb[0].mxu0
    %1897 = vdwg.mxu0
    %v1898 = vadd.f32 %v1850, %v1893
    %v1899 = vxor.u32 %v1848, 2147483648
    %v1900 = vmul.f32 %v1899, 1.442695
    %v1901 = vpow.pop %v1900
    %v1902 = vadd.f32 %v1901, 1.0
    %v1903 = vrcp.pop %v1902
    %v1904 = vmul.f32 1.0, %v1903
    %v1905 = vtanh.pop %v1848
    %v1906 = vmul.f32 %v1904, %v1758
    %1908 = vrot.lane.b32.xlu0 %v1905, 64
    %v1909 = vpop.permute.xlu0 %1908
    %v1911 = vmul.f32 %v1904, %v1909
    %1913 = vrot.lane.b32.xlu0 %v1911, 32
    %v1914 = vpop.permute.xlu0 %1913
    %v1916 = vadd.f32 %v1906, %v1914
    %v1917 = vtanh.pop %v1916
    %1919 = vrot.lane.b32.xlu0 %v1917, 64
    %v1920 = vpop.permute.xlu0 %1919
    %v1922 = vmul.f32 %v1904, %v1920
    %v1923 = vxor.u32 %v1898, 2147483648
    %v1924 = vmul.f32 %v1923, 1.442695
    %v1925 = vpow.pop %v1924
    %v1926 = vadd.f32 %v1925, 1.0
    %v1927 = vrcp.pop %v1926
    %v1928 = vmul.f32 1.0, %v1927
    %v1929 = vtanh.pop %v1898
    %v1930 = vmul.f32 %v1928, %v1782
    %1932 = vrot.lane.b32.xlu0 %v1929, 64
    %v1933 = vpop.permute.xlu0 %1932
    %v1935 = vmul.f32 %v1928, %v1933
    %1937 = vrot.lane.b32.xlu0 %v1935, 32
    %v1938 = vpop.permute.xlu0 %1937
    %v1940 = vadd.f32 %v1930, %v1938
    %v1941 = vtanh.pop %v1940
    %1943 = vrot.lane.b32.xlu0 %v1941, 64
    %v1944 = vpop.permute.xlu0 %1943
    %v1946 = vmul.f32 %v1928, %v1944
    %1948 = vrot.lane.b32.xlu0 %v1922, 32
    %v1949 = vpop.permute.xlu0 %1948
    %1951 = vst.msk [vmem:[%s843] sm:$0x3] %vm196, %v1949
    %1953 = vrot.lane.b32.xlu0 %v1946, 64
    %v1954 = vpop.permute.xlu0 %1953
    %1956 = vst.msk [vmem:[%s837] sm:$0x3] %vm203, %v1954
    %s1957 = scalar_lea.vmem %s0, 24
    %v1958 = vld [vmem:[%s1957] sm:$0x3]
    %v1959 = vpack.c.bf16 %v1922, %v1922
    %1961 = vrot.lane.b32.xlu0 %v1959, 32
    %v1962 = vpop.permute.xlu0 %1961
    %v1964 = vsel %vm44, %v1962, 0
    %1966 = vmatprep.subr.bf16.mxu0 0
    %1967 = vmatpush1.bf16.msra.mxu0 %v40
    %1968 = vmatprep.subr.bf16.mxu0 0
    %1969 = vmatpush1.bf16.msra.mxu0 %v41
    %1970 = vmatprep.subr.bf16.mxu0 0
    %1971 = vmatpush1.bf16.msra.mxu0 0
    %1972 = vmatprep.subr.bf16.mxu0 0
    %1973 = vmatpush1.bf16.msra.mxu0 0
    %1974 = vmatprep.subr.bf16.mxu0 0
    %1975 = vmatpush1.bf16.msra.mxu0 0
    %1976 = vmatprep.subr.bf16.mxu0 0
    %1977 = vmatpush1.bf16.msra.mxu0 0
    %1978 = vmatprep.subr.bf16.mxu0 0
    %1979 = vmatpush1.bf16.msra.mxu0 0
    %1980 = vmatprep.subr.bf16.mxu0 0
    %1981 = vmatpush1.bf16.msra.mxu0 0
    %1982 = vmatprep.subr.bf16.mxu0 0
    %1983 = vmatpush1.bf16.msra.mxu0 0
    %1984 = vmatprep.subr.bf16.mxu0 0
    %1985 = vmatpush1.bf16.msra.mxu0 0
    %1986 = vmatprep.subr.bf16.mxu0 0
    %1987 = vmatpush1.bf16.msra.mxu0 0
    %1988 = vmatprep.subr.bf16.mxu0 0
    %1989 = vmatpush1.bf16.msra.mxu0 0
    %1990 = vmatprep.subr.bf16.mxu0 0
    %1991 = vmatpush1.bf16.msra.mxu0 0
    %1992 = vmatprep.subr.bf16.mxu0 0
    %1993 = vmatpush1.bf16.msra.mxu0 0
    %1994 = vmatprep.subr.bf16.mxu0 0
    %1995 = vmatpush1.bf16.msra.mxu0 0
    %1996 = vmatprep.subr.bf16.mxu0 0
    %1997 = vmatpush1.bf16.msra.mxu0 0
    %1998 = vmatprep.mubr.bf16.mxu0 0
    %1999 = vmatmul.mubr.bf16.gmra.mrb[0].mxu0 %v1964
    %v2000 = vpop.f32.mrb[0].mxu0
    %v2001 = vadd.f32 0.0, %v2000
    %v2002 = vpop.f32.mrb[0].mxu0
    %v2003 = vpop.f32.mrb[0].mxu0
    %v2004 = vpop.f32.mrb[0].mxu0
    %2005 = vdwg.mxu0
    %v2006 = vadd.f32 %v1958, %v2001
    %s2007 = scalar_lea.vmem %s1, 6
    %v2008 = vld [vmem:[%s2007] sm:$0x3]
    %v2009 = vpack.c.bf16 %v1946, %v1946
    %2011 = vrot.lane.b32.xlu0 %v2009, 32
    %v2012 = vpop.permute.xlu0 %2011
    %v2014 = vsel %vm44, %v2012, 0
    %2016 = vmatprep.subr.bf16.mxu0 0
    %2017 = vmatpush1.bf16.msra.mxu0 %v99
    %2018 = vmatprep.subr.bf16.mxu0 0
    %2019 = vmatpush1.bf16.msra.mxu0 %v100
    %2020 = vmatprep.subr.bf16.mxu0 0
    %2021 = vmatpush1.bf16.msra.mxu0 0
    %2022 = vmatprep.subr.bf16.mxu0 0
    %2023 = vmatpush1.bf16.msra.mxu0 0
    %2024 = vmatprep.subr.bf16.mxu0 0
    %2025 = vmatpush1.bf16.msra.mxu0 0
    %2026 = vmatprep.subr.bf16.mxu0 0
    %2027 = vmatpush1.bf16.msra.mxu0 0
    %2028 = vmatprep.subr.bf16.mxu0 0
    %2029 = vmatpush1.bf16.msra.mxu0 0
    %2030 = vmatprep.subr.bf16.mxu0 0
    %2031 = vmatpush1.bf16.msra.mxu0 0
    %2032 = vmatprep.subr.bf16.mxu0 0
    %2033 = vmatpush1.bf16.msra.mxu0 0
    %2034 = vmatprep.subr.bf16.mxu0 0
    %2035 = vmatpush1.bf16.msra.mxu0 0
    %2036 = vmatprep.subr.bf16.mxu0 0
    %2037 = vmatpush1.bf16.msra.mxu0 0
    %2038 = vmatprep.subr.bf16.mxu0 0
    %2039 = vmatpush1.bf16.msra.mxu0 0
    %2040 = vmatprep.subr.bf16.mxu0 0
    %2041 = vmatpush1.bf16.msra.mxu0 0
    %2042 = vmatprep.subr.bf16.mxu0 0
    %2043 = vmatpush1.bf16.msra.mxu0 0
    %2044 = vmatprep.subr.bf16.mxu0 0
    %2045 = vmatpush1.bf16.msra.mxu0 0
    %2046 = vmatprep.subr.bf16.mxu0 0
    %2047 = vmatpush1.bf16.msra.mxu0 0
    %2048 = vmatprep.mubr.bf16.mxu0 0
    %2049 = vmatmul.mubr.bf16.gmra.mrb[0].mxu0 %v2014
    %v2050 = vpop.f32.mrb[0].mxu0
    %v2051 = vadd.f32 0.0, %v2050
    %v2052 = vpop.f32.mrb[0].mxu0
    %v2053 = vpop.f32.mrb[0].mxu0
    %v2054 = vpop.f32.mrb[0].mxu0
    %2055 = vdwg.mxu0
    %v2056 = vadd.f32 %v2008, %v2051
    %v2057 = vxor.u32 %v2006, 2147483648
    %v2058 = vmul.f32 %v2057, 1.442695
    %v2059 = vpow.pop %v2058
    %v2060 = vadd.f32 %v2059, 1.0
    %v2061 = vrcp.pop %v2060
    %v2062 = vmul.f32 1.0, %v2061
    %v2063 = vtanh.pop %v2006
    %v2064 = vmul.f32 %v2062, %v1916
    %2066 = vrot.lane.b32.xlu0 %v2063, 64
    %v2067 = vpop.permute.xlu0 %2066
    %v2069 = vmul.f32 %v2062, %v2067
    %2071 = vrot.lane.b32.xlu0 %v2069, 32
    %v2072 = vpop.permute.xlu0 %2071
    %v2074 = vadd.f32 %v2064, %v2072
    %v2075 = vtanh.pop %v2074
    %2077 = vrot.lane.b32.xlu0 %v2075, 64
    %v2078 = vpop.permute.xlu0 %2077
    %v2080 = vmul.f32 %v2062, %v2078
    %v2081 = vxor.u32 %v2056, 2147483648
    %v2082 = vmul.f32 %v2081, 1.442695
    %v2083 = vpow.pop %v2082
    %v2084 = vadd.f32 %v2083, 1.0
    %v2085 = vrcp.pop %v2084
    %v2086 = vmul.f32 1.0, %v2085
    %v2087 = vtanh.pop %v2056
    %v2088 = vmul.f32 %v2086, %v1940
    %2090 = vrot.lane.b32.xlu0 %v2087, 64
    %v2091 = vpop.permute.xlu0 %2090
    %v2093 = vmul.f32 %v2086, %v2091
    %2095 = vrot.lane.b32.xlu0 %v2093, 32
    %v2096 = vpop.permute.xlu0 %2095
    %v2098 = vadd.f32 %v2088, %v2096
    %v2099 = vtanh.pop %v2098
    %2101 = vrot.lane.b32.xlu0 %v2099, 64
    %v2102 = vpop.permute.xlu0 %2101
    %v2104 = vmul.f32 %v2086, %v2102
    %2106 = vrot.lane.b32.xlu0 %v2080, 32
    %v2107 = vpop.permute.xlu0 %2106
    %2109 = vst.msk [vmem:[%s683] sm:$0x3] %vm196, %v2107
    %2111 = vrot.lane.b32.xlu0 %v2104, 64
    %v2112 = vpop.permute.xlu0 %2111
    %2114 = vst.msk [vmem:[%s677] sm:$0x3] %vm203, %v2112
    %s2115 = scalar_lea.vmem %s0, 26
    %v2116 = vld [vmem:[%s2115] sm:$0x3]
    %v2117 = vpack.c.bf16 %v2080, %v2080
    %2119 = vrot.lane.b32.xlu0 %v2117, 32
    %v2120 = vpop.permute.xlu0 %2119
    %v2122 = vsel %vm44, %v2120, 0
    %2124 = vmatprep.subr.bf16.mxu0 0
    %2125 = vmatpush1.bf16.msra.mxu0 %v40
    %2126 = vmatprep.subr.bf16.mxu0 0
    %2127 = vmatpush1.bf16.msra.mxu0 %v41
    %2128 = vmatprep.subr.bf16.mxu0 0
    %2129 = vmatpush1.bf16.msra.mxu0 0
    %2130 = vmatprep.subr.bf16.mxu0 0
    %2131 = vmatpush1.bf16.msra.mxu0 0
    %2132 = vmatprep.subr.bf16.mxu0 0
    %2133 = vmatpush1.bf16.msra.mxu0 0
    %2134 = vmatprep.subr.bf16.mxu0 0
    %2135 = vmatpush1.bf16.msra.mxu0 0
    %2136 = vmatprep.subr.bf16.mxu0 0
    %2137 = vmatpush1.bf16.msra.mxu0 0
    %2138 = vmatprep.subr.bf16.mxu0 0
    %2139 = vmatpush1.bf16.msra.mxu0 0
    %2140 = vmatprep.subr.bf16.mxu0 0
    %2141 = vmatpush1.bf16.msra.mxu0 0
    %2142 = vmatprep.subr.bf16.mxu0 0
    %2143 = vmatpush1.bf16.msra.mxu0 0
    %2144 = vmatprep.subr.bf16.mxu0 0
    %2145 = vmatpush1.bf16.msra.mxu0 0
    %2146 = vmatprep.subr.bf16.mxu0 0
    %2147 = vmatpush1.bf16.msra.mxu0 0
    %2148 = vmatprep.subr.bf16.mxu0 0
    %2149 = vmatpush1.bf16.msra.mxu0 0
    %2150 = vmatprep.subr.bf16.mxu0 0
    %2151 = vmatpush1.bf16.msra.mxu0 0
    %2152 = vmatprep.subr.bf16.mxu0 0
    %2153 = vmatpush1.bf16.msra.mxu0 0
    %2154 = vmatprep.subr.bf16.mxu0 0
    %2155 = vmatpush1.bf16.msra.mxu0 0
    %2156 = vmatprep.mubr.bf16.mxu0 0
    %2157 = vmatmul.mubr.bf16.gmra.mrb[0].mxu0 %v2122
    %v2158 = vpop.f32.mrb[0].mxu0
    %v2159 = vadd.f32 0.0, %v2158
    %v2160 = vpop.f32.mrb[0].mxu0
    %v2161 = vpop.f32.mrb[0].mxu0
    %v2162 = vpop.f32.mrb[0].mxu0
    %2163 = vdwg.mxu0
    %v2164 = vadd.f32 %v2116, %v2159
    %s2165 = scalar_lea.vmem %s1, 4
    %v2166 = vld [vmem:[%s2165] sm:$0x3]
    %v2167 = vpack.c.bf16 %v2104, %v2104
    %2169 = vrot.lane.b32.xlu0 %v2167, 32
    %v2170 = vpop.permute.xlu0 %2169
    %v2172 = vsel %vm44, %v2170, 0
    %2174 = vmatprep.subr.bf16.mxu0 0
    %2175 = vmatpush1.bf16.msra.mxu0 %v99
    %2176 = vmatprep.subr.bf16.mxu0 0
    %2177 = vmatpush1.bf16.msra.mxu0 %v100
    %2178 = vmatprep.subr.bf16.mxu0 0
    %2179 = vmatpush1.bf16.msra.mxu0 0
    %2180 = vmatprep.subr.bf16.mxu0 0
    %2181 = vmatpush1.bf16.msra.mxu0 0
    %2182 = vmatprep.subr.bf16.mxu0 0
    %2183 = vmatpush1.bf16.msra.mxu0 0
    %2184 = vmatprep.subr.bf16.mxu0 0
    %2185 = vmatpush1.bf16.msra.mxu0 0
    %2186 = vmatprep.subr.bf16.mxu0 0
    %2187 = vmatpush1.bf16.msra.mxu0 0
    %2188 = vmatprep.subr.bf16.mxu0 0
    %2189 = vmatpush1.bf16.msra.mxu0 0
    %2190 = vmatprep.subr.bf16.mxu0 0
    %2191 = vmatpush1.bf16.msra.mxu0 0
    %2192 = vmatprep.subr.bf16.mxu0 0
    %2193 = vmatpush1.bf16.msra.mxu0 0
    %2194 = vmatprep.subr.bf16.mxu0 0
    %2195 = vmatpush1.bf16.msra.mxu0 0
    %2196 = vmatprep.subr.bf16.mxu0 0
    %2197 = vmatpush1.bf16.msra.mxu0 0
    %2198 = vmatprep.subr.bf16.mxu0 0
    %2199 = vmatpush1.bf16.msra.mxu0 0
    %2200 = vmatprep.subr.bf16.mxu0 0
    %2201 = vmatpush1.bf16.msra.mxu0 0
    %2202 = vmatprep.subr.bf16.mxu0 0
    %2203 = vmatpush1.bf16.msra.mxu0 0
    %2204 = vmatprep.subr.bf16.mxu0 0
    %2205 = vmatpush1.bf16.msra.mxu0 0
    %2206 = vmatprep.mubr.bf16.mxu0 0
    %2207 = vmatmul.mubr.bf16.gmra.mrb[0].mxu0 %v2172
    %v2208 = vpop.f32.mrb[0].mxu0
    %v2209 = vadd.f32 0.0, %v2208
    %v2210 = vpop.f32.mrb[0].mxu0
    %v2211 = vpop.f32.mrb[0].mxu0
    %v2212 = vpop.f32.mrb[0].mxu0
    %2213 = vdwg.mxu0
    %v2214 = vadd.f32 %v2166, %v2209
    %v2215 = vxor.u32 %v2164, 2147483648
    %v2216 = vmul.f32 %v2215, 1.442695
    %v2217 = vpow.pop %v2216
    %v2218 = vadd.f32 %v2217, 1.0
    %v2219 = vrcp.pop %v2218
    %v2220 = vmul.f32 1.0, %v2219
    %v2221 = vtanh.pop %v2164
    %v2222 = vmul.f32 %v2220, %v2074
    %2224 = vrot.lane.b32.xlu0 %v2221, 64
    %v2225 = vpop.permute.xlu0 %2224
    %v2227 = vmul.f32 %v2220, %v2225
    %2229 = vrot.lane.b32.xlu0 %v2227, 32
    %v2230 = vpop.permute.xlu0 %2229
    %v2232 = vadd.f32 %v2222, %v2230
    %v2233 = vtanh.pop %v2232
    %2235 = vrot.lane.b32.xlu0 %v2233, 64
    %v2236 = vpop.permute.xlu0 %2235
    %v2238 = vmul.f32 %v2220, %v2236
    %v2239 = vxor.u32 %v2214, 2147483648
    %v2240 = vmul.f32 %v2239, 1.442695
    %v2241 = vpow.pop %v2240
    %v2242 = vadd.f32 %v2241, 1.0
    %v2243 = vrcp.pop %v2242
    %v2244 = vmul.f32 1.0, %v2243
    %v2245 = vtanh.pop %v2214
    %v2246 = vmul.f32 %v2244, %v2098
    %2248 = vrot.lane.b32.xlu0 %v2245, 64
    %v2249 = vpop.permute.xlu0 %2248
    %v2251 = vmul.f32 %v2244, %v2249
    %2253 = vrot.lane.b32.xlu0 %v2251, 32
    %v2254 = vpop.permute.xlu0 %2253
    %v2256 = vadd.f32 %v2246, %v2254
    %v2257 = vtanh.pop %v2256
    %2259 = vrot.lane.b32.xlu0 %v2257, 64
    %v2260 = vpop.permute.xlu0 %2259
    %v2262 = vmul.f32 %v2244, %v2260
    %2264 = vrot.lane.b32.xlu0 %v2238, 32
    %v2265 = vpop.permute.xlu0 %2264
    %2267 = vst.msk [vmem:[%s523] sm:$0x3] %vm196, %v2265
    %2269 = vrot.lane.b32.xlu0 %v2262, 64
    %v2270 = vpop.permute.xlu0 %2269
    %2272 = vst.msk [vmem:[%s517] sm:$0x3] %vm203, %v2270
    %s2273 = scalar_lea.vmem %s0, 28
    %v2274 = vld [vmem:[%s2273] sm:$0x3]
    %v2275 = vpack.c.bf16 %v2238, %v2238
    %2277 = vrot.lane.b32.xlu0 %v2275, 32
    %v2278 = vpop.permute.xlu0 %2277
    %v2280 = vsel %vm44, %v2278, 0
    %2282 = vmatprep.subr.bf16.mxu0 0
    %2283 = vmatpush1.bf16.msra.mxu0 %v40
    %2284 = vmatprep.subr.bf16.mxu0 0
    %2285 = vmatpush1.bf16.msra.mxu0 %v41
    %2286 = vmatprep.subr.bf16.mxu0 0
    %2287 = vmatpush1.bf16.msra.mxu0 0
    %2288 = vmatprep.subr.bf16.mxu0 0
    %2289 = vmatpush1.bf16.msra.mxu0 0
    %2290 = vmatprep.subr.bf16.mxu0 0
    %2291 = vmatpush1.bf16.msra.mxu0 0
    %2292 = vmatprep.subr.bf16.mxu0 0
    %2293 = vmatpush1.bf16.msra.mxu0 0
    %2294 = vmatprep.subr.bf16.mxu0 0
    %2295 = vmatpush1.bf16.msra.mxu0 0
    %2296 = vmatprep.subr.bf16.mxu0 0
    %2297 = vmatpush1.bf16.msra.mxu0 0
    %2298 = vmatprep.subr.bf16.mxu0 0
    %2299 = vmatpush1.bf16.msra.mxu0 0
    %2300 = vmatprep.subr.bf16.mxu0 0
    %2301 = vmatpush1.bf16.msra.mxu0 0
    %2302 = vmatprep.subr.bf16.mxu0 0
    %2303 = vmatpush1.bf16.msra.mxu0 0
    %2304 = vmatprep.subr.bf16.mxu0 0
    %2305 = vmatpush1.bf16.msra.mxu0 0
    %2306 = vmatprep.subr.bf16.mxu0 0
    %2307 = vmatpush1.bf16.msra.mxu0 0
    %2308 = vmatprep.subr.bf16.mxu0 0
    %2309 = vmatpush1.bf16.msra.mxu0 0
    %2310 = vmatprep.subr.bf16.mxu0 0
    %2311 = vmatpush1.bf16.msra.mxu0 0
    %2312 = vmatprep.subr.bf16.mxu0 0
    %2313 = vmatpush1.bf16.msra.mxu0 0
    %2314 = vmatprep.mubr.bf16.mxu0 0
    %2315 = vmatmul.mubr.bf16.gmra.mrb[0].mxu0 %v2280
    %v2316 = vpop.f32.mrb[0].mxu0
    %v2317 = vadd.f32 0.0, %v2316
    %v2318 = vpop.f32.mrb[0].mxu0
    %v2319 = vpop.f32.mrb[0].mxu0
    %v2320 = vpop.f32.mrb[0].mxu0
    %2321 = vdwg.mxu0
    %v2322 = vadd.f32 %v2274, %v2317
    %s2323 = scalar_lea.vmem %s1, 2
    %v2324 = vld [vmem:[%s2323] sm:$0x3]
    %v2325 = vpack.c.bf16 %v2262, %v2262
    %2327 = vrot.lane.b32.xlu0 %v2325, 32
    %v2328 = vpop.permute.xlu0 %2327
    %v2330 = vsel %vm44, %v2328, 0
    %2332 = vmatprep.subr.bf16.mxu0 0
    %2333 = vmatpush1.bf16.msra.mxu0 %v99
    %2334 = vmatprep.subr.bf16.mxu0 0
    %2335 = vmatpush1.bf16.msra.mxu0 %v100
    %2336 = vmatprep.subr.bf16.mxu0 0
    %2337 = vmatpush1.bf16.msra.mxu0 0
    %2338 = vmatprep.subr.bf16.mxu0 0
    %2339 = vmatpush1.bf16.msra.mxu0 0
    %2340 = vmatprep.subr.bf16.mxu0 0
    %2341 = vmatpush1.bf16.msra.mxu0 0
    %2342 = vmatprep.subr.bf16.mxu0 0
    %2343 = vmatpush1.bf16.msra.mxu0 0
    %2344 = vmatprep.subr.bf16.mxu0 0
    %2345 = vmatpush1.bf16.msra.mxu0 0
    %2346 = vmatprep.subr.bf16.mxu0 0
    %2347 = vmatpush1.bf16.msra.mxu0 0
    %2348 = vmatprep.subr.bf16.mxu0 0
    %2349 = vmatpush1.bf16.msra.mxu0 0
    %2350 = vmatprep.subr.bf16.mxu0 0
    %2351 = vmatpush1.bf16.msra.mxu0 0
    %2352 = vmatprep.subr.bf16.mxu0 0
    %2353 = vmatpush1.bf16.msra.mxu0 0
    %2354 = vmatprep.subr.bf16.mxu0 0
    %2355 = vmatpush1.bf16.msra.mxu0 0
    %2356 = vmatprep.subr.bf16.mxu0 0
    %2357 = vmatpush1.bf16.msra.mxu0 0
    %2358 = vmatprep.subr.bf16.mxu0 0
    %2359 = vmatpush1.bf16.msra.mxu0 0
    %2360 = vmatprep.subr.bf16.mxu0 0
    %2361 = vmatpush1.bf16.msra.mxu0 0
    %2362 = vmatprep.subr.bf16.mxu0 0
    %2363 = vmatpush1.bf16.msra.mxu0 0
    %2364 = vmatprep.mubr.bf16.mxu0 0
    %2365 = vmatmul.mubr.bf16.gmra.mrb[0].mxu0 %v2330
    %v2366 = vpop.f32.mrb[0].mxu0
    %v2367 = vadd.f32 0.0, %v2366
    %v2368 = vpop.f32.mrb[0].mxu0
    %v2369 = vpop.f32.mrb[0].mxu0
    %v2370 = vpop.f32.mrb[0].mxu0
    %2371 = vdwg.mxu0
    %v2372 = vadd.f32 %v2324, %v2367
    %v2373 = vxor.u32 %v2322, 2147483648
    %v2374 = vmul.f32 %v2373, 1.442695
    %v2375 = vpow.pop %v2374
    %v2376 = vadd.f32 %v2375, 1.0
    %v2377 = vrcp.pop %v2376
    %v2378 = vmul.f32 1.0, %v2377
    %v2379 = vtanh.pop %v2322
    %v2380 = vmul.f32 %v2378, %v2232
    %2382 = vrot.lane.b32.xlu0 %v2379, 64
    %v2383 = vpop.permute.xlu0 %2382
    %v2385 = vmul.f32 %v2378, %v2383
    %2387 = vrot.lane.b32.xlu0 %v2385, 32
    %v2388 = vpop.permute.xlu0 %2387
    %v2390 = vadd.f32 %v2380, %v2388
    %v2391 = vtanh.pop %v2390
    %2393 = vrot.lane.b32.xlu0 %v2391, 64
    %v2394 = vpop.permute.xlu0 %2393
    %v2396 = vmul.f32 %v2378, %v2394
    %v2397 = vxor.u32 %v2372, 2147483648
    %v2398 = vmul.f32 %v2397, 1.442695
    %v2399 = vpow.pop %v2398
    %v2400 = vadd.f32 %v2399, 1.0
    %v2401 = vrcp.pop %v2400
    %v2402 = vmul.f32 1.0, %v2401
    %v2403 = vtanh.pop %v2372
    %v2404 = vmul.f32 %v2402, %v2256
    %2406 = vrot.lane.b32.xlu0 %v2403, 64
    %v2407 = vpop.permute.xlu0 %2406
    %v2409 = vmul.f32 %v2402, %v2407
    %2411 = vrot.lane.b32.xlu0 %v2409, 32
    %v2412 = vpop.permute.xlu0 %2411
    %v2414 = vadd.f32 %v2404, %v2412
    %v2415 = vtanh.pop %v2414
    %2417 = vrot.lane.b32.xlu0 %v2415, 64
    %v2418 = vpop.permute.xlu0 %2417
    %v2420 = vmul.f32 %v2402, %v2418
    %2422 = vrot.lane.b32.xlu0 %v2396, 32
    %v2423 = vpop.permute.xlu0 %2422
    %2425 = vst.msk [vmem:[%s363] sm:$0x3] %vm196, %v2423
    %2427 = vrot.lane.b32.xlu0 %v2420, 64
    %v2428 = vpop.permute.xlu0 %2427
    %2430 = vst.msk [vmem:[%s357] sm:$0x3] %vm203, %v2428
    %s2431 = scalar_lea.vmem %s0, 30
    %v2432 = vld [vmem:[%s2431] sm:$0x3]
    %v2433 = vpack.c.bf16 %v2396, %v2396
    %2435 = vrot.lane.b32.xlu0 %v2433, 32
    %v2436 = vpop.permute.xlu0 %2435
    %v2438 = vsel %vm44, %v2436, 0
    %2440 = vmatprep.subr.bf16.mxu0 0
    %2441 = vmatpush1.bf16.msra.mxu0 %v40
    %2442 = vmatprep.subr.bf16.mxu0 0
    %2443 = vmatpush1.bf16.msra.mxu0 %v41
    %2444 = vmatprep.subr.bf16.mxu0 0
    %2445 = vmatpush1.bf16.msra.mxu0 0
    %2446 = vmatprep.subr.bf16.mxu0 0
    %2447 = vmatpush1.bf16.msra.mxu0 0
    %2448 = vmatprep.subr.bf16.mxu0 0
    %2449 = vmatpush1.bf16.msra.mxu0 0
    %2450 = vmatprep.subr.bf16.mxu0 0
    %2451 = vmatpush1.bf16.msra.mxu0 0
    %2452 = vmatprep.subr.bf16.mxu0 0
    %2453 = vmatpush1.bf16.msra.mxu0 0
    %2454 = vmatprep.subr.bf16.mxu0 0
    %2455 = vmatpush1.bf16.msra.mxu0 0
    %2456 = vmatprep.subr.bf16.mxu0 0
    %2457 = vmatpush1.bf16.msra.mxu0 0
    %2458 = vmatprep.subr.bf16.mxu0 0
    %2459 = vmatpush1.bf16.msra.mxu0 0
    %2460 = vmatprep.subr.bf16.mxu0 0
    %2461 = vmatpush1.bf16.msra.mxu0 0
    %2462 = vmatprep.subr.bf16.mxu0 0
    %2463 = vmatpush1.bf16.msra.mxu0 0
    %2464 = vmatprep.subr.bf16.mxu0 0
    %2465 = vmatpush1.bf16.msra.mxu0 0
    %2466 = vmatprep.subr.bf16.mxu0 0
    %2467 = vmatpush1.bf16.msra.mxu0 0
    %2468 = vmatprep.subr.bf16.mxu0 0
    %2469 = vmatpush1.bf16.msra.mxu0 0
    %2470 = vmatprep.subr.bf16.mxu0 0
    %2471 = vmatpush1.bf16.msra.mxu0 0
    %2472 = vmatprep.mubr.bf16.mxu0 0
    %2473 = vmatmul.mubr.bf16.gmra.mrb[0].mxu0 %v2438
    %v2474 = vpop.f32.mrb[0].mxu0
    %v2475 = vadd.f32 0.0, %v2474
    %v2476 = vpop.f32.mrb[0].mxu0
    %v2477 = vpop.f32.mrb[0].mxu0
    %v2478 = vpop.f32.mrb[0].mxu0
    %2479 = vdwg.mxu0
    %v2480 = vadd.f32 %v2432, %v2475
    %v2481 = vld [vmem:[%s1] sm:$0x3]
    %v2482 = vpack.c.bf16 %v2420, %v2420
    %2484 = vrot.lane.b32.xlu0 %v2482, 32
    %v2485 = vpop.permute.xlu0 %2484
    %v2487 = vsel %vm44, %v2485, 0
    %2489 = vmatprep.subr.bf16.mxu0 0
    %2490 = vmatpush1.bf16.msra.mxu0 %v99
    %2491 = vmatprep.subr.bf16.mxu0 0
    %2492 = vmatpush1.bf16.msra.mxu0 %v100
    %2493 = vmatprep.subr.bf16.mxu0 0
    %2494 = vmatpush1.bf16.msra.mxu0 0
    %2495 = vmatprep.subr.bf16.mxu0 0
    %2496 = vmatpush1.bf16.msra.mxu0 0
    %2497 = vmatprep.subr.bf16.mxu0 0
    %2498 = vmatpush1.bf16.msra.mxu0 0
    %2499 = vmatprep.subr.bf16.mxu0 0
    %2500 = vmatpush1.bf16.msra.mxu0 0
    %2501 = vmatprep.subr.bf16.mxu0 0
    %2502 = vmatpush1.bf16.msra.mxu0 0
    %2503 = vmatprep.subr.bf16.mxu0 0
    %2504 = vmatpush1.bf16.msra.mxu0 0
    %2505 = vmatprep.subr.bf16.mxu0 0
    %2506 = vmatpush1.bf16.msra.mxu0 0
    %2507 = vmatprep.subr.bf16.mxu0 0
    %2508 = vmatpush1.bf16.msra.mxu0 0
    %2509 = vmatprep.subr.bf16.mxu0 0
    %2510 = vmatpush1.bf16.msra.mxu0 0
    %2511 = vmatprep.subr.bf16.mxu0 0
    %2512 = vmatpush1.bf16.msra.mxu0 0
    %2513 = vmatprep.subr.bf16.mxu0 0
    %2514 = vmatpush1.bf16.msra.mxu0 0
    %2515 = vmatprep.subr.bf16.mxu0 0
    %2516 = vmatpush1.bf16.msra.mxu0 0
    %2517 = vmatprep.subr.bf16.mxu0 0
    %2518 = vmatpush1.bf16.msra.mxu0 0
    %2519 = vmatprep.subr.bf16.mxu0 0
    %2520 = vmatpush1.bf16.msra.mxu0 0
    %2521 = vmatprep.mubr.bf16.mxu0 0
    %2522 = vmatmul.mubr.bf16.gmra.mrb[0].mxu0 %v2487
    %v2523 = vpop.f32.mrb[0].mxu0
    %v2524 = vadd.f32 0.0, %v2523
    %v2525 = vpop.f32.mrb[0].mxu0
    %v2526 = vpop.f32.mrb[0].mxu0
    %v2527 = vpop.f32.mrb[0].mxu0
    %2528 = vdwg.mxu0
    %v2529 = vadd.f32 %v2481, %v2524
    %v2530 = vxor.u32 %v2480, 2147483648
    %v2531 = vmul.f32 %v2530, 1.442695
    %v2532 = vpow.pop %v2531
    %v2533 = vadd.f32 %v2532, 1.0
    %v2534 = vrcp.pop %v2533
    %v2535 = vmul.f32 1.0, %v2534
    %v2536 = vtanh.pop %v2480
    %v2537 = vmul.f32 %v2535, %v2390
    %2539 = vrot.lane.b32.xlu0 %v2536, 64
    %v2540 = vpop.permute.xlu0 %2539
    %v2542 = vmul.f32 %v2535, %v2540
    %2544 = vrot.lane.b32.xlu0 %v2542, 32
    %v2545 = vpop.permute.xlu0 %2544
    %v2547 = vadd.f32 %v2537, %v2545
    %v2548 = vtanh.pop %v2547
    %2550 = vrot.lane.b32.xlu0 %v2548, 64
    %v2551 = vpop.permute.xlu0 %2550
    %v2553 = vmul.f32 %v2535, %v2551
    %v2554 = vxor.u32 %v2529, 2147483648
    %v2555 = vmul.f32 %v2554, 1.442695
    %v2556 = vpow.pop %v2555
    %v2557 = vadd.f32 %v2556, 1.0
    %v2558 = vrcp.pop %v2557
    %v2559 = vmul.f32 1.0, %v2558
    %v2560 = vtanh.pop %v2529
    %v2561 = vmul.f32 %v2559, %v2414
    %2563 = vrot.lane.b32.xlu0 %v2560, 64
    %v2564 = vpop.permute.xlu0 %2563
    %v2566 = vmul.f32 %v2559, %v2564
    %2568 = vrot.lane.b32.xlu0 %v2566, 32
    %v2569 = vpop.permute.xlu0 %2568
    %v2571 = vadd.f32 %v2561, %v2569
    %v2572 = vtanh.pop %v2571
    %2574 = vrot.lane.b32.xlu0 %v2572, 64
    %v2575 = vpop.permute.xlu0 %2574
    %v2577 = vmul.f32 %v2559, %v2575
    %2579 = vrot.lane.b32.xlu0 %v2553, 32
    %v2580 = vpop.permute.xlu0 %2579
    %2582 = vst.msk [vmem:[%s202] sm:$0x3] %vm196, %v2580
    %2584 = vrot.lane.b32.xlu0 %v2577, 64
    %v2585 = vpop.permute.xlu0 %2584
    %2587 = vst.msk [vmem:[%s4] sm:$0x3] %vm203, %v2585
    %2588 = vst.msk [vmem:[#allocation2] sm:$0x3] %vm196, %v2580
    %2589 = vrot.lane.b32.xlu0 %v2577, 32
    %v2590 = vpop.permute.xlu0 %2589
    %s2592 = scalar_lea.vmem [#allocation2], 2
    %2593 = vst.msk [vmem:[%s2592] sm:$0x3] %vm196, %v2590
    %2595 = vrot.lane.b32.xlu0 %v2547, 96
    %v2596 = vpop.permute.xlu0 %2595
    %2598 = vst.msk [vmem:[#allocation4] sm:$0x3] %vm196, %v2596
    %2600 = vrot.lane.b32.xlu0 %v2571, 96
    %v2601 = vpop.permute.xlu0 %2600
    %s2603 = scalar_lea.vmem [#allocation4], 2
    %2604 = vst.msk [vmem:[%s2603] sm:$0x3] %vm196, %v2601
    // Predicated region
    $region18: #{listener_forward.3} parent=1 // pred_check
      _
    $region19: #{listener_forward.3} parent=1 // pred_check_branch
      %2606 = sbr.rel (0) target = $region21
    $region20: #{listener_forward.3} parent=1 // pred_region
      _
    $region21: #{listener_forward.3} parent=1 // pred_fallthru
      _
    // Predicated region
    $region22: #{listener_forward.3} parent=1 // pred_check
      _
    $region23: #{listener_forward.3} parent=1 // pred_check_branch
      %2608 = sbr.rel (0) target = $region25
    $region24: #{listener_forward.3} parent=1 // pred_region
      %s2610 = ssub.s32 64, 64
      %2611 = vsyncadd [#allocation3], %s2610
      %s2612 = sshll.u32 [#allocation2], 4
      %s2613 = int_to_ptr.vmem [resolvable:$true] %s2612
      %2618 = dma.vmem_to_hbm [thread:$0]  %s2613, 64, %s5, [#allocation3], 32, 32, 2
    $region25: #{listener_forward.3} parent=1 // pred_fallthru
      _
    // Predicated region
    $region26: #{listener_forward.3} parent=1 // pred_check
      _
    $region27: #{listener_forward.3} parent=1 // pred_check_branch
      %2620 = sbr.rel (0) target = $region29
    $region28: #{listener_forward.3} parent=1 // pred_region
      %s2622 = ssub.s32 64, 64
      %2623 = vsyncadd [#allocation5], %s2622
      %s2624 = sshll.u32 [#allocation4], 4
      %s2625 = int_to_ptr.vmem [resolvable:$true] %s2624
      %2630 = dma.vmem_to_hbm [thread:$0]  %s2625, 64, %s6, [#allocation5], 32, 32, 2
    $region29: #{listener_forward.3} parent=1 // pred_fallthru
      _
    // Predicated region
    $region30: #{listener_forward.3} parent=1 // pred_check
      _
    $region31: #{listener_forward.3} parent=1 // pred_check_branch
      %2632 = sbr.rel (0) target = $region33
    $region32: #{listener_forward.3} parent=1 // pred_region
      _
    $region33: #{listener_forward.3} parent=1 // pred_fallthru
      _
    // Predicated region
    $region34: #{listener_forward.3} parent=1 // pred_check
      _
    $region35: #{listener_forward.3} parent=1 // pred_check_branch
      %2634 = sbr.rel (0) target = $region37
    $region36: #{listener_forward.3} parent=1 // pred_region
      %2635 = dma.done [#allocation3], 64
    $region37: #{listener_forward.3} parent=1 // pred_fallthru
      _
    // Predicated region
    $region38: #{listener_forward.3} parent=1 // pred_check
      _
    $region39: #{listener_forward.3} parent=1 // pred_check_branch
      %2637 = sbr.rel (0) target = $region41
    $region40: #{listener_forward.3} parent=1 // pred_region
      %2638 = dma.done [#allocation5], 64
    $region41: #{listener_forward.3} parent=1 // pred_fallthru
      _
    %2639 = vsyncpa [#allocation3], 1
    %2640 = vsyncpa [#allocation5], 1

</llo_original>
